<compile_context>
chip_gen: v7x
topology: tpu7x:2x2x1
jax: 0.10.0
libtpu: 0.0.40
codegen_flags: <defaults>
</compile_context>

<pallas_src>
import numpy as np
import jax
import jax.numpy as jnp
from jax.experimental import pallas as pl
from jax.experimental.pallas import tpu as pltpu

# ----- static config -----
NET_WIDTH = 32                       # W
DEFOR_DEPTH = 2                      # D
POSBASE_PE = 2
SCALE_ROT_PE = 2
EMB_FEATS = 16                       # cfg.model.nsg.embedding_feats_shape
DEFORM_W = NET_WIDTH + EMB_FEATS     # 48
HEAD_OUT = [3, 3, 4, 1, 12]          # dx, ds, dr, do, dshs
HEAD_K = 5 * DEFORM_W + EMB_FEATS    # 256  (5 heads + fused pos_lifespan)

# 64-lane slab layout shared by input, hidden and output:
#   output lanes (also input passthrough lanes):
#     [pts(3), scl(3), rot(4), opa(1), shs(12)] = lanes 0..22
#     [dx(3), dshs(12), dr(4), mu(1), logsig/sig(1)] = lanes 23..43 (heads only)
#   input-only lanes (never read out of the output):
#     time at lane 44, embedding_feats at lanes 48..63; everything else zero.
SLAB_W = 64
IN_W = SLAB_W
OUT_W = SLAB_W
O_PTS, O_SCL, O_ROT, O_OPA, O_SHS = 0, 3, 6, 10, 11
O_DX, O_DSHS, O_DR, O_MU, O_SIG = 23, 26, 38, 42, 43
OUT_USED = 44
C_TIM = 44
C_EMB = 48

TM = 1024                            # rows per grid step (sweep 1024..2048)


# ----------------------------------------------------------------------------
# Pallas kernel: feature_out MLP -> fused heads + pos_lifespan -> lane-aligned
# epilogue.  No lane concatenates; one input DMA and one output store per tile.
# ----------------------------------------------------------------------------
def deform_kernel(x_ref, wf0_ref, bf0_ref, wf1_ref, bf1_ref,
                  wh1_ref, bh1_ref, wh2_ref, bh2_ref, out_ref):
    bf16 = jnp.bfloat16
    x = x_ref[...]                                     # (TM, 64) f32
    xb = x.astype(bf16)
    lane = jax.lax.broadcasted_iota(jnp.int32, (1, SLAB_W), 1)

    # query_time (no_grid): feature_out(cat(pts3, t1)), padded to 64 lanes.
    # wf0 rows 0..2 = pts weights, row 44 = time weight, rest exact zeros.
    h = jnp.dot(xb, wf0_ref[...],
                preferred_element_type=jnp.float32) + bf0_ref[...]
    h = jnp.dot(jax.nn.relu(h).astype(bf16), wf1_ref[...],
                preferred_element_type=jnp.float32) + bf1_ref[...]      # (TM, 64)

    # hidden slab: lanes 0..31 = feature_out, lanes 48..63 = embedding_feats
    # (one lane-masked select instead of a concat; wh1 rows 32..47 are zero).
    hidden = jnp.where(lane < NET_WIDTH, h, x)
    hr = jax.nn.relu(hidden).astype(bf16)

    # five deform heads + pos_lifespan fused into one packed matmul pair;
    # wh2 columns already sit at the output lane offsets.
    h1 = jax.nn.relu(jnp.dot(hr, wh1_ref[...],
                             preferred_element_type=jnp.float32)
                     + bh1_ref[...]).astype(bf16)                       # (TM, 256) bf16
    heads = jnp.dot(h1, wh2_ref[...],
                    preferred_element_type=jnp.float32) + bh2_ref[...]  # (TM, 64) f32

    # passthrough + deltas, all lane-aligned (mask == 1, statically removed)
    out = x + heads

    # life score / sigma epilogue (3 narrow per-row scalars, divide-free)
    tim = x[:, C_TIM:C_TIM + 1]
    mu = heads[:, O_MU:O_MU + 1]
    logsig = heads[:, O_SIG:O_SIG + 1]
    d = tim - mu
    inv_var = jnp.exp(-2.0 * logsig)
    life = jnp.exp(-0.5 * (d * d) * inv_var)
    sig = jnp.exp(logsig)

    out = out * jnp.where(lane == O_OPA, life, 1.0)     # opacity *= life_score
    out = jnp.where(lane == O_SIG, sig, out)            # sigma_t = exp(logsig)
    out_ref[...] = out


# ----------------------------------------------------------------------------
# Wrapper: input/output packing + pallas_call plumbing.
# ----------------------------------------------------------------------------
def deform_network_forward(packed_w, point, scales, rotations, opacity,
                           shs, times_sel, embedding_feats, tm=TM):
    N = point.shape[0]

    # NOTE: poc_fre is intentionally skipped -- the no_grid path consumes only
    # point_emb[:, :3] / scales_emb[:, :3] / rotations_emb[:, :4], which are
    # exactly the raw inputs.
    # TODO(synk): ideally the producer emits this packed 64-lane layout
    # directly (and the consumer reads the packed output); the concatenate /
    # slicing here is an extra HBM pass over the point cloud.
    zeros = lambda w: jnp.zeros((N, w), jnp.float32)
    x = jnp.concatenate(
        [point, scales, rotations, opacity, shs.reshape(N, 12),          # 0..22
         zeros(C_TIM - 23), times_sel[:, :1], zeros(C_EMB - C_TIM - 1),  # 23..47
         embedding_feats], axis=-1).astype(jnp.float32)                   # 48..63

    n_pad = (-N) % tm
    if n_pad:
        x = jnp.pad(x, ((0, n_pad), (0, 0)))
    n_rows = N + n_pad

    weights = [packed_w["wf0"], packed_w["bf0"], packed_w["wf1"], packed_w["bf1"],
               packed_w["wh1"], packed_w["bh1"], packed_w["wh2"], packed_w["bh2"]]

    in_specs = ([pl.BlockSpec((tm, IN_W), lambda i: (i, 0))] +
                [pl.BlockSpec(a.shape, lambda i: (0, 0)) for a in weights])

    out = pl.pallas_call(
        deform_kernel,
        out_shape=jax.ShapeDtypeStruct((n_rows, OUT_W), jnp.float32),
        grid_spec=pltpu.PrefetchScalarGridSpec(
            num_scalar_prefetch=0,
            grid=(n_rows // tm,),
            in_specs=in_specs,
            out_specs=pl.BlockSpec((tm, OUT_W), lambda i: (i, 0))),
        compiler_params=pltpu.CompilerParams(
            dimension_semantics=("parallel",),
            vmem_limit_bytes=32 * 1024 * 1024),
    )(x, *weights)

    out = out[:N]
    pts = out[:, O_PTS:O_PTS + 3]
    scl = out[:, O_SCL:O_SCL + 3]
    rot = out[:, O_ROT:O_ROT + 4]
    opa = out[:, O_OPA:O_OPA + 1]
    shs_o = out[:, O_SHS:O_SHS + 12].reshape(N, 4, 3)
    dx = out[:, O_DX:O_DX + 3]
    dshs = out[:, O_DSHS:O_DSHS + 12].reshape(N, 4, 3)
    dr = out[:, O_DR:O_DR + 4]
    mu_t = out[:, O_MU:O_MU + 1]
    sigma_t = out[:, O_SIG:O_SIG + 1]
    feat = None   # cfg.model.deformable.feat_head = False
    return (pts, scl, rot, opa, shs_o, dx, feat, dshs, dr, mu_t, sigma_t)


# ----------------------------------------------------------------------------
# Parameter init (module shapes, synthetic) + packing for the kernel.
# ----------------------------------------------------------------------------
def init_params(key):
    keys = iter(jax.random.split(key, 64))

    def xavier(shape):
        fan_in, fan_out = shape
        a = float(np.sqrt(6.0 / (fan_in + fan_out)))
        return jax.random.uniform(next(keys), shape, jnp.float32, -a, a)

    def bias(dim):
        return jax.random.uniform(next(keys), (1, dim), jnp.float32, -0.1, 0.1)

    p = {}
    p["pos_poc"] = jnp.asarray([2.0 ** i for i in range(POSBASE_PE)], jnp.float32)
    p["rot_scale_poc"] = jnp.asarray([2.0 ** i for i in range(SCALE_ROT_PE)], jnp.float32)

    # feature_out: Linear(4, W), ReLU, Linear(W, W)   (D = 2)
    p["wf0"] = xavier((4, NET_WIDTH)); p["bf0"] = bias(NET_WIDTH)
    p["wf1"] = xavier((NET_WIDTH, NET_WIDTH)); p["bf1"] = bias(NET_WIDTH)

    # five deform heads: ReLU, Linear(dW,dW), ReLU, Linear(dW,out)
    for hi, oh in enumerate(HEAD_OUT):
        p[f"w1_{hi}"] = xavier((DEFORM_W, DEFORM_W)); p[f"b1_{hi}"] = bias(DEFORM_W)
        p[f"w2_{hi}"] = xavier((DEFORM_W, oh));       p[f"b2_{hi}"] = bias(oh)

    # pos_lifespan: ReLU, Linear(E, E), ReLU, Linear(E, 2)
    p["wl1"] = xavier((EMB_FEATS, EMB_FEATS)); p["bl1"] = bias(EMB_FEATS)
    p["wl2"] = xavier((EMB_FEATS, 2)); p["bl2"] = bias(2)
    return p


def pack_params(params):
    """Pack all MLPs into the 64-lane slab layout used by the kernel.

    Exact: every padded / duplicated weight entry is either a zero (exact-zero
    accumulation) or a verbatim copy of an original column written to an extra
    output lane.
    """
    dW, W, E = DEFORM_W, NET_WIDTH, EMB_FEATS

    # feature_out padded to the 64-lane slab (pts rows 0..2, time row C_TIM)
    wf0 = np.zeros((SLAB_W, SLAB_W), np.float32)
    wf0[0:3, 0:W] = np.asarray(params["wf0"])[0:3, :]
    wf0[C_TIM, 0:W] = np.asarray(params["wf0"])[3, :]
    bf0 = np.zeros((1, SLAB_W), np.float32); bf0[:, 0:W] = np.asarray(params["bf0"])
    wf1 = np.zeros((SLAB_W, SLAB_W), np.float32)
    wf1[0:W, 0:W] = np.asarray(params["wf1"])
    bf1 = np.zeros((1, SLAB_W), np.float32); bf1[:, 0:W] = np.asarray(params["bf1"])

    # fused heads + pos_lifespan
    #   layer 1: rows follow the 64-lane hidden slab (h at 0..31, emb at 48..63)
    #   layer 2: columns placed directly at the packed output lane offsets
    wh1 = np.zeros((SLAB_W, HEAD_K), np.float32)
    bh1 = np.zeros((1, HEAD_K), np.float32)
    wh2 = np.zeros((HEAD_K, OUT_W), np.float32)
    bh2 = np.zeros((1, OUT_W), np.float32)

    head_dst = [
        [(O_PTS, 3), (O_DX, 3)],      # pos_deform      (dx)
        [(O_SCL, 3)],                 # scales_deform   (ds)
        [(O_ROT, 4), (O_DR, 4)],      # rotations_deform(dr)
        [(O_OPA, 1)],                 # opacity_deform  (do)
        [(O_SHS, 12), (O_DSHS, 12)],  # shs_deform      (dshs)
    ]
    for hi, dsts in enumerate(head_dst):
        c0, c1 = hi * dW, (hi + 1) * dW
        w1 = np.asarray(params[f"w1_{hi}"]); b1 = np.asarray(params[f"b1_{hi}"])
        w2 = np.asarray(params[f"w2_{hi}"]); b2 = np.asarray(params[f"b2_{hi}"])
        wh1[0:W, c0:c1] = w1[0:W, :]
        wh1[C_EMB:C_EMB + E, c0:c1] = w1[W:dW, :]
        bh1[:, c0:c1] = b1
        for off, width in dsts:
            wh2[c0:c1, off:off + width] = w2
            bh2[:, off:off + width] = b2

    # fused pos_lifespan: h1 columns 240:256, output lanes O_MU / O_SIG
    wh1[C_EMB:C_EMB + E, 5 * dW:] = np.asarray(params["wl1"])
    bh1[:, 5 * dW:] = np.asarray(params["bl1"])
    wl2 = np.asarray(params["wl2"]); bl2 = np.asarray(params["bl2"])
    wh2[5 * dW:, O_MU] = wl2[:, 0]
    wh2[5 * dW:, O_SIG] = wl2[:, 1]
    bh2[0, O_MU] = bl2[0, 0]
    bh2[0, O_SIG] = bl2[0, 1]

    return dict(
        wf0=jnp.asarray(wf0, jnp.bfloat16), bf0=jnp.asarray(bf0),
        wf1=jnp.asarray(wf1, jnp.bfloat16), bf1=jnp.asarray(bf1),
        wh1=jnp.asarray(wh1, jnp.bfloat16), bh1=jnp.asarray(bh1),
        wh2=jnp.asarray(wh2, jnp.bfloat16), bh2=jnp.asarray(bh2),
    )


# ----------------------------------------------------------------------------
# Plain-JAX reference (mirrors the PyTorch module; matmul operands in bf16 to
# match the kernel's MXU precision, f32 accumulate).
# ----------------------------------------------------------------------------
def poc_fre(x, poc):
    emb = (x[..., None] * poc).reshape(x.shape[:-1] + (-1,))
    return jnp.concatenate([x, jnp.sin(emb), jnp.cos(emb)], axis=-1)


def _mm(a, w):
    return jnp.dot(a.astype(jnp.bfloat16), w.astype(jnp.bfloat16),
                   preferred_element_type=jnp.float32)


def ref_forward(params, point, scales, rotations, opacity, shs, times_sel, emb):
    N = point.shape[0]
    point_emb = poc_fre(point, params["pos_poc"])
    scales_emb = poc_fre(scales, params["rot_scale_poc"])
    rotations_emb = poc_fre(rotations, params["rot_scale_poc"])

    x = jnp.concatenate([point_emb[:, :3], times_sel[:, :1]], -1)
    h = _mm(x, params["wf0"]) + params["bf0"]
    h = _mm(jax.nn.relu(h), params["wf1"]) + params["bf1"]
    hidden = jnp.concatenate([h, emb], axis=1)
    mask = jnp.ones_like(opacity[:, :1])

    hr = jax.nn.relu(hidden)
    head_outs = []
    for hi, oh in enumerate(HEAD_OUT):
        a = jax.nn.relu(_mm(hr, params[f"w1_{hi}"]) + params[f"b1_{hi}"])
        head_outs.append(_mm(a, params[f"w2_{hi}"]) + params[f"b2_{hi}"])
    dx, ds, dr, do, dshs = head_outs

    er = jax.nn.relu(emb)
    l1 = jax.nn.relu(_mm(er, params["wl1"]) + params["bl1"])
    l2 = _mm(l1, params["wl2"]) + params["bl2"]
    mu_t = l2[:, 0:1]
    sigma_t = jnp.exp(l2[:, 1:2])
    life = jnp.exp(-(times_sel - mu_t) ** 2 / (2.0 * sigma_t ** 2))

    pts = point_emb[:, :3] * mask + dx
    scl = scales_emb[:, :3] * mask + ds
    rot = rotations_emb[:, :4] + dr
    opa = (opacity[:, :1] * mask + do) * life
    shs_o = shs * mask[..., None] + dshs.reshape(N, 4, 3)
    return (pts, scl, rot, opa, shs_o, dx, None, dshs.reshape(N, 4, 3),
            dr, mu_t, sigma_t)


if __name__ == "__main__":
    key = jax.random.PRNGKey(0)
    pkey, *dkeys = jax.random.split(key, 9)
    params = init_params(pkey)
    packed_w = pack_params(params)

    # Small point cloud; with TM=1024 this gives a 4-step "parallel" grid (both
    # v7x TensorCores stay busy).  Non-multiple-of-TM N is handled by padding.
    N = 4096
    point = jax.random.normal(dkeys[0], (N, 3), jnp.float32)
    scales = jax.random.normal(dkeys[1], (N, 3), jnp.float32)
    rotations = jax.random.normal(dkeys[2], (N, 4), jnp.float32)
    opacity = jax.random.uniform(dkeys[3], (N, 1), jnp.float32)
    shs = jax.random.normal(dkeys[4], (N, 4, 3), jnp.float32)
    times_sel = jax.random.uniform(dkeys[5], (N, 1), jnp.float32)
    embedding_feats = jax.random.normal(dkeys[6], (N, EMB_FEATS), jnp.float32)

    outs = deform_network_forward(packed_w, point, scales, rotations, opacity,
                                  shs, times_sel, embedding_feats)
    jax.block_until_ready(outs)

    refs = ref_forward(params, point, scales, rotations, opacity,
                       shs, times_sel, embedding_feats)
    names = ["pts", "scales", "rotations", "opacity", "shs", "dx", "feat",
             "dshs", "dr", "mu_t", "sigma_t"]
    for name, o, r in zip(names, outs, refs):
        if o is None and r is None:
            continue
        np.testing.assert_allclose(np.asarray(o), np.asarray(r),
                                   atol=1e-2, rtol=1e-2, err_msg=name)

    print("KERNEL_OK")
</pallas_src>

<mosaic_0001>
module attributes {stable_mosaic.version = 11 : i64} {
  func.func @deform_kernel(%arg0: i32, %arg1: memref<1024x64xf32, #tpu.memory_space<vmem>>, %arg2: memref<64x64xbf16, #tpu.memory_space<vmem>>, %arg3: memref<1x64xf32, #tpu.memory_space<vmem>>, %arg4: memref<64x64xbf16, #tpu.memory_space<vmem>>, %arg5: memref<1x64xf32, #tpu.memory_space<vmem>>, %arg6: memref<64x256xbf16, #tpu.memory_space<vmem>>, %arg7: memref<1x256xf32, #tpu.memory_space<vmem>>, %arg8: memref<256x64xbf16, #tpu.memory_space<vmem>>, %arg9: memref<1x64xf32, #tpu.memory_space<vmem>>, %arg10: memref<1024x64xf32, #tpu.memory_space<vmem>>) attributes {dimension_semantics = [#tpu.dimension_semantics<parallel>], iteration_bounds = array<i64: 4>, scalar_prefetch = 0 : i64, scratch_operands = 0 : i64, tpu.core_type = #tpu.core_type<tc>, window_params = [{transform_indices = @transform_0, window_bounds = array<i64: 1024, 64>}, {pipeline_mode = #tpu.pipeline_mode<synchronous>, transform_indices = @transform_1, window_bounds = array<i64: 64, 64>}, {pipeline_mode = #tpu.pipeline_mode<synchronous>, transform_indices = @transform_2, window_bounds = array<i64: 1, 64>}, {pipeline_mode = #tpu.pipeline_mode<synchronous>, transform_indices = @transform_3, window_bounds = array<i64: 64, 64>}, {pipeline_mode = #tpu.pipeline_mode<synchronous>, transform_indices = @transform_4, window_bounds = array<i64: 1, 64>}, {pipeline_mode = #tpu.pipeline_mode<synchronous>, transform_indices = @transform_5, window_bounds = array<i64: 64, 256>}, {pipeline_mode = #tpu.pipeline_mode<synchronous>, transform_indices = @transform_6, window_bounds = array<i64: 1, 256>}, {pipeline_mode = #tpu.pipeline_mode<synchronous>, transform_indices = @transform_7, window_bounds = array<i64: 256, 64>}, {pipeline_mode = #tpu.pipeline_mode<synchronous>, transform_indices = @transform_8, window_bounds = array<i64: 1, 64>}, {transform_indices = @transform_9, window_bounds = array<i64: 1024, 64>}]} {
    %c0 = arith.constant 0 : index
    %c0_0 = arith.constant 0 : index
    %0 = vector.load %arg1[%c0, %c0_0] : memref<1024x64xf32, #tpu.memory_space<vmem>>, vector<1024x64xf32>
    %1 = arith.truncf %0 : vector<1024x64xf32> to vector<1024x64xbf16>
    %2 = tpu.iota {dimensions = array<i32: 1>} : vector<1x64xi32>
    %c0_1 = arith.constant 0 : index
    %c0_2 = arith.constant 0 : index
    %3 = vector.load %arg2[%c0_1, %c0_2] : memref<64x64xbf16, #tpu.memory_space<vmem>>, vector<64x64xbf16>
    %cst = arith.constant dense<0.000000e+00> : vector<1024x64xf32>
    %4 = tpu.matmul %1, %3, %cst {dimension_numbers = #tpu.dot_dimension_numbers<[1], [0], [0], [1], [0, 0, 1, 1], [], []>} : vector<1024x64xbf16>, vector<64x64xbf16>, vector<1024x64xf32> -> vector<1024x64xf32>
    %c0_3 = arith.constant 0 : index
    %c0_4 = arith.constant 0 : index
    %5 = vector.load %arg3[%c0_3, %c0_4] : memref<1x64xf32, #tpu.memory_space<vmem>>, vector<1x64xf32>
    %6 = vector.broadcast %5 : vector<1x64xf32> to vector<1024x64xf32>
    %7 = arith.addf %4, %6 : vector<1024x64xf32>
    %cst_5 = arith.constant 0.000000e+00 : f32
    %8 = vector.broadcast %cst_5 : f32 to vector<1024x64xf32>
    %9 = arith.maximumf %7, %8 : vector<1024x64xf32>
    %10 = arith.truncf %9 : vector<1024x64xf32> to vector<1024x64xbf16>
    %c0_6 = arith.constant 0 : index
    %c0_7 = arith.constant 0 : index
    %11 = vector.load %arg4[%c0_6, %c0_7] : memref<64x64xbf16, #tpu.memory_space<vmem>>, vector<64x64xbf16>
    %cst_8 = arith.constant dense<0.000000e+00> : vector<1024x64xf32>
    %12 = tpu.matmul %10, %11, %cst_8 {dimension_numbers = #tpu.dot_dimension_numbers<[1], [0], [0], [1], [0, 0, 1, 1], [], []>} : vector<1024x64xbf16>, vector<64x64xbf16>, vector<1024x64xf32> -> vector<1024x64xf32>
    %c0_9 = arith.constant 0 : index
    %c0_10 = arith.constant 0 : index
    %13 = vector.load %arg5[%c0_9, %c0_10] : memref<1x64xf32, #tpu.memory_space<vmem>>, vector<1x64xf32>
    %14 = vector.broadcast %13 : vector<1x64xf32> to vector<1024x64xf32>
    %15 = arith.addf %12, %14 : vector<1024x64xf32>
    %c32_i32 = arith.constant 32 : i32
    %16 = vector.broadcast %c32_i32 : i32 to vector<1x64xi32>
    %17 = arith.cmpi slt, %2, %16 : vector<1x64xi32>
    %18 = vector.shape_cast %17 : vector<1x64xi1> to vector<1x64xi1>
    %19 = vector.broadcast %18 : vector<1x64xi1> to vector<1024x64xi1>
    %20 = arith.select %19, %15, %0 : vector<1024x64xi1>, vector<1024x64xf32>
    %cst_11 = arith.constant 0.000000e+00 : f32
    %21 = vector.broadcast %cst_11 : f32 to vector<1024x64xf32>
    %22 = arith.maximumf %20, %21 : vector<1024x64xf32>
    %23 = arith.truncf %22 : vector<1024x64xf32> to vector<1024x64xbf16>
    %c0_12 = arith.constant 0 : index
    %c0_13 = arith.constant 0 : index
    %24 = vector.load %arg6[%c0_12, %c0_13] : memref<64x256xbf16, #tpu.memory_space<vmem>>, vector<64x256xbf16>
    %cst_14 = arith.constant dense<0.000000e+00> : vector<1024x256xf32>
    %25 = tpu.matmul %23, %24, %cst_14 {dimension_numbers = #tpu.dot_dimension_numbers<[1], [0], [0], [1], [0, 0, 1, 1], [], []>} : vector<1024x64xbf16>, vector<64x256xbf16>, vector<1024x256xf32> -> vector<1024x256xf32>
    %c0_15 = arith.constant 0 : index
    %c0_16 = arith.constant 0 : index
    %26 = vector.load %arg7[%c0_15, %c0_16] : memref<1x256xf32, #tpu.memory_space<vmem>>, vector<1x256xf32>
    %27 = vector.broadcast %26 : vector<1x256xf32> to vector<1024x256xf32>
    %28 = arith.addf %25, %27 : vector<1024x256xf32>
    %cst_17 = arith.constant 0.000000e+00 : f32
    %29 = vector.broadcast %cst_17 : f32 to vector<1024x256xf32>
    %30 = arith.maximumf %28, %29 : vector<1024x256xf32>
    %31 = arith.truncf %30 : vector<1024x256xf32> to vector<1024x256xbf16>
    %c0_18 = arith.constant 0 : index
    %c0_19 = arith.constant 0 : index
    %32 = vector.load %arg8[%c0_18, %c0_19] : memref<256x64xbf16, #tpu.memory_space<vmem>>, vector<256x64xbf16>
    %cst_20 = arith.constant dense<0.000000e+00> : vector<1024x64xf32>
    %33 = tpu.matmul %31, %32, %cst_20 {dimension_numbers = #tpu.dot_dimension_numbers<[1], [0], [0], [1], [0, 0, 1, 1], [], []>} : vector<1024x256xbf16>, vector<256x64xbf16>, vector<1024x64xf32> -> vector<1024x64xf32>
    %c0_21 = arith.constant 0 : index
    %c0_22 = arith.constant 0 : index
    %34 = vector.load %arg9[%c0_21, %c0_22] : memref<1x64xf32, #tpu.memory_space<vmem>>, vector<1x64xf32>
    %35 = vector.broadcast %34 : vector<1x64xf32> to vector<1024x64xf32>
    %36 = arith.addf %33, %35 : vector<1024x64xf32>
    %37 = arith.addf %0, %36 : vector<1024x64xf32>
    %38 = vector.extract_strided_slice %0 {offsets = [0, 44], sizes = [1024, 1], strides = [1, 1]} : vector<1024x64xf32> to vector<1024x1xf32>
    %39 = vector.extract_strided_slice %36 {offsets = [0, 42], sizes = [1024, 1], strides = [1, 1]} : vector<1024x64xf32> to vector<1024x1xf32>
    %40 = vector.extract_strided_slice %36 {offsets = [0, 43], sizes = [1024, 1], strides = [1, 1]} : vector<1024x64xf32> to vector<1024x1xf32>
    %41 = arith.subf %38, %39 : vector<1024x1xf32>
    %cst_23 = arith.constant -2.000000e+00 : f32
    %42 = vector.broadcast %cst_23 : f32 to vector<1024x1xf32>
    %43 = arith.mulf %42, %40 : vector<1024x1xf32>
    %44 = math.exp %43 : vector<1024x1xf32>
    %45 = arith.mulf %41, %41 : vector<1024x1xf32>
    %cst_24 = arith.constant -5.000000e-01 : f32
    %46 = vector.broadcast %cst_24 : f32 to vector<1024x1xf32>
    %47 = arith.mulf %46, %45 : vector<1024x1xf32>
    %48 = arith.mulf %47, %44 : vector<1024x1xf32>
    %49 = math.exp %48 : vector<1024x1xf32>
    %50 = math.exp %40 : vector<1024x1xf32>
    %c10_i32 = arith.constant 10 : i32
    %51 = vector.broadcast %c10_i32 : i32 to vector<1x64xi32>
    %52 = arith.cmpi eq, %2, %51 : vector<1x64xi32>
    %cst_25 = arith.constant 1.000000e+00 : f32
    %53 = vector.shape_cast %52 : vector<1x64xi1> to vector<1x64xi1>
    %54 = vector.broadcast %53 : vector<1x64xi1> to vector<1024x64xi1>
    %55 = vector.shape_cast %49 : vector<1024x1xf32> to vector<1024x1xf32>
    %56 = vector.broadcast %55 : vector<1024x1xf32> to vector<1024x64xf32>
    %57 = vector.broadcast %cst_25 : f32 to vector<1024x64xf32>
    %58 = arith.select %54, %56, %57 : vector<1024x64xi1>, vector<1024x64xf32>
    %59 = arith.mulf %37, %58 : vector<1024x64xf32>
    %c43_i32 = arith.constant 43 : i32
    %60 = vector.broadcast %c43_i32 : i32 to vector<1x64xi32>
    %61 = arith.cmpi eq, %2, %60 : vector<1x64xi32>
    %62 = vector.shape_cast %61 : vector<1x64xi1> to vector<1x64xi1>
    %63 = vector.broadcast %62 : vector<1x64xi1> to vector<1024x64xi1>
    %64 = vector.shape_cast %50 : vector<1024x1xf32> to vector<1024x1xf32>
    %65 = vector.broadcast %64 : vector<1024x1xf32> to vector<1024x64xf32>
    %66 = arith.select %63, %65, %59 : vector<1024x64xi1>, vector<1024x64xf32>
    %c0_26 = arith.constant 0 : index
    %c0_27 = arith.constant 0 : index
    %67 = vector.load %arg10[%c0_26, %c0_27] : memref<1024x64xf32, #tpu.memory_space<vmem>>, vector<1024x64xf32>
    tpu.vector_store %arg10[%c0_26, %c0_27], %66 {strides = array<i32>} : memref<1024x64xf32, #tpu.memory_space<vmem>>, vector<1024x64xf32>,
    return
  }
  func.func @transform_0(%arg0: i32) -> (i32, i32) {
    %c0_i32 = arith.constant 0 : i32
    %c0_i32_0 = arith.constant 0 : i32
    return %arg0, %c0_i32 : i32, i32
  }
  func.func @transform_1(%arg0: i32) -> (i32, i32) {
    %c0_i32 = arith.constant 0 : i32
    %c0_i32_0 = arith.constant 0 : i32
    %c0_i32_1 = arith.constant 0 : i32
    return %c0_i32, %c0_i32_0 : i32, i32
  }
  func.func @transform_2(%arg0: i32) -> (i32, i32) {
    %c0_i32 = arith.constant 0 : i32
    %c0_i32_0 = arith.constant 0 : i32
    %c0_i32_1 = arith.constant 0 : i32
    return %c0_i32, %c0_i32_0 : i32, i32
  }
  func.func @transform_3(%arg0: i32) -> (i32, i32) {
    %c0_i32 = arith.constant 0 : i32
    %c0_i32_0 = arith.constant 0 : i32
    %c0_i32_1 = arith.constant 0 : i32
    return %c0_i32, %c0_i32_0 : i32, i32
  }
  func.func @transform_4(%arg0: i32) -> (i32, i32) {
    %c0_i32 = arith.constant 0 : i32
    %c0_i32_0 = arith.constant 0 : i32
    %c0_i32_1 = arith.constant 0 : i32
    return %c0_i32, %c0_i32_0 : i32, i32
  }
  func.func @transform_5(%arg0: i32) -> (i32, i32) {
    %c0_i32 = arith.constant 0 : i32
    %c0_i32_0 = arith.constant 0 : i32
    %c0_i32_1 = arith.constant 0 : i32
    return %c0_i32, %c0_i32_0 : i32, i32
  }
  func.func @transform_6(%arg0: i32) -> (i32, i32) {
    %c0_i32 = arith.constant 0 : i32
    %c0_i32_0 = arith.constant 0 : i32
    %c0_i32_1 = arith.constant 0 : i32
    return %c0_i32, %c0_i32_0 : i32, i32
  }
  func.func @transform_7(%arg0: i32) -> (i32, i32) {
    %c0_i32 = arith.constant 0 : i32
    %c0_i32_0 = arith.constant 0 : i32
    %c0_i32_1 = arith.constant 0 : i32
    return %c0_i32, %c0_i32_0 : i32, i32
  }
  func.func @transform_8(%arg0: i32) -> (i32, i32) {
    %c0_i32 = arith.constant 0 : i32
    %c0_i32_0 = arith.constant 0 : i32
    %c0_i32_1 = arith.constant 0 : i32
    return %c0_i32, %c0_i32_0 : i32, i32
  }
  func.func @transform_9(%arg0: i32) -> (i32, i32) {
    %c0_i32 = arith.constant 0 : i32
    %c0_i32_0 = arith.constant 0 : i32
    return %arg0, %c0_i32 : i32, i32
  }
}

</mosaic_0001>

<llo_original>
// kernel: tpu_custom_call.1
$region0: #{tpu_custom_call.1}
  #allocation0 [shape = 'u32[]', space=smem, size = 0x4, offset = 0x4, fixed_abs, tag = 'smem constant byte address 0x4 - core index']
  #allocation1 [shape = 'u32[144,128]{1,0:T(1,128)}', space=vmem, size = 0x12000, scoped, tag = 'internal scratch']
  %s0 = inlined_call_operand.vmem [shape: f32[4096,64], index: 0, kind: input, shape index: {}]
  %s1 = inlined_call_operand.vmem [shape: bf16[64,64], index: 1, kind: input, shape index: {}]
  %s2 = inlined_call_operand.vmem [shape: f32[1,64], index: 2, kind: input, shape index: {}]
  %s3 = inlined_call_operand.vmem [shape: bf16[64,64], index: 3, kind: input, shape index: {}]
  %s4 = inlined_call_operand.vmem [shape: f32[1,64], index: 4, kind: input, shape index: {}]
  %s5 = inlined_call_operand.vmem [shape: bf16[64,256], index: 5, kind: input, shape index: {}]
  %s6 = inlined_call_operand.vmem [shape: f32[1,256], index: 6, kind: input, shape index: {}]
  %s7 = inlined_call_operand.vmem [shape: bf16[256,64], index: 7, kind: input, shape index: {}]
  %s8 = inlined_call_operand.vmem [shape: f32[1,64], index: 8, kind: input, shape index: {}]
  %s9 = inlined_call_operand.vmem [shape: f32[4096,64], index: 9, kind: output, shape index: {}]
  %s10 = sld [smem:[#allocation0]]
  $region69: #{tpu_custom_call.1} parent=0
    _
  %s12 = ssub.s32 1, %s10
  %s13 = scalar_select 0, %s12, %s10
  loop: start=0, step=1, limit=6
  $region2: #{tpu_custom_call.1} parent=0 // loop_pre_header
    _
  $region3: #{tpu_custom_call.1} parent=0 // loop_header
    %s15 = sphi 0, %s19
    %p16 = scmp.ge.s32.totalorder %s15, 6
    %s25 = sphi 0, %s27
    %s28 = sphi 0, %s25
    %s29 = sphi 0, %s28
    %s45 = sphi 0, %s29
    %s49 = sphi 0, %s49
    %s51 = sphi 0, %s49
    %s52 = sphi 0, %s51
    %s66 = sphi 0, %s52
    %s70 = sphi 0, %s70
    %s72 = sphi 0, %s70
    %s73 = sphi 0, %s72
    %s87 = sphi 0, %s73
    %s91 = sphi 0, %s91
    %s93 = sphi 0, %s91
    %s94 = sphi 0, %s93
    %s108 = sphi 0, %s94
    %s112 = sphi 0, %s112
    %s114 = sphi 0, %s112
    %s115 = sphi 0, %s114
    %s129 = sphi 0, %s115
    %s133 = sphi 0, %s133
    %s135 = sphi 0, %s133
    %s136 = sphi 0, %s135
    %s150 = sphi 0, %s136
    %s154 = sphi 0, %s154
    %s156 = sphi 0, %s154
    %s157 = sphi 0, %s156
    %s171 = sphi 0, %s157
    %s175 = sphi 0, %s175
    %s177 = sphi 0, %s175
    %s178 = sphi 0, %s177
    %s192 = sphi 0, %s178
    %s196 = sphi 0, %s196
    %s198 = sphi 0, %s196
    %s199 = sphi 0, %s198
    %s213 = sphi 0, %s199
    %s219 = sphi 0, %s221
    %s222 = sphi 0, %s219
    %s223 = sphi 0, %s222
    %s239 = sphi 0, %s223
  $region4: #{tpu_custom_call.1} parent=0 // loop_header_branch
    %18 = sbr.rel (%p16) target = $region8
  $region5: #{tpu_custom_call.1} parent=0 // loop_body
    %s20 = ssub.s32 %s15, 1
    %s21 = ssub.s32 %s15, 2
    %s22 = sadd.s32 %s15, 1
    %s23 = ssub.s32 %s15, %s22
    %p24 = scmp.eq.s32.totalorder %s23, 0
    %s26 = sadd.s32 %s25, 1
    %s27 = scalar_select %p24, %s25, %s26
    %p30 = pneg %p24
    %p31 = scmp.eq.s32.totalorder %s15, 3
    %p32 = por %p30, %p31
    %p33 = scmp.ne.s32.totalorder %s25, %s28
    %p34 = scmp.eq.s32.totalorder %s15, 0
    %p35 = por %p33, %p34
    %p36 = scmp.ne.s32.totalorder %s25, %s28
    %p37 = scmp.eq.s32.totalorder %s20, 3
    %p38 = por %p36, %p37
    %p39 = scmp.ne.s32.totalorder %s28, %s29
    %p40 = scmp.eq.s32.totalorder %s20, 0
    %p41 = por %p39, %p40
    %p42 = scmp.ne.s32.totalorder %s28, %s29
    %p43 = scmp.eq.s32.totalorder %s21, 3
    %p44 = por %p42, %p43
    %p46 = scmp.ne.s32.totalorder %s29, %s45
    %p47 = scmp.eq.s32.totalorder %s21, 0
    %p48 = por %p46, %p47
    %s50 = sadd.s32 %s49, 1
    %p53 = scmp.eq.s32.totalorder %s15, 3
    %p54 = scmp.ne.s32.totalorder %s49, %s51
    %p55 = scmp.eq.s32.totalorder %s15, 0
    %p56 = por %p54, %p55
    %p57 = scmp.ne.s32.totalorder %s49, %s51
    %p58 = scmp.eq.s32.totalorder %s20, 3
    %p59 = por %p57, %p58
    %p60 = scmp.ne.s32.totalorder %s51, %s52
    %p61 = scmp.eq.s32.totalorder %s20, 0
    %p62 = por %p60, %p61
    %p63 = scmp.ne.s32.totalorder %s51, %s52
    %p64 = scmp.eq.s32.totalorder %s21, 3
    %p65 = por %p63, %p64
    %p67 = scmp.ne.s32.totalorder %s52, %s66
    %p68 = scmp.eq.s32.totalorder %s21, 0
    %p69 = por %p67, %p68
    %s71 = sadd.s32 %s70, 1
    %p74 = scmp.eq.s32.totalorder %s15, 3
    %p75 = scmp.ne.s32.totalorder %s70, %s72
    %p76 = scmp.eq.s32.totalorder %s15, 0
    %p77 = por %p75, %p76
    %p78 = scmp.ne.s32.totalorder %s70, %s72
    %p79 = scmp.eq.s32.totalorder %s20, 3
    %p80 = por %p78, %p79
    %p81 = scmp.ne.s32.totalorder %s72, %s73
    %p82 = scmp.eq.s32.totalorder %s20, 0
    %p83 = por %p81, %p82
    %p84 = scmp.ne.s32.totalorder %s72, %s73
    %p85 = scmp.eq.s32.totalorder %s21, 3
    %p86 = por %p84, %p85
    %p88 = scmp.ne.s32.totalorder %s73, %s87
    %p89 = scmp.eq.s32.totalorder %s21, 0
    %p90 = por %p88, %p89
    %s92 = sadd.s32 %s91, 1
    %p95 = scmp.eq.s32.totalorder %s15, 3
    %p96 = scmp.ne.s32.totalorder %s91, %s93
    %p97 = scmp.eq.s32.totalorder %s15, 0
    %p98 = por %p96, %p97
    %p99 = scmp.ne.s32.totalorder %s91, %s93
    %p100 = scmp.eq.s32.totalorder %s20, 3
    %p101 = por %p99, %p100
    %p102 = scmp.ne.s32.totalorder %s93, %s94
    %p103 = scmp.eq.s32.totalorder %s20, 0
    %p104 = por %p102, %p103
    %p105 = scmp.ne.s32.totalorder %s93, %s94
    %p106 = scmp.eq.s32.totalorder %s21, 3
    %p107 = por %p105, %p106
    %p109 = scmp.ne.s32.totalorder %s94, %s108
    %p110 = scmp.eq.s32.totalorder %s21, 0
    %p111 = por %p109, %p110
    %s113 = sadd.s32 %s112, 1
    %p116 = scmp.eq.s32.totalorder %s15, 3
    %p117 = scmp.ne.s32.totalorder %s112, %s114
    %p118 = scmp.eq.s32.totalorder %s15, 0
    %p119 = por %p117, %p118
    %p120 = scmp.ne.s32.totalorder %s112, %s114
    %p121 = scmp.eq.s32.totalorder %s20, 3
    %p122 = por %p120, %p121
    %p123 = scmp.ne.s32.totalorder %s114, %s115
    %p124 = scmp.eq.s32.totalorder %s20, 0
    %p125 = por %p123, %p124
    %p126 = scmp.ne.s32.totalorder %s114, %s115
    %p127 = scmp.eq.s32.totalorder %s21, 3
    %p128 = por %p126, %p127
    %p130 = scmp.ne.s32.totalorder %s115, %s129
    %p131 = scmp.eq.s32.totalorder %s21, 0
    %p132 = por %p130, %p131
    %s134 = sadd.s32 %s133, 1
    %p137 = scmp.eq.s32.totalorder %s15, 3
    %p138 = scmp.ne.s32.totalorder %s133, %s135
    %p139 = scmp.eq.s32.totalorder %s15, 0
    %p140 = por %p138, %p139
    %p141 = scmp.ne.s32.totalorder %s133, %s135
    %p142 = scmp.eq.s32.totalorder %s20, 3
    %p143 = por %p141, %p142
    %p144 = scmp.ne.s32.totalorder %s135, %s136
    %p145 = scmp.eq.s32.totalorder %s20, 0
    %p146 = por %p144, %p145
    %p147 = scmp.ne.s32.totalorder %s135, %s136
    %p148 = scmp.eq.s32.totalorder %s21, 3
    %p149 = por %p147, %p148
    %p151 = scmp.ne.s32.totalorder %s136, %s150
    %p152 = scmp.eq.s32.totalorder %s21, 0
    %p153 = por %p151, %p152
    %s155 = sadd.s32 %s154, 1
    %p158 = scmp.eq.s32.totalorder %s15, 3
    %p159 = scmp.ne.s32.totalorder %s154, %s156
    %p160 = scmp.eq.s32.totalorder %s15, 0
    %p161 = por %p159, %p160
    %p162 = scmp.ne.s32.totalorder %s154, %s156
    %p163 = scmp.eq.s32.totalorder %s20, 3
    %p164 = por %p162, %p163
    %p165 = scmp.ne.s32.totalorder %s156, %s157
    %p166 = scmp.eq.s32.totalorder %s20, 0
    %p167 = por %p165, %p166
    %p168 = scmp.ne.s32.totalorder %s156, %s157
    %p169 = scmp.eq.s32.totalorder %s21, 3
    %p170 = por %p168, %p169
    %p172 = scmp.ne.s32.totalorder %s157, %s171
    %p173 = scmp.eq.s32.totalorder %s21, 0
    %p174 = por %p172, %p173
    %s176 = sadd.s32 %s175, 1
    %p179 = scmp.eq.s32.totalorder %s15, 3
    %p180 = scmp.ne.s32.totalorder %s175, %s177
    %p181 = scmp.eq.s32.totalorder %s15, 0
    %p182 = por %p180, %p181
    %p183 = scmp.ne.s32.totalorder %s175, %s177
    %p184 = scmp.eq.s32.totalorder %s20, 3
    %p185 = por %p183, %p184
    %p186 = scmp.ne.s32.totalorder %s177, %s178
    %p187 = scmp.eq.s32.totalorder %s20, 0
    %p188 = por %p186, %p187
    %p189 = scmp.ne.s32.totalorder %s177, %s178
    %p190 = scmp.eq.s32.totalorder %s21, 3
    %p191 = por %p189, %p190
    %p193 = scmp.ne.s32.totalorder %s178, %s192
    %p194 = scmp.eq.s32.totalorder %s21, 0
    %p195 = por %p193, %p194
    %s197 = sadd.s32 %s196, 1
    %p200 = scmp.eq.s32.totalorder %s15, 3
    %p201 = scmp.ne.s32.totalorder %s196, %s198
    %p202 = scmp.eq.s32.totalorder %s15, 0
    %p203 = por %p201, %p202
    %p204 = scmp.ne.s32.totalorder %s196, %s198
    %p205 = scmp.eq.s32.totalorder %s20, 3
    %p206 = por %p204, %p205
    %p207 = scmp.ne.s32.totalorder %s198, %s199
    %p208 = scmp.eq.s32.totalorder %s20, 0
    %p209 = por %p207, %p208
    %p210 = scmp.ne.s32.totalorder %s198, %s199
    %p211 = scmp.eq.s32.totalorder %s21, 3
    %p212 = por %p210, %p211
    %p214 = scmp.ne.s32.totalorder %s199, %s213
    %p215 = scmp.eq.s32.totalorder %s21, 0
    %p216 = por %p214, %p215
    %s217 = ssub.s32 %s15, %s22
    %p218 = scmp.eq.s32.totalorder %s217, 0
    %s220 = sadd.s32 %s219, 1
    %s221 = scalar_select %p218, %s219, %s220
    %p224 = pneg %p218
    %p225 = scmp.eq.s32.totalorder %s15, 3
    %p226 = por %p224, %p225
    %p227 = scmp.ne.s32.totalorder %s219, %s222
    %p228 = scmp.eq.s32.totalorder %s15, 0
    %p229 = por %p227, %p228
    %p230 = scmp.ne.s32.totalorder %s219, %s222
    %p231 = scmp.eq.s32.totalorder %s20, 3
    %p232 = por %p230, %p231
    %p233 = scmp.ne.s32.totalorder %s222, %s223
    %p234 = scmp.eq.s32.totalorder %s20, 0
    %p235 = por %p233, %p234
    %p236 = scmp.ne.s32.totalorder %s222, %s223
    %p237 = scmp.eq.s32.totalorder %s21, 3
    %p238 = por %p236, %p237
    %p240 = scmp.ne.s32.totalorder %s223, %s239
    %p241 = scmp.eq.s32.totalorder %s21, 0
    %p242 = por %p240, %p241
    %p243 = scmp.le.s32.totalorder 1, %s15
    %p244 = scmp.lt.s32.totalorder %s15, 5
    %p245 = pnand %p243, %p244
    %p246 = pneg %p245
    // Predicated region
    $region9: #{tpu_custom_call.1} parent=5 // pred_check
      _
    $region10: #{tpu_custom_call.1} parent=5 // pred_check_branch
      %248 = sbr.rel (%p245) target = $region12
    $region11: #{tpu_custom_call.1} parent=5 // pred_region
      %s249 = ssub.s32 %s15, 1
      // Predicated region
      $region13: #{tpu_custom_call.1} parent=11 // pred_check
        %p250 = pneg %p62
      $region14: #{tpu_custom_call.1} parent=11 // pred_check_branch
        %252 = sbr.rel (%p250) target = $region16
      $region15: #{tpu_custom_call.1} parent=11 // pred_region
        _
      $region16: #{tpu_custom_call.1} parent=11 // pred_fallthru
        _
      // Predicated region
      $region17: #{tpu_custom_call.1} parent=11 // pred_check
        %p253 = pneg %p83
      $region18: #{tpu_custom_call.1} parent=11 // pred_check_branch
        %255 = sbr.rel (%p253) target = $region20
      $region19: #{tpu_custom_call.1} parent=11 // pred_region
        _
      $region20: #{tpu_custom_call.1} parent=11 // pred_fallthru
        _
      // Predicated region
      $region21: #{tpu_custom_call.1} parent=11 // pred_check
        %p256 = pneg %p104
      $region22: #{tpu_custom_call.1} parent=11 // pred_check_branch
        %258 = sbr.rel (%p256) target = $region24
      $region23: #{tpu_custom_call.1} parent=11 // pred_region
        _
      $region24: #{tpu_custom_call.1} parent=11 // pred_fallthru
        _
      // Predicated region
      $region25: #{tpu_custom_call.1} parent=11 // pred_check
        %p259 = pneg %p125
      $region26: #{tpu_custom_call.1} parent=11 // pred_check_branch
        %261 = sbr.rel (%p259) target = $region28
      $region27: #{tpu_custom_call.1} parent=11 // pred_region
        _
      $region28: #{tpu_custom_call.1} parent=11 // pred_fallthru
        _
      // Predicated region
      $region29: #{tpu_custom_call.1} parent=11 // pred_check
        %p262 = pneg %p146
      $region30: #{tpu_custom_call.1} parent=11 // pred_check_branch
        %264 = sbr.rel (%p262) target = $region32
      $region31: #{tpu_custom_call.1} parent=11 // pred_region
        _
      $region32: #{tpu_custom_call.1} parent=11 // pred_fallthru
        _
      // Predicated region
      $region33: #{tpu_custom_call.1} parent=11 // pred_check
        %p265 = pneg %p167
      $region34: #{tpu_custom_call.1} parent=11 // pred_check_branch
        %267 = sbr.rel (%p265) target = $region36
      $region35: #{tpu_custom_call.1} parent=11 // pred_region
        _
      $region36: #{tpu_custom_call.1} parent=11 // pred_fallthru
        _
      // Predicated region
      $region37: #{tpu_custom_call.1} parent=11 // pred_check
        %p268 = pneg %p188
      $region38: #{tpu_custom_call.1} parent=11 // pred_check_branch
        %270 = sbr.rel (%p268) target = $region40
      $region39: #{tpu_custom_call.1} parent=11 // pred_region
        _
      $region40: #{tpu_custom_call.1} parent=11 // pred_fallthru
        _
      // Predicated region
      $region41: #{tpu_custom_call.1} parent=11 // pred_check
        %p271 = pneg %p209
      $region42: #{tpu_custom_call.1} parent=11 // pred_check_branch
        %273 = sbr.rel (%p271) target = $region44
      $region43: #{tpu_custom_call.1} parent=11 // pred_region
        _
      $region44: #{tpu_custom_call.1} parent=11 // pred_fallthru
        _
    $region12: #{tpu_custom_call.1} parent=5 // pred_fallthru
      _
    %p274 = scmp.lt.s32.totalorder %s15, 4
    // Predicated region
    $region45: #{tpu_custom_call.1} parent=5 // pred_check
      %p275 = pneg %p274
    $region46: #{tpu_custom_call.1} parent=5 // pred_check_branch
      %277 = sbr.rel (%p275) target = $region48
    $region47: #{tpu_custom_call.1} parent=5 // pred_region
      // Predicated region
      $region49: #{tpu_custom_call.1} parent=47 // pred_check
        %p278 = pneg %p35
      $region50: #{tpu_custom_call.1} parent=47 // pred_check_branch
        %280 = sbr.rel (%p278) target = $region52
      $region51: #{tpu_custom_call.1} parent=47 // pred_region
        %s281 = smul.u32 128, %s15
        %p282 = scmp.lt.s32.totalorder %s281, 511
        %s283 = scalar_select %p282, %s281, 511
        %s284 = smul.addr %s283, 8
        %s285 = scalar_lea.vmem %s0, %s284
        %s286 = smul.u32 128, %s15
      $region52: #{tpu_custom_call.1} parent=47 // pred_fallthru
        _
    $region48: #{tpu_custom_call.1} parent=5 // pred_fallthru
      _
    %p287 = scmp.le.s32.totalorder 1, %s15
    %p288 = scmp.lt.s32.totalorder %s15, 5
    %p289 = pnand %p287, %p288
    %p290 = pneg %p289
    // Predicated region
    $region53: #{tpu_custom_call.1} parent=5 // pred_check
      _
    $region54: #{tpu_custom_call.1} parent=5 // pred_check_branch
      %292 = sbr.rel (%p289) target = $region56
    $region55: #{tpu_custom_call.1} parent=5 // pred_region
      %s293 = ssub.s32 %s15, 1
      %s294 = smul.u32 128, %s20
      %p295 = scmp.lt.s32.totalorder %s294, 511
      %s296 = scalar_select %p295, %s294, 511
      %s297 = smul.addr %s296, 8
      %s298 = scalar_lea.vmem %s0, %s297
      %p299 = pneg %p41
      %p300 = pneg %p38
      %p301 = pneg %p62
      %p302 = pneg %p59
      %p303 = pneg %p83
      %p304 = pneg %p80
      %p305 = pneg %p104
      %p306 = pneg %p101
      %p307 = pneg %p125
      %p308 = pneg %p122
      %p309 = pneg %p146
      %p310 = pneg %p143
      %p311 = pneg %p167
      %p312 = pneg %p164
      %p313 = pneg %p188
      %p314 = pneg %p185
      %p315 = pneg %p209
      %p316 = pneg %p206
      %p317 = pneg %p235
      %p318 = pneg %p232
      %s319 = smul.u32 128, %s20
      %p320 = scmp.lt.s32.totalorder %s319, 511
      %s321 = scalar_select %p320, %s319, 511
      %s322 = smul.addr %s321, 8
      %s323 = scalar_lea.vmem %s9, %s322
      %s324 = smul.u32 128, %s20
      %p325 = scmp.lt.s32.totalorder %s324, 511
      %s326 = scalar_select %p325, %s324, 511
      %s327 = smul.addr %s326, 8
      %s328 = scalar_lea.vmem %s0, %s327
      %s329 = smul.u32 128, %s20
      %s330 = smul.u32 128, %s20
      %p331 = scmp.lt.s32.totalorder %s330, 511
      %s332 = scalar_select %p331, %s330, 511
      %s333 = smul.addr %s332, 8
      %s334 = scalar_lea.vmem %s9, %s333
      %s335 = smul.u32 128, %s20
      %v337 = vld [vmem:[%s328] sm:$0xff]
      %v338 = vld [vmem:[%s328 + $0x8] sm:$0xff]
      %v339 = vld [vmem:[%s328 + $0x10] sm:$0xff]
      %v340 = vld [vmem:[%s328 + $0x18] sm:$0xff]
      %v341 = vld [vmem:[%s328 + $0x20] sm:$0xff]
      %v342 = vld [vmem:[%s328 + $0x28] sm:$0xff]
      %v343 = vld [vmem:[%s328 + $0x30] sm:$0xff]
      %v344 = vld [vmem:[%s328 + $0x38] sm:$0xff]
      %v345 = vld [vmem:[%s328 + $0x40] sm:$0xff]
      %v346 = vld [vmem:[%s328 + $0x48] sm:$0xff]
      %v347 = vld [vmem:[%s328 + $0x50] sm:$0xff]
      %v348 = vld [vmem:[%s328 + $0x58] sm:$0xff]
      %v349 = vld [vmem:[%s328 + $0x60] sm:$0xff]
      %v350 = vld [vmem:[%s328 + $0x68] sm:$0xff]
      %v351 = vld [vmem:[%s328 + $0x70] sm:$0xff]
      %v352 = vld [vmem:[%s328 + $0x78] sm:$0xff]
      %v353 = vld [vmem:[%s328 + $0x80] sm:$0xff]
      %v354 = vld [vmem:[%s328 + $0x88] sm:$0xff]
      %v355 = vld [vmem:[%s328 + $0x90] sm:$0xff]
      %v356 = vld [vmem:[%s328 + $0x98] sm:$0xff]
      %v357 = vld [vmem:[%s328 + $0xa0] sm:$0xff]
      %v358 = vld [vmem:[%s328 + $0xa8] sm:$0xff]
      %v359 = vld [vmem:[%s328 + $0xb0] sm:$0xff]
      %v360 = vld [vmem:[%s328 + $0xb8] sm:$0xff]
      %v361 = vld [vmem:[%s328 + $0xc0] sm:$0xff]
      %v362 = vld [vmem:[%s328 + $0xc8] sm:$0xff]
      %v363 = vld [vmem:[%s328 + $0xd0] sm:$0xff]
      %v364 = vld [vmem:[%s328 + $0xd8] sm:$0xff]
      %v365 = vld [vmem:[%s328 + $0xe0] sm:$0xff]
      %v366 = vld [vmem:[%s328 + $0xe8] sm:$0xff]
      %v367 = vld [vmem:[%s328 + $0xf0] sm:$0xff]
      %v368 = vld [vmem:[%s328 + $0xf8] sm:$0xff]
      %v369 = vld [vmem:[%s328 + $0x100] sm:$0xff]
      %v370 = vld [vmem:[%s328 + $0x108] sm:$0xff]
      %v371 = vld [vmem:[%s328 + $0x110] sm:$0xff]
      %v372 = vld [vmem:[%s328 + $0x118] sm:$0xff]
      %v373 = vld [vmem:[%s328 + $0x120] sm:$0xff]
      %v374 = vld [vmem:[%s328 + $0x128] sm:$0xff]
      %v375 = vld [vmem:[%s328 + $0x130] sm:$0xff]
      %v376 = vld [vmem:[%s328 + $0x138] sm:$0xff]
      %v377 = vld [vmem:[%s328 + $0x140] sm:$0xff]
      %v378 = vld [vmem:[%s328 + $0x148] sm:$0xff]
      %v379 = vld [vmem:[%s328 + $0x150] sm:$0xff]
      %v380 = vld [vmem:[%s328 + $0x158] sm:$0xff]
      %v381 = vld [vmem:[%s328 + $0x160] sm:$0xff]
      %v382 = vld [vmem:[%s328 + $0x168] sm:$0xff]
      %v383 = vld [vmem:[%s328 + $0x170] sm:$0xff]
      %v384 = vld [vmem:[%s328 + $0x178] sm:$0xff]
      %v385 = vld [vmem:[%s328 + $0x180] sm:$0xff]
      %v386 = vld [vmem:[%s328 + $0x188] sm:$0xff]
      %v387 = vld [vmem:[%s328 + $0x190] sm:$0xff]
      %v388 = vld [vmem:[%s328 + $0x198] sm:$0xff]
      %v389 = vld [vmem:[%s328 + $0x1a0] sm:$0xff]
      %v390 = vld [vmem:[%s328 + $0x1a8] sm:$0xff]
      %v391 = vld [vmem:[%s328 + $0x1b0] sm:$0xff]
      %v392 = vld [vmem:[%s328 + $0x1b8] sm:$0xff]
      %v393 = vld [vmem:[%s328 + $0x1c0] sm:$0xff]
      %v394 = vld [vmem:[%s328 + $0x1c8] sm:$0xff]
      %v395 = vld [vmem:[%s328 + $0x1d0] sm:$0xff]
      %v396 = vld [vmem:[%s328 + $0x1d8] sm:$0xff]
      %v397 = vld [vmem:[%s328 + $0x1e0] sm:$0xff]
      %v398 = vld [vmem:[%s328 + $0x1e8] sm:$0xff]
      %v399 = vld [vmem:[%s328 + $0x1f0] sm:$0xff]
      %v400 = vld [vmem:[%s328 + $0x1f8] sm:$0xff]
      %v401 = vld [vmem:[%s328 + $0x200] sm:$0xff]
      %v402 = vld [vmem:[%s328 + $0x208] sm:$0xff]
      %v403 = vld [vmem:[%s328 + $0x210] sm:$0xff]
      %v404 = vld [vmem:[%s328 + $0x218] sm:$0xff]
      %v405 = vld [vmem:[%s328 + $0x220] sm:$0xff]
      %v406 = vld [vmem:[%s328 + $0x228] sm:$0xff]
      %v407 = vld [vmem:[%s328 + $0x230] sm:$0xff]
      %v408 = vld [vmem:[%s328 + $0x238] sm:$0xff]
      %v409 = vld [vmem:[%s328 + $0x240] sm:$0xff]
      %v410 = vld [vmem:[%s328 + $0x248] sm:$0xff]
      %v411 = vld [vmem:[%s328 + $0x250] sm:$0xff]
      %v412 = vld [vmem:[%s328 + $0x258] sm:$0xff]
      %v413 = vld [vmem:[%s328 + $0x260] sm:$0xff]
      %v414 = vld [vmem:[%s328 + $0x268] sm:$0xff]
      %v415 = vld [vmem:[%s328 + $0x270] sm:$0xff]
      %v416 = vld [vmem:[%s328 + $0x278] sm:$0xff]
      %v417 = vld [vmem:[%s328 + $0x280] sm:$0xff]
      %v418 = vld [vmem:[%s328 + $0x288] sm:$0xff]
      %v419 = vld [vmem:[%s328 + $0x290] sm:$0xff]
      %v420 = vld [vmem:[%s328 + $0x298] sm:$0xff]
      %v421 = vld [vmem:[%s328 + $0x2a0] sm:$0xff]
      %v422 = vld [vmem:[%s328 + $0x2a8] sm:$0xff]
      %v423 = vld [vmem:[%s328 + $0x2b0] sm:$0xff]
      %v424 = vld [vmem:[%s328 + $0x2b8] sm:$0xff]
      %v425 = vld [vmem:[%s328 + $0x2c0] sm:$0xff]
      %v426 = vld [vmem:[%s328 + $0x2c8] sm:$0xff]
      %v427 = vld [vmem:[%s328 + $0x2d0] sm:$0xff]
      %v428 = vld [vmem:[%s328 + $0x2d8] sm:$0xff]
      %v429 = vld [vmem:[%s328 + $0x2e0] sm:$0xff]
      %v430 = vld [vmem:[%s328 + $0x2e8] sm:$0xff]
      %v431 = vld [vmem:[%s328 + $0x2f0] sm:$0xff]
      %v432 = vld [vmem:[%s328 + $0x2f8] sm:$0xff]
      %v433 = vld [vmem:[%s328 + $0x300] sm:$0xff]
      %v434 = vld [vmem:[%s328 + $0x308] sm:$0xff]
      %v435 = vld [vmem:[%s328 + $0x310] sm:$0xff]
      %v436 = vld [vmem:[%s328 + $0x318] sm:$0xff]
      %v437 = vld [vmem:[%s328 + $0x320] sm:$0xff]
      %v438 = vld [vmem:[%s328 + $0x328] sm:$0xff]
      %v439 = vld [vmem:[%s328 + $0x330] sm:$0xff]
      %v440 = vld [vmem:[%s328 + $0x338] sm:$0xff]
      %v441 = vld [vmem:[%s328 + $0x340] sm:$0xff]
      %v442 = vld [vmem:[%s328 + $0x348] sm:$0xff]
      %v443 = vld [vmem:[%s328 + $0x350] sm:$0xff]
      %v444 = vld [vmem:[%s328 + $0x358] sm:$0xff]
      %v445 = vld [vmem:[%s328 + $0x360] sm:$0xff]
      %v446 = vld [vmem:[%s328 + $0x368] sm:$0xff]
      %v447 = vld [vmem:[%s328 + $0x370] sm:$0xff]
      %v448 = vld [vmem:[%s328 + $0x378] sm:$0xff]
      %v449 = vld [vmem:[%s328 + $0x380] sm:$0xff]
      %v450 = vld [vmem:[%s328 + $0x388] sm:$0xff]
      %v451 = vld [vmem:[%s328 + $0x390] sm:$0xff]
      %v452 = vld [vmem:[%s328 + $0x398] sm:$0xff]
      %v453 = vld [vmem:[%s328 + $0x3a0] sm:$0xff]
      %v454 = vld [vmem:[%s328 + $0x3a8] sm:$0xff]
      %v455 = vld [vmem:[%s328 + $0x3b0] sm:$0xff]
      %v456 = vld [vmem:[%s328 + $0x3b8] sm:$0xff]
      %v457 = vld [vmem:[%s328 + $0x3c0] sm:$0xff]
      %v458 = vld [vmem:[%s328 + $0x3c8] sm:$0xff]
      %v459 = vld [vmem:[%s328 + $0x3d0] sm:$0xff]
      %v460 = vld [vmem:[%s328 + $0x3d8] sm:$0xff]
      %v461 = vld [vmem:[%s328 + $0x3e0] sm:$0xff]
      %v462 = vld [vmem:[%s328 + $0x3e8] sm:$0xff]
      %v463 = vld [vmem:[%s328 + $0x3f0] sm:$0xff]
      %v464 = vld [vmem:[%s328 + $0x3f8] sm:$0xff]
      %v465 = vpack.c.bf16 %v338, %v337
      %v466 = vpack.c.bf16 %v340, %v339
      %v467 = vpack.c.bf16 %v342, %v341
      %v468 = vpack.c.bf16 %v344, %v343
      %v469 = vpack.c.bf16 %v346, %v345
      %v470 = vpack.c.bf16 %v348, %v347
      %v471 = vpack.c.bf16 %v350, %v349
      %v472 = vpack.c.bf16 %v352, %v351
      %v473 = vpack.c.bf16 %v354, %v353
      %v474 = vpack.c.bf16 %v356, %v355
      %v475 = vpack.c.bf16 %v358, %v357
      %v476 = vpack.c.bf16 %v360, %v359
      %v477 = vpack.c.bf16 %v362, %v361
      %v478 = vpack.c.bf16 %v364, %v363
      %v479 = vpack.c.bf16 %v366, %v365
      %v480 = vpack.c.bf16 %v368, %v367
      %v481 = vpack.c.bf16 %v370, %v369
      %v482 = vpack.c.bf16 %v372, %v371
      %v483 = vpack.c.bf16 %v374, %v373
      %v484 = vpack.c.bf16 %v376, %v375
      %v485 = vpack.c.bf16 %v378, %v377
      %v486 = vpack.c.bf16 %v380, %v379
      %v487 = vpack.c.bf16 %v382, %v381
      %v488 = vpack.c.bf16 %v384, %v383
      %v489 = vpack.c.bf16 %v386, %v385
      %v490 = vpack.c.bf16 %v388, %v387
      %v491 = vpack.c.bf16 %v390, %v389
      %v492 = vpack.c.bf16 %v392, %v391
      %v493 = vpack.c.bf16 %v394, %v393
      %v494 = vpack.c.bf16 %v396, %v395
      %v495 = vpack.c.bf16 %v398, %v397
      %v496 = vpack.c.bf16 %v400, %v399
      %v497 = vpack.c.bf16 %v402, %v401
      %v498 = vpack.c.bf16 %v404, %v403
      %v499 = vpack.c.bf16 %v406, %v405
      %v500 = vpack.c.bf16 %v408, %v407
      %v501 = vpack.c.bf16 %v410, %v409
      %v502 = vpack.c.bf16 %v412, %v411
      %v503 = vpack.c.bf16 %v414, %v413
      %v504 = vpack.c.bf16 %v416, %v415
      %v505 = vpack.c.bf16 %v418, %v417
      %v506 = vpack.c.bf16 %v420, %v419
      %v507 = vpack.c.bf16 %v422, %v421
      %v508 = vpack.c.bf16 %v424, %v423
      %v509 = vpack.c.bf16 %v426, %v425
      %v510 = vpack.c.bf16 %v428, %v427
      %v511 = vpack.c.bf16 %v430, %v429
      %v512 = vpack.c.bf16 %v432, %v431
      %v513 = vpack.c.bf16 %v434, %v433
      %v514 = vpack.c.bf16 %v436, %v435
      %v515 = vpack.c.bf16 %v438, %v437
      %v516 = vpack.c.bf16 %v440, %v439
      %v517 = vpack.c.bf16 %v442, %v441
      %v518 = vpack.c.bf16 %v444, %v443
      %v519 = vpack.c.bf16 %v446, %v445
      %v520 = vpack.c.bf16 %v448, %v447
      %v521 = vpack.c.bf16 %v450, %v449
      %v522 = vpack.c.bf16 %v452, %v451
      %v523 = vpack.c.bf16 %v454, %v453
      %v524 = vpack.c.bf16 %v456, %v455
      %v525 = vpack.c.bf16 %v458, %v457
      %v526 = vpack.c.bf16 %v460, %v459
      %v527 = vpack.c.bf16 %v462, %v461
      %v528 = vpack.c.bf16 %v464, %v463
      %v529 = vlaneseq
      %v530 = vand.u32 %v529, 127
      %v531 = vld [vmem:[%s1] sm:$0xf]
      %v532 = vld [vmem:[%s1 + $0x4] sm:$0xf]
      %v533 = vld [vmem:[%s1 + $0x8] sm:$0xf]
      %v534 = vld [vmem:[%s1 + $0xc] sm:$0xf]
      %v535 = vld [vmem:[%s1 + $0x10] sm:$0xf]
      %v536 = vld [vmem:[%s1 + $0x14] sm:$0xf]
      %v537 = vld [vmem:[%s1 + $0x18] sm:$0xf]
      %v538 = vld [vmem:[%s1 + $0x1c] sm:$0xf]
      %v539 = vld [vmem:[%s2] sm:$0x1]
      %v541 = vlaneseq
      %v542 = vshrl.u32 %v541, 7
      %v543 = vsub.s32 0, %v542
      %v544 = vrot.slane %v539, %v543
      %v554 = vunpack.c.l.b16 %v531
      %v555 = vunpack.c.l.b16 %v532
      %v556 = vunpack.c.l.b16 %v533
      %v557 = vunpack.c.l.b16 %v534
      %v558 = vunpack.c.l.b16 %v535
      %v559 = vunpack.c.l.b16 %v536
      %v560 = vunpack.c.l.b16 %v537
      %v561 = vunpack.c.l.b16 %v538
      %v562 = vpack.c.b16 %v555, %v554
      %v563 = vpack.c.b16 %v557, %v556
      %v564 = vpack.c.b16 %v559, %v558
      %v565 = vpack.c.b16 %v561, %v560
      %vm570 = vcmask 523264
      %v572 = vsel %vm570, %v465, 0
      %v575 = vsel %vm570, %v466, 0
      %v578 = vsel %vm570, %v467, 0
      %v581 = vsel %vm570, %v468, 0
      %v584 = vsel %vm570, %v469, 0
      %v587 = vsel %vm570, %v470, 0
      %v590 = vsel %vm570, %v471, 0
      %v593 = vsel %vm570, %v472, 0
      %v596 = vsel %vm570, %v473, 0
      %v599 = vsel %vm570, %v474, 0
      %v602 = vsel %vm570, %v475, 0
      %v605 = vsel %vm570, %v476, 0
      %v608 = vsel %vm570, %v477, 0
      %v611 = vsel %vm570, %v478, 0
      %v614 = vsel %vm570, %v479, 0
      %v617 = vsel %vm570, %v480, 0
      %v620 = vsel %vm570, %v481, 0
      %v623 = vsel %vm570, %v482, 0
      %v626 = vsel %vm570, %v483, 0
      %v629 = vsel %vm570, %v484, 0
      %v632 = vsel %vm570, %v485, 0
      %v635 = vsel %vm570, %v486, 0
      %v638 = vsel %vm570, %v487, 0
      %v641 = vsel %vm570, %v488, 0
      %v644 = vsel %vm570, %v489, 0
      %v647 = vsel %vm570, %v490, 0
      %v650 = vsel %vm570, %v491, 0
      %v653 = vsel %vm570, %v492, 0
      %v656 = vsel %vm570, %v493, 0
      %v659 = vsel %vm570, %v494, 0
      %v662 = vsel %vm570, %v495, 0
      %v665 = vsel %vm570, %v496, 0
      %v668 = vsel %vm570, %v497, 0
      %v671 = vsel %vm570, %v498, 0
      %v674 = vsel %vm570, %v499, 0
      %v677 = vsel %vm570, %v500, 0
      %v680 = vsel %vm570, %v501, 0
      %v683 = vsel %vm570, %v502, 0
      %v686 = vsel %vm570, %v503, 0
      %v689 = vsel %vm570, %v504, 0
      %v692 = vsel %vm570, %v505, 0
      %v695 = vsel %vm570, %v506, 0
      %v698 = vsel %vm570, %v507, 0
      %v701 = vsel %vm570, %v508, 0
      %v704 = vsel %vm570, %v509, 0
      %v707 = vsel %vm570, %v510, 0
      %v710 = vsel %vm570, %v511, 0
      %v713 = vsel %vm570, %v512, 0
      %v716 = vsel %vm570, %v513, 0
      %v719 = vsel %vm570, %v514, 0
      %v722 = vsel %vm570, %v515, 0
      %v725 = vsel %vm570, %v516, 0
      %v728 = vsel %vm570, %v517, 0
      %v731 = vsel %vm570, %v518, 0
      %v734 = vsel %vm570, %v519, 0
      %v737 = vsel %vm570, %v520, 0
      %v740 = vsel %vm570, %v521, 0
      %v743 = vsel %vm570, %v522, 0
      %v746 = vsel %vm570, %v523, 0
      %v749 = vsel %vm570, %v524, 0
      %v752 = vsel %vm570, %v525, 0
      %v755 = vsel %vm570, %v526, 0
      %v758 = vsel %vm570, %v527, 0
      %v761 = vsel %vm570, %v528, 0
      %763 = vmatprep.subr.bf16.mxu0 0
      %764 = vmatpush1.bf16.msra.mxu0 %v562
      %765 = vmatprep.subr.bf16.mxu0 0
      %766 = vmatpush1.bf16.msra.mxu0 %v563
      %767 = vmatprep.subr.bf16.mxu0 0
      %768 = vmatpush1.bf16.msra.mxu0 %v564
      %769 = vmatprep.subr.bf16.mxu0 0
      %770 = vmatpush1.bf16.msra.mxu0 %v565
      %771 = vmatprep.subr.bf16.mxu0 0
      %772 = vmatpush1.bf16.msra.mxu0 0
      %773 = vmatprep.subr.bf16.mxu0 0
      %774 = vmatpush1.bf16.msra.mxu0 0
      %775 = vmatprep.subr.bf16.mxu0 0
      %776 = vmatpush1.bf16.msra.mxu0 0
      %777 = vmatprep.subr.bf16.mxu0 0
      %778 = vmatpush1.bf16.msra.mxu0 0
      %779 = vmatprep.subr.bf16.mxu0 0
      %780 = vmatpush1.bf16.msra.mxu0 0
      %781 = vmatprep.subr.bf16.mxu0 0
      %782 = vmatpush1.bf16.msra.mxu0 0
      %783 = vmatprep.subr.bf16.mxu0 0
      %784 = vmatpush1.bf16.msra.mxu0 0
      %785 = vmatprep.subr.bf16.mxu0 0
      %786 = vmatpush1.bf16.msra.mxu0 0
      %787 = vmatprep.subr.bf16.mxu0 0
      %788 = vmatpush1.bf16.msra.mxu0 0
      %789 = vmatprep.subr.bf16.mxu0 0
      %790 = vmatpush1.bf16.msra.mxu0 0
      %791 = vmatprep.subr.bf16.mxu0 0
      %792 = vmatpush1.bf16.msra.mxu0 0
      %793 = vmatprep.subr.bf16.mxu0 0
      %794 = vmatpush1.bf16.msra.mxu0 0
      %795 = vmatprep.mubr.bf16.mxu0 0
      %796 = vmatmul.mubr.bf16.gmra.mrb[0].mxu0 %v572
      %v797 = vpop.f32.mrb[0].mxu0
      %v798 = vadd.f32 %v544, %v797
      %v799 = vpop.f32.mrb[0].mxu0
      %v800 = vpop.f32.mrb[0].mxu0
      %v801 = vadd.f32 %v544, %v800
      %v802 = vpop.f32.mrb[0].mxu0
      %803 = vmatprep.mubr.bf16.mxu0 0
      %804 = vmatmul.mubr.bf16.gmra.mrb[0].mxu0 %v575
      %v805 = vpop.f32.mrb[0].mxu0
      %v806 = vadd.f32 %v544, %v805
      %v807 = vpop.f32.mrb[0].mxu0
      %v808 = vpop.f32.mrb[0].mxu0
      %v809 = vadd.f32 %v544, %v808
      %v810 = vpop.f32.mrb[0].mxu0
      %811 = vmatprep.mubr.bf16.mxu0 0
      %812 = vmatmul.mubr.bf16.gmra.mrb[0].mxu0 %v578
      %v813 = vpop.f32.mrb[0].mxu0
      %v814 = vadd.f32 %v544, %v813
      %v815 = vpop.f32.mrb[0].mxu0
      %v816 = vpop.f32.mrb[0].mxu0
      %v817 = vadd.f32 %v544, %v816
      %v818 = vpop.f32.mrb[0].mxu0
      %819 = vmatprep.mubr.bf16.mxu0 0
      %820 = vmatmul.mubr.bf16.gmra.mrb[0].mxu0 %v581
      %v821 = vpop.f32.mrb[0].mxu0
      %v822 = vadd.f32 %v544, %v821
      %v823 = vpop.f32.mrb[0].mxu0
      %v824 = vpop.f32.mrb[0].mxu0
      %v825 = vadd.f32 %v544, %v824
      %v826 = vpop.f32.mrb[0].mxu0
      %827 = vmatprep.mubr.bf16.mxu0 0
      %828 = vmatmul.mubr.bf16.gmra.mrb[0].mxu0 %v584
      %v829 = vpop.f32.mrb[0].mxu0
      %v830 = vadd.f32 %v544, %v829
      %v831 = vpop.f32.mrb[0].mxu0
      %v832 = vpop.f32.mrb[0].mxu0
      %v833 = vadd.f32 %v544, %v832
      %v834 = vpop.f32.mrb[0].mxu0
      %835 = vmatprep.mubr.bf16.mxu0 0
      %836 = vmatmul.mubr.bf16.gmra.mrb[0].mxu0 %v587
      %v837 = vpop.f32.mrb[0].mxu0
      %v838 = vadd.f32 %v544, %v837
      %v839 = vpop.f32.mrb[0].mxu0
      %v840 = vpop.f32.mrb[0].mxu0
      %v841 = vadd.f32 %v544, %v840
      %v842 = vpop.f32.mrb[0].mxu0
      %843 = vmatprep.mubr.bf16.mxu0 0
      %844 = vmatmul.mubr.bf16.gmra.mrb[0].mxu0 %v590
      %v845 = vpop.f32.mrb[0].mxu0
      %v846 = vadd.f32 %v544, %v845
      %v847 = vpop.f32.mrb[0].mxu0
      %v848 = vpop.f32.mrb[0].mxu0
      %v849 = vadd.f32 %v544, %v848
      %v850 = vpop.f32.mrb[0].mxu0
      %851 = vmatprep.mubr.bf16.mxu0 0
      %852 = vmatmul.mubr.bf16.gmra.mrb[0].mxu0 %v593
      %v853 = vpop.f32.mrb[0].mxu0
      %v854 = vadd.f32 %v544, %v853
      %v855 = vpop.f32.mrb[0].mxu0
      %v856 = vpop.f32.mrb[0].mxu0
      %v857 = vadd.f32 %v544, %v856
      %v858 = vpop.f32.mrb[0].mxu0
      %859 = vmatprep.mubr.bf16.mxu0 0
      %860 = vmatmul.mubr.bf16.gmra.mrb[0].mxu0 %v596
      %v861 = vpop.f32.mrb[0].mxu0
      %v862 = vadd.f32 %v544, %v861
      %v863 = vpop.f32.mrb[0].mxu0
      %v864 = vpop.f32.mrb[0].mxu0
      %v865 = vadd.f32 %v544, %v864
      %v866 = vpop.f32.mrb[0].mxu0
      %867 = vmatprep.mubr.bf16.mxu0 0
      %868 = vmatmul.mubr.bf16.gmra.mrb[0].mxu0 %v599
      %v869 = vpop.f32.mrb[0].mxu0
      %v870 = vadd.f32 %v544, %v869
      %v871 = vpop.f32.mrb[0].mxu0
      %v872 = vpop.f32.mrb[0].mxu0
      %v873 = vadd.f32 %v544, %v872
      %v874 = vpop.f32.mrb[0].mxu0
      %875 = vmatprep.mubr.bf16.mxu0 0
      %876 = vmatmul.mubr.bf16.gmra.mrb[0].mxu0 %v602
      %v877 = vpop.f32.mrb[0].mxu0
      %v878 = vadd.f32 %v544, %v877
      %v879 = vpop.f32.mrb[0].mxu0
      %v880 = vpop.f32.mrb[0].mxu0
      %v881 = vadd.f32 %v544, %v880
      %v882 = vpop.f32.mrb[0].mxu0
      %883 = vmatprep.mubr.bf16.mxu0 0
      %884 = vmatmul.mubr.bf16.gmra.mrb[0].mxu0 %v605
      %v885 = vpop.f32.mrb[0].mxu0
      %v886 = vadd.f32 %v544, %v885
      %v887 = vpop.f32.mrb[0].mxu0
      %v888 = vpop.f32.mrb[0].mxu0
      %v889 = vadd.f32 %v544, %v888
      %v890 = vpop.f32.mrb[0].mxu0
      %891 = vmatprep.mubr.bf16.mxu0 0
      %892 = vmatmul.mubr.bf16.gmra.mrb[0].mxu0 %v608
      %v893 = vpop.f32.mrb[0].mxu0
      %v894 = vadd.f32 %v544, %v893
      %v895 = vpop.f32.mrb[0].mxu0
      %v896 = vpop.f32.mrb[0].mxu0
      %v897 = vadd.f32 %v544, %v896
      %v898 = vpop.f32.mrb[0].mxu0
      %899 = vmatprep.mubr.bf16.mxu0 0
      %900 = vmatmul.mubr.bf16.gmra.mrb[0].mxu0 %v611
      %v901 = vpop.f32.mrb[0].mxu0
      %v902 = vadd.f32 %v544, %v901
      %v903 = vpop.f32.mrb[0].mxu0
      %v904 = vpop.f32.mrb[0].mxu0
      %v905 = vadd.f32 %v544, %v904
      %v906 = vpop.f32.mrb[0].mxu0
      %907 = vmatprep.mubr.bf16.mxu0 0
      %908 = vmatmul.mubr.bf16.gmra.mrb[0].mxu0 %v614
      %v909 = vpop.f32.mrb[0].mxu0
      %v910 = vadd.f32 %v544, %v909
      %v911 = vpop.f32.mrb[0].mxu0
      %v912 = vpop.f32.mrb[0].mxu0
      %v913 = vadd.f32 %v544, %v912
      %v914 = vpop.f32.mrb[0].mxu0
      %915 = vmatprep.mubr.bf16.mxu0 0
      %916 = vmatmul.mubr.bf16.gmra.mrb[0].mxu0 %v617
      %v917 = vpop.f32.mrb[0].mxu0
      %v918 = vadd.f32 %v544, %v917
      %v919 = vpop.f32.mrb[0].mxu0
      %v920 = vpop.f32.mrb[0].mxu0
      %v921 = vadd.f32 %v544, %v920
      %v922 = vpop.f32.mrb[0].mxu0
      %923 = vmatprep.mubr.bf16.mxu0 0
      %924 = vmatmul.mubr.bf16.gmra.mrb[0].mxu0 %v620
      %v925 = vpop.f32.mrb[0].mxu0
      %v926 = vadd.f32 %v544, %v925
      %v927 = vpop.f32.mrb[0].mxu0
      %v928 = vpop.f32.mrb[0].mxu0
      %v929 = vadd.f32 %v544, %v928
      %v930 = vpop.f32.mrb[0].mxu0
      %931 = vmatprep.mubr.bf16.mxu0 0
      %932 = vmatmul.mubr.bf16.gmra.mrb[0].mxu0 %v623
      %v933 = vpop.f32.mrb[0].mxu0
      %v934 = vadd.f32 %v544, %v933
      %v935 = vpop.f32.mrb[0].mxu0
      %v936 = vpop.f32.mrb[0].mxu0
      %v937 = vadd.f32 %v544, %v936
      %v938 = vpop.f32.mrb[0].mxu0
      %939 = vmatprep.mubr.bf16.mxu0 0
      %940 = vmatmul.mubr.bf16.gmra.mrb[0].mxu0 %v626
      %v941 = vpop.f32.mrb[0].mxu0
      %v942 = vadd.f32 %v544, %v941
      %v943 = vpop.f32.mrb[0].mxu0
      %v944 = vpop.f32.mrb[0].mxu0
      %v945 = vadd.f32 %v544, %v944
      %v946 = vpop.f32.mrb[0].mxu0
      %947 = vmatprep.mubr.bf16.mxu0 0
      %948 = vmatmul.mubr.bf16.gmra.mrb[0].mxu0 %v629
      %v949 = vpop.f32.mrb[0].mxu0
      %v950 = vadd.f32 %v544, %v949
      %v951 = vpop.f32.mrb[0].mxu0
      %v952 = vpop.f32.mrb[0].mxu0
      %v953 = vadd.f32 %v544, %v952
      %v954 = vpop.f32.mrb[0].mxu0
      %955 = vmatprep.mubr.bf16.mxu0 0
      %956 = vmatmul.mubr.bf16.gmra.mrb[0].mxu0 %v632
      %v957 = vpop.f32.mrb[0].mxu0
      %v958 = vadd.f32 %v544, %v957
      %v959 = vpop.f32.mrb[0].mxu0
      %v960 = vpop.f32.mrb[0].mxu0
      %v961 = vadd.f32 %v544, %v960
      %v962 = vpop.f32.mrb[0].mxu0
      %963 = vmatprep.mubr.bf16.mxu0 0
      %964 = vmatmul.mubr.bf16.gmra.mrb[0].mxu0 %v635
      %v965 = vpop.f32.mrb[0].mxu0
      %v966 = vadd.f32 %v544, %v965
      %v967 = vpop.f32.mrb[0].mxu0
      %v968 = vpop.f32.mrb[0].mxu0
      %v969 = vadd.f32 %v544, %v968
      %v970 = vpop.f32.mrb[0].mxu0
      %971 = vmatprep.mubr.bf16.mxu0 0
      %972 = vmatmul.mubr.bf16.gmra.mrb[0].mxu0 %v638
      %v973 = vpop.f32.mrb[0].mxu0
      %v974 = vadd.f32 %v544, %v973
      %v975 = vpop.f32.mrb[0].mxu0
      %v976 = vpop.f32.mrb[0].mxu0
      %v977 = vadd.f32 %v544, %v976
      %v978 = vpop.f32.mrb[0].mxu0
      %979 = vmatprep.mubr.bf16.mxu0 0
      %980 = vmatmul.mubr.bf16.gmra.mrb[0].mxu0 %v641
      %v981 = vpop.f32.mrb[0].mxu0
      %v982 = vadd.f32 %v544, %v981
      %v983 = vpop.f32.mrb[0].mxu0
      %v984 = vpop.f32.mrb[0].mxu0
      %v985 = vadd.f32 %v544, %v984
      %v986 = vpop.f32.mrb[0].mxu0
      %987 = vmatprep.mubr.bf16.mxu0 0
      %988 = vmatmul.mubr.bf16.gmra.mrb[0].mxu0 %v644
      %v989 = vpop.f32.mrb[0].mxu0
      %v990 = vadd.f32 %v544, %v989
      %v991 = vpop.f32.mrb[0].mxu0
      %v992 = vpop.f32.mrb[0].mxu0
      %v993 = vadd.f32 %v544, %v992
      %v994 = vpop.f32.mrb[0].mxu0
      %995 = vmatprep.mubr.bf16.mxu0 0
      %996 = vmatmul.mubr.bf16.gmra.mrb[0].mxu0 %v647
      %v997 = vpop.f32.mrb[0].mxu0
      %v998 = vadd.f32 %v544, %v997
      %v999 = vpop.f32.mrb[0].mxu0
      %v1000 = vpop.f32.mrb[0].mxu0
      %v1001 = vadd.f32 %v544, %v1000
      %v1002 = vpop.f32.mrb[0].mxu0
      %1003 = vmatprep.mubr.bf16.mxu0 0
      %1004 = vmatmul.mubr.bf16.gmra.mrb[0].mxu0 %v650
      %v1005 = vpop.f32.mrb[0].mxu0
      %v1006 = vadd.f32 %v544, %v1005
      %v1007 = vpop.f32.mrb[0].mxu0
      %v1008 = vpop.f32.mrb[0].mxu0
      %v1009 = vadd.f32 %v544, %v1008
      %v1010 = vpop.f32.mrb[0].mxu0
      %1011 = vmatprep.mubr.bf16.mxu0 0
      %1012 = vmatmul.mubr.bf16.gmra.mrb[0].mxu0 %v653
      %v1013 = vpop.f32.mrb[0].mxu0
      %v1014 = vadd.f32 %v544, %v1013
      %v1015 = vpop.f32.mrb[0].mxu0
      %v1016 = vpop.f32.mrb[0].mxu0
      %v1017 = vadd.f32 %v544, %v1016
      %v1018 = vpop.f32.mrb[0].mxu0
      %1019 = vmatprep.mubr.bf16.mxu0 0
      %1020 = vmatmul.mubr.bf16.gmra.mrb[0].mxu0 %v656
      %v1021 = vpop.f32.mrb[0].mxu0
      %v1022 = vadd.f32 %v544, %v1021
      %v1023 = vpop.f32.mrb[0].mxu0
      %v1024 = vpop.f32.mrb[0].mxu0
      %v1025 = vadd.f32 %v544, %v1024
      %v1026 = vpop.f32.mrb[0].mxu0
      %1027 = vmatprep.mubr.bf16.mxu0 0
      %1028 = vmatmul.mubr.bf16.gmra.mrb[0].mxu0 %v659
      %v1029 = vpop.f32.mrb[0].mxu0
      %v1030 = vadd.f32 %v544, %v1029
      %v1031 = vpop.f32.mrb[0].mxu0
      %v1032 = vpop.f32.mrb[0].mxu0
      %v1033 = vadd.f32 %v544, %v1032
      %v1034 = vpop.f32.mrb[0].mxu0
      %1035 = vmatprep.mubr.bf16.mxu0 0
      %1036 = vmatmul.mubr.bf16.gmra.mrb[0].mxu0 %v662
      %v1037 = vpop.f32.mrb[0].mxu0
      %v1038 = vadd.f32 %v544, %v1037
      %v1039 = vpop.f32.mrb[0].mxu0
      %v1040 = vpop.f32.mrb[0].mxu0
      %v1041 = vadd.f32 %v544, %v1040
      %v1042 = vpop.f32.mrb[0].mxu0
      %1043 = vmatprep.mubr.bf16.mxu0 0
      %1044 = vmatmul.mubr.bf16.gmra.mrb[0].mxu0 %v665
      %v1045 = vpop.f32.mrb[0].mxu0
      %v1046 = vadd.f32 %v544, %v1045
      %v1047 = vpop.f32.mrb[0].mxu0
      %v1048 = vpop.f32.mrb[0].mxu0
      %v1049 = vadd.f32 %v544, %v1048
      %v1050 = vpop.f32.mrb[0].mxu0
      %1051 = vmatprep.mubr.bf16.mxu0 0
      %1052 = vmatmul.mubr.bf16.gmra.mrb[0].mxu0 %v668
      %v1053 = vpop.f32.mrb[0].mxu0
      %v1054 = vadd.f32 %v544, %v1053
      %v1055 = vpop.f32.mrb[0].mxu0
      %v1056 = vpop.f32.mrb[0].mxu0
      %v1057 = vadd.f32 %v544, %v1056
      %v1058 = vpop.f32.mrb[0].mxu0
      %1059 = vmatprep.mubr.bf16.mxu0 0
      %1060 = vmatmul.mubr.bf16.gmra.mrb[0].mxu0 %v671
      %v1061 = vpop.f32.mrb[0].mxu0
      %v1062 = vadd.f32 %v544, %v1061
      %v1063 = vpop.f32.mrb[0].mxu0
      %v1064 = vpop.f32.mrb[0].mxu0
      %v1065 = vadd.f32 %v544, %v1064
      %v1066 = vpop.f32.mrb[0].mxu0
      %1067 = vmatprep.mubr.bf16.mxu0 0
      %1068 = vmatmul.mubr.bf16.gmra.mrb[0].mxu0 %v674
      %v1069 = vpop.f32.mrb[0].mxu0
      %v1070 = vadd.f32 %v544, %v1069
      %v1071 = vpop.f32.mrb[0].mxu0
      %v1072 = vpop.f32.mrb[0].mxu0
      %v1073 = vadd.f32 %v544, %v1072
      %v1074 = vpop.f32.mrb[0].mxu0
      %1075 = vmatprep.mubr.bf16.mxu0 0
      %1076 = vmatmul.mubr.bf16.gmra.mrb[0].mxu0 %v677
      %v1077 = vpop.f32.mrb[0].mxu0
      %v1078 = vadd.f32 %v544, %v1077
      %v1079 = vpop.f32.mrb[0].mxu0
      %v1080 = vpop.f32.mrb[0].mxu0
      %v1081 = vadd.f32 %v544, %v1080
      %v1082 = vpop.f32.mrb[0].mxu0
      %1083 = vmatprep.mubr.bf16.mxu0 0
      %1084 = vmatmul.mubr.bf16.gmra.mrb[0].mxu0 %v680
      %v1085 = vpop.f32.mrb[0].mxu0
      %v1086 = vadd.f32 %v544, %v1085
      %v1087 = vpop.f32.mrb[0].mxu0
      %v1088 = vpop.f32.mrb[0].mxu0
      %v1089 = vadd.f32 %v544, %v1088
      %v1090 = vpop.f32.mrb[0].mxu0
      %1091 = vmatprep.mubr.bf16.mxu0 0
      %1092 = vmatmul.mubr.bf16.gmra.mrb[0].mxu0 %v683
      %v1093 = vpop.f32.mrb[0].mxu0
      %v1094 = vadd.f32 %v544, %v1093
      %v1095 = vpop.f32.mrb[0].mxu0
      %v1096 = vpop.f32.mrb[0].mxu0
      %v1097 = vadd.f32 %v544, %v1096
      %v1098 = vpop.f32.mrb[0].mxu0
      %1099 = vmatprep.mubr.bf16.mxu0 0
      %1100 = vmatmul.mubr.bf16.gmra.mrb[0].mxu0 %v686
      %v1101 = vpop.f32.mrb[0].mxu0
      %v1102 = vadd.f32 %v544, %v1101
      %v1103 = vpop.f32.mrb[0].mxu0
      %v1104 = vpop.f32.mrb[0].mxu0
      %v1105 = vadd.f32 %v544, %v1104
      %v1106 = vpop.f32.mrb[0].mxu0
      %1107 = vmatprep.mubr.bf16.mxu0 0
      %1108 = vmatmul.mubr.bf16.gmra.mrb[0].mxu0 %v689
      %v1109 = vpop.f32.mrb[0].mxu0
      %v1110 = vadd.f32 %v544, %v1109
      %v1111 = vpop.f32.mrb[0].mxu0
      %v1112 = vpop.f32.mrb[0].mxu0
      %v1113 = vadd.f32 %v544, %v1112
      %v1114 = vpop.f32.mrb[0].mxu0
      %1115 = vmatprep.mubr.bf16.mxu0 0
      %1116 = vmatmul.mubr.bf16.gmra.mrb[0].mxu0 %v692
      %v1117 = vpop.f32.mrb[0].mxu0
      %v1118 = vadd.f32 %v544, %v1117
      %v1119 = vpop.f32.mrb[0].mxu0
      %v1120 = vpop.f32.mrb[0].mxu0
      %v1121 = vadd.f32 %v544, %v1120
      %v1122 = vpop.f32.mrb[0].mxu0
      %1123 = vmatprep.mubr.bf16.mxu0 0
      %1124 = vmatmul.mubr.bf16.gmra.mrb[0].mxu0 %v695
      %v1125 = vpop.f32.mrb[0].mxu0
      %v1126 = vadd.f32 %v544, %v1125
      %v1127 = vpop.f32.mrb[0].mxu0
      %v1128 = vpop.f32.mrb[0].mxu0
      %v1129 = vadd.f32 %v544, %v1128
      %v1130 = vpop.f32.mrb[0].mxu0
      %1131 = vmatprep.mubr.bf16.mxu0 0
      %1132 = vmatmul.mubr.bf16.gmra.mrb[0].mxu0 %v698
      %v1133 = vpop.f32.mrb[0].mxu0
      %v1134 = vadd.f32 %v544, %v1133
      %v1135 = vpop.f32.mrb[0].mxu0
      %v1136 = vpop.f32.mrb[0].mxu0
      %v1137 = vadd.f32 %v544, %v1136
      %v1138 = vpop.f32.mrb[0].mxu0
      %1139 = vmatprep.mubr.bf16.mxu0 0
      %1140 = vmatmul.mubr.bf16.gmra.mrb[0].mxu0 %v701
      %v1141 = vpop.f32.mrb[0].mxu0
      %v1142 = vadd.f32 %v544, %v1141
      %v1143 = vpop.f32.mrb[0].mxu0
      %v1144 = vpop.f32.mrb[0].mxu0
      %v1145 = vadd.f32 %v544, %v1144
      %v1146 = vpop.f32.mrb[0].mxu0
      %1147 = vmatprep.mubr.bf16.mxu0 0
      %1148 = vmatmul.mubr.bf16.gmra.mrb[0].mxu0 %v704
      %v1149 = vpop.f32.mrb[0].mxu0
      %v1150 = vadd.f32 %v544, %v1149
      %v1151 = vpop.f32.mrb[0].mxu0
      %v1152 = vpop.f32.mrb[0].mxu0
      %v1153 = vadd.f32 %v544, %v1152
      %v1154 = vpop.f32.mrb[0].mxu0
      %1155 = vmatprep.mubr.bf16.mxu0 0
      %1156 = vmatmul.mubr.bf16.gmra.mrb[0].mxu0 %v707
      %v1157 = vpop.f32.mrb[0].mxu0
      %v1158 = vadd.f32 %v544, %v1157
      %v1159 = vpop.f32.mrb[0].mxu0
      %v1160 = vpop.f32.mrb[0].mxu0
      %v1161 = vadd.f32 %v544, %v1160
      %v1162 = vpop.f32.mrb[0].mxu0
      %1163 = vmatprep.mubr.bf16.mxu0 0
      %1164 = vmatmul.mubr.bf16.gmra.mrb[0].mxu0 %v710
      %v1165 = vpop.f32.mrb[0].mxu0
      %v1166 = vadd.f32 %v544, %v1165
      %v1167 = vpop.f32.mrb[0].mxu0
      %v1168 = vpop.f32.mrb[0].mxu0
      %v1169 = vadd.f32 %v544, %v1168
      %v1170 = vpop.f32.mrb[0].mxu0
      %1171 = vmatprep.mubr.bf16.mxu0 0
      %1172 = vmatmul.mubr.bf16.gmra.mrb[0].mxu0 %v713
      %v1173 = vpop.f32.mrb[0].mxu0
      %v1174 = vadd.f32 %v544, %v1173
      %v1175 = vpop.f32.mrb[0].mxu0
      %v1176 = vpop.f32.mrb[0].mxu0
      %v1177 = vadd.f32 %v544, %v1176
      %v1178 = vpop.f32.mrb[0].mxu0
      %1179 = vmatprep.mubr.bf16.mxu0 0
      %1180 = vmatmul.mubr.bf16.gmra.mrb[0].mxu0 %v716
      %v1181 = vpop.f32.mrb[0].mxu0
      %v1182 = vadd.f32 %v544, %v1181
      %v1183 = vpop.f32.mrb[0].mxu0
      %v1184 = vpop.f32.mrb[0].mxu0
      %v1185 = vadd.f32 %v544, %v1184
      %v1186 = vpop.f32.mrb[0].mxu0
      %1187 = vmatprep.mubr.bf16.mxu0 0
      %1188 = vmatmul.mubr.bf16.gmra.mrb[0].mxu0 %v719
      %v1189 = vpop.f32.mrb[0].mxu0
      %v1190 = vadd.f32 %v544, %v1189
      %v1191 = vpop.f32.mrb[0].mxu0
      %v1192 = vpop.f32.mrb[0].mxu0
      %v1193 = vadd.f32 %v544, %v1192
      %v1194 = vpop.f32.mrb[0].mxu0
      %1195 = vmatprep.mubr.bf16.mxu0 0
      %1196 = vmatmul.mubr.bf16.gmra.mrb[0].mxu0 %v722
      %v1197 = vpop.f32.mrb[0].mxu0
      %v1198 = vadd.f32 %v544, %v1197
      %v1199 = vpop.f32.mrb[0].mxu0
      %v1200 = vpop.f32.mrb[0].mxu0
      %v1201 = vadd.f32 %v544, %v1200
      %v1202 = vpop.f32.mrb[0].mxu0
      %1203 = vmatprep.mubr.bf16.mxu0 0
      %1204 = vmatmul.mubr.bf16.gmra.mrb[0].mxu0 %v725
      %v1205 = vpop.f32.mrb[0].mxu0
      %v1206 = vadd.f32 %v544, %v1205
      %v1207 = vpop.f32.mrb[0].mxu0
      %v1208 = vpop.f32.mrb[0].mxu0
      %v1209 = vadd.f32 %v544, %v1208
      %v1210 = vpop.f32.mrb[0].mxu0
      %1211 = vmatprep.mubr.bf16.mxu0 0
      %1212 = vmatmul.mubr.bf16.gmra.mrb[0].mxu0 %v728
      %v1213 = vpop.f32.mrb[0].mxu0
      %v1214 = vadd.f32 %v544, %v1213
      %v1215 = vpop.f32.mrb[0].mxu0
      %v1216 = vpop.f32.mrb[0].mxu0
      %v1217 = vadd.f32 %v544, %v1216
      %v1218 = vpop.f32.mrb[0].mxu0
      %1219 = vmatprep.mubr.bf16.mxu0 0
      %1220 = vmatmul.mubr.bf16.gmra.mrb[0].mxu0 %v731
      %v1221 = vpop.f32.mrb[0].mxu0
      %v1222 = vadd.f32 %v544, %v1221
      %v1223 = vpop.f32.mrb[0].mxu0
      %v1224 = vpop.f32.mrb[0].mxu0
      %v1225 = vadd.f32 %v544, %v1224
      %v1226 = vpop.f32.mrb[0].mxu0
      %1227 = vmatprep.mubr.bf16.mxu0 0
      %1228 = vmatmul.mubr.bf16.gmra.mrb[0].mxu0 %v734
      %v1229 = vpop.f32.mrb[0].mxu0
      %v1230 = vadd.f32 %v544, %v1229
      %v1231 = vpop.f32.mrb[0].mxu0
      %v1232 = vpop.f32.mrb[0].mxu0
      %v1233 = vadd.f32 %v544, %v1232
      %v1234 = vpop.f32.mrb[0].mxu0
      %1235 = vmatprep.mubr.bf16.mxu0 0
      %1236 = vmatmul.mubr.bf16.gmra.mrb[0].mxu0 %v737
      %v1237 = vpop.f32.mrb[0].mxu0
      %v1238 = vadd.f32 %v544, %v1237
      %v1239 = vpop.f32.mrb[0].mxu0
      %v1240 = vpop.f32.mrb[0].mxu0
      %v1241 = vadd.f32 %v544, %v1240
      %v1242 = vpop.f32.mrb[0].mxu0
      %1243 = vmatprep.mubr.bf16.mxu0 0
      %1244 = vmatmul.mubr.bf16.gmra.mrb[0].mxu0 %v740
      %v1245 = vpop.f32.mrb[0].mxu0
      %v1246 = vadd.f32 %v544, %v1245
      %v1247 = vpop.f32.mrb[0].mxu0
      %v1248 = vpop.f32.mrb[0].mxu0
      %v1249 = vadd.f32 %v544, %v1248
      %v1250 = vpop.f32.mrb[0].mxu0
      %1251 = vmatprep.mubr.bf16.mxu0 0
      %1252 = vmatmul.mubr.bf16.gmra.mrb[0].mxu0 %v743
      %v1253 = vpop.f32.mrb[0].mxu0
      %v1254 = vadd.f32 %v544, %v1253
      %v1255 = vpop.f32.mrb[0].mxu0
      %v1256 = vpop.f32.mrb[0].mxu0
      %v1257 = vadd.f32 %v544, %v1256
      %v1258 = vpop.f32.mrb[0].mxu0
      %1259 = vmatprep.mubr.bf16.mxu0 0
      %1260 = vmatmul.mubr.bf16.gmra.mrb[0].mxu0 %v746
      %v1261 = vpop.f32.mrb[0].mxu0
      %v1262 = vadd.f32 %v544, %v1261
      %v1263 = vpop.f32.mrb[0].mxu0
      %v1264 = vpop.f32.mrb[0].mxu0
      %v1265 = vadd.f32 %v544, %v1264
      %v1266 = vpop.f32.mrb[0].mxu0
      %1267 = vmatprep.mubr.bf16.mxu0 0
      %1268 = vmatmul.mubr.bf16.gmra.mrb[0].mxu0 %v749
      %v1269 = vpop.f32.mrb[0].mxu0
      %v1270 = vadd.f32 %v544, %v1269
      %v1271 = vpop.f32.mrb[0].mxu0
      %v1272 = vpop.f32.mrb[0].mxu0
      %v1273 = vadd.f32 %v544, %v1272
      %v1274 = vpop.f32.mrb[0].mxu0
      %1275 = vmatprep.mubr.bf16.mxu0 0
      %1276 = vmatmul.mubr.bf16.gmra.mrb[0].mxu0 %v752
      %v1277 = vpop.f32.mrb[0].mxu0
      %v1278 = vadd.f32 %v544, %v1277
      %v1279 = vpop.f32.mrb[0].mxu0
      %v1280 = vpop.f32.mrb[0].mxu0
      %v1281 = vadd.f32 %v544, %v1280
      %v1282 = vpop.f32.mrb[0].mxu0
      %1283 = vmatprep.mubr.bf16.mxu0 0
      %1284 = vmatmul.mubr.bf16.gmra.mrb[0].mxu0 %v755
      %v1285 = vpop.f32.mrb[0].mxu0
      %v1286 = vadd.f32 %v544, %v1285
      %v1287 = vpop.f32.mrb[0].mxu0
      %v1288 = vpop.f32.mrb[0].mxu0
      %v1289 = vadd.f32 %v544, %v1288
      %v1290 = vpop.f32.mrb[0].mxu0
      %1291 = vmatprep.mubr.bf16.mxu0 0
      %1292 = vmatmul.mubr.bf16.gmra.mrb[0].mxu0 %v758
      %v1293 = vpop.f32.mrb[0].mxu0
      %v1294 = vadd.f32 %v544, %v1293
      %v1295 = vpop.f32.mrb[0].mxu0
      %v1296 = vpop.f32.mrb[0].mxu0
      %v1297 = vadd.f32 %v544, %v1296
      %v1298 = vpop.f32.mrb[0].mxu0
      %1299 = vmatprep.mubr.bf16.mxu0 0
      %1300 = vmatmul.mubr.bf16.gmra.mrb[0].mxu0 %v761
      %v1301 = vpop.f32.mrb[0].mxu0
      %v1302 = vadd.f32 %v544, %v1301
      %v1303 = vpop.f32.mrb[0].mxu0
      %v1304 = vpop.f32.mrb[0].mxu0
      %v1305 = vadd.f32 %v544, %v1304
      %v1306 = vpop.f32.mrb[0].mxu0
      %1307 = vdwg.mxu0
      %v1308 = vmax.f32 %v798, 0.0
      %v1309 = vmax.f32 %v801, 0.0
      %v1310 = vmax.f32 %v806, 0.0
      %v1311 = vmax.f32 %v809, 0.0
      %v1312 = vmax.f32 %v814, 0.0
      %v1313 = vmax.f32 %v817, 0.0
      %v1314 = vmax.f32 %v822, 0.0
      %v1315 = vmax.f32 %v825, 0.0
      %v1316 = vmax.f32 %v830, 0.0
      %v1317 = vmax.f32 %v833, 0.0
      %v1318 = vmax.f32 %v838, 0.0
      %v1319 = vmax.f32 %v841, 0.0
      %v1320 = vmax.f32 %v846, 0.0
      %v1321 = vmax.f32 %v849, 0.0
      %v1322 = vmax.f32 %v854, 0.0
      %v1323 = vmax.f32 %v857, 0.0
      %v1324 = vmax.f32 %v862, 0.0
      %v1325 = vmax.f32 %v865, 0.0
      %v1326 = vmax.f32 %v870, 0.0
      %v1327 = vmax.f32 %v873, 0.0
      %v1328 = vmax.f32 %v878, 0.0
      %v1329 = vmax.f32 %v881, 0.0
      %v1330 = vmax.f32 %v886, 0.0
      %v1331 = vmax.f32 %v889, 0.0
      %v1332 = vmax.f32 %v894, 0.0
      %v1333 = vmax.f32 %v897, 0.0
      %v1334 = vmax.f32 %v902, 0.0
      %v1335 = vmax.f32 %v905, 0.0
      %v1336 = vmax.f32 %v910, 0.0
      %v1337 = vmax.f32 %v913, 0.0
      %v1338 = vmax.f32 %v918, 0.0
      %v1339 = vmax.f32 %v921, 0.0
      %v1340 = vmax.f32 %v926, 0.0
      %v1341 = vmax.f32 %v929, 0.0
      %v1342 = vmax.f32 %v934, 0.0
      %v1343 = vmax.f32 %v937, 0.0
      %v1344 = vmax.f32 %v942, 0.0
      %v1345 = vmax.f32 %v945, 0.0
      %v1346 = vmax.f32 %v950, 0.0
      %v1347 = vmax.f32 %v953, 0.0
      %v1348 = vmax.f32 %v958, 0.0
      %v1349 = vmax.f32 %v961, 0.0
      %v1350 = vmax.f32 %v966, 0.0
      %v1351 = vmax.f32 %v969, 0.0
      %v1352 = vmax.f32 %v974, 0.0
      %v1353 = vmax.f32 %v977, 0.0
      %v1354 = vmax.f32 %v982, 0.0
      %v1355 = vmax.f32 %v985, 0.0
      %v1356 = vmax.f32 %v990, 0.0
      %v1357 = vmax.f32 %v993, 0.0
      %v1358 = vmax.f32 %v998, 0.0
      %v1359 = vmax.f32 %v1001, 0.0
      %v1360 = vmax.f32 %v1006, 0.0
      %v1361 = vmax.f32 %v1009, 0.0
      %v1362 = vmax.f32 %v1014, 0.0
      %v1363 = vmax.f32 %v1017, 0.0
      %v1364 = vmax.f32 %v1022, 0.0
      %v1365 = vmax.f32 %v1025, 0.0
      %v1366 = vmax.f32 %v1030, 0.0
      %v1367 = vmax.f32 %v1033, 0.0
      %v1368 = vmax.f32 %v1038, 0.0
      %v1369 = vmax.f32 %v1041, 0.0
      %v1370 = vmax.f32 %v1046, 0.0
      %v1371 = vmax.f32 %v1049, 0.0
      %v1372 = vmax.f32 %v1054, 0.0
      %v1373 = vmax.f32 %v1057, 0.0
      %v1374 = vmax.f32 %v1062, 0.0
      %v1375 = vmax.f32 %v1065, 0.0
      %v1376 = vmax.f32 %v1070, 0.0
      %v1377 = vmax.f32 %v1073, 0.0
      %v1378 = vmax.f32 %v1078, 0.0
      %v1379 = vmax.f32 %v1081, 0.0
      %v1380 = vmax.f32 %v1086, 0.0
      %v1381 = vmax.f32 %v1089, 0.0
      %v1382 = vmax.f32 %v1094, 0.0
      %v1383 = vmax.f32 %v1097, 0.0
      %v1384 = vmax.f32 %v1102, 0.0
      %v1385 = vmax.f32 %v1105, 0.0
      %v1386 = vmax.f32 %v1110, 0.0
      %v1387 = vmax.f32 %v1113, 0.0
      %v1388 = vmax.f32 %v1118, 0.0
      %v1389 = vmax.f32 %v1121, 0.0
      %v1390 = vmax.f32 %v1126, 0.0
      %v1391 = vmax.f32 %v1129, 0.0
      %v1392 = vmax.f32 %v1134, 0.0
      %v1393 = vmax.f32 %v1137, 0.0
      %v1394 = vmax.f32 %v1142, 0.0
      %v1395 = vmax.f32 %v1145, 0.0
      %v1396 = vmax.f32 %v1150, 0.0
      %v1397 = vmax.f32 %v1153, 0.0
      %v1398 = vmax.f32 %v1158, 0.0
      %v1399 = vmax.f32 %v1161, 0.0
      %v1400 = vmax.f32 %v1166, 0.0
      %v1401 = vmax.f32 %v1169, 0.0
      %v1402 = vmax.f32 %v1174, 0.0
      %v1403 = vmax.f32 %v1177, 0.0
      %v1404 = vmax.f32 %v1182, 0.0
      %v1405 = vmax.f32 %v1185, 0.0
      %v1406 = vmax.f32 %v1190, 0.0
      %v1407 = vmax.f32 %v1193, 0.0
      %v1408 = vmax.f32 %v1198, 0.0
      %v1409 = vmax.f32 %v1201, 0.0
      %v1410 = vmax.f32 %v1206, 0.0
      %v1411 = vmax.f32 %v1209, 0.0
      %v1412 = vmax.f32 %v1214, 0.0
      %v1413 = vmax.f32 %v1217, 0.0
      %v1414 = vmax.f32 %v1222, 0.0
      %v1415 = vmax.f32 %v1225, 0.0
      %v1416 = vmax.f32 %v1230, 0.0
      %v1417 = vmax.f32 %v1233, 0.0
      %v1418 = vmax.f32 %v1238, 0.0
      %v1419 = vmax.f32 %v1241, 0.0
      %v1420 = vmax.f32 %v1246, 0.0
      %v1421 = vmax.f32 %v1249, 0.0
      %v1422 = vmax.f32 %v1254, 0.0
      %v1423 = vmax.f32 %v1257, 0.0
      %v1424 = vmax.f32 %v1262, 0.0
      %v1425 = vmax.f32 %v1265, 0.0
      %v1426 = vmax.f32 %v1270, 0.0
      %v1427 = vmax.f32 %v1273, 0.0
      %v1428 = vmax.f32 %v1278, 0.0
      %v1429 = vmax.f32 %v1281, 0.0
      %v1430 = vmax.f32 %v1286, 0.0
      %v1431 = vmax.f32 %v1289, 0.0
      %v1432 = vmax.f32 %v1294, 0.0
      %v1433 = vmax.f32 %v1297, 0.0
      %v1434 = vmax.f32 %v1302, 0.0
      %v1435 = vmax.f32 %v1305, 0.0
      %v1436 = vpack.c.bf16 %v1309, %v1308
      %v1437 = vpack.c.bf16 %v1311, %v1310
      %v1438 = vpack.c.bf16 %v1313, %v1312
      %v1439 = vpack.c.bf16 %v1315, %v1314
      %v1440 = vpack.c.bf16 %v1317, %v1316
      %v1441 = vpack.c.bf16 %v1319, %v1318
      %v1442 = vpack.c.bf16 %v1321, %v1320
      %v1443 = vpack.c.bf16 %v1323, %v1322
      %v1444 = vpack.c.bf16 %v1325, %v1324
      %v1445 = vpack.c.bf16 %v1327, %v1326
      %v1446 = vpack.c.bf16 %v1329, %v1328
      %v1447 = vpack.c.bf16 %v1331, %v1330
      %v1448 = vpack.c.bf16 %v1333, %v1332
      %v1449 = vpack.c.bf16 %v1335, %v1334
      %v1450 = vpack.c.bf16 %v1337, %v1336
      %v1451 = vpack.c.bf16 %v1339, %v1338
      %v1452 = vpack.c.bf16 %v1341, %v1340
      %v1453 = vpack.c.bf16 %v1343, %v1342
      %v1454 = vpack.c.bf16 %v1345, %v1344
      %v1455 = vpack.c.bf16 %v1347, %v1346
      %v1456 = vpack.c.bf16 %v1349, %v1348
      %v1457 = vpack.c.bf16 %v1351, %v1350
      %v1458 = vpack.c.bf16 %v1353, %v1352
      %v1459 = vpack.c.bf16 %v1355, %v1354
      %v1460 = vpack.c.bf16 %v1357, %v1356
      %v1461 = vpack.c.bf16 %v1359, %v1358
      %v1462 = vpack.c.bf16 %v1361, %v1360
      %v1463 = vpack.c.bf16 %v1363, %v1362
      %v1464 = vpack.c.bf16 %v1365, %v1364
      %v1465 = vpack.c.bf16 %v1367, %v1366
      %v1466 = vpack.c.bf16 %v1369, %v1368
      %v1467 = vpack.c.bf16 %v1371, %v1370
      %v1468 = vpack.c.bf16 %v1373, %v1372
      %v1469 = vpack.c.bf16 %v1375, %v1374
      %v1470 = vpack.c.bf16 %v1377, %v1376
      %v1471 = vpack.c.bf16 %v1379, %v1378
      %v1472 = vpack.c.bf16 %v1381, %v1380
      %v1473 = vpack.c.bf16 %v1383, %v1382
      %v1474 = vpack.c.bf16 %v1385, %v1384
      %v1475 = vpack.c.bf16 %v1387, %v1386
      %v1476 = vpack.c.bf16 %v1389, %v1388
      %v1477 = vpack.c.bf16 %v1391, %v1390
      %v1478 = vpack.c.bf16 %v1393, %v1392
      %v1479 = vpack.c.bf16 %v1395, %v1394
      %v1480 = vpack.c.bf16 %v1397, %v1396
      %v1481 = vpack.c.bf16 %v1399, %v1398
      %v1482 = vpack.c.bf16 %v1401, %v1400
      %v1483 = vpack.c.bf16 %v1403, %v1402
      %v1484 = vpack.c.bf16 %v1405, %v1404
      %v1485 = vpack.c.bf16 %v1407, %v1406
      %v1486 = vpack.c.bf16 %v1409, %v1408
      %v1487 = vpack.c.bf16 %v1411, %v1410
      %v1488 = vpack.c.bf16 %v1413, %v1412
      %v1489 = vpack.c.bf16 %v1415, %v1414
      %v1490 = vpack.c.bf16 %v1417, %v1416
      %v1491 = vpack.c.bf16 %v1419, %v1418
      %v1492 = vpack.c.bf16 %v1421, %v1420
      %v1493 = vpack.c.bf16 %v1423, %v1422
      %v1494 = vpack.c.bf16 %v1425, %v1424
      %v1495 = vpack.c.bf16 %v1427, %v1426
      %v1496 = vpack.c.bf16 %v1429, %v1428
      %v1497 = vpack.c.bf16 %v1431, %v1430
      %v1498 = vpack.c.bf16 %v1433, %v1432
      %v1499 = vpack.c.bf16 %v1435, %v1434
      %v1500 = vld [vmem:[%s3] sm:$0xf]
      %v1501 = vld [vmem:[%s3 + $0x4] sm:$0xf]
      %v1502 = vld [vmem:[%s3 + $0x8] sm:$0xf]
      %v1503 = vld [vmem:[%s3 + $0xc] sm:$0xf]
      %v1504 = vld [vmem:[%s3 + $0x10] sm:$0xf]
      %v1505 = vld [vmem:[%s3 + $0x14] sm:$0xf]
      %v1506 = vld [vmem:[%s3 + $0x18] sm:$0xf]
      %v1507 = vld [vmem:[%s3 + $0x1c] sm:$0xf]
      %v1508 = vld [vmem:[%s4] sm:$0x1]
      %v1510 = vlaneseq
      %v1511 = vshrl.u32 %v1510, 7
      %v1512 = vsub.s32 0, %v1511
      %v1513 = vrot.slane %v1508, %v1512
      %v1523 = vunpack.c.l.b16 %v1500
      %v1524 = vunpack.c.l.b16 %v1501
      %v1525 = vunpack.c.l.b16 %v1502
      %v1526 = vunpack.c.l.b16 %v1503
      %v1527 = vunpack.c.l.b16 %v1504
      %v1528 = vunpack.c.l.b16 %v1505
      %v1529 = vunpack.c.l.b16 %v1506
      %v1530 = vunpack.c.l.b16 %v1507
      %v1531 = vpack.c.b16 %v1524, %v1523
      %v1532 = vpack.c.b16 %v1526, %v1525
      %v1533 = vpack.c.b16 %v1528, %v1527
      %v1534 = vpack.c.b16 %v1530, %v1529
      %v1540 = vsel %vm570, %v1436, 0
      %v1543 = vsel %vm570, %v1437, 0
      %v1546 = vsel %vm570, %v1438, 0
      %v1549 = vsel %vm570, %v1439, 0
      %v1552 = vsel %vm570, %v1440, 0
      %v1555 = vsel %vm570, %v1441, 0
      %v1558 = vsel %vm570, %v1442, 0
      %v1561 = vsel %vm570, %v1443, 0
      %v1564 = vsel %vm570, %v1444, 0
      %v1567 = vsel %vm570, %v1445, 0
      %v1570 = vsel %vm570, %v1446, 0
      %v1573 = vsel %vm570, %v1447, 0
      %v1576 = vsel %vm570, %v1448, 0
      %v1579 = vsel %vm570, %v1449, 0
      %v1582 = vsel %vm570, %v1450, 0
      %v1585 = vsel %vm570, %v1451, 0
      %v1588 = vsel %vm570, %v1452, 0
      %v1591 = vsel %vm570, %v1453, 0
      %v1594 = vsel %vm570, %v1454, 0
      %v1597 = vsel %vm570, %v1455, 0
      %v1600 = vsel %vm570, %v1456, 0
      %v1603 = vsel %vm570, %v1457, 0
      %v1606 = vsel %vm570, %v1458, 0
      %v1609 = vsel %vm570, %v1459, 0
      %v1612 = vsel %vm570, %v1460, 0
      %v1615 = vsel %vm570, %v1461, 0
      %v1618 = vsel %vm570, %v1462, 0
      %v1621 = vsel %vm570, %v1463, 0
      %v1624 = vsel %vm570, %v1464, 0
      %v1627 = vsel %vm570, %v1465, 0
      %v1630 = vsel %vm570, %v1466, 0
      %v1633 = vsel %vm570, %v1467, 0
      %v1636 = vsel %vm570, %v1468, 0
      %v1639 = vsel %vm570, %v1469, 0
      %v1642 = vsel %vm570, %v1470, 0
      %v1645 = vsel %vm570, %v1471, 0
      %v1648 = vsel %vm570, %v1472, 0
      %v1651 = vsel %vm570, %v1473, 0
      %v1654 = vsel %vm570, %v1474, 0
      %v1657 = vsel %vm570, %v1475, 0
      %v1660 = vsel %vm570, %v1476, 0
      %v1663 = vsel %vm570, %v1477, 0
      %v1666 = vsel %vm570, %v1478, 0
      %v1669 = vsel %vm570, %v1479, 0
      %v1672 = vsel %vm570, %v1480, 0
      %v1675 = vsel %vm570, %v1481, 0
      %v1678 = vsel %vm570, %v1482, 0
      %v1681 = vsel %vm570, %v1483, 0
      %v1684 = vsel %vm570, %v1484, 0
      %v1687 = vsel %vm570, %v1485, 0
      %v1690 = vsel %vm570, %v1486, 0
      %v1693 = vsel %vm570, %v1487, 0
      %v1696 = vsel %vm570, %v1488, 0
      %v1699 = vsel %vm570, %v1489, 0
      %v1702 = vsel %vm570, %v1490, 0
      %v1705 = vsel %vm570, %v1491, 0
      %v1708 = vsel %vm570, %v1492, 0
      %v1711 = vsel %vm570, %v1493, 0
      %v1714 = vsel %vm570, %v1494, 0
      %v1717 = vsel %vm570, %v1495, 0
      %v1720 = vsel %vm570, %v1496, 0
      %v1723 = vsel %vm570, %v1497, 0
      %v1726 = vsel %vm570, %v1498, 0
      %v1729 = vsel %vm570, %v1499, 0
      %1731 = vmatprep.subr.bf16.mxu0 0
      %1732 = vmatpush1.bf16.msra.mxu0 %v1531
      %1733 = vmatprep.subr.bf16.mxu0 0
      %1734 = vmatpush1.bf16.msra.mxu0 %v1532
      %1735 = vmatprep.subr.bf16.mxu0 0
      %1736 = vmatpush1.bf16.msra.mxu0 %v1533
      %1737 = vmatprep.subr.bf16.mxu0 0
      %1738 = vmatpush1.bf16.msra.mxu0 %v1534
      %1739 = vmatprep.subr.bf16.mxu0 0
      %1740 = vmatpush1.bf16.msra.mxu0 0
      %1741 = vmatprep.subr.bf16.mxu0 0
      %1742 = vmatpush1.bf16.msra.mxu0 0
      %1743 = vmatprep.subr.bf16.mxu0 0
      %1744 = vmatpush1.bf16.msra.mxu0 0
      %1745 = vmatprep.subr.bf16.mxu0 0
      %1746 = vmatpush1.bf16.msra.mxu0 0
      %1747 = vmatprep.subr.bf16.mxu0 0
      %1748 = vmatpush1.bf16.msra.mxu0 0
      %1749 = vmatprep.subr.bf16.mxu0 0
      %1750 = vmatpush1.bf16.msra.mxu0 0
      %1751 = vmatprep.subr.bf16.mxu0 0
      %1752 = vmatpush1.bf16.msra.mxu0 0
      %1753 = vmatprep.subr.bf16.mxu0 0
      %1754 = vmatpush1.bf16.msra.mxu0 0
      %1755 = vmatprep.subr.bf16.mxu0 0
      %1756 = vmatpush1.bf16.msra.mxu0 0
      %1757 = vmatprep.subr.bf16.mxu0 0
      %1758 = vmatpush1.bf16.msra.mxu0 0
      %1759 = vmatprep.subr.bf16.mxu0 0
      %1760 = vmatpush1.bf16.msra.mxu0 0
      %1761 = vmatprep.subr.bf16.mxu0 0
      %1762 = vmatpush1.bf16.msra.mxu0 0
      %1763 = vmatprep.mubr.bf16.mxu0 0
      %1764 = vmatmul.mubr.bf16.gmra.mrb[0].mxu0 %v1540
      %v1765 = vpop.f32.mrb[0].mxu0
      %v1766 = vadd.f32 %v1513, %v1765
      %v1767 = vpop.f32.mrb[0].mxu0
      %v1768 = vpop.f32.mrb[0].mxu0
      %v1769 = vadd.f32 %v1513, %v1768
      %v1770 = vpop.f32.mrb[0].mxu0
      %1771 = vmatprep.mubr.bf16.mxu0 0
      %1772 = vmatmul.mubr.bf16.gmra.mrb[0].mxu0 %v1543
      %v1773 = vpop.f32.mrb[0].mxu0
      %v1774 = vadd.f32 %v1513, %v1773
      %v1775 = vpop.f32.mrb[0].mxu0
      %v1776 = vpop.f32.mrb[0].mxu0
      %v1777 = vadd.f32 %v1513, %v1776
      %v1778 = vpop.f32.mrb[0].mxu0
      %1779 = vmatprep.mubr.bf16.mxu0 0
      %1780 = vmatmul.mubr.bf16.gmra.mrb[0].mxu0 %v1546
      %v1781 = vpop.f32.mrb[0].mxu0
      %v1782 = vadd.f32 %v1513, %v1781
      %v1783 = vpop.f32.mrb[0].mxu0
      %v1784 = vpop.f32.mrb[0].mxu0
      %v1785 = vadd.f32 %v1513, %v1784
      %v1786 = vpop.f32.mrb[0].mxu0
      %1787 = vmatprep.mubr.bf16.mxu0 0
      %1788 = vmatmul.mubr.bf16.gmra.mrb[0].mxu0 %v1549
      %v1789 = vpop.f32.mrb[0].mxu0
      %v1790 = vadd.f32 %v1513, %v1789
      %v1791 = vpop.f32.mrb[0].mxu0
      %v1792 = vpop.f32.mrb[0].mxu0
      %v1793 = vadd.f32 %v1513, %v1792
      %v1794 = vpop.f32.mrb[0].mxu0
      %1795 = vmatprep.mubr.bf16.mxu0 0
      %1796 = vmatmul.mubr.bf16.gmra.mrb[0].mxu0 %v1552
      %v1797 = vpop.f32.mrb[0].mxu0
      %v1798 = vadd.f32 %v1513, %v1797
      %v1799 = vpop.f32.mrb[0].mxu0
      %v1800 = vpop.f32.mrb[0].mxu0
      %v1801 = vadd.f32 %v1513, %v1800
      %v1802 = vpop.f32.mrb[0].mxu0
      %1803 = vmatprep.mubr.bf16.mxu0 0
      %1804 = vmatmul.mubr.bf16.gmra.mrb[0].mxu0 %v1555
      %v1805 = vpop.f32.mrb[0].mxu0
      %v1806 = vadd.f32 %v1513, %v1805
      %v1807 = vpop.f32.mrb[0].mxu0
      %v1808 = vpop.f32.mrb[0].mxu0
      %v1809 = vadd.f32 %v1513, %v1808
      %v1810 = vpop.f32.mrb[0].mxu0
      %1811 = vmatprep.mubr.bf16.mxu0 0
      %1812 = vmatmul.mubr.bf16.gmra.mrb[0].mxu0 %v1558
      %v1813 = vpop.f32.mrb[0].mxu0
      %v1814 = vadd.f32 %v1513, %v1813
      %v1815 = vpop.f32.mrb[0].mxu0
      %v1816 = vpop.f32.mrb[0].mxu0
      %v1817 = vadd.f32 %v1513, %v1816
      %v1818 = vpop.f32.mrb[0].mxu0
      %1819 = vmatprep.mubr.bf16.mxu0 0
      %1820 = vmatmul.mubr.bf16.gmra.mrb[0].mxu0 %v1561
      %v1821 = vpop.f32.mrb[0].mxu0
      %v1822 = vadd.f32 %v1513, %v1821
      %v1823 = vpop.f32.mrb[0].mxu0
      %v1824 = vpop.f32.mrb[0].mxu0
      %v1825 = vadd.f32 %v1513, %v1824
      %v1826 = vpop.f32.mrb[0].mxu0
      %1827 = vmatprep.mubr.bf16.mxu0 0
      %1828 = vmatmul.mubr.bf16.gmra.mrb[0].mxu0 %v1564
      %v1829 = vpop.f32.mrb[0].mxu0
      %v1830 = vadd.f32 %v1513, %v1829
      %v1831 = vpop.f32.mrb[0].mxu0
      %v1832 = vpop.f32.mrb[0].mxu0
      %v1833 = vadd.f32 %v1513, %v1832
      %v1834 = vpop.f32.mrb[0].mxu0
      %1835 = vmatprep.mubr.bf16.mxu0 0
      %1836 = vmatmul.mubr.bf16.gmra.mrb[0].mxu0 %v1567
      %v1837 = vpop.f32.mrb[0].mxu0
      %v1838 = vadd.f32 %v1513, %v1837
      %v1839 = vpop.f32.mrb[0].mxu0
      %v1840 = vpop.f32.mrb[0].mxu0
      %v1841 = vadd.f32 %v1513, %v1840
      %v1842 = vpop.f32.mrb[0].mxu0
      %1843 = vmatprep.mubr.bf16.mxu0 0
      %1844 = vmatmul.mubr.bf16.gmra.mrb[0].mxu0 %v1570
      %v1845 = vpop.f32.mrb[0].mxu0
      %v1846 = vadd.f32 %v1513, %v1845
      %v1847 = vpop.f32.mrb[0].mxu0
      %v1848 = vpop.f32.mrb[0].mxu0
      %v1849 = vadd.f32 %v1513, %v1848
      %v1850 = vpop.f32.mrb[0].mxu0
      %1851 = vmatprep.mubr.bf16.mxu0 0
      %1852 = vmatmul.mubr.bf16.gmra.mrb[0].mxu0 %v1573
      %v1853 = vpop.f32.mrb[0].mxu0
      %v1854 = vadd.f32 %v1513, %v1853
      %v1855 = vpop.f32.mrb[0].mxu0
      %v1856 = vpop.f32.mrb[0].mxu0
      %v1857 = vadd.f32 %v1513, %v1856
      %v1858 = vpop.f32.mrb[0].mxu0
      %1859 = vmatprep.mubr.bf16.mxu0 0
      %1860 = vmatmul.mubr.bf16.gmra.mrb[0].mxu0 %v1576
      %v1861 = vpop.f32.mrb[0].mxu0
      %v1862 = vadd.f32 %v1513, %v1861
      %v1863 = vpop.f32.mrb[0].mxu0
      %v1864 = vpop.f32.mrb[0].mxu0
      %v1865 = vadd.f32 %v1513, %v1864
      %v1866 = vpop.f32.mrb[0].mxu0
      %1867 = vmatprep.mubr.bf16.mxu0 0
      %1868 = vmatmul.mubr.bf16.gmra.mrb[0].mxu0 %v1579
      %v1869 = vpop.f32.mrb[0].mxu0
      %v1870 = vadd.f32 %v1513, %v1869
      %v1871 = vpop.f32.mrb[0].mxu0
      %v1872 = vpop.f32.mrb[0].mxu0
      %v1873 = vadd.f32 %v1513, %v1872
      %v1874 = vpop.f32.mrb[0].mxu0
      %1875 = vmatprep.mubr.bf16.mxu0 0
      %1876 = vmatmul.mubr.bf16.gmra.mrb[0].mxu0 %v1582
      %v1877 = vpop.f32.mrb[0].mxu0
      %v1878 = vadd.f32 %v1513, %v1877
      %v1879 = vpop.f32.mrb[0].mxu0
      %v1880 = vpop.f32.mrb[0].mxu0
      %v1881 = vadd.f32 %v1513, %v1880
      %v1882 = vpop.f32.mrb[0].mxu0
      %1883 = vmatprep.mubr.bf16.mxu0 0
      %1884 = vmatmul.mubr.bf16.gmra.mrb[0].mxu0 %v1585
      %v1885 = vpop.f32.mrb[0].mxu0
      %v1886 = vadd.f32 %v1513, %v1885
      %v1887 = vpop.f32.mrb[0].mxu0
      %v1888 = vpop.f32.mrb[0].mxu0
      %v1889 = vadd.f32 %v1513, %v1888
      %v1890 = vpop.f32.mrb[0].mxu0
      %1891 = vmatprep.mubr.bf16.mxu0 0
      %1892 = vmatmul.mubr.bf16.gmra.mrb[0].mxu0 %v1588
      %v1893 = vpop.f32.mrb[0].mxu0
      %v1894 = vadd.f32 %v1513, %v1893
      %v1895 = vpop.f32.mrb[0].mxu0
      %v1896 = vpop.f32.mrb[0].mxu0
      %v1897 = vadd.f32 %v1513, %v1896
      %v1898 = vpop.f32.mrb[0].mxu0
      %1899 = vmatprep.mubr.bf16.mxu0 0
      %1900 = vmatmul.mubr.bf16.gmra.mrb[0].mxu0 %v1591
      %v1901 = vpop.f32.mrb[0].mxu0
      %v1902 = vadd.f32 %v1513, %v1901
      %v1903 = vpop.f32.mrb[0].mxu0
      %v1904 = vpop.f32.mrb[0].mxu0
      %v1905 = vadd.f32 %v1513, %v1904
      %v1906 = vpop.f32.mrb[0].mxu0
      %1907 = vmatprep.mubr.bf16.mxu0 0
      %1908 = vmatmul.mubr.bf16.gmra.mrb[0].mxu0 %v1594
      %v1909 = vpop.f32.mrb[0].mxu0
      %v1910 = vadd.f32 %v1513, %v1909
      %v1911 = vpop.f32.mrb[0].mxu0
      %v1912 = vpop.f32.mrb[0].mxu0
      %v1913 = vadd.f32 %v1513, %v1912
      %v1914 = vpop.f32.mrb[0].mxu0
      %1915 = vmatprep.mubr.bf16.mxu0 0
      %1916 = vmatmul.mubr.bf16.gmra.mrb[0].mxu0 %v1597
      %v1917 = vpop.f32.mrb[0].mxu0
      %v1918 = vadd.f32 %v1513, %v1917
      %v1919 = vpop.f32.mrb[0].mxu0
      %v1920 = vpop.f32.mrb[0].mxu0
      %v1921 = vadd.f32 %v1513, %v1920
      %v1922 = vpop.f32.mrb[0].mxu0
      %1923 = vmatprep.mubr.bf16.mxu0 0
      %1924 = vmatmul.mubr.bf16.gmra.mrb[0].mxu0 %v1600
      %v1925 = vpop.f32.mrb[0].mxu0
      %v1926 = vadd.f32 %v1513, %v1925
      %v1927 = vpop.f32.mrb[0].mxu0
      %v1928 = vpop.f32.mrb[0].mxu0
      %v1929 = vadd.f32 %v1513, %v1928
      %v1930 = vpop.f32.mrb[0].mxu0
      %1931 = vmatprep.mubr.bf16.mxu0 0
      %1932 = vmatmul.mubr.bf16.gmra.mrb[0].mxu0 %v1603
      %v1933 = vpop.f32.mrb[0].mxu0
      %v1934 = vadd.f32 %v1513, %v1933
      %v1935 = vpop.f32.mrb[0].mxu0
      %v1936 = vpop.f32.mrb[0].mxu0
      %v1937 = vadd.f32 %v1513, %v1936
      %v1938 = vpop.f32.mrb[0].mxu0
      %1939 = vmatprep.mubr.bf16.mxu0 0
      %1940 = vmatmul.mubr.bf16.gmra.mrb[0].mxu0 %v1606
      %v1941 = vpop.f32.mrb[0].mxu0
      %v1942 = vadd.f32 %v1513, %v1941
      %v1943 = vpop.f32.mrb[0].mxu0
      %v1944 = vpop.f32.mrb[0].mxu0
      %v1945 = vadd.f32 %v1513, %v1944
      %v1946 = vpop.f32.mrb[0].mxu0
      %1947 = vmatprep.mubr.bf16.mxu0 0
      %1948 = vmatmul.mubr.bf16.gmra.mrb[0].mxu0 %v1609
      %v1949 = vpop.f32.mrb[0].mxu0
      %v1950 = vadd.f32 %v1513, %v1949
      %v1951 = vpop.f32.mrb[0].mxu0
      %v1952 = vpop.f32.mrb[0].mxu0
      %v1953 = vadd.f32 %v1513, %v1952
      %v1954 = vpop.f32.mrb[0].mxu0
      %1955 = vmatprep.mubr.bf16.mxu0 0
      %1956 = vmatmul.mubr.bf16.gmra.mrb[0].mxu0 %v1612
      %v1957 = vpop.f32.mrb[0].mxu0
      %v1958 = vadd.f32 %v1513, %v1957
      %v1959 = vpop.f32.mrb[0].mxu0
      %v1960 = vpop.f32.mrb[0].mxu0
      %v1961 = vadd.f32 %v1513, %v1960
      %v1962 = vpop.f32.mrb[0].mxu0
      %1963 = vmatprep.mubr.bf16.mxu0 0
      %1964 = vmatmul.mubr.bf16.gmra.mrb[0].mxu0 %v1615
      %v1965 = vpop.f32.mrb[0].mxu0
      %v1966 = vadd.f32 %v1513, %v1965
      %v1967 = vpop.f32.mrb[0].mxu0
      %v1968 = vpop.f32.mrb[0].mxu0
      %v1969 = vadd.f32 %v1513, %v1968
      %v1970 = vpop.f32.mrb[0].mxu0
      %1971 = vmatprep.mubr.bf16.mxu0 0
      %1972 = vmatmul.mubr.bf16.gmra.mrb[0].mxu0 %v1618
      %v1973 = vpop.f32.mrb[0].mxu0
      %v1974 = vadd.f32 %v1513, %v1973
      %v1975 = vpop.f32.mrb[0].mxu0
      %v1976 = vpop.f32.mrb[0].mxu0
      %v1977 = vadd.f32 %v1513, %v1976
      %v1978 = vpop.f32.mrb[0].mxu0
      %1979 = vmatprep.mubr.bf16.mxu0 0
      %1980 = vmatmul.mubr.bf16.gmra.mrb[0].mxu0 %v1621
      %v1981 = vpop.f32.mrb[0].mxu0
      %v1982 = vadd.f32 %v1513, %v1981
      %v1983 = vpop.f32.mrb[0].mxu0
      %v1984 = vpop.f32.mrb[0].mxu0
      %v1985 = vadd.f32 %v1513, %v1984
      %v1986 = vpop.f32.mrb[0].mxu0
      %1987 = vmatprep.mubr.bf16.mxu0 0
      %1988 = vmatmul.mubr.bf16.gmra.mrb[0].mxu0 %v1624
      %v1989 = vpop.f32.mrb[0].mxu0
      %v1990 = vadd.f32 %v1513, %v1989
      %v1991 = vpop.f32.mrb[0].mxu0
      %v1992 = vpop.f32.mrb[0].mxu0
      %v1993 = vadd.f32 %v1513, %v1992
      %v1994 = vpop.f32.mrb[0].mxu0
      %1995 = vmatprep.mubr.bf16.mxu0 0
      %1996 = vmatmul.mubr.bf16.gmra.mrb[0].mxu0 %v1627
      %v1997 = vpop.f32.mrb[0].mxu0
      %v1998 = vadd.f32 %v1513, %v1997
      %v1999 = vpop.f32.mrb[0].mxu0
      %v2000 = vpop.f32.mrb[0].mxu0
      %v2001 = vadd.f32 %v1513, %v2000
      %v2002 = vpop.f32.mrb[0].mxu0
      %2003 = vmatprep.mubr.bf16.mxu0 0
      %2004 = vmatmul.mubr.bf16.gmra.mrb[0].mxu0 %v1630
      %v2005 = vpop.f32.mrb[0].mxu0
      %v2006 = vadd.f32 %v1513, %v2005
      %v2007 = vpop.f32.mrb[0].mxu0
      %v2008 = vpop.f32.mrb[0].mxu0
      %v2009 = vadd.f32 %v1513, %v2008
      %v2010 = vpop.f32.mrb[0].mxu0
      %2011 = vmatprep.mubr.bf16.mxu0 0
      %2012 = vmatmul.mubr.bf16.gmra.mrb[0].mxu0 %v1633
      %v2013 = vpop.f32.mrb[0].mxu0
      %v2014 = vadd.f32 %v1513, %v2013
      %v2015 = vpop.f32.mrb[0].mxu0
      %v2016 = vpop.f32.mrb[0].mxu0
      %v2017 = vadd.f32 %v1513, %v2016
      %v2018 = vpop.f32.mrb[0].mxu0
      %2019 = vmatprep.mubr.bf16.mxu0 0
      %2020 = vmatmul.mubr.bf16.gmra.mrb[0].mxu0 %v1636
      %v2021 = vpop.f32.mrb[0].mxu0
      %v2022 = vadd.f32 %v1513, %v2021
      %v2023 = vpop.f32.mrb[0].mxu0
      %v2024 = vpop.f32.mrb[0].mxu0
      %v2025 = vadd.f32 %v1513, %v2024
      %v2026 = vpop.f32.mrb[0].mxu0
      %2027 = vmatprep.mubr.bf16.mxu0 0
      %2028 = vmatmul.mubr.bf16.gmra.mrb[0].mxu0 %v1639
      %v2029 = vpop.f32.mrb[0].mxu0
      %v2030 = vadd.f32 %v1513, %v2029
      %v2031 = vpop.f32.mrb[0].mxu0
      %v2032 = vpop.f32.mrb[0].mxu0
      %v2033 = vadd.f32 %v1513, %v2032
      %v2034 = vpop.f32.mrb[0].mxu0
      %2035 = vmatprep.mubr.bf16.mxu0 0
      %2036 = vmatmul.mubr.bf16.gmra.mrb[0].mxu0 %v1642
      %v2037 = vpop.f32.mrb[0].mxu0
      %v2038 = vadd.f32 %v1513, %v2037
      %v2039 = vpop.f32.mrb[0].mxu0
      %v2040 = vpop.f32.mrb[0].mxu0
      %v2041 = vadd.f32 %v1513, %v2040
      %v2042 = vpop.f32.mrb[0].mxu0
      %2043 = vmatprep.mubr.bf16.mxu0 0
      %2044 = vmatmul.mubr.bf16.gmra.mrb[0].mxu0 %v1645
      %v2045 = vpop.f32.mrb[0].mxu0
      %v2046 = vadd.f32 %v1513, %v2045
      %v2047 = vpop.f32.mrb[0].mxu0
      %v2048 = vpop.f32.mrb[0].mxu0
      %v2049 = vadd.f32 %v1513, %v2048
      %v2050 = vpop.f32.mrb[0].mxu0
      %2051 = vmatprep.mubr.bf16.mxu0 0
      %2052 = vmatmul.mubr.bf16.gmra.mrb[0].mxu0 %v1648
      %v2053 = vpop.f32.mrb[0].mxu0
      %v2054 = vadd.f32 %v1513, %v2053
      %v2055 = vpop.f32.mrb[0].mxu0
      %v2056 = vpop.f32.mrb[0].mxu0
      %v2057 = vadd.f32 %v1513, %v2056
      %v2058 = vpop.f32.mrb[0].mxu0
      %2059 = vmatprep.mubr.bf16.mxu0 0
      %2060 = vmatmul.mubr.bf16.gmra.mrb[0].mxu0 %v1651
      %v2061 = vpop.f32.mrb[0].mxu0
      %v2062 = vadd.f32 %v1513, %v2061
      %v2063 = vpop.f32.mrb[0].mxu0
      %v2064 = vpop.f32.mrb[0].mxu0
      %v2065 = vadd.f32 %v1513, %v2064
      %v2066 = vpop.f32.mrb[0].mxu0
      %2067 = vmatprep.mubr.bf16.mxu0 0
      %2068 = vmatmul.mubr.bf16.gmra.mrb[0].mxu0 %v1654
      %v2069 = vpop.f32.mrb[0].mxu0
      %v2070 = vadd.f32 %v1513, %v2069
      %v2071 = vpop.f32.mrb[0].mxu0
      %v2072 = vpop.f32.mrb[0].mxu0
      %v2073 = vadd.f32 %v1513, %v2072
      %v2074 = vpop.f32.mrb[0].mxu0
      %2075 = vmatprep.mubr.bf16.mxu0 0
      %2076 = vmatmul.mubr.bf16.gmra.mrb[0].mxu0 %v1657
      %v2077 = vpop.f32.mrb[0].mxu0
      %v2078 = vadd.f32 %v1513, %v2077
      %v2079 = vpop.f32.mrb[0].mxu0
      %v2080 = vpop.f32.mrb[0].mxu0
      %v2081 = vadd.f32 %v1513, %v2080
      %v2082 = vpop.f32.mrb[0].mxu0
      %2083 = vmatprep.mubr.bf16.mxu0 0
      %2084 = vmatmul.mubr.bf16.gmra.mrb[0].mxu0 %v1660
      %v2085 = vpop.f32.mrb[0].mxu0
      %v2086 = vadd.f32 %v1513, %v2085
      %v2087 = vpop.f32.mrb[0].mxu0
      %v2088 = vpop.f32.mrb[0].mxu0
      %v2089 = vadd.f32 %v1513, %v2088
      %v2090 = vpop.f32.mrb[0].mxu0
      %2091 = vmatprep.mubr.bf16.mxu0 0
      %2092 = vmatmul.mubr.bf16.gmra.mrb[0].mxu0 %v1663
      %v2093 = vpop.f32.mrb[0].mxu0
      %v2094 = vadd.f32 %v1513, %v2093
      %v2095 = vpop.f32.mrb[0].mxu0
      %v2096 = vpop.f32.mrb[0].mxu0
      %v2097 = vadd.f32 %v1513, %v2096
      %v2098 = vpop.f32.mrb[0].mxu0
      %2099 = vmatprep.mubr.bf16.mxu0 0
      %2100 = vmatmul.mubr.bf16.gmra.mrb[0].mxu0 %v1666
      %v2101 = vpop.f32.mrb[0].mxu0
      %v2102 = vadd.f32 %v1513, %v2101
      %v2103 = vpop.f32.mrb[0].mxu0
      %v2104 = vpop.f32.mrb[0].mxu0
      %v2105 = vadd.f32 %v1513, %v2104
      %v2106 = vpop.f32.mrb[0].mxu0
      %2107 = vmatprep.mubr.bf16.mxu0 0
      %2108 = vmatmul.mubr.bf16.gmra.mrb[0].mxu0 %v1669
      %v2109 = vpop.f32.mrb[0].mxu0
      %v2110 = vadd.f32 %v1513, %v2109
      %v2111 = vpop.f32.mrb[0].mxu0
      %v2112 = vpop.f32.mrb[0].mxu0
      %v2113 = vadd.f32 %v1513, %v2112
      %v2114 = vpop.f32.mrb[0].mxu0
      %2115 = vmatprep.mubr.bf16.mxu0 0
      %2116 = vmatmul.mubr.bf16.gmra.mrb[0].mxu0 %v1672
      %v2117 = vpop.f32.mrb[0].mxu0
      %v2118 = vadd.f32 %v1513, %v2117
      %v2119 = vpop.f32.mrb[0].mxu0
      %v2120 = vpop.f32.mrb[0].mxu0
      %v2121 = vadd.f32 %v1513, %v2120
      %v2122 = vpop.f32.mrb[0].mxu0
      %2123 = vmatprep.mubr.bf16.mxu0 0
      %2124 = vmatmul.mubr.bf16.gmra.mrb[0].mxu0 %v1675
      %v2125 = vpop.f32.mrb[0].mxu0
      %v2126 = vadd.f32 %v1513, %v2125
      %v2127 = vpop.f32.mrb[0].mxu0
      %v2128 = vpop.f32.mrb[0].mxu0
      %v2129 = vadd.f32 %v1513, %v2128
      %v2130 = vpop.f32.mrb[0].mxu0
      %2131 = vmatprep.mubr.bf16.mxu0 0
      %2132 = vmatmul.mubr.bf16.gmra.mrb[0].mxu0 %v1678
      %v2133 = vpop.f32.mrb[0].mxu0
      %v2134 = vadd.f32 %v1513, %v2133
      %v2135 = vpop.f32.mrb[0].mxu0
      %v2136 = vpop.f32.mrb[0].mxu0
      %v2137 = vadd.f32 %v1513, %v2136
      %v2138 = vpop.f32.mrb[0].mxu0
      %2139 = vmatprep.mubr.bf16.mxu0 0
      %2140 = vmatmul.mubr.bf16.gmra.mrb[0].mxu0 %v1681
      %v2141 = vpop.f32.mrb[0].mxu0
      %v2142 = vadd.f32 %v1513, %v2141
      %v2143 = vpop.f32.mrb[0].mxu0
      %v2144 = vpop.f32.mrb[0].mxu0
      %v2145 = vadd.f32 %v1513, %v2144
      %v2146 = vpop.f32.mrb[0].mxu0
      %2147 = vmatprep.mubr.bf16.mxu0 0
      %2148 = vmatmul.mubr.bf16.gmra.mrb[0].mxu0 %v1684
      %v2149 = vpop.f32.mrb[0].mxu0
      %v2150 = vadd.f32 %v1513, %v2149
      %v2151 = vpop.f32.mrb[0].mxu0
      %v2152 = vpop.f32.mrb[0].mxu0
      %v2153 = vadd.f32 %v1513, %v2152
      %v2154 = vpop.f32.mrb[0].mxu0
      %2155 = vmatprep.mubr.bf16.mxu0 0
      %2156 = vmatmul.mubr.bf16.gmra.mrb[0].mxu0 %v1687
      %v2157 = vpop.f32.mrb[0].mxu0
      %v2158 = vadd.f32 %v1513, %v2157
      %v2159 = vpop.f32.mrb[0].mxu0
      %v2160 = vpop.f32.mrb[0].mxu0
      %v2161 = vadd.f32 %v1513, %v2160
      %v2162 = vpop.f32.mrb[0].mxu0
      %2163 = vmatprep.mubr.bf16.mxu0 0
      %2164 = vmatmul.mubr.bf16.gmra.mrb[0].mxu0 %v1690
      %v2165 = vpop.f32.mrb[0].mxu0
      %v2166 = vadd.f32 %v1513, %v2165
      %v2167 = vpop.f32.mrb[0].mxu0
      %v2168 = vpop.f32.mrb[0].mxu0
      %v2169 = vadd.f32 %v1513, %v2168
      %v2170 = vpop.f32.mrb[0].mxu0
      %2171 = vmatprep.mubr.bf16.mxu0 0
      %2172 = vmatmul.mubr.bf16.gmra.mrb[0].mxu0 %v1693
      %v2173 = vpop.f32.mrb[0].mxu0
      %v2174 = vadd.f32 %v1513, %v2173
      %v2175 = vpop.f32.mrb[0].mxu0
      %v2176 = vpop.f32.mrb[0].mxu0
      %v2177 = vadd.f32 %v1513, %v2176
      %v2178 = vpop.f32.mrb[0].mxu0
      %2179 = vmatprep.mubr.bf16.mxu0 0
      %2180 = vmatmul.mubr.bf16.gmra.mrb[0].mxu0 %v1696
      %v2181 = vpop.f32.mrb[0].mxu0
      %v2182 = vadd.f32 %v1513, %v2181
      %v2183 = vpop.f32.mrb[0].mxu0
      %v2184 = vpop.f32.mrb[0].mxu0
      %v2185 = vadd.f32 %v1513, %v2184
      %v2186 = vpop.f32.mrb[0].mxu0
      %2187 = vmatprep.mubr.bf16.mxu0 0
      %2188 = vmatmul.mubr.bf16.gmra.mrb[0].mxu0 %v1699
      %v2189 = vpop.f32.mrb[0].mxu0
      %v2190 = vadd.f32 %v1513, %v2189
      %v2191 = vpop.f32.mrb[0].mxu0
      %v2192 = vpop.f32.mrb[0].mxu0
      %v2193 = vadd.f32 %v1513, %v2192
      %v2194 = vpop.f32.mrb[0].mxu0
      %2195 = vmatprep.mubr.bf16.mxu0 0
      %2196 = vmatmul.mubr.bf16.gmra.mrb[0].mxu0 %v1702
      %v2197 = vpop.f32.mrb[0].mxu0
      %v2198 = vadd.f32 %v1513, %v2197
      %v2199 = vpop.f32.mrb[0].mxu0
      %v2200 = vpop.f32.mrb[0].mxu0
      %v2201 = vadd.f32 %v1513, %v2200
      %v2202 = vpop.f32.mrb[0].mxu0
      %2203 = vmatprep.mubr.bf16.mxu0 0
      %2204 = vmatmul.mubr.bf16.gmra.mrb[0].mxu0 %v1705
      %v2205 = vpop.f32.mrb[0].mxu0
      %v2206 = vadd.f32 %v1513, %v2205
      %v2207 = vpop.f32.mrb[0].mxu0
      %v2208 = vpop.f32.mrb[0].mxu0
      %v2209 = vadd.f32 %v1513, %v2208
      %v2210 = vpop.f32.mrb[0].mxu0
      %2211 = vmatprep.mubr.bf16.mxu0 0
      %2212 = vmatmul.mubr.bf16.gmra.mrb[0].mxu0 %v1708
      %v2213 = vpop.f32.mrb[0].mxu0
      %v2214 = vadd.f32 %v1513, %v2213
      %v2215 = vpop.f32.mrb[0].mxu0
      %v2216 = vpop.f32.mrb[0].mxu0
      %v2217 = vadd.f32 %v1513, %v2216
      %v2218 = vpop.f32.mrb[0].mxu0
      %2219 = vmatprep.mubr.bf16.mxu0 0
      %2220 = vmatmul.mubr.bf16.gmra.mrb[0].mxu0 %v1711
      %v2221 = vpop.f32.mrb[0].mxu0
      %v2222 = vadd.f32 %v1513, %v2221
      %v2223 = vpop.f32.mrb[0].mxu0
      %v2224 = vpop.f32.mrb[0].mxu0
      %v2225 = vadd.f32 %v1513, %v2224
      %v2226 = vpop.f32.mrb[0].mxu0
      %2227 = vmatprep.mubr.bf16.mxu0 0
      %2228 = vmatmul.mubr.bf16.gmra.mrb[0].mxu0 %v1714
      %v2229 = vpop.f32.mrb[0].mxu0
      %v2230 = vadd.f32 %v1513, %v2229
      %v2231 = vpop.f32.mrb[0].mxu0
      %v2232 = vpop.f32.mrb[0].mxu0
      %v2233 = vadd.f32 %v1513, %v2232
      %v2234 = vpop.f32.mrb[0].mxu0
      %2235 = vmatprep.mubr.bf16.mxu0 0
      %2236 = vmatmul.mubr.bf16.gmra.mrb[0].mxu0 %v1717
      %v2237 = vpop.f32.mrb[0].mxu0
      %v2238 = vadd.f32 %v1513, %v2237
      %v2239 = vpop.f32.mrb[0].mxu0
      %v2240 = vpop.f32.mrb[0].mxu0
      %v2241 = vadd.f32 %v1513, %v2240
      %v2242 = vpop.f32.mrb[0].mxu0
      %2243 = vmatprep.mubr.bf16.mxu0 0
      %2244 = vmatmul.mubr.bf16.gmra.mrb[0].mxu0 %v1720
      %v2245 = vpop.f32.mrb[0].mxu0
      %v2246 = vadd.f32 %v1513, %v2245
      %v2247 = vpop.f32.mrb[0].mxu0
      %v2248 = vpop.f32.mrb[0].mxu0
      %v2249 = vadd.f32 %v1513, %v2248
      %v2250 = vpop.f32.mrb[0].mxu0
      %2251 = vmatprep.mubr.bf16.mxu0 0
      %2252 = vmatmul.mubr.bf16.gmra.mrb[0].mxu0 %v1723
      %v2253 = vpop.f32.mrb[0].mxu0
      %v2254 = vadd.f32 %v1513, %v2253
      %v2255 = vpop.f32.mrb[0].mxu0
      %v2256 = vpop.f32.mrb[0].mxu0
      %v2257 = vadd.f32 %v1513, %v2256
      %v2258 = vpop.f32.mrb[0].mxu0
      %2259 = vmatprep.mubr.bf16.mxu0 0
      %2260 = vmatmul.mubr.bf16.gmra.mrb[0].mxu0 %v1726
      %v2261 = vpop.f32.mrb[0].mxu0
      %v2262 = vadd.f32 %v1513, %v2261
      %v2263 = vpop.f32.mrb[0].mxu0
      %v2264 = vpop.f32.mrb[0].mxu0
      %v2265 = vadd.f32 %v1513, %v2264
      %v2266 = vpop.f32.mrb[0].mxu0
      %2267 = vmatprep.mubr.bf16.mxu0 0
      %2268 = vmatmul.mubr.bf16.gmra.mrb[0].mxu0 %v1729
      %v2269 = vpop.f32.mrb[0].mxu0
      %v2270 = vadd.f32 %v1513, %v2269
      %v2271 = vpop.f32.mrb[0].mxu0
      %v2272 = vpop.f32.mrb[0].mxu0
      %v2273 = vadd.f32 %v1513, %v2272
      %v2274 = vpop.f32.mrb[0].mxu0
      %2275 = vdwg.mxu0
      %vm2276 = vcmp.lt.s32.totalorder %v530, 32
      %v2277 = vsel %vm2276, 1, 0
      %vm2278 = vcmp.eq.s32.totalorder %v2277, 1
      %v2279 = vsel %vm2278, %v1766, %v337
      %v2280 = vsel %vm2278, %v1769, %v338
      %v2281 = vsel %vm2278, %v1774, %v339
      %v2282 = vsel %vm2278, %v1777, %v340
      %v2283 = vsel %vm2278, %v1782, %v341
      %v2284 = vsel %vm2278, %v1785, %v342
      %v2285 = vsel %vm2278, %v1790, %v343
      %v2286 = vsel %vm2278, %v1793, %v344
      %v2287 = vsel %vm2278, %v1798, %v345
      %v2288 = vsel %vm2278, %v1801, %v346
      %v2289 = vsel %vm2278, %v1806, %v347
      %v2290 = vsel %vm2278, %v1809, %v348
      %v2291 = vsel %vm2278, %v1814, %v349
      %v2292 = vsel %vm2278, %v1817, %v350
      %v2293 = vsel %vm2278, %v1822, %v351
      %v2294 = vsel %vm2278, %v1825, %v352
      %v2295 = vsel %vm2278, %v1830, %v353
      %v2296 = vsel %vm2278, %v1833, %v354
      %v2297 = vsel %vm2278, %v1838, %v355
      %v2298 = vsel %vm2278, %v1841, %v356
      %v2299 = vsel %vm2278, %v1846, %v357
      %v2300 = vsel %vm2278, %v1849, %v358
      %v2301 = vsel %vm2278, %v1854, %v359
      %v2302 = vsel %vm2278, %v1857, %v360
      %v2303 = vsel %vm2278, %v1862, %v361
      %v2304 = vsel %vm2278, %v1865, %v362
      %v2305 = vsel %vm2278, %v1870, %v363
      %v2306 = vsel %vm2278, %v1873, %v364
      %v2307 = vsel %vm2278, %v1878, %v365
      %v2308 = vsel %vm2278, %v1881, %v366
      %v2309 = vsel %vm2278, %v1886, %v367
      %v2310 = vsel %vm2278, %v1889, %v368
      %v2311 = vsel %vm2278, %v1894, %v369
      %v2312 = vsel %vm2278, %v1897, %v370
      %v2313 = vsel %vm2278, %v1902, %v371
      %v2314 = vsel %vm2278, %v1905, %v372
      %v2315 = vsel %vm2278, %v1910, %v373
      %v2316 = vsel %vm2278, %v1913, %v374
      %v2317 = vsel %vm2278, %v1918, %v375
      %v2318 = vsel %vm2278, %v1921, %v376
      %v2319 = vsel %vm2278, %v1926, %v377
      %v2320 = vsel %vm2278, %v1929, %v378
      %v2321 = vsel %vm2278, %v1934, %v379
      %v2322 = vsel %vm2278, %v1937, %v380
      %v2323 = vsel %vm2278, %v1942, %v381
      %v2324 = vsel %vm2278, %v1945, %v382
      %v2325 = vsel %vm2278, %v1950, %v383
      %v2326 = vsel %vm2278, %v1953, %v384
      %v2327 = vsel %vm2278, %v1958, %v385
      %v2328 = vsel %vm2278, %v1961, %v386
      %v2329 = vsel %vm2278, %v1966, %v387
      %v2330 = vsel %vm2278, %v1969, %v388
      %v2331 = vsel %vm2278, %v1974, %v389
      %v2332 = vsel %vm2278, %v1977, %v390
      %v2333 = vsel %vm2278, %v1982, %v391
      %v2334 = vsel %vm2278, %v1985, %v392
      %v2335 = vsel %vm2278, %v1990, %v393
      %v2336 = vsel %vm2278, %v1993, %v394
      %v2337 = vsel %vm2278, %v1998, %v395
      %v2338 = vsel %vm2278, %v2001, %v396
      %v2339 = vsel %vm2278, %v2006, %v397
      %v2340 = vsel %vm2278, %v2009, %v398
      %v2341 = vsel %vm2278, %v2014, %v399
      %v2342 = vsel %vm2278, %v2017, %v400
      %v2343 = vsel %vm2278, %v2022, %v401
      %v2344 = vsel %vm2278, %v2025, %v402
      %v2345 = vsel %vm2278, %v2030, %v403
      %v2346 = vsel %vm2278, %v2033, %v404
      %v2347 = vsel %vm2278, %v2038, %v405
      %v2348 = vsel %vm2278, %v2041, %v406
      %v2349 = vsel %vm2278, %v2046, %v407
      %v2350 = vsel %vm2278, %v2049, %v408
      %v2351 = vsel %vm2278, %v2054, %v409
      %v2352 = vsel %vm2278, %v2057, %v410
      %v2353 = vsel %vm2278, %v2062, %v411
      %v2354 = vsel %vm2278, %v2065, %v412
      %v2355 = vsel %vm2278, %v2070, %v413
      %v2356 = vsel %vm2278, %v2073, %v414
      %v2357 = vsel %vm2278, %v2078, %v415
      %v2358 = vsel %vm2278, %v2081, %v416
      %v2359 = vsel %vm2278, %v2086, %v417
      %v2360 = vsel %vm2278, %v2089, %v418
      %v2361 = vsel %vm2278, %v2094, %v419
      %v2362 = vsel %vm2278, %v2097, %v420
      %v2363 = vsel %vm2278, %v2102, %v421
      %v2364 = vsel %vm2278, %v2105, %v422
      %v2365 = vsel %vm2278, %v2110, %v423
      %v2366 = vsel %vm2278, %v2113, %v424
      %v2367 = vsel %vm2278, %v2118, %v425
      %v2368 = vsel %vm2278, %v2121, %v426
      %v2369 = vsel %vm2278, %v2126, %v427
      %v2370 = vsel %vm2278, %v2129, %v428
      %v2371 = vsel %vm2278, %v2134, %v429
      %v2372 = vsel %vm2278, %v2137, %v430
      %v2373 = vsel %vm2278, %v2142, %v431
      %v2374 = vsel %vm2278, %v2145, %v432
      %v2375 = vsel %vm2278, %v2150, %v433
      %v2376 = vsel %vm2278, %v2153, %v434
      %v2377 = vsel %vm2278, %v2158, %v435
      %v2378 = vsel %vm2278, %v2161, %v436
      %v2379 = vsel %vm2278, %v2166, %v437
      %v2380 = vsel %vm2278, %v2169, %v438
      %v2381 = vsel %vm2278, %v2174, %v439
      %v2382 = vsel %vm2278, %v2177, %v440
      %v2383 = vsel %vm2278, %v2182, %v441
      %v2384 = vsel %vm2278, %v2185, %v442
      %v2385 = vsel %vm2278, %v2190, %v443
      %v2386 = vsel %vm2278, %v2193, %v444
      %v2387 = vsel %vm2278, %v2198, %v445
      %v2388 = vsel %vm2278, %v2201, %v446
      %v2389 = vsel %vm2278, %v2206, %v447
      %v2390 = vsel %vm2278, %v2209, %v448
      %v2391 = vsel %vm2278, %v2214, %v449
      %v2392 = vsel %vm2278, %v2217, %v450
      %v2393 = vsel %vm2278, %v2222, %v451
      %v2394 = vsel %vm2278, %v2225, %v452
      %v2395 = vsel %vm2278, %v2230, %v453
      %v2396 = vsel %vm2278, %v2233, %v454
      %v2397 = vsel %vm2278, %v2238, %v455
      %v2398 = vsel %vm2278, %v2241, %v456
      %v2399 = vsel %vm2278, %v2246, %v457
      %v2400 = vsel %vm2278, %v2249, %v458
      %v2401 = vsel %vm2278, %v2254, %v459
      %v2402 = vsel %vm2278, %v2257, %v460
      %v2403 = vsel %vm2278, %v2262, %v461
      %v2404 = vsel %vm2278, %v2265, %v462
      %v2405 = vsel %vm2278, %v2270, %v463
      %v2406 = vsel %vm2278, %v2273, %v464
      %v2407 = vmax.f32 %v2279, 0.0
      %v2408 = vmax.f32 %v2280, 0.0
      %v2409 = vmax.f32 %v2281, 0.0
      %v2410 = vmax.f32 %v2282, 0.0
      %v2411 = vmax.f32 %v2283, 0.0
      %v2412 = vmax.f32 %v2284, 0.0
      %v2413 = vmax.f32 %v2285, 0.0
      %v2414 = vmax.f32 %v2286, 0.0
      %v2415 = vmax.f32 %v2287, 0.0
      %v2416 = vmax.f32 %v2288, 0.0
      %v2417 = vmax.f32 %v2289, 0.0
      %v2418 = vmax.f32 %v2290, 0.0
      %v2419 = vmax.f32 %v2291, 0.0
      %v2420 = vmax.f32 %v2292, 0.0
      %v2421 = vmax.f32 %v2293, 0.0
      %v2422 = vmax.f32 %v2294, 0.0
      %v2423 = vmax.f32 %v2295, 0.0
      %v2424 = vmax.f32 %v2296, 0.0
      %v2425 = vmax.f32 %v2297, 0.0
      %v2426 = vmax.f32 %v2298, 0.0
      %v2427 = vmax.f32 %v2299, 0.0
      %v2428 = vmax.f32 %v2300, 0.0
      %v2429 = vmax.f32 %v2301, 0.0
      %v2430 = vmax.f32 %v2302, 0.0
      %v2431 = vmax.f32 %v2303, 0.0
      %v2432 = vmax.f32 %v2304, 0.0
      %v2433 = vmax.f32 %v2305, 0.0
      %v2434 = vmax.f32 %v2306, 0.0
      %v2435 = vmax.f32 %v2307, 0.0
      %v2436 = vmax.f32 %v2308, 0.0
      %v2437 = vmax.f32 %v2309, 0.0
      %v2438 = vmax.f32 %v2310, 0.0
      %v2439 = vmax.f32 %v2311, 0.0
      %v2440 = vmax.f32 %v2312, 0.0
      %v2441 = vmax.f32 %v2313, 0.0
      %v2442 = vmax.f32 %v2314, 0.0
      %v2443 = vmax.f32 %v2315, 0.0
      %v2444 = vmax.f32 %v2316, 0.0
      %v2445 = vmax.f32 %v2317, 0.0
      %v2446 = vmax.f32 %v2318, 0.0
      %v2447 = vmax.f32 %v2319, 0.0
      %v2448 = vmax.f32 %v2320, 0.0
      %v2449 = vmax.f32 %v2321, 0.0
      %v2450 = vmax.f32 %v2322, 0.0
      %v2451 = vmax.f32 %v2323, 0.0
      %v2452 = vmax.f32 %v2324, 0.0
      %v2453 = vmax.f32 %v2325, 0.0
      %v2454 = vmax.f32 %v2326, 0.0
      %v2455 = vmax.f32 %v2327, 0.0
      %v2456 = vmax.f32 %v2328, 0.0
      %v2457 = vmax.f32 %v2329, 0.0
      %v2458 = vmax.f32 %v2330, 0.0
      %v2459 = vmax.f32 %v2331, 0.0
      %v2460 = vmax.f32 %v2332, 0.0
      %v2461 = vmax.f32 %v2333, 0.0
      %v2462 = vmax.f32 %v2334, 0.0
      %v2463 = vmax.f32 %v2335, 0.0
      %v2464 = vmax.f32 %v2336, 0.0
      %v2465 = vmax.f32 %v2337, 0.0
      %v2466 = vmax.f32 %v2338, 0.0
      %v2467 = vmax.f32 %v2339, 0.0
      %v2468 = vmax.f32 %v2340, 0.0
      %v2469 = vmax.f32 %v2341, 0.0
      %v2470 = vmax.f32 %v2342, 0.0
      %v2471 = vmax.f32 %v2343, 0.0
      %v2472 = vmax.f32 %v2344, 0.0
      %v2473 = vmax.f32 %v2345, 0.0
      %v2474 = vmax.f32 %v2346, 0.0
      %v2475 = vmax.f32 %v2347, 0.0
      %v2476 = vmax.f32 %v2348, 0.0
      %v2477 = vmax.f32 %v2349, 0.0
      %v2478 = vmax.f32 %v2350, 0.0
      %v2479 = vmax.f32 %v2351, 0.0
      %v2480 = vmax.f32 %v2352, 0.0
      %v2481 = vmax.f32 %v2353, 0.0
      %v2482 = vmax.f32 %v2354, 0.0
      %v2483 = vmax.f32 %v2355, 0.0
      %v2484 = vmax.f32 %v2356, 0.0
      %v2485 = vmax.f32 %v2357, 0.0
      %v2486 = vmax.f32 %v2358, 0.0
      %v2487 = vmax.f32 %v2359, 0.0
      %v2488 = vmax.f32 %v2360, 0.0
      %v2489 = vmax.f32 %v2361, 0.0
      %v2490 = vmax.f32 %v2362, 0.0
      %v2491 = vmax.f32 %v2363, 0.0
      %v2492 = vmax.f32 %v2364, 0.0
      %v2493 = vmax.f32 %v2365, 0.0
      %v2494 = vmax.f32 %v2366, 0.0
      %v2495 = vmax.f32 %v2367, 0.0
      %v2496 = vmax.f32 %v2368, 0.0
      %v2497 = vmax.f32 %v2369, 0.0
      %v2498 = vmax.f32 %v2370, 0.0
      %v2499 = vmax.f32 %v2371, 0.0
      %v2500 = vmax.f32 %v2372, 0.0
      %v2501 = vmax.f32 %v2373, 0.0
      %v2502 = vmax.f32 %v2374, 0.0
      %v2503 = vmax.f32 %v2375, 0.0
      %v2504 = vmax.f32 %v2376, 0.0
      %v2505 = vmax.f32 %v2377, 0.0
      %v2506 = vmax.f32 %v2378, 0.0
      %v2507 = vmax.f32 %v2379, 0.0
      %v2508 = vmax.f32 %v2380, 0.0
      %v2509 = vmax.f32 %v2381, 0.0
      %v2510 = vmax.f32 %v2382, 0.0
      %v2511 = vmax.f32 %v2383, 0.0
      %v2512 = vmax.f32 %v2384, 0.0
      %v2513 = vmax.f32 %v2385, 0.0
      %v2514 = vmax.f32 %v2386, 0.0
      %v2515 = vmax.f32 %v2387, 0.0
      %v2516 = vmax.f32 %v2388, 0.0
      %v2517 = vmax.f32 %v2389, 0.0
      %v2518 = vmax.f32 %v2390, 0.0
      %v2519 = vmax.f32 %v2391, 0.0
      %v2520 = vmax.f32 %v2392, 0.0
      %v2521 = vmax.f32 %v2393, 0.0
      %v2522 = vmax.f32 %v2394, 0.0
      %v2523 = vmax.f32 %v2395, 0.0
      %v2524 = vmax.f32 %v2396, 0.0
      %v2525 = vmax.f32 %v2397, 0.0
      %v2526 = vmax.f32 %v2398, 0.0
      %v2527 = vmax.f32 %v2399, 0.0
      %v2528 = vmax.f32 %v2400, 0.0
      %v2529 = vmax.f32 %v2401, 0.0
      %v2530 = vmax.f32 %v2402, 0.0
      %v2531 = vmax.f32 %v2403, 0.0
      %v2532 = vmax.f32 %v2404, 0.0
      %v2533 = vmax.f32 %v2405, 0.0
      %v2534 = vmax.f32 %v2406, 0.0
      %v2535 = vpack.c.bf16 %v2408, %v2407
      %v2536 = vpack.c.bf16 %v2410, %v2409
      %v2537 = vpack.c.bf16 %v2412, %v2411
      %v2538 = vpack.c.bf16 %v2414, %v2413
      %v2539 = vpack.c.bf16 %v2416, %v2415
      %v2540 = vpack.c.bf16 %v2418, %v2417
      %v2541 = vpack.c.bf16 %v2420, %v2419
      %v2542 = vpack.c.bf16 %v2422, %v2421
      %v2543 = vpack.c.bf16 %v2424, %v2423
      %v2544 = vpack.c.bf16 %v2426, %v2425
      %v2545 = vpack.c.bf16 %v2428, %v2427
      %v2546 = vpack.c.bf16 %v2430, %v2429
      %v2547 = vpack.c.bf16 %v2432, %v2431
      %v2548 = vpack.c.bf16 %v2434, %v2433
      %v2549 = vpack.c.bf16 %v2436, %v2435
      %v2550 = vpack.c.bf16 %v2438, %v2437
      %v2551 = vpack.c.bf16 %v2440, %v2439
      %v2552 = vpack.c.bf16 %v2442, %v2441
      %v2553 = vpack.c.bf16 %v2444, %v2443
      %v2554 = vpack.c.bf16 %v2446, %v2445
      %v2555 = vpack.c.bf16 %v2448, %v2447
      %v2556 = vpack.c.bf16 %v2450, %v2449
      %v2557 = vpack.c.bf16 %v2452, %v2451
      %v2558 = vpack.c.bf16 %v2454, %v2453
      %v2559 = vpack.c.bf16 %v2456, %v2455
      %v2560 = vpack.c.bf16 %v2458, %v2457
      %v2561 = vpack.c.bf16 %v2460, %v2459
      %v2562 = vpack.c.bf16 %v2462, %v2461
      %v2563 = vpack.c.bf16 %v2464, %v2463
      %v2564 = vpack.c.bf16 %v2466, %v2465
      %v2565 = vpack.c.bf16 %v2468, %v2467
      %v2566 = vpack.c.bf16 %v2470, %v2469
      %v2567 = vpack.c.bf16 %v2472, %v2471
      %v2568 = vpack.c.bf16 %v2474, %v2473
      %v2569 = vpack.c.bf16 %v2476, %v2475
      %v2570 = vpack.c.bf16 %v2478, %v2477
      %v2571 = vpack.c.bf16 %v2480, %v2479
      %v2572 = vpack.c.bf16 %v2482, %v2481
      %v2573 = vpack.c.bf16 %v2484, %v2483
      %v2574 = vpack.c.bf16 %v2486, %v2485
      %v2575 = vpack.c.bf16 %v2488, %v2487
      %v2576 = vpack.c.bf16 %v2490, %v2489
      %v2577 = vpack.c.bf16 %v2492, %v2491
      %v2578 = vpack.c.bf16 %v2494, %v2493
      %v2579 = vpack.c.bf16 %v2496, %v2495
      %v2580 = vpack.c.bf16 %v2498, %v2497
      %v2581 = vpack.c.bf16 %v2500, %v2499
      %v2582 = vpack.c.bf16 %v2502, %v2501
      %v2583 = vpack.c.bf16 %v2504, %v2503
      %v2584 = vpack.c.bf16 %v2506, %v2505
      %v2585 = vpack.c.bf16 %v2508, %v2507
      %v2586 = vpack.c.bf16 %v2510, %v2509
      %v2587 = vpack.c.bf16 %v2512, %v2511
      %v2588 = vpack.c.bf16 %v2514, %v2513
      %v2589 = vpack.c.bf16 %v2516, %v2515
      %v2590 = vpack.c.bf16 %v2518, %v2517
      %v2591 = vpack.c.bf16 %v2520, %v2519
      %v2592 = vpack.c.bf16 %v2522, %v2521
      %v2593 = vpack.c.bf16 %v2524, %v2523
      %v2594 = vpack.c.bf16 %v2526, %v2525
      %v2595 = vpack.c.bf16 %v2528, %v2527
      %v2596 = vpack.c.bf16 %v2530, %v2529
      %v2597 = vpack.c.bf16 %v2532, %v2531
      %v2598 = vpack.c.bf16 %v2534, %v2533
      %v2599 = vld [vmem:[%s5] sm:$0xff]
      %v2600 = vld [vmem:[%s5 + $0x8] sm:$0xff]
      %v2601 = vld [vmem:[%s5 + $0x10] sm:$0xff]
      %v2602 = vld [vmem:[%s5 + $0x18] sm:$0xff]
      %v2603 = vld [vmem:[%s5 + $0x20] sm:$0xff]
      %v2604 = vld [vmem:[%s5 + $0x28] sm:$0xff]
      %v2605 = vld [vmem:[%s5 + $0x30] sm:$0xff]
      %v2606 = vld [vmem:[%s5 + $0x38] sm:$0xff]
      %v2607 = vld [vmem:[%s6] sm:$0x3]
      %v2609 = vlaneseq
      %v2610 = vshrl.u32 %v2609, 7
      %v2611 = vsub.s32 0, %v2610
      %v2612 = vrot.slane %v2607, %v2611
      %v2613 = vlaneseq
      %v2614 = vshrl.u32 %v2613, 7
      %v2615 = vsub.s32 1, %v2614
      %v2616 = vrot.slane %v2607, %v2615
      %v2627 = vunpack.c.l.b16 %v2599
      %v2628 = vunpack.c.h.b16 %v2599
      %v2629 = vunpack.c.l.b16 %v2600
      %v2630 = vunpack.c.h.b16 %v2600
      %v2631 = vunpack.c.l.b16 %v2601
      %v2632 = vunpack.c.h.b16 %v2601
      %v2633 = vunpack.c.l.b16 %v2602
      %v2634 = vunpack.c.h.b16 %v2602
      %v2635 = vunpack.c.l.b16 %v2603
      %v2636 = vunpack.c.h.b16 %v2603
      %v2637 = vunpack.c.l.b16 %v2604
      %v2638 = vunpack.c.h.b16 %v2604
      %v2639 = vunpack.c.l.b16 %v2605
      %v2640 = vunpack.c.h.b16 %v2605
      %v2641 = vunpack.c.l.b16 %v2606
      %v2642 = vunpack.c.h.b16 %v2606
      %v2643 = vpack.c.b16 %v2629, %v2627
      %v2644 = vpack.c.b16 %v2630, %v2628
      %v2645 = vpack.c.b16 %v2633, %v2631
      %v2646 = vpack.c.b16 %v2634, %v2632
      %v2647 = vpack.c.b16 %v2637, %v2635
      %v2648 = vpack.c.b16 %v2638, %v2636
      %v2649 = vpack.c.b16 %v2641, %v2639
      %v2650 = vpack.c.b16 %v2642, %v2640
      %v2660 = vsel %vm570, %v2535, 0
      %v2663 = vsel %vm570, %v2536, 0
      %v2666 = vsel %vm570, %v2537, 0
      %v2669 = vsel %vm570, %v2538, 0
      %v2672 = vsel %vm570, %v2539, 0
      %v2675 = vsel %vm570, %v2540, 0
      %v2678 = vsel %vm570, %v2541, 0
      %v2681 = vsel %vm570, %v2542, 0
      %v2684 = vsel %vm570, %v2543, 0
      %v2687 = vsel %vm570, %v2544, 0
      %v2690 = vsel %vm570, %v2545, 0
      %v2693 = vsel %vm570, %v2546, 0
      %v2696 = vsel %vm570, %v2547, 0
      %v2699 = vsel %vm570, %v2548, 0
      %v2702 = vsel %vm570, %v2549, 0
      %v2705 = vsel %vm570, %v2550, 0
      %v2708 = vsel %vm570, %v2551, 0
      %v2711 = vsel %vm570, %v2552, 0
      %v2714 = vsel %vm570, %v2553, 0
      %v2717 = vsel %vm570, %v2554, 0
      %v2720 = vsel %vm570, %v2555, 0
      %v2723 = vsel %vm570, %v2556, 0
      %v2726 = vsel %vm570, %v2557, 0
      %v2729 = vsel %vm570, %v2558, 0
      %v2732 = vsel %vm570, %v2559, 0
      %v2735 = vsel %vm570, %v2560, 0
      %v2738 = vsel %vm570, %v2561, 0
      %v2741 = vsel %vm570, %v2562, 0
      %v2744 = vsel %vm570, %v2563, 0
      %v2747 = vsel %vm570, %v2564, 0
      %v2750 = vsel %vm570, %v2565, 0
      %v2753 = vsel %vm570, %v2566, 0
      %v2756 = vsel %vm570, %v2567, 0
      %v2759 = vsel %vm570, %v2568, 0
      %v2762 = vsel %vm570, %v2569, 0
      %v2765 = vsel %vm570, %v2570, 0
      %v2768 = vsel %vm570, %v2571, 0
      %v2771 = vsel %vm570, %v2572, 0
      %v2774 = vsel %vm570, %v2573, 0
      %v2777 = vsel %vm570, %v2574, 0
      %v2780 = vsel %vm570, %v2575, 0
      %v2783 = vsel %vm570, %v2576, 0
      %v2786 = vsel %vm570, %v2577, 0
      %v2789 = vsel %vm570, %v2578, 0
      %v2792 = vsel %vm570, %v2579, 0
      %v2795 = vsel %vm570, %v2580, 0
      %v2798 = vsel %vm570, %v2581, 0
      %v2801 = vsel %vm570, %v2582, 0
      %v2804 = vsel %vm570, %v2583, 0
      %v2807 = vsel %vm570, %v2584, 0
      %v2810 = vsel %vm570, %v2585, 0
      %v2813 = vsel %vm570, %v2586, 0
      %v2816 = vsel %vm570, %v2587, 0
      %v2819 = vsel %vm570, %v2588, 0
      %v2822 = vsel %vm570, %v2589, 0
      %v2825 = vsel %vm570, %v2590, 0
      %v2828 = vsel %vm570, %v2591, 0
      %v2831 = vsel %vm570, %v2592, 0
      %v2834 = vsel %vm570, %v2593, 0
      %v2837 = vsel %vm570, %v2594, 0
      %v2840 = vsel %vm570, %v2595, 0
      %v2843 = vsel %vm570, %v2596, 0
      %v2846 = vsel %vm570, %v2597, 0
      %v2849 = vsel %vm570, %v2598, 0
      %2851 = vmatprep.subr.bf16.mxu0 %v2644
      %2852 = vmatpush1.bf16.msra.mxu0 %v2643
      %2853 = vmatprep.subr.bf16.mxu0 %v2646
      %2854 = vmatpush1.bf16.msra.mxu0 %v2645
      %2855 = vmatprep.subr.bf16.mxu0 %v2648
      %2856 = vmatpush1.bf16.msra.mxu0 %v2647
      %2857 = vmatprep.subr.bf16.mxu0 %v2650
      %2858 = vmatpush1.bf16.msra.mxu0 %v2649
      %2859 = vmatprep.subr.bf16.mxu0 0
      %2860 = vmatpush1.bf16.msra.mxu0 0
      %2861 = vmatprep.subr.bf16.mxu0 0
      %2862 = vmatpush1.bf16.msra.mxu0 0
      %2863 = vmatprep.subr.bf16.mxu0 0
      %2864 = vmatpush1.bf16.msra.mxu0 0
      %2865 = vmatprep.subr.bf16.mxu0 0
      %2866 = vmatpush1.bf16.msra.mxu0 0
      %2867 = vmatprep.subr.bf16.mxu0 0
      %2868 = vmatpush1.bf16.msra.mxu0 0
      %2869 = vmatprep.subr.bf16.mxu0 0
      %2870 = vmatpush1.bf16.msra.mxu0 0
      %2871 = vmatprep.subr.bf16.mxu0 0
      %2872 = vmatpush1.bf16.msra.mxu0 0
      %2873 = vmatprep.subr.bf16.mxu0 0
      %2874 = vmatpush1.bf16.msra.mxu0 0
      %2875 = vmatprep.subr.bf16.mxu0 0
      %2876 = vmatpush1.bf16.msra.mxu0 0
      %2877 = vmatprep.subr.bf16.mxu0 0
      %2878 = vmatpush1.bf16.msra.mxu0 0
      %2879 = vmatprep.subr.bf16.mxu0 0
      %2880 = vmatpush1.bf16.msra.mxu0 0
      %2881 = vmatprep.subr.bf16.mxu0 0
      %2882 = vmatpush1.bf16.msra.mxu0 0
      %2883 = vmatprep.mubr.bf16.mxu0 0
      %2884 = vmatmul.mubr.bf16.gmra.mrb[0].mxu0 %v2660
      %v2885 = vpop.f32.mrb[0].mxu0
      %v2886 = vadd.f32 %v2612, %v2885
      %v2887 = vpop.f32.mrb[0].mxu0
      %v2888 = vadd.f32 %v2616, %v2887
      %v2889 = vpop.f32.mrb[0].mxu0
      %v2890 = vadd.f32 %v2612, %v2889
      %v2891 = vpop.f32.mrb[0].mxu0
      %v2892 = vadd.f32 %v2616, %v2891
      %2893 = vmatprep.mubr.bf16.mxu0 0
      %2894 = vmatmul.mubr.bf16.gmra.mrb[0].mxu0 %v2663
      %v2895 = vpop.f32.mrb[0].mxu0
      %v2896 = vadd.f32 %v2612, %v2895
      %v2897 = vpop.f32.mrb[0].mxu0
      %v2898 = vadd.f32 %v2616, %v2897
      %v2899 = vpop.f32.mrb[0].mxu0
      %v2900 = vadd.f32 %v2612, %v2899
      %v2901 = vpop.f32.mrb[0].mxu0
      %v2902 = vadd.f32 %v2616, %v2901
      %2903 = vmatprep.mubr.bf16.mxu0 0
      %2904 = vmatmul.mubr.bf16.gmra.mrb[0].mxu0 %v2666
      %v2905 = vpop.f32.mrb[0].mxu0
      %v2906 = vadd.f32 %v2612, %v2905
      %v2907 = vpop.f32.mrb[0].mxu0
      %v2908 = vadd.f32 %v2616, %v2907
      %v2909 = vpop.f32.mrb[0].mxu0
      %v2910 = vadd.f32 %v2612, %v2909
      %v2911 = vpop.f32.mrb[0].mxu0
      %v2912 = vadd.f32 %v2616, %v2911
      %2913 = vmatprep.mubr.bf16.mxu0 0
      %2914 = vmatmul.mubr.bf16.gmra.mrb[0].mxu0 %v2669
      %v2915 = vpop.f32.mrb[0].mxu0
      %v2916 = vadd.f32 %v2612, %v2915
      %v2917 = vpop.f32.mrb[0].mxu0
      %v2918 = vadd.f32 %v2616, %v2917
      %v2919 = vpop.f32.mrb[0].mxu0
      %v2920 = vadd.f32 %v2612, %v2919
      %v2921 = vpop.f32.mrb[0].mxu0
      %v2922 = vadd.f32 %v2616, %v2921
      %2923 = vmatprep.mubr.bf16.mxu0 0
      %2924 = vmatmul.mubr.bf16.gmra.mrb[0].mxu0 %v2672
      %v2925 = vpop.f32.mrb[0].mxu0
      %v2926 = vadd.f32 %v2612, %v2925
      %v2927 = vpop.f32.mrb[0].mxu0
      %v2928 = vadd.f32 %v2616, %v2927
      %v2929 = vpop.f32.mrb[0].mxu0
      %v2930 = vadd.f32 %v2612, %v2929
      %v2931 = vpop.f32.mrb[0].mxu0
      %v2932 = vadd.f32 %v2616, %v2931
      %2933 = vmatprep.mubr.bf16.mxu0 0
      %2934 = vmatmul.mubr.bf16.gmra.mrb[0].mxu0 %v2675
      %v2935 = vpop.f32.mrb[0].mxu0
      %v2936 = vadd.f32 %v2612, %v2935
      %v2937 = vpop.f32.mrb[0].mxu0
      %v2938 = vadd.f32 %v2616, %v2937
      %v2939 = vpop.f32.mrb[0].mxu0
      %v2940 = vadd.f32 %v2612, %v2939
      %v2941 = vpop.f32.mrb[0].mxu0
      %v2942 = vadd.f32 %v2616, %v2941
      %2943 = vmatprep.mubr.bf16.mxu0 0
      %2944 = vmatmul.mubr.bf16.gmra.mrb[0].mxu0 %v2678
      %v2945 = vpop.f32.mrb[0].mxu0
      %v2946 = vadd.f32 %v2612, %v2945
      %v2947 = vpop.f32.mrb[0].mxu0
      %v2948 = vadd.f32 %v2616, %v2947
      %v2949 = vpop.f32.mrb[0].mxu0
      %v2950 = vadd.f32 %v2612, %v2949
      %v2951 = vpop.f32.mrb[0].mxu0
      %v2952 = vadd.f32 %v2616, %v2951
      %2953 = vmatprep.mubr.bf16.mxu0 0
      %2954 = vmatmul.mubr.bf16.gmra.mrb[0].mxu0 %v2681
      %v2955 = vpop.f32.mrb[0].mxu0
      %v2956 = vadd.f32 %v2612, %v2955
      %v2957 = vpop.f32.mrb[0].mxu0
      %v2958 = vadd.f32 %v2616, %v2957
      %v2959 = vpop.f32.mrb[0].mxu0
      %v2960 = vadd.f32 %v2612, %v2959
      %v2961 = vpop.f32.mrb[0].mxu0
      %v2962 = vadd.f32 %v2616, %v2961
      %2963 = vmatprep.mubr.bf16.mxu0 0
      %2964 = vmatmul.mubr.bf16.gmra.mrb[0].mxu0 %v2684
      %v2965 = vpop.f32.mrb[0].mxu0
      %v2966 = vadd.f32 %v2612, %v2965
      %v2967 = vpop.f32.mrb[0].mxu0
      %v2968 = vadd.f32 %v2616, %v2967
      %v2969 = vpop.f32.mrb[0].mxu0
      %v2970 = vadd.f32 %v2612, %v2969
      %v2971 = vpop.f32.mrb[0].mxu0
      %v2972 = vadd.f32 %v2616, %v2971
      %2973 = vmatprep.mubr.bf16.mxu0 0
      %2974 = vmatmul.mubr.bf16.gmra.mrb[0].mxu0 %v2687
      %v2975 = vpop.f32.mrb[0].mxu0
      %v2976 = vadd.f32 %v2612, %v2975
      %v2977 = vpop.f32.mrb[0].mxu0
      %v2978 = vadd.f32 %v2616, %v2977
      %v2979 = vpop.f32.mrb[0].mxu0
      %v2980 = vadd.f32 %v2612, %v2979
      %v2981 = vpop.f32.mrb[0].mxu0
      %v2982 = vadd.f32 %v2616, %v2981
      %2983 = vmatprep.mubr.bf16.mxu0 0
      %2984 = vmatmul.mubr.bf16.gmra.mrb[0].mxu0 %v2690
      %v2985 = vpop.f32.mrb[0].mxu0
      %v2986 = vadd.f32 %v2612, %v2985
      %v2987 = vpop.f32.mrb[0].mxu0
      %v2988 = vadd.f32 %v2616, %v2987
      %v2989 = vpop.f32.mrb[0].mxu0
      %v2990 = vadd.f32 %v2612, %v2989
      %v2991 = vpop.f32.mrb[0].mxu0
      %v2992 = vadd.f32 %v2616, %v2991
      %2993 = vmatprep.mubr.bf16.mxu0 0
      %2994 = vmatmul.mubr.bf16.gmra.mrb[0].mxu0 %v2693
      %v2995 = vpop.f32.mrb[0].mxu0
      %v2996 = vadd.f32 %v2612, %v2995
      %v2997 = vpop.f32.mrb[0].mxu0
      %v2998 = vadd.f32 %v2616, %v2997
      %v2999 = vpop.f32.mrb[0].mxu0
      %v3000 = vadd.f32 %v2612, %v2999
      %v3001 = vpop.f32.mrb[0].mxu0
      %v3002 = vadd.f32 %v2616, %v3001
      %3003 = vmatprep.mubr.bf16.mxu0 0
      %3004 = vmatmul.mubr.bf16.gmra.mrb[0].mxu0 %v2696
      %v3005 = vpop.f32.mrb[0].mxu0
      %v3006 = vadd.f32 %v2612, %v3005
      %v3007 = vpop.f32.mrb[0].mxu0
      %v3008 = vadd.f32 %v2616, %v3007
      %v3009 = vpop.f32.mrb[0].mxu0
      %v3010 = vadd.f32 %v2612, %v3009
      %v3011 = vpop.f32.mrb[0].mxu0
      %v3012 = vadd.f32 %v2616, %v3011
      %3013 = vmatprep.mubr.bf16.mxu0 0
      %3014 = vmatmul.mubr.bf16.gmra.mrb[0].mxu0 %v2699
      %v3015 = vpop.f32.mrb[0].mxu0
      %v3016 = vadd.f32 %v2612, %v3015
      %v3017 = vpop.f32.mrb[0].mxu0
      %v3018 = vadd.f32 %v2616, %v3017
      %v3019 = vpop.f32.mrb[0].mxu0
      %v3020 = vadd.f32 %v2612, %v3019
      %v3021 = vpop.f32.mrb[0].mxu0
      %v3022 = vadd.f32 %v2616, %v3021
      %3023 = vmatprep.mubr.bf16.mxu0 0
      %3024 = vmatmul.mubr.bf16.gmra.mrb[0].mxu0 %v2702
      %v3025 = vpop.f32.mrb[0].mxu0
      %v3026 = vadd.f32 %v2612, %v3025
      %v3027 = vpop.f32.mrb[0].mxu0
      %v3028 = vadd.f32 %v2616, %v3027
      %v3029 = vpop.f32.mrb[0].mxu0
      %v3030 = vadd.f32 %v2612, %v3029
      %v3031 = vpop.f32.mrb[0].mxu0
      %v3032 = vadd.f32 %v2616, %v3031
      %3033 = vmatprep.mubr.bf16.mxu0 0
      %3034 = vmatmul.mubr.bf16.gmra.mrb[0].mxu0 %v2705
      %v3035 = vpop.f32.mrb[0].mxu0
      %v3036 = vadd.f32 %v2612, %v3035
      %v3037 = vpop.f32.mrb[0].mxu0
      %v3038 = vadd.f32 %v2616, %v3037
      %v3039 = vpop.f32.mrb[0].mxu0
      %v3040 = vadd.f32 %v2612, %v3039
      %v3041 = vpop.f32.mrb[0].mxu0
      %v3042 = vadd.f32 %v2616, %v3041
      %3043 = vmatprep.mubr.bf16.mxu0 0
      %3044 = vmatmul.mubr.bf16.gmra.mrb[0].mxu0 %v2708
      %v3045 = vpop.f32.mrb[0].mxu0
      %v3046 = vadd.f32 %v2612, %v3045
      %v3047 = vpop.f32.mrb[0].mxu0
      %v3048 = vadd.f32 %v2616, %v3047
      %v3049 = vpop.f32.mrb[0].mxu0
      %v3050 = vadd.f32 %v2612, %v3049
      %v3051 = vpop.f32.mrb[0].mxu0
      %v3052 = vadd.f32 %v2616, %v3051
      %3053 = vmatprep.mubr.bf16.mxu0 0
      %3054 = vmatmul.mubr.bf16.gmra.mrb[0].mxu0 %v2711
      %v3055 = vpop.f32.mrb[0].mxu0
      %v3056 = vadd.f32 %v2612, %v3055
      %v3057 = vpop.f32.mrb[0].mxu0
      %v3058 = vadd.f32 %v2616, %v3057
      %v3059 = vpop.f32.mrb[0].mxu0
      %v3060 = vadd.f32 %v2612, %v3059
      %v3061 = vpop.f32.mrb[0].mxu0
      %v3062 = vadd.f32 %v2616, %v3061
      %3063 = vmatprep.mubr.bf16.mxu0 0
      %3064 = vmatmul.mubr.bf16.gmra.mrb[0].mxu0 %v2714
      %v3065 = vpop.f32.mrb[0].mxu0
      %v3066 = vadd.f32 %v2612, %v3065
      %v3067 = vpop.f32.mrb[0].mxu0
      %v3068 = vadd.f32 %v2616, %v3067
      %v3069 = vpop.f32.mrb[0].mxu0
      %v3070 = vadd.f32 %v2612, %v3069
      %v3071 = vpop.f32.mrb[0].mxu0
      %v3072 = vadd.f32 %v2616, %v3071
      %3073 = vmatprep.mubr.bf16.mxu0 0
      %3074 = vmatmul.mubr.bf16.gmra.mrb[0].mxu0 %v2717
      %v3075 = vpop.f32.mrb[0].mxu0
      %v3076 = vadd.f32 %v2612, %v3075
      %v3077 = vpop.f32.mrb[0].mxu0
      %v3078 = vadd.f32 %v2616, %v3077
      %v3079 = vpop.f32.mrb[0].mxu0
      %v3080 = vadd.f32 %v2612, %v3079
      %v3081 = vpop.f32.mrb[0].mxu0
      %v3082 = vadd.f32 %v2616, %v3081
      %3083 = vmatprep.mubr.bf16.mxu0 0
      %3084 = vmatmul.mubr.bf16.gmra.mrb[0].mxu0 %v2720
      %v3085 = vpop.f32.mrb[0].mxu0
      %v3086 = vadd.f32 %v2612, %v3085
      %v3087 = vpop.f32.mrb[0].mxu0
      %v3088 = vadd.f32 %v2616, %v3087
      %v3089 = vpop.f32.mrb[0].mxu0
      %v3090 = vadd.f32 %v2612, %v3089
      %v3091 = vpop.f32.mrb[0].mxu0
      %v3092 = vadd.f32 %v2616, %v3091
      %3093 = vmatprep.mubr.bf16.mxu0 0
      %3094 = vmatmul.mubr.bf16.gmra.mrb[0].mxu0 %v2723
      %v3095 = vpop.f32.mrb[0].mxu0
      %v3096 = vadd.f32 %v2612, %v3095
      %v3097 = vpop.f32.mrb[0].mxu0
      %v3098 = vadd.f32 %v2616, %v3097
      %v3099 = vpop.f32.mrb[0].mxu0
      %v3100 = vadd.f32 %v2612, %v3099
      %v3101 = vpop.f32.mrb[0].mxu0
      %v3102 = vadd.f32 %v2616, %v3101
      %3103 = vmatprep.mubr.bf16.mxu0 0
      %3104 = vmatmul.mubr.bf16.gmra.mrb[0].mxu0 %v2726
      %v3105 = vpop.f32.mrb[0].mxu0
      %v3106 = vadd.f32 %v2612, %v3105
      %v3107 = vpop.f32.mrb[0].mxu0
      %v3108 = vadd.f32 %v2616, %v3107
      %v3109 = vpop.f32.mrb[0].mxu0
      %v3110 = vadd.f32 %v2612, %v3109
      %v3111 = vpop.f32.mrb[0].mxu0
      %v3112 = vadd.f32 %v2616, %v3111
      %3113 = vmatprep.mubr.bf16.mxu0 0
      %3114 = vmatmul.mubr.bf16.gmra.mrb[0].mxu0 %v2729
      %v3115 = vpop.f32.mrb[0].mxu0
      %v3116 = vadd.f32 %v2612, %v3115
      %v3117 = vpop.f32.mrb[0].mxu0
      %v3118 = vadd.f32 %v2616, %v3117
      %v3119 = vpop.f32.mrb[0].mxu0
      %v3120 = vadd.f32 %v2612, %v3119
      %v3121 = vpop.f32.mrb[0].mxu0
      %v3122 = vadd.f32 %v2616, %v3121
      %3123 = vmatprep.mubr.bf16.mxu0 0
      %3124 = vmatmul.mubr.bf16.gmra.mrb[0].mxu0 %v2732
      %v3125 = vpop.f32.mrb[0].mxu0
      %v3126 = vadd.f32 %v2612, %v3125
      %v3127 = vpop.f32.mrb[0].mxu0
      %v3128 = vadd.f32 %v2616, %v3127
      %v3129 = vpop.f32.mrb[0].mxu0
      %v3130 = vadd.f32 %v2612, %v3129
      %v3131 = vpop.f32.mrb[0].mxu0
      %v3132 = vadd.f32 %v2616, %v3131
      %3133 = vmatprep.mubr.bf16.mxu0 0
      %3134 = vmatmul.mubr.bf16.gmra.mrb[0].mxu0 %v2735
      %v3135 = vpop.f32.mrb[0].mxu0
      %v3136 = vadd.f32 %v2612, %v3135
      %v3137 = vpop.f32.mrb[0].mxu0
      %v3138 = vadd.f32 %v2616, %v3137
      %v3139 = vpop.f32.mrb[0].mxu0
      %v3140 = vadd.f32 %v2612, %v3139
      %v3141 = vpop.f32.mrb[0].mxu0
      %v3142 = vadd.f32 %v2616, %v3141
      %3143 = vmatprep.mubr.bf16.mxu0 0
      %3144 = vmatmul.mubr.bf16.gmra.mrb[0].mxu0 %v2738
      %v3145 = vpop.f32.mrb[0].mxu0
      %v3146 = vadd.f32 %v2612, %v3145
      %v3147 = vpop.f32.mrb[0].mxu0
      %v3148 = vadd.f32 %v2616, %v3147
      %v3149 = vpop.f32.mrb[0].mxu0
      %v3150 = vadd.f32 %v2612, %v3149
      %v3151 = vpop.f32.mrb[0].mxu0
      %v3152 = vadd.f32 %v2616, %v3151
      %3153 = vmatprep.mubr.bf16.mxu0 0
      %3154 = vmatmul.mubr.bf16.gmra.mrb[0].mxu0 %v2741
      %v3155 = vpop.f32.mrb[0].mxu0
      %v3156 = vadd.f32 %v2612, %v3155
      %v3157 = vpop.f32.mrb[0].mxu0
      %v3158 = vadd.f32 %v2616, %v3157
      %v3159 = vpop.f32.mrb[0].mxu0
      %v3160 = vadd.f32 %v2612, %v3159
      %v3161 = vpop.f32.mrb[0].mxu0
      %v3162 = vadd.f32 %v2616, %v3161
      %3163 = vmatprep.mubr.bf16.mxu0 0
      %3164 = vmatmul.mubr.bf16.gmra.mrb[0].mxu0 %v2744
      %v3165 = vpop.f32.mrb[0].mxu0
      %v3166 = vadd.f32 %v2612, %v3165
      %v3167 = vpop.f32.mrb[0].mxu0
      %v3168 = vadd.f32 %v2616, %v3167
      %v3169 = vpop.f32.mrb[0].mxu0
      %v3170 = vadd.f32 %v2612, %v3169
      %v3171 = vpop.f32.mrb[0].mxu0
      %v3172 = vadd.f32 %v2616, %v3171
      %3173 = vmatprep.mubr.bf16.mxu0 0
      %3174 = vmatmul.mubr.bf16.gmra.mrb[0].mxu0 %v2747
      %v3175 = vpop.f32.mrb[0].mxu0
      %v3176 = vadd.f32 %v2612, %v3175
      %v3177 = vpop.f32.mrb[0].mxu0
      %v3178 = vadd.f32 %v2616, %v3177
      %v3179 = vpop.f32.mrb[0].mxu0
      %v3180 = vadd.f32 %v2612, %v3179
      %v3181 = vpop.f32.mrb[0].mxu0
      %v3182 = vadd.f32 %v2616, %v3181
      %3183 = vmatprep.mubr.bf16.mxu0 0
      %3184 = vmatmul.mubr.bf16.gmra.mrb[0].mxu0 %v2750
      %v3185 = vpop.f32.mrb[0].mxu0
      %v3186 = vadd.f32 %v2612, %v3185
      %v3187 = vpop.f32.mrb[0].mxu0
      %v3188 = vadd.f32 %v2616, %v3187
      %v3189 = vpop.f32.mrb[0].mxu0
      %v3190 = vadd.f32 %v2612, %v3189
      %v3191 = vpop.f32.mrb[0].mxu0
      %v3192 = vadd.f32 %v2616, %v3191
      %3193 = vmatprep.mubr.bf16.mxu0 0
      %3194 = vmatmul.mubr.bf16.gmra.mrb[0].mxu0 %v2753
      %v3195 = vpop.f32.mrb[0].mxu0
      %v3196 = vadd.f32 %v2612, %v3195
      %v3197 = vpop.f32.mrb[0].mxu0
      %v3198 = vadd.f32 %v2616, %v3197
      %v3199 = vpop.f32.mrb[0].mxu0
      %v3200 = vadd.f32 %v2612, %v3199
      %v3201 = vpop.f32.mrb[0].mxu0
      %v3202 = vadd.f32 %v2616, %v3201
      %3203 = vmatprep.mubr.bf16.mxu0 0
      %3204 = vmatmul.mubr.bf16.gmra.mrb[0].mxu0 %v2756
      %v3205 = vpop.f32.mrb[0].mxu0
      %v3206 = vadd.f32 %v2612, %v3205
      %v3207 = vpop.f32.mrb[0].mxu0
      %v3208 = vadd.f32 %v2616, %v3207
      %v3209 = vpop.f32.mrb[0].mxu0
      %v3210 = vadd.f32 %v2612, %v3209
      %v3211 = vpop.f32.mrb[0].mxu0
      %v3212 = vadd.f32 %v2616, %v3211
      %3213 = vmatprep.mubr.bf16.mxu0 0
      %3214 = vmatmul.mubr.bf16.gmra.mrb[0].mxu0 %v2759
      %v3215 = vpop.f32.mrb[0].mxu0
      %v3216 = vadd.f32 %v2612, %v3215
      %v3217 = vpop.f32.mrb[0].mxu0
      %v3218 = vadd.f32 %v2616, %v3217
      %v3219 = vpop.f32.mrb[0].mxu0
      %v3220 = vadd.f32 %v2612, %v3219
      %v3221 = vpop.f32.mrb[0].mxu0
      %v3222 = vadd.f32 %v2616, %v3221
      %3223 = vmatprep.mubr.bf16.mxu0 0
      %3224 = vmatmul.mubr.bf16.gmra.mrb[0].mxu0 %v2762
      %v3225 = vpop.f32.mrb[0].mxu0
      %v3226 = vadd.f32 %v2612, %v3225
      %v3227 = vpop.f32.mrb[0].mxu0
      %v3228 = vadd.f32 %v2616, %v3227
      %v3229 = vpop.f32.mrb[0].mxu0
      %v3230 = vadd.f32 %v2612, %v3229
      %v3231 = vpop.f32.mrb[0].mxu0
      %v3232 = vadd.f32 %v2616, %v3231
      %3233 = vmatprep.mubr.bf16.mxu0 0
      %3234 = vmatmul.mubr.bf16.gmra.mrb[0].mxu0 %v2765
      %v3235 = vpop.f32.mrb[0].mxu0
      %v3236 = vadd.f32 %v2612, %v3235
      %v3237 = vpop.f32.mrb[0].mxu0
      %v3238 = vadd.f32 %v2616, %v3237
      %v3239 = vpop.f32.mrb[0].mxu0
      %v3240 = vadd.f32 %v2612, %v3239
      %v3241 = vpop.f32.mrb[0].mxu0
      %v3242 = vadd.f32 %v2616, %v3241
      %3243 = vmatprep.mubr.bf16.mxu0 0
      %3244 = vmatmul.mubr.bf16.gmra.mrb[0].mxu0 %v2768
      %v3245 = vpop.f32.mrb[0].mxu0
      %v3246 = vadd.f32 %v2612, %v3245
      %v3247 = vpop.f32.mrb[0].mxu0
      %v3248 = vadd.f32 %v2616, %v3247
      %v3249 = vpop.f32.mrb[0].mxu0
      %v3250 = vadd.f32 %v2612, %v3249
      %v3251 = vpop.f32.mrb[0].mxu0
      %v3252 = vadd.f32 %v2616, %v3251
      %3253 = vmatprep.mubr.bf16.mxu0 0
      %3254 = vmatmul.mubr.bf16.gmra.mrb[0].mxu0 %v2771
      %v3255 = vpop.f32.mrb[0].mxu0
      %v3256 = vadd.f32 %v2612, %v3255
      %v3257 = vpop.f32.mrb[0].mxu0
      %v3258 = vadd.f32 %v2616, %v3257
      %v3259 = vpop.f32.mrb[0].mxu0
      %v3260 = vadd.f32 %v2612, %v3259
      %v3261 = vpop.f32.mrb[0].mxu0
      %v3262 = vadd.f32 %v2616, %v3261
      %3263 = vmatprep.mubr.bf16.mxu0 0
      %3264 = vmatmul.mubr.bf16.gmra.mrb[0].mxu0 %v2774
      %v3265 = vpop.f32.mrb[0].mxu0
      %v3266 = vadd.f32 %v2612, %v3265
      %v3267 = vpop.f32.mrb[0].mxu0
      %v3268 = vadd.f32 %v2616, %v3267
      %v3269 = vpop.f32.mrb[0].mxu0
      %v3270 = vadd.f32 %v2612, %v3269
      %v3271 = vpop.f32.mrb[0].mxu0
      %v3272 = vadd.f32 %v2616, %v3271
      %3273 = vmatprep.mubr.bf16.mxu0 0
      %3274 = vmatmul.mubr.bf16.gmra.mrb[0].mxu0 %v2777
      %v3275 = vpop.f32.mrb[0].mxu0
      %v3276 = vadd.f32 %v2612, %v3275
      %v3277 = vpop.f32.mrb[0].mxu0
      %v3278 = vadd.f32 %v2616, %v3277
      %v3279 = vpop.f32.mrb[0].mxu0
      %v3280 = vadd.f32 %v2612, %v3279
      %v3281 = vpop.f32.mrb[0].mxu0
      %v3282 = vadd.f32 %v2616, %v3281
      %3283 = vmatprep.mubr.bf16.mxu0 0
      %3284 = vmatmul.mubr.bf16.gmra.mrb[0].mxu0 %v2780
      %v3285 = vpop.f32.mrb[0].mxu0
      %v3286 = vadd.f32 %v2612, %v3285
      %v3287 = vpop.f32.mrb[0].mxu0
      %v3288 = vadd.f32 %v2616, %v3287
      %v3289 = vpop.f32.mrb[0].mxu0
      %v3290 = vadd.f32 %v2612, %v3289
      %v3291 = vpop.f32.mrb[0].mxu0
      %v3292 = vadd.f32 %v2616, %v3291
      %3293 = vmatprep.mubr.bf16.mxu0 0
      %3294 = vmatmul.mubr.bf16.gmra.mrb[0].mxu0 %v2783
      %v3295 = vpop.f32.mrb[0].mxu0
      %v3296 = vadd.f32 %v2612, %v3295
      %v3297 = vpop.f32.mrb[0].mxu0
      %v3298 = vadd.f32 %v2616, %v3297
      %v3299 = vpop.f32.mrb[0].mxu0
      %v3300 = vadd.f32 %v2612, %v3299
      %v3301 = vpop.f32.mrb[0].mxu0
      %v3302 = vadd.f32 %v2616, %v3301
      %3303 = vmatprep.mubr.bf16.mxu0 0
      %3304 = vmatmul.mubr.bf16.gmra.mrb[0].mxu0 %v2786
      %v3305 = vpop.f32.mrb[0].mxu0
      %v3306 = vadd.f32 %v2612, %v3305
      %v3307 = vpop.f32.mrb[0].mxu0
      %v3308 = vadd.f32 %v2616, %v3307
      %v3309 = vpop.f32.mrb[0].mxu0
      %v3310 = vadd.f32 %v2612, %v3309
      %v3311 = vpop.f32.mrb[0].mxu0
      %v3312 = vadd.f32 %v2616, %v3311
      %3313 = vmatprep.mubr.bf16.mxu0 0
      %3314 = vmatmul.mubr.bf16.gmra.mrb[0].mxu0 %v2789
      %v3315 = vpop.f32.mrb[0].mxu0
      %v3316 = vadd.f32 %v2612, %v3315
      %v3317 = vpop.f32.mrb[0].mxu0
      %v3318 = vadd.f32 %v2616, %v3317
      %v3319 = vpop.f32.mrb[0].mxu0
      %v3320 = vadd.f32 %v2612, %v3319
      %v3321 = vpop.f32.mrb[0].mxu0
      %v3322 = vadd.f32 %v2616, %v3321
      %3323 = vmatprep.mubr.bf16.mxu0 0
      %3324 = vmatmul.mubr.bf16.gmra.mrb[0].mxu0 %v2792
      %v3325 = vpop.f32.mrb[0].mxu0
      %v3326 = vadd.f32 %v2612, %v3325
      %v3327 = vpop.f32.mrb[0].mxu0
      %v3328 = vadd.f32 %v2616, %v3327
      %v3329 = vpop.f32.mrb[0].mxu0
      %v3330 = vadd.f32 %v2612, %v3329
      %v3331 = vpop.f32.mrb[0].mxu0
      %v3332 = vadd.f32 %v2616, %v3331
      %3333 = vmatprep.mubr.bf16.mxu0 0
      %3334 = vmatmul.mubr.bf16.gmra.mrb[0].mxu0 %v2795
      %v3335 = vpop.f32.mrb[0].mxu0
      %v3336 = vadd.f32 %v2612, %v3335
      %v3337 = vpop.f32.mrb[0].mxu0
      %v3338 = vadd.f32 %v2616, %v3337
      %v3339 = vpop.f32.mrb[0].mxu0
      %v3340 = vadd.f32 %v2612, %v3339
      %v3341 = vpop.f32.mrb[0].mxu0
      %v3342 = vadd.f32 %v2616, %v3341
      %3343 = vmatprep.mubr.bf16.mxu0 0
      %3344 = vmatmul.mubr.bf16.gmra.mrb[0].mxu0 %v2798
      %v3345 = vpop.f32.mrb[0].mxu0
      %v3346 = vadd.f32 %v2612, %v3345
      %v3347 = vpop.f32.mrb[0].mxu0
      %v3348 = vadd.f32 %v2616, %v3347
      %v3349 = vpop.f32.mrb[0].mxu0
      %v3350 = vadd.f32 %v2612, %v3349
      %v3351 = vpop.f32.mrb[0].mxu0
      %v3352 = vadd.f32 %v2616, %v3351
      %3353 = vmatprep.mubr.bf16.mxu0 0
      %3354 = vmatmul.mubr.bf16.gmra.mrb[0].mxu0 %v2801
      %v3355 = vpop.f32.mrb[0].mxu0
      %v3356 = vadd.f32 %v2612, %v3355
      %v3357 = vpop.f32.mrb[0].mxu0
      %v3358 = vadd.f32 %v2616, %v3357
      %v3359 = vpop.f32.mrb[0].mxu0
      %v3360 = vadd.f32 %v2612, %v3359
      %v3361 = vpop.f32.mrb[0].mxu0
      %v3362 = vadd.f32 %v2616, %v3361
      %3363 = vmatprep.mubr.bf16.mxu0 0
      %3364 = vmatmul.mubr.bf16.gmra.mrb[0].mxu0 %v2804
      %v3365 = vpop.f32.mrb[0].mxu0
      %v3366 = vadd.f32 %v2612, %v3365
      %v3367 = vpop.f32.mrb[0].mxu0
      %v3368 = vadd.f32 %v2616, %v3367
      %v3369 = vpop.f32.mrb[0].mxu0
      %v3370 = vadd.f32 %v2612, %v3369
      %v3371 = vpop.f32.mrb[0].mxu0
      %v3372 = vadd.f32 %v2616, %v3371
      %3373 = vmatprep.mubr.bf16.mxu0 0
      %3374 = vmatmul.mubr.bf16.gmra.mrb[0].mxu0 %v2807
      %v3375 = vpop.f32.mrb[0].mxu0
      %v3376 = vadd.f32 %v2612, %v3375
      %v3377 = vpop.f32.mrb[0].mxu0
      %v3378 = vadd.f32 %v2616, %v3377
      %v3379 = vpop.f32.mrb[0].mxu0
      %v3380 = vadd.f32 %v2612, %v3379
      %v3381 = vpop.f32.mrb[0].mxu0
      %v3382 = vadd.f32 %v2616, %v3381
      %3383 = vmatprep.mubr.bf16.mxu0 0
      %3384 = vmatmul.mubr.bf16.gmra.mrb[0].mxu0 %v2810
      %v3385 = vpop.f32.mrb[0].mxu0
      %v3386 = vadd.f32 %v2612, %v3385
      %v3387 = vpop.f32.mrb[0].mxu0
      %v3388 = vadd.f32 %v2616, %v3387
      %v3389 = vpop.f32.mrb[0].mxu0
      %v3390 = vadd.f32 %v2612, %v3389
      %v3391 = vpop.f32.mrb[0].mxu0
      %v3392 = vadd.f32 %v2616, %v3391
      %3393 = vmatprep.mubr.bf16.mxu0 0
      %3394 = vmatmul.mubr.bf16.gmra.mrb[0].mxu0 %v2813
      %v3395 = vpop.f32.mrb[0].mxu0
      %v3396 = vadd.f32 %v2612, %v3395
      %v3397 = vpop.f32.mrb[0].mxu0
      %v3398 = vadd.f32 %v2616, %v3397
      %v3399 = vpop.f32.mrb[0].mxu0
      %v3400 = vadd.f32 %v2612, %v3399
      %v3401 = vpop.f32.mrb[0].mxu0
      %v3402 = vadd.f32 %v2616, %v3401
      %3403 = vmatprep.mubr.bf16.mxu0 0
      %3404 = vmatmul.mubr.bf16.gmra.mrb[0].mxu0 %v2816
      %v3405 = vpop.f32.mrb[0].mxu0
      %v3406 = vadd.f32 %v2612, %v3405
      %v3407 = vpop.f32.mrb[0].mxu0
      %v3408 = vadd.f32 %v2616, %v3407
      %v3409 = vpop.f32.mrb[0].mxu0
      %v3410 = vadd.f32 %v2612, %v3409
      %v3411 = vpop.f32.mrb[0].mxu0
      %v3412 = vadd.f32 %v2616, %v3411
      %3413 = vmatprep.mubr.bf16.mxu0 0
      %3414 = vmatmul.mubr.bf16.gmra.mrb[0].mxu0 %v2819
      %v3415 = vpop.f32.mrb[0].mxu0
      %v3416 = vadd.f32 %v2612, %v3415
      %v3417 = vpop.f32.mrb[0].mxu0
      %v3418 = vadd.f32 %v2616, %v3417
      %v3419 = vpop.f32.mrb[0].mxu0
      %v3420 = vadd.f32 %v2612, %v3419
      %v3421 = vpop.f32.mrb[0].mxu0
      %v3422 = vadd.f32 %v2616, %v3421
      %3423 = vmatprep.mubr.bf16.mxu0 0
      %3424 = vmatmul.mubr.bf16.gmra.mrb[0].mxu0 %v2822
      %v3425 = vpop.f32.mrb[0].mxu0
      %v3426 = vadd.f32 %v2612, %v3425
      %v3427 = vpop.f32.mrb[0].mxu0
      %v3428 = vadd.f32 %v2616, %v3427
      %v3429 = vpop.f32.mrb[0].mxu0
      %v3430 = vadd.f32 %v2612, %v3429
      %v3431 = vpop.f32.mrb[0].mxu0
      %v3432 = vadd.f32 %v2616, %v3431
      %3433 = vmatprep.mubr.bf16.mxu0 0
      %3434 = vmatmul.mubr.bf16.gmra.mrb[0].mxu0 %v2825
      %v3435 = vpop.f32.mrb[0].mxu0
      %v3436 = vadd.f32 %v2612, %v3435
      %v3437 = vpop.f32.mrb[0].mxu0
      %v3438 = vadd.f32 %v2616, %v3437
      %v3439 = vpop.f32.mrb[0].mxu0
      %v3440 = vadd.f32 %v2612, %v3439
      %v3441 = vpop.f32.mrb[0].mxu0
      %v3442 = vadd.f32 %v2616, %v3441
      %3443 = vmatprep.mubr.bf16.mxu0 0
      %3444 = vmatmul.mubr.bf16.gmra.mrb[0].mxu0 %v2828
      %v3445 = vpop.f32.mrb[0].mxu0
      %v3446 = vadd.f32 %v2612, %v3445
      %v3447 = vpop.f32.mrb[0].mxu0
      %v3448 = vadd.f32 %v2616, %v3447
      %v3449 = vpop.f32.mrb[0].mxu0
      %v3450 = vadd.f32 %v2612, %v3449
      %v3451 = vpop.f32.mrb[0].mxu0
      %v3452 = vadd.f32 %v2616, %v3451
      %3453 = vmatprep.mubr.bf16.mxu0 0
      %3454 = vmatmul.mubr.bf16.gmra.mrb[0].mxu0 %v2831
      %v3455 = vpop.f32.mrb[0].mxu0
      %v3456 = vadd.f32 %v2612, %v3455
      %v3457 = vpop.f32.mrb[0].mxu0
      %v3458 = vadd.f32 %v2616, %v3457
      %v3459 = vpop.f32.mrb[0].mxu0
      %v3460 = vadd.f32 %v2612, %v3459
      %v3461 = vpop.f32.mrb[0].mxu0
      %v3462 = vadd.f32 %v2616, %v3461
      %3463 = vmatprep.mubr.bf16.mxu0 0
      %3464 = vmatmul.mubr.bf16.gmra.mrb[0].mxu0 %v2834
      %v3465 = vpop.f32.mrb[0].mxu0
      %v3466 = vadd.f32 %v2612, %v3465
      %v3467 = vpop.f32.mrb[0].mxu0
      %v3468 = vadd.f32 %v2616, %v3467
      %v3469 = vpop.f32.mrb[0].mxu0
      %v3470 = vadd.f32 %v2612, %v3469
      %v3471 = vpop.f32.mrb[0].mxu0
      %v3472 = vadd.f32 %v2616, %v3471
      %3473 = vmatprep.mubr.bf16.mxu0 0
      %3474 = vmatmul.mubr.bf16.gmra.mrb[0].mxu0 %v2837
      %v3475 = vpop.f32.mrb[0].mxu0
      %v3476 = vadd.f32 %v2612, %v3475
      %v3477 = vpop.f32.mrb[0].mxu0
      %v3478 = vadd.f32 %v2616, %v3477
      %v3479 = vpop.f32.mrb[0].mxu0
      %v3480 = vadd.f32 %v2612, %v3479
      %v3481 = vpop.f32.mrb[0].mxu0
      %v3482 = vadd.f32 %v2616, %v3481
      %3483 = vmatprep.mubr.bf16.mxu0 0
      %3484 = vmatmul.mubr.bf16.gmra.mrb[0].mxu0 %v2840
      %v3485 = vpop.f32.mrb[0].mxu0
      %v3486 = vadd.f32 %v2612, %v3485
      %v3487 = vpop.f32.mrb[0].mxu0
      %v3488 = vadd.f32 %v2616, %v3487
      %v3489 = vpop.f32.mrb[0].mxu0
      %v3490 = vadd.f32 %v2612, %v3489
      %v3491 = vpop.f32.mrb[0].mxu0
      %v3492 = vadd.f32 %v2616, %v3491
      %3493 = vmatprep.mubr.bf16.mxu0 0
      %3494 = vmatmul.mubr.bf16.gmra.mrb[0].mxu0 %v2843
      %v3495 = vpop.f32.mrb[0].mxu0
      %v3496 = vadd.f32 %v2612, %v3495
      %v3497 = vpop.f32.mrb[0].mxu0
      %v3498 = vadd.f32 %v2616, %v3497
      %v3499 = vpop.f32.mrb[0].mxu0
      %v3500 = vadd.f32 %v2612, %v3499
      %v3501 = vpop.f32.mrb[0].mxu0
      %v3502 = vadd.f32 %v2616, %v3501
      %3503 = vmatprep.mubr.bf16.mxu0 0
      %3504 = vmatmul.mubr.bf16.gmra.mrb[0].mxu0 %v2846
      %v3505 = vpop.f32.mrb[0].mxu0
      %v3506 = vadd.f32 %v2612, %v3505
      %v3507 = vpop.f32.mrb[0].mxu0
      %v3508 = vadd.f32 %v2616, %v3507
      %v3509 = vpop.f32.mrb[0].mxu0
      %v3510 = vadd.f32 %v2612, %v3509
      %v3511 = vpop.f32.mrb[0].mxu0
      %v3512 = vadd.f32 %v2616, %v3511
      %3513 = vmatprep.mubr.bf16.mxu0 0
      %3514 = vmatmul.mubr.bf16.gmra.mrb[0].mxu0 %v2849
      %v3515 = vpop.f32.mrb[0].mxu0
      %v3516 = vadd.f32 %v2612, %v3515
      %v3517 = vpop.f32.mrb[0].mxu0
      %v3518 = vadd.f32 %v2616, %v3517
      %v3519 = vpop.f32.mrb[0].mxu0
      %v3520 = vadd.f32 %v2612, %v3519
      %v3521 = vpop.f32.mrb[0].mxu0
      %v3522 = vadd.f32 %v2616, %v3521
      %3523 = vdwg.mxu0
      %v3524 = vmax.f32 %v2886, 0.0
      %v3525 = vmax.f32 %v2888, 0.0
      %v3526 = vmax.f32 %v2890, 0.0
      %v3527 = vmax.f32 %v2892, 0.0
      %v3528 = vmax.f32 %v2896, 0.0
      %v3529 = vmax.f32 %v2898, 0.0
      %v3530 = vmax.f32 %v2900, 0.0
      %v3531 = vmax.f32 %v2902, 0.0
      %v3532 = vmax.f32 %v2906, 0.0
      %v3533 = vmax.f32 %v2908, 0.0
      %v3534 = vmax.f32 %v2910, 0.0
      %v3535 = vmax.f32 %v2912, 0.0
      %v3536 = vmax.f32 %v2916, 0.0
      %v3537 = vmax.f32 %v2918, 0.0
      %v3538 = vmax.f32 %v2920, 0.0
      %v3539 = vmax.f32 %v2922, 0.0
      %v3540 = vmax.f32 %v2926, 0.0
      %v3541 = vmax.f32 %v2928, 0.0
      %v3542 = vmax.f32 %v2930, 0.0
      %v3543 = vmax.f32 %v2932, 0.0
      %v3544 = vmax.f32 %v2936, 0.0
      %v3545 = vmax.f32 %v2938, 0.0
      %v3546 = vmax.f32 %v2940, 0.0
      %v3547 = vmax.f32 %v2942, 0.0
      %v3548 = vmax.f32 %v2946, 0.0
      %v3549 = vmax.f32 %v2948, 0.0
      %v3550 = vmax.f32 %v2950, 0.0
      %v3551 = vmax.f32 %v2952, 0.0
      %v3552 = vmax.f32 %v2956, 0.0
      %v3553 = vmax.f32 %v2958, 0.0
      %v3554 = vmax.f32 %v2960, 0.0
      %v3555 = vmax.f32 %v2962, 0.0
      %v3556 = vmax.f32 %v2966, 0.0
      %v3557 = vmax.f32 %v2968, 0.0
      %v3558 = vmax.f32 %v2970, 0.0
      %v3559 = vmax.f32 %v2972, 0.0
      %v3560 = vmax.f32 %v2976, 0.0
      %v3561 = vmax.f32 %v2978, 0.0
      %v3562 = vmax.f32 %v2980, 0.0
      %v3563 = vmax.f32 %v2982, 0.0
      %v3564 = vmax.f32 %v2986, 0.0
      %v3565 = vmax.f32 %v2988, 0.0
      %v3566 = vmax.f32 %v2990, 0.0
      %v3567 = vmax.f32 %v2992, 0.0
      %v3568 = vmax.f32 %v2996, 0.0
      %v3569 = vmax.f32 %v2998, 0.0
      %v3570 = vmax.f32 %v3000, 0.0
      %v3571 = vmax.f32 %v3002, 0.0
      %v3572 = vmax.f32 %v3006, 0.0
      %v3573 = vmax.f32 %v3008, 0.0
      %v3574 = vmax.f32 %v3010, 0.0
      %v3575 = vmax.f32 %v3012, 0.0
      %v3576 = vmax.f32 %v3016, 0.0
      %v3577 = vmax.f32 %v3018, 0.0
      %v3578 = vmax.f32 %v3020, 0.0
      %v3579 = vmax.f32 %v3022, 0.0
      %v3580 = vmax.f32 %v3026, 0.0
      %v3581 = vmax.f32 %v3028, 0.0
      %v3582 = vmax.f32 %v3030, 0.0
      %v3583 = vmax.f32 %v3032, 0.0
      %v3584 = vmax.f32 %v3036, 0.0
      %v3585 = vmax.f32 %v3038, 0.0
      %v3586 = vmax.f32 %v3040, 0.0
      %v3587 = vmax.f32 %v3042, 0.0
      %v3588 = vmax.f32 %v3046, 0.0
      %v3589 = vmax.f32 %v3048, 0.0
      %v3590 = vmax.f32 %v3050, 0.0
      %v3591 = vmax.f32 %v3052, 0.0
      %v3592 = vmax.f32 %v3056, 0.0
      %v3593 = vmax.f32 %v3058, 0.0
      %v3594 = vmax.f32 %v3060, 0.0
      %v3595 = vmax.f32 %v3062, 0.0
      %v3596 = vmax.f32 %v3066, 0.0
      %v3597 = vmax.f32 %v3068, 0.0
      %v3598 = vmax.f32 %v3070, 0.0
      %v3599 = vmax.f32 %v3072, 0.0
      %v3600 = vmax.f32 %v3076, 0.0
      %v3601 = vmax.f32 %v3078, 0.0
      %v3602 = vmax.f32 %v3080, 0.0
      %v3603 = vmax.f32 %v3082, 0.0
      %v3604 = vmax.f32 %v3086, 0.0
      %v3605 = vmax.f32 %v3088, 0.0
      %v3606 = vmax.f32 %v3090, 0.0
      %v3607 = vmax.f32 %v3092, 0.0
      %v3608 = vmax.f32 %v3096, 0.0
      %v3609 = vmax.f32 %v3098, 0.0
      %v3610 = vmax.f32 %v3100, 0.0
      %v3611 = vmax.f32 %v3102, 0.0
      %v3612 = vmax.f32 %v3106, 0.0
      %v3613 = vmax.f32 %v3108, 0.0
      %v3614 = vmax.f32 %v3110, 0.0
      %v3615 = vmax.f32 %v3112, 0.0
      %v3616 = vmax.f32 %v3116, 0.0
      %v3617 = vmax.f32 %v3118, 0.0
      %v3618 = vmax.f32 %v3120, 0.0
      %v3619 = vmax.f32 %v3122, 0.0
      %v3620 = vmax.f32 %v3126, 0.0
      %v3621 = vmax.f32 %v3128, 0.0
      %v3622 = vmax.f32 %v3130, 0.0
      %v3623 = vmax.f32 %v3132, 0.0
      %v3624 = vmax.f32 %v3136, 0.0
      %v3625 = vmax.f32 %v3138, 0.0
      %v3626 = vmax.f32 %v3140, 0.0
      %v3627 = vmax.f32 %v3142, 0.0
      %v3628 = vmax.f32 %v3146, 0.0
      %v3629 = vmax.f32 %v3148, 0.0
      %v3630 = vmax.f32 %v3150, 0.0
      %v3631 = vmax.f32 %v3152, 0.0
      %v3632 = vmax.f32 %v3156, 0.0
      %v3633 = vmax.f32 %v3158, 0.0
      %v3634 = vmax.f32 %v3160, 0.0
      %v3635 = vmax.f32 %v3162, 0.0
      %v3636 = vmax.f32 %v3166, 0.0
      %v3637 = vmax.f32 %v3168, 0.0
      %v3638 = vmax.f32 %v3170, 0.0
      %v3639 = vmax.f32 %v3172, 0.0
      %v3640 = vmax.f32 %v3176, 0.0
      %v3641 = vmax.f32 %v3178, 0.0
      %v3642 = vmax.f32 %v3180, 0.0
      %v3643 = vmax.f32 %v3182, 0.0
      %v3644 = vmax.f32 %v3186, 0.0
      %v3645 = vmax.f32 %v3188, 0.0
      %v3646 = vmax.f32 %v3190, 0.0
      %v3647 = vmax.f32 %v3192, 0.0
      %v3648 = vmax.f32 %v3196, 0.0
      %v3649 = vmax.f32 %v3198, 0.0
      %v3650 = vmax.f32 %v3200, 0.0
      %v3651 = vmax.f32 %v3202, 0.0
      %v3652 = vmax.f32 %v3206, 0.0
      %v3653 = vmax.f32 %v3208, 0.0
      %v3654 = vmax.f32 %v3210, 0.0
      %v3655 = vmax.f32 %v3212, 0.0
      %v3656 = vmax.f32 %v3216, 0.0
      %v3657 = vmax.f32 %v3218, 0.0
      %v3658 = vmax.f32 %v3220, 0.0
      %v3659 = vmax.f32 %v3222, 0.0
      %v3660 = vmax.f32 %v3226, 0.0
      %v3661 = vmax.f32 %v3228, 0.0
      %v3662 = vmax.f32 %v3230, 0.0
      %v3663 = vmax.f32 %v3232, 0.0
      %v3664 = vmax.f32 %v3236, 0.0
      %v3665 = vmax.f32 %v3238, 0.0
      %v3666 = vmax.f32 %v3240, 0.0
      %v3667 = vmax.f32 %v3242, 0.0
      %v3668 = vmax.f32 %v3246, 0.0
      %v3669 = vmax.f32 %v3248, 0.0
      %v3670 = vmax.f32 %v3250, 0.0
      %v3671 = vmax.f32 %v3252, 0.0
      %v3672 = vmax.f32 %v3256, 0.0
      %v3673 = vmax.f32 %v3258, 0.0
      %v3674 = vmax.f32 %v3260, 0.0
      %v3675 = vmax.f32 %v3262, 0.0
      %v3676 = vmax.f32 %v3266, 0.0
      %v3677 = vmax.f32 %v3268, 0.0
      %v3678 = vmax.f32 %v3270, 0.0
      %v3679 = vmax.f32 %v3272, 0.0
      %v3680 = vmax.f32 %v3276, 0.0
      %v3681 = vmax.f32 %v3278, 0.0
      %v3682 = vmax.f32 %v3280, 0.0
      %v3683 = vmax.f32 %v3282, 0.0
      %v3684 = vmax.f32 %v3286, 0.0
      %v3685 = vmax.f32 %v3288, 0.0
      %v3686 = vmax.f32 %v3290, 0.0
      %v3687 = vmax.f32 %v3292, 0.0
      %v3688 = vmax.f32 %v3296, 0.0
      %v3689 = vmax.f32 %v3298, 0.0
      %v3690 = vmax.f32 %v3300, 0.0
      %v3691 = vmax.f32 %v3302, 0.0
      %v3692 = vmax.f32 %v3306, 0.0
      %v3693 = vmax.f32 %v3308, 0.0
      %v3694 = vmax.f32 %v3310, 0.0
      %v3695 = vmax.f32 %v3312, 0.0
      %v3696 = vmax.f32 %v3316, 0.0
      %v3697 = vmax.f32 %v3318, 0.0
      %v3698 = vmax.f32 %v3320, 0.0
      %v3699 = vmax.f32 %v3322, 0.0
      %v3700 = vmax.f32 %v3326, 0.0
      %v3701 = vmax.f32 %v3328, 0.0
      %v3702 = vmax.f32 %v3330, 0.0
      %v3703 = vmax.f32 %v3332, 0.0
      %v3704 = vmax.f32 %v3336, 0.0
      %v3705 = vmax.f32 %v3338, 0.0
      %v3706 = vmax.f32 %v3340, 0.0
      %v3707 = vmax.f32 %v3342, 0.0
      %v3708 = vmax.f32 %v3346, 0.0
      %v3709 = vmax.f32 %v3348, 0.0
      %v3710 = vmax.f32 %v3350, 0.0
      %v3711 = vmax.f32 %v3352, 0.0
      %v3712 = vmax.f32 %v3356, 0.0
      %v3713 = vmax.f32 %v3358, 0.0
      %v3714 = vmax.f32 %v3360, 0.0
      %v3715 = vmax.f32 %v3362, 0.0
      %v3716 = vmax.f32 %v3366, 0.0
      %v3717 = vmax.f32 %v3368, 0.0
      %v3718 = vmax.f32 %v3370, 0.0
      %v3719 = vmax.f32 %v3372, 0.0
      %v3720 = vmax.f32 %v3376, 0.0
      %v3721 = vmax.f32 %v3378, 0.0
      %v3722 = vmax.f32 %v3380, 0.0
      %v3723 = vmax.f32 %v3382, 0.0
      %v3724 = vmax.f32 %v3386, 0.0
      %v3725 = vmax.f32 %v3388, 0.0
      %v3726 = vmax.f32 %v3390, 0.0
      %v3727 = vmax.f32 %v3392, 0.0
      %v3728 = vmax.f32 %v3396, 0.0
      %v3729 = vmax.f32 %v3398, 0.0
      %v3730 = vmax.f32 %v3400, 0.0
      %v3731 = vmax.f32 %v3402, 0.0
      %v3732 = vmax.f32 %v3406, 0.0
      %v3733 = vmax.f32 %v3408, 0.0
      %v3734 = vmax.f32 %v3410, 0.0
      %v3735 = vmax.f32 %v3412, 0.0
      %v3736 = vmax.f32 %v3416, 0.0
      %v3737 = vmax.f32 %v3418, 0.0
      %v3738 = vmax.f32 %v3420, 0.0
      %v3739 = vmax.f32 %v3422, 0.0
      %v3740 = vmax.f32 %v3426, 0.0
      %v3741 = vmax.f32 %v3428, 0.0
      %v3742 = vmax.f32 %v3430, 0.0
      %v3743 = vmax.f32 %v3432, 0.0
      %v3744 = vmax.f32 %v3436, 0.0
      %v3745 = vmax.f32 %v3438, 0.0
      %v3746 = vmax.f32 %v3440, 0.0
      %v3747 = vmax.f32 %v3442, 0.0
      %v3748 = vmax.f32 %v3446, 0.0
      %v3749 = vmax.f32 %v3448, 0.0
      %v3750 = vmax.f32 %v3450, 0.0
      %v3751 = vmax.f32 %v3452, 0.0
      %v3752 = vmax.f32 %v3456, 0.0
      %v3753 = vmax.f32 %v3458, 0.0
      %v3754 = vmax.f32 %v3460, 0.0
      %v3755 = vmax.f32 %v3462, 0.0
      %v3756 = vmax.f32 %v3466, 0.0
      %v3757 = vmax.f32 %v3468, 0.0
      %v3758 = vmax.f32 %v3470, 0.0
      %v3759 = vmax.f32 %v3472, 0.0
      %v3760 = vmax.f32 %v3476, 0.0
      %v3761 = vmax.f32 %v3478, 0.0
      %v3762 = vmax.f32 %v3480, 0.0
      %v3763 = vmax.f32 %v3482, 0.0
      %v3764 = vmax.f32 %v3486, 0.0
      %v3765 = vmax.f32 %v3488, 0.0
      %v3766 = vmax.f32 %v3490, 0.0
      %v3767 = vmax.f32 %v3492, 0.0
      %v3768 = vmax.f32 %v3496, 0.0
      %v3769 = vmax.f32 %v3498, 0.0
      %v3770 = vmax.f32 %v3500, 0.0
      %v3771 = vmax.f32 %v3502, 0.0
      %v3772 = vmax.f32 %v3506, 0.0
      %v3773 = vmax.f32 %v3508, 0.0
      %v3774 = vmax.f32 %v3510, 0.0
      %v3775 = vmax.f32 %v3512, 0.0
      %v3776 = vmax.f32 %v3516, 0.0
      %v3777 = vmax.f32 %v3518, 0.0
      %v3778 = vmax.f32 %v3520, 0.0
      %v3779 = vmax.f32 %v3522, 0.0
      %v3780 = vpack.c.bf16 %v3526, %v3524
      %v3781 = vpack.c.bf16 %v3527, %v3525
      %v3782 = vpack.c.bf16 %v3530, %v3528
      %v3783 = vpack.c.bf16 %v3531, %v3529
      %v3784 = vpack.c.bf16 %v3534, %v3532
      %v3785 = vpack.c.bf16 %v3535, %v3533
      %v3786 = vpack.c.bf16 %v3538, %v3536
      %v3787 = vpack.c.bf16 %v3539, %v3537
      %v3788 = vpack.c.bf16 %v3542, %v3540
      %v3789 = vpack.c.bf16 %v3543, %v3541
      %v3790 = vpack.c.bf16 %v3546, %v3544
      %v3791 = vpack.c.bf16 %v3547, %v3545
      %v3792 = vpack.c.bf16 %v3550, %v3548
      %v3793 = vpack.c.bf16 %v3551, %v3549
      %v3794 = vpack.c.bf16 %v3554, %v3552
      %v3795 = vpack.c.bf16 %v3555, %v3553
      %v3796 = vpack.c.bf16 %v3558, %v3556
      %v3797 = vpack.c.bf16 %v3559, %v3557
      %v3798 = vpack.c.bf16 %v3562, %v3560
      %v3799 = vpack.c.bf16 %v3563, %v3561
      %v3800 = vpack.c.bf16 %v3566, %v3564
      %v3801 = vpack.c.bf16 %v3567, %v3565
      %v3802 = vpack.c.bf16 %v3570, %v3568
      %v3803 = vpack.c.bf16 %v3571, %v3569
      %v3804 = vpack.c.bf16 %v3574, %v3572
      %v3805 = vpack.c.bf16 %v3575, %v3573
      %v3806 = vpack.c.bf16 %v3578, %v3576
      %v3807 = vpack.c.bf16 %v3579, %v3577
      %v3808 = vpack.c.bf16 %v3582, %v3580
      %v3809 = vpack.c.bf16 %v3583, %v3581
      %v3810 = vpack.c.bf16 %v3586, %v3584
      %v3811 = vpack.c.bf16 %v3587, %v3585
      %v3812 = vpack.c.bf16 %v3590, %v3588
      %v3813 = vpack.c.bf16 %v3591, %v3589
      %v3814 = vpack.c.bf16 %v3594, %v3592
      %v3815 = vpack.c.bf16 %v3595, %v3593
      %v3816 = vpack.c.bf16 %v3598, %v3596
      %v3817 = vpack.c.bf16 %v3599, %v3597
      %v3818 = vpack.c.bf16 %v3602, %v3600
      %v3819 = vpack.c.bf16 %v3603, %v3601
      %v3820 = vpack.c.bf16 %v3606, %v3604
      %v3821 = vpack.c.bf16 %v3607, %v3605
      %v3822 = vpack.c.bf16 %v3610, %v3608
      %v3823 = vpack.c.bf16 %v3611, %v3609
      %v3824 = vpack.c.bf16 %v3614, %v3612
      %v3825 = vpack.c.bf16 %v3615, %v3613
      %v3826 = vpack.c.bf16 %v3618, %v3616
      %v3827 = vpack.c.bf16 %v3619, %v3617
      %v3828 = vpack.c.bf16 %v3622, %v3620
      %v3829 = vpack.c.bf16 %v3623, %v3621
      %v3830 = vpack.c.bf16 %v3626, %v3624
      %v3831 = vpack.c.bf16 %v3627, %v3625
      %v3832 = vpack.c.bf16 %v3630, %v3628
      %v3833 = vpack.c.bf16 %v3631, %v3629
      %v3834 = vpack.c.bf16 %v3634, %v3632
      %v3835 = vpack.c.bf16 %v3635, %v3633
      %v3836 = vpack.c.bf16 %v3638, %v3636
      %v3837 = vpack.c.bf16 %v3639, %v3637
      %v3838 = vpack.c.bf16 %v3642, %v3640
      %v3839 = vpack.c.bf16 %v3643, %v3641
      %v3840 = vpack.c.bf16 %v3646, %v3644
      %v3841 = vpack.c.bf16 %v3647, %v3645
      %v3842 = vpack.c.bf16 %v3650, %v3648
      %v3843 = vpack.c.bf16 %v3651, %v3649
      %v3844 = vpack.c.bf16 %v3654, %v3652
      %v3845 = vpack.c.bf16 %v3655, %v3653
      %v3846 = vpack.c.bf16 %v3658, %v3656
      %v3847 = vpack.c.bf16 %v3659, %v3657
      %v3848 = vpack.c.bf16 %v3662, %v3660
      %v3849 = vpack.c.bf16 %v3663, %v3661
      %v3850 = vpack.c.bf16 %v3666, %v3664
      %v3851 = vpack.c.bf16 %v3667, %v3665
      %v3852 = vpack.c.bf16 %v3670, %v3668
      %v3853 = vpack.c.bf16 %v3671, %v3669
      %v3854 = vpack.c.bf16 %v3674, %v3672
      %v3855 = vpack.c.bf16 %v3675, %v3673
      %v3856 = vpack.c.bf16 %v3678, %v3676
      %v3857 = vpack.c.bf16 %v3679, %v3677
      %v3858 = vpack.c.bf16 %v3682, %v3680
      %v3859 = vpack.c.bf16 %v3683, %v3681
      %v3860 = vpack.c.bf16 %v3686, %v3684
      %v3861 = vpack.c.bf16 %v3687, %v3685
      %v3862 = vpack.c.bf16 %v3690, %v3688
      %v3863 = vpack.c.bf16 %v3691, %v3689
      %v3864 = vpack.c.bf16 %v3694, %v3692
      %v3865 = vpack.c.bf16 %v3695, %v3693
      %v3866 = vpack.c.bf16 %v3698, %v3696
      %v3867 = vpack.c.bf16 %v3699, %v3697
      %v3868 = vpack.c.bf16 %v3702, %v3700
      %v3869 = vpack.c.bf16 %v3703, %v3701
      %v3870 = vpack.c.bf16 %v3706, %v3704
      %v3871 = vpack.c.bf16 %v3707, %v3705
      %v3872 = vpack.c.bf16 %v3710, %v3708
      %v3873 = vpack.c.bf16 %v3711, %v3709
      %v3874 = vpack.c.bf16 %v3714, %v3712
      %v3875 = vpack.c.bf16 %v3715, %v3713
      %v3876 = vpack.c.bf16 %v3718, %v3716
      %v3877 = vpack.c.bf16 %v3719, %v3717
      %v3878 = vpack.c.bf16 %v3722, %v3720
      %v3879 = vpack.c.bf16 %v3723, %v3721
      %v3880 = vpack.c.bf16 %v3726, %v3724
      %v3881 = vpack.c.bf16 %v3727, %v3725
      %v3882 = vpack.c.bf16 %v3730, %v3728
      %v3883 = vpack.c.bf16 %v3731, %v3729
      %v3884 = vpack.c.bf16 %v3734, %v3732
      %v3885 = vpack.c.bf16 %v3735, %v3733
      %v3886 = vpack.c.bf16 %v3738, %v3736
      %v3887 = vpack.c.bf16 %v3739, %v3737
      %v3888 = vpack.c.bf16 %v3742, %v3740
      %v3889 = vpack.c.bf16 %v3743, %v3741
      %v3890 = vpack.c.bf16 %v3746, %v3744
      %v3891 = vpack.c.bf16 %v3747, %v3745
      %v3892 = vpack.c.bf16 %v3750, %v3748
      %v3893 = vpack.c.bf16 %v3751, %v3749
      %v3894 = vpack.c.bf16 %v3754, %v3752
      %v3895 = vpack.c.bf16 %v3755, %v3753
      %v3896 = vpack.c.bf16 %v3758, %v3756
      %v3897 = vpack.c.bf16 %v3759, %v3757
      %v3898 = vpack.c.bf16 %v3762, %v3760
      %v3899 = vpack.c.bf16 %v3763, %v3761
      %v3900 = vpack.c.bf16 %v3766, %v3764
      %v3901 = vpack.c.bf16 %v3767, %v3765
      %v3902 = vpack.c.bf16 %v3770, %v3768
      %v3903 = vpack.c.bf16 %v3771, %v3769
      %v3904 = vpack.c.bf16 %v3774, %v3772
      %v3905 = vpack.c.bf16 %v3775, %v3773
      %v3906 = vpack.c.bf16 %v3778, %v3776
      %v3907 = vpack.c.bf16 %v3779, %v3777
      %v3908 = vld [vmem:[%s7] sm:$0xf]
      %v3909 = vld [vmem:[%s7 + $0x4] sm:$0xf]
      %v3910 = vld [vmem:[%s7 + $0x8] sm:$0xf]
      %v3911 = vld [vmem:[%s7 + $0xc] sm:$0xf]
      %v3912 = vld [vmem:[%s7 + $0x10] sm:$0xf]
      %v3913 = vld [vmem:[%s7 + $0x14] sm:$0xf]
      %v3914 = vld [vmem:[%s7 + $0x18] sm:$0xf]
      %v3915 = vld [vmem:[%s7 + $0x1c] sm:$0xf]
      %v3916 = vld [vmem:[%s7 + $0x20] sm:$0xf]
      %v3917 = vld [vmem:[%s7 + $0x24] sm:$0xf]
      %v3918 = vld [vmem:[%s7 + $0x28] sm:$0xf]
      %v3919 = vld [vmem:[%s7 + $0x2c] sm:$0xf]
      %v3920 = vld [vmem:[%s7 + $0x30] sm:$0xf]
      %v3921 = vld [vmem:[%s7 + $0x34] sm:$0xf]
      %v3922 = vld [vmem:[%s7 + $0x38] sm:$0xf]
      %v3923 = vld [vmem:[%s7 + $0x3c] sm:$0xf]
      %v3924 = vld [vmem:[%s7 + $0x40] sm:$0xf]
      %v3925 = vld [vmem:[%s7 + $0x44] sm:$0xf]
      %v3926 = vld [vmem:[%s7 + $0x48] sm:$0xf]
      %v3927 = vld [vmem:[%s7 + $0x4c] sm:$0xf]
      %v3928 = vld [vmem:[%s7 + $0x50] sm:$0xf]
      %v3929 = vld [vmem:[%s7 + $0x54] sm:$0xf]
      %v3930 = vld [vmem:[%s7 + $0x58] sm:$0xf]
      %v3931 = vld [vmem:[%s7 + $0x5c] sm:$0xf]
      %v3932 = vld [vmem:[%s7 + $0x60] sm:$0xf]
      %v3933 = vld [vmem:[%s7 + $0x64] sm:$0xf]
      %v3934 = vld [vmem:[%s7 + $0x68] sm:$0xf]
      %v3935 = vld [vmem:[%s7 + $0x6c] sm:$0xf]
      %v3936 = vld [vmem:[%s7 + $0x70] sm:$0xf]
      %v3937 = vld [vmem:[%s7 + $0x74] sm:$0xf]
      %v3938 = vld [vmem:[%s7 + $0x78] sm:$0xf]
      %v3939 = vld [vmem:[%s7 + $0x7c] sm:$0xf]
      %v3940 = vld [vmem:[%s8] sm:$0x1]
      %v3942 = vlaneseq
      %v3943 = vshrl.u32 %v3942, 7
      %v3944 = vsub.s32 0, %v3943
      %v3945 = vrot.slane %v3940, %v3944
      %v3979 = vunpack.c.l.b16 %v3908
      %v3980 = vunpack.c.l.b16 %v3909
      %v3981 = vunpack.c.l.b16 %v3910
      %v3982 = vunpack.c.l.b16 %v3911
      %v3983 = vunpack.c.l.b16 %v3912
      %v3984 = vunpack.c.l.b16 %v3913
      %v3985 = vunpack.c.l.b16 %v3914
      %v3986 = vunpack.c.l.b16 %v3915
      %v3987 = vunpack.c.l.b16 %v3916
      %v3988 = vunpack.c.l.b16 %v3917
      %v3989 = vunpack.c.l.b16 %v3918
      %v3990 = vunpack.c.l.b16 %v3919
      %v3991 = vunpack.c.l.b16 %v3920
      %v3992 = vunpack.c.l.b16 %v3921
      %v3993 = vunpack.c.l.b16 %v3922
      %v3994 = vunpack.c.l.b16 %v3923
      %v3995 = vunpack.c.l.b16 %v3924
      %v3996 = vunpack.c.l.b16 %v3925
      %v3997 = vunpack.c.l.b16 %v3926
      %v3998 = vunpack.c.l.b16 %v3927
      %v3999 = vunpack.c.l.b16 %v3928
      %v4000 = vunpack.c.l.b16 %v3929
      %v4001 = vunpack.c.l.b16 %v3930
      %v4002 = vunpack.c.l.b16 %v3931
      %v4003 = vunpack.c.l.b16 %v3932
      %v4004 = vunpack.c.l.b16 %v3933
      %v4005 = vunpack.c.l.b16 %v3934
      %v4006 = vunpack.c.l.b16 %v3935
      %v4007 = vunpack.c.l.b16 %v3936
      %v4008 = vunpack.c.l.b16 %v3937
      %v4009 = vunpack.c.l.b16 %v3938
      %v4010 = vunpack.c.l.b16 %v3939
      %v4011 = vpack.c.b16 %v3980, %v3979
      %v4012 = vpack.c.b16 %v3982, %v3981
      %v4013 = vpack.c.b16 %v3984, %v3983
      %v4014 = vpack.c.b16 %v3986, %v3985
      %v4015 = vpack.c.b16 %v3988, %v3987
      %v4016 = vpack.c.b16 %v3990, %v3989
      %v4017 = vpack.c.b16 %v3992, %v3991
      %v4018 = vpack.c.b16 %v3994, %v3993
      %v4019 = vpack.c.b16 %v3996, %v3995
      %v4020 = vpack.c.b16 %v3998, %v3997
      %v4021 = vpack.c.b16 %v4000, %v3999
      %v4022 = vpack.c.b16 %v4002, %v4001
      %v4023 = vpack.c.b16 %v4004, %v4003
      %v4024 = vpack.c.b16 %v4006, %v4005
      %v4025 = vpack.c.b16 %v4008, %v4007
      %v4026 = vpack.c.b16 %v4010, %v4009
      %4043 = vmatprep.subr.bf16.mxu0 0
      %4044 = vmatpush1.bf16.msra.mxu0 %v4011
      %4045 = vmatprep.subr.bf16.mxu0 0
      %4046 = vmatpush1.bf16.msra.mxu0 %v4012
      %4047 = vmatprep.subr.bf16.mxu0 0
      %4048 = vmatpush1.bf16.msra.mxu0 %v4013
      %4049 = vmatprep.subr.bf16.mxu0 0
      %4050 = vmatpush1.bf16.msra.mxu0 %v4014
      %4051 = vmatprep.subr.bf16.mxu0 0
      %4052 = vmatpush1.bf16.msra.mxu0 %v4015
      %4053 = vmatprep.subr.bf16.mxu0 0
      %4054 = vmatpush1.bf16.msra.mxu0 %v4016
      %4055 = vmatprep.subr.bf16.mxu0 0
      %4056 = vmatpush1.bf16.msra.mxu0 %v4017
      %4057 = vmatprep.subr.bf16.mxu0 0
      %4058 = vmatpush1.bf16.msra.mxu0 %v4018
      %4059 = vmatprep.subr.bf16.mxu0 0
      %4060 = vmatpush1.bf16.msra.mxu0 %v4019
      %4061 = vmatprep.subr.bf16.mxu0 0
      %4062 = vmatpush1.bf16.msra.mxu0 %v4020
      %4063 = vmatprep.subr.bf16.mxu0 0
      %4064 = vmatpush1.bf16.msra.mxu0 %v4021
      %4065 = vmatprep.subr.bf16.mxu0 0
      %4066 = vmatpush1.bf16.msra.mxu0 %v4022
      %4067 = vmatprep.subr.bf16.mxu0 0
      %4068 = vmatpush1.bf16.msra.mxu0 %v4023
      %4069 = vmatprep.subr.bf16.mxu0 0
      %4070 = vmatpush1.bf16.msra.mxu0 %v4024
      %4071 = vmatprep.subr.bf16.mxu0 0
      %4072 = vmatpush1.bf16.msra.mxu0 %v4025
      %4073 = vmatprep.subr.bf16.mxu0 0
      %4074 = vmatpush1.bf16.msra.mxu0 %v4026
      %4075 = vmatprep.mubr.bf16.mxu0 %v3781
      %4076 = vmatmul.mubr.bf16.gmra.mrb[0].mxu0 %v3780
      %v4077 = vpop.f32.mrb[0].mxu0
      %v4078 = vadd.f32 %v3945, %v4077
      %v4079 = vpop.f32.mrb[0].mxu0
      %v4080 = vpop.f32.mrb[0].mxu0
      %v4081 = vadd.f32 %v3945, %v4080
      %v4082 = vpop.f32.mrb[0].mxu0
      %4083 = vmatprep.mubr.bf16.mxu0 %v3783
      %4084 = vmatmul.mubr.bf16.gmra.mrb[0].mxu0 %v3782
      %v4085 = vpop.f32.mrb[0].mxu0
      %v4086 = vadd.f32 %v3945, %v4085
      %v4087 = vpop.f32.mrb[0].mxu0
      %v4088 = vpop.f32.mrb[0].mxu0
      %v4089 = vadd.f32 %v3945, %v4088
      %v4090 = vpop.f32.mrb[0].mxu0
      %4091 = vmatprep.mubr.bf16.mxu0 %v3785
      %4092 = vmatmul.mubr.bf16.gmra.mrb[0].mxu0 %v3784
      %v4093 = vpop.f32.mrb[0].mxu0
      %v4094 = vadd.f32 %v3945, %v4093
      %v4095 = vpop.f32.mrb[0].mxu0
      %v4096 = vpop.f32.mrb[0].mxu0
      %v4097 = vadd.f32 %v3945, %v4096
      %v4098 = vpop.f32.mrb[0].mxu0
      %4099 = vmatprep.mubr.bf16.mxu0 %v3787
      %4100 = vmatmul.mubr.bf16.gmra.mrb[0].mxu0 %v3786
      %v4101 = vpop.f32.mrb[0].mxu0
      %v4102 = vadd.f32 %v3945, %v4101
      %v4103 = vpop.f32.mrb[0].mxu0
      %v4104 = vpop.f32.mrb[0].mxu0
      %v4105 = vadd.f32 %v3945, %v4104
      %v4106 = vpop.f32.mrb[0].mxu0
      %4107 = vmatprep.mubr.bf16.mxu0 %v3789
      %4108 = vmatmul.mubr.bf16.gmra.mrb[0].mxu0 %v3788
      %v4109 = vpop.f32.mrb[0].mxu0
      %v4110 = vadd.f32 %v3945, %v4109
      %v4111 = vpop.f32.mrb[0].mxu0
      %v4112 = vpop.f32.mrb[0].mxu0
      %v4113 = vadd.f32 %v3945, %v4112
      %v4114 = vpop.f32.mrb[0].mxu0
      %4115 = vmatprep.mubr.bf16.mxu0 %v3791
      %4116 = vmatmul.mubr.bf16.gmra.mrb[0].mxu0 %v3790
      %v4117 = vpop.f32.mrb[0].mxu0
      %v4118 = vadd.f32 %v3945, %v4117
      %v4119 = vpop.f32.mrb[0].mxu0
      %v4120 = vpop.f32.mrb[0].mxu0
      %v4121 = vadd.f32 %v3945, %v4120
      %v4122 = vpop.f32.mrb[0].mxu0
      %4123 = vmatprep.mubr.bf16.mxu0 %v3793
      %4124 = vmatmul.mubr.bf16.gmra.mrb[0].mxu0 %v3792
      %v4125 = vpop.f32.mrb[0].mxu0
      %v4126 = vadd.f32 %v3945, %v4125
      %v4127 = vpop.f32.mrb[0].mxu0
      %v4128 = vpop.f32.mrb[0].mxu0
      %v4129 = vadd.f32 %v3945, %v4128
      %v4130 = vpop.f32.mrb[0].mxu0
      %4131 = vmatprep.mubr.bf16.mxu0 %v3795
      %4132 = vmatmul.mubr.bf16.gmra.mrb[0].mxu0 %v3794
      %v4133 = vpop.f32.mrb[0].mxu0
      %v4134 = vadd.f32 %v3945, %v4133
      %v4135 = vpop.f32.mrb[0].mxu0
      %v4136 = vpop.f32.mrb[0].mxu0
      %v4137 = vadd.f32 %v3945, %v4136
      %v4138 = vpop.f32.mrb[0].mxu0
      %4139 = vmatprep.mubr.bf16.mxu0 %v3797
      %4140 = vmatmul.mubr.bf16.gmra.mrb[0].mxu0 %v3796
      %v4141 = vpop.f32.mrb[0].mxu0
      %v4142 = vadd.f32 %v3945, %v4141
      %v4143 = vpop.f32.mrb[0].mxu0
      %v4144 = vpop.f32.mrb[0].mxu0
      %v4145 = vadd.f32 %v3945, %v4144
      %v4146 = vpop.f32.mrb[0].mxu0
      %4147 = vmatprep.mubr.bf16.mxu0 %v3799
      %4148 = vmatmul.mubr.bf16.gmra.mrb[0].mxu0 %v3798
      %v4149 = vpop.f32.mrb[0].mxu0
      %v4150 = vadd.f32 %v3945, %v4149
      %v4151 = vpop.f32.mrb[0].mxu0
      %v4152 = vpop.f32.mrb[0].mxu0
      %v4153 = vadd.f32 %v3945, %v4152
      %v4154 = vpop.f32.mrb[0].mxu0
      %4155 = vmatprep.mubr.bf16.mxu0 %v3801
      %4156 = vmatmul.mubr.bf16.gmra.mrb[0].mxu0 %v3800
      %v4157 = vpop.f32.mrb[0].mxu0
      %v4158 = vadd.f32 %v3945, %v4157
      %v4159 = vpop.f32.mrb[0].mxu0
      %v4160 = vpop.f32.mrb[0].mxu0
      %v4161 = vadd.f32 %v3945, %v4160
      %v4162 = vpop.f32.mrb[0].mxu0
      %4163 = vmatprep.mubr.bf16.mxu0 %v3803
      %4164 = vmatmul.mubr.bf16.gmra.mrb[0].mxu0 %v3802
      %v4165 = vpop.f32.mrb[0].mxu0
      %v4166 = vadd.f32 %v3945, %v4165
      %v4167 = vpop.f32.mrb[0].mxu0
      %v4168 = vpop.f32.mrb[0].mxu0
      %v4169 = vadd.f32 %v3945, %v4168
      %v4170 = vpop.f32.mrb[0].mxu0
      %4171 = vmatprep.mubr.bf16.mxu0 %v3805
      %4172 = vmatmul.mubr.bf16.gmra.mrb[0].mxu0 %v3804
      %v4173 = vpop.f32.mrb[0].mxu0
      %v4174 = vadd.f32 %v3945, %v4173
      %v4175 = vpop.f32.mrb[0].mxu0
      %v4176 = vpop.f32.mrb[0].mxu0
      %v4177 = vadd.f32 %v3945, %v4176
      %v4178 = vpop.f32.mrb[0].mxu0
      %4179 = vmatprep.mubr.bf16.mxu0 %v3807
      %4180 = vmatmul.mubr.bf16.gmra.mrb[0].mxu0 %v3806
      %v4181 = vpop.f32.mrb[0].mxu0
      %v4182 = vadd.f32 %v3945, %v4181
      %v4183 = vpop.f32.mrb[0].mxu0
      %v4184 = vpop.f32.mrb[0].mxu0
      %v4185 = vadd.f32 %v3945, %v4184
      %v4186 = vpop.f32.mrb[0].mxu0
      %4187 = vmatprep.mubr.bf16.mxu0 %v3809
      %4188 = vmatmul.mubr.bf16.gmra.mrb[0].mxu0 %v3808
      %v4189 = vpop.f32.mrb[0].mxu0
      %v4190 = vadd.f32 %v3945, %v4189
      %v4191 = vpop.f32.mrb[0].mxu0
      %v4192 = vpop.f32.mrb[0].mxu0
      %v4193 = vadd.f32 %v3945, %v4192
      %v4194 = vpop.f32.mrb[0].mxu0
      %4195 = vmatprep.mubr.bf16.mxu0 %v3811
      %4196 = vmatmul.mubr.bf16.gmra.mrb[0].mxu0 %v3810
      %v4197 = vpop.f32.mrb[0].mxu0
      %v4198 = vadd.f32 %v3945, %v4197
      %v4199 = vpop.f32.mrb[0].mxu0
      %v4200 = vpop.f32.mrb[0].mxu0
      %v4201 = vadd.f32 %v3945, %v4200
      %v4202 = vpop.f32.mrb[0].mxu0
      %4203 = vmatprep.mubr.bf16.mxu0 %v3813
      %4204 = vmatmul.mubr.bf16.gmra.mrb[0].mxu0 %v3812
      %v4205 = vpop.f32.mrb[0].mxu0
      %v4206 = vadd.f32 %v3945, %v4205
      %v4207 = vpop.f32.mrb[0].mxu0
      %v4208 = vpop.f32.mrb[0].mxu0
      %v4209 = vadd.f32 %v3945, %v4208
      %v4210 = vpop.f32.mrb[0].mxu0
      %4211 = vmatprep.mubr.bf16.mxu0 %v3815
      %4212 = vmatmul.mubr.bf16.gmra.mrb[0].mxu0 %v3814
      %v4213 = vpop.f32.mrb[0].mxu0
      %v4214 = vadd.f32 %v3945, %v4213
      %v4215 = vpop.f32.mrb[0].mxu0
      %v4216 = vpop.f32.mrb[0].mxu0
      %v4217 = vadd.f32 %v3945, %v4216
      %v4218 = vpop.f32.mrb[0].mxu0
      %4219 = vmatprep.mubr.bf16.mxu0 %v3817
      %4220 = vmatmul.mubr.bf16.gmra.mrb[0].mxu0 %v3816
      %v4221 = vpop.f32.mrb[0].mxu0
      %v4222 = vadd.f32 %v3945, %v4221
      %v4223 = vpop.f32.mrb[0].mxu0
      %v4224 = vpop.f32.mrb[0].mxu0
      %v4225 = vadd.f32 %v3945, %v4224
      %v4226 = vpop.f32.mrb[0].mxu0
      %4227 = vmatprep.mubr.bf16.mxu0 %v3819
      %4228 = vmatmul.mubr.bf16.gmra.mrb[0].mxu0 %v3818
      %v4229 = vpop.f32.mrb[0].mxu0
      %v4230 = vadd.f32 %v3945, %v4229
      %v4231 = vpop.f32.mrb[0].mxu0
      %v4232 = vpop.f32.mrb[0].mxu0
      %v4233 = vadd.f32 %v3945, %v4232
      %v4234 = vpop.f32.mrb[0].mxu0
      %4235 = vmatprep.mubr.bf16.mxu0 %v3821
      %4236 = vmatmul.mubr.bf16.gmra.mrb[0].mxu0 %v3820
      %v4237 = vpop.f32.mrb[0].mxu0
      %v4238 = vadd.f32 %v3945, %v4237
      %v4239 = vpop.f32.mrb[0].mxu0
      %v4240 = vpop.f32.mrb[0].mxu0
      %v4241 = vadd.f32 %v3945, %v4240
      %v4242 = vpop.f32.mrb[0].mxu0
      %4243 = vmatprep.mubr.bf16.mxu0 %v3823
      %4244 = vmatmul.mubr.bf16.gmra.mrb[0].mxu0 %v3822
      %v4245 = vpop.f32.mrb[0].mxu0
      %v4246 = vadd.f32 %v3945, %v4245
      %v4247 = vpop.f32.mrb[0].mxu0
      %v4248 = vpop.f32.mrb[0].mxu0
      %v4249 = vadd.f32 %v3945, %v4248
      %v4250 = vpop.f32.mrb[0].mxu0
      %4251 = vmatprep.mubr.bf16.mxu0 %v3825
      %4252 = vmatmul.mubr.bf16.gmra.mrb[0].mxu0 %v3824
      %v4253 = vpop.f32.mrb[0].mxu0
      %v4254 = vadd.f32 %v3945, %v4253
      %v4255 = vpop.f32.mrb[0].mxu0
      %v4256 = vpop.f32.mrb[0].mxu0
      %v4257 = vadd.f32 %v3945, %v4256
      %v4258 = vpop.f32.mrb[0].mxu0
      %4259 = vmatprep.mubr.bf16.mxu0 %v3827
      %4260 = vmatmul.mubr.bf16.gmra.mrb[0].mxu0 %v3826
      %v4261 = vpop.f32.mrb[0].mxu0
      %v4262 = vadd.f32 %v3945, %v4261
      %v4263 = vpop.f32.mrb[0].mxu0
      %v4264 = vpop.f32.mrb[0].mxu0
      %v4265 = vadd.f32 %v3945, %v4264
      %v4266 = vpop.f32.mrb[0].mxu0
      %4267 = vmatprep.mubr.bf16.mxu0 %v3829
      %4268 = vmatmul.mubr.bf16.gmra.mrb[0].mxu0 %v3828
      %v4269 = vpop.f32.mrb[0].mxu0
      %v4270 = vadd.f32 %v3945, %v4269
      %v4271 = vpop.f32.mrb[0].mxu0
      %v4272 = vpop.f32.mrb[0].mxu0
      %v4273 = vadd.f32 %v3945, %v4272
      %v4274 = vpop.f32.mrb[0].mxu0
      %4275 = vmatprep.mubr.bf16.mxu0 %v3831
      %4276 = vmatmul.mubr.bf16.gmra.mrb[0].mxu0 %v3830
      %v4277 = vpop.f32.mrb[0].mxu0
      %v4278 = vadd.f32 %v3945, %v4277
      %v4279 = vpop.f32.mrb[0].mxu0
      %v4280 = vpop.f32.mrb[0].mxu0
      %v4281 = vadd.f32 %v3945, %v4280
      %v4282 = vpop.f32.mrb[0].mxu0
      %4283 = vmatprep.mubr.bf16.mxu0 %v3833
      %4284 = vmatmul.mubr.bf16.gmra.mrb[0].mxu0 %v3832
      %v4285 = vpop.f32.mrb[0].mxu0
      %v4286 = vadd.f32 %v3945, %v4285
      %v4287 = vpop.f32.mrb[0].mxu0
      %v4288 = vpop.f32.mrb[0].mxu0
      %v4289 = vadd.f32 %v3945, %v4288
      %v4290 = vpop.f32.mrb[0].mxu0
      %4291 = vmatprep.mubr.bf16.mxu0 %v3835
      %4292 = vmatmul.mubr.bf16.gmra.mrb[0].mxu0 %v3834
      %v4293 = vpop.f32.mrb[0].mxu0
      %v4294 = vadd.f32 %v3945, %v4293
      %v4295 = vpop.f32.mrb[0].mxu0
      %v4296 = vpop.f32.mrb[0].mxu0
      %v4297 = vadd.f32 %v3945, %v4296
      %v4298 = vpop.f32.mrb[0].mxu0
      %4299 = vmatprep.mubr.bf16.mxu0 %v3837
      %4300 = vmatmul.mubr.bf16.gmra.mrb[0].mxu0 %v3836
      %v4301 = vpop.f32.mrb[0].mxu0
      %v4302 = vadd.f32 %v3945, %v4301
      %v4303 = vpop.f32.mrb[0].mxu0
      %v4304 = vpop.f32.mrb[0].mxu0
      %v4305 = vadd.f32 %v3945, %v4304
      %v4306 = vpop.f32.mrb[0].mxu0
      %4307 = vmatprep.mubr.bf16.mxu0 %v3839
      %4308 = vmatmul.mubr.bf16.gmra.mrb[0].mxu0 %v3838
      %v4309 = vpop.f32.mrb[0].mxu0
      %v4310 = vadd.f32 %v3945, %v4309
      %v4311 = vpop.f32.mrb[0].mxu0
      %v4312 = vpop.f32.mrb[0].mxu0
      %v4313 = vadd.f32 %v3945, %v4312
      %v4314 = vpop.f32.mrb[0].mxu0
      %4315 = vmatprep.mubr.bf16.mxu0 %v3841
      %4316 = vmatmul.mubr.bf16.gmra.mrb[0].mxu0 %v3840
      %v4317 = vpop.f32.mrb[0].mxu0
      %v4318 = vadd.f32 %v3945, %v4317
      %v4319 = vpop.f32.mrb[0].mxu0
      %v4320 = vpop.f32.mrb[0].mxu0
      %v4321 = vadd.f32 %v3945, %v4320
      %v4322 = vpop.f32.mrb[0].mxu0
      %4323 = vmatprep.mubr.bf16.mxu0 %v3843
      %4324 = vmatmul.mubr.bf16.gmra.mrb[0].mxu0 %v3842
      %v4325 = vpop.f32.mrb[0].mxu0
      %v4326 = vadd.f32 %v3945, %v4325
      %v4327 = vpop.f32.mrb[0].mxu0
      %v4328 = vpop.f32.mrb[0].mxu0
      %v4329 = vadd.f32 %v3945, %v4328
      %v4330 = vpop.f32.mrb[0].mxu0
      %4331 = vmatprep.mubr.bf16.mxu0 %v3845
      %4332 = vmatmul.mubr.bf16.gmra.mrb[0].mxu0 %v3844
      %v4333 = vpop.f32.mrb[0].mxu0
      %v4334 = vadd.f32 %v3945, %v4333
      %v4335 = vpop.f32.mrb[0].mxu0
      %v4336 = vpop.f32.mrb[0].mxu0
      %v4337 = vadd.f32 %v3945, %v4336
      %v4338 = vpop.f32.mrb[0].mxu0
      %4339 = vmatprep.mubr.bf16.mxu0 %v3847
      %4340 = vmatmul.mubr.bf16.gmra.mrb[0].mxu0 %v3846
      %v4341 = vpop.f32.mrb[0].mxu0
      %v4342 = vadd.f32 %v3945, %v4341
      %v4343 = vpop.f32.mrb[0].mxu0
      %v4344 = vpop.f32.mrb[0].mxu0
      %v4345 = vadd.f32 %v3945, %v4344
      %v4346 = vpop.f32.mrb[0].mxu0
      %4347 = vmatprep.mubr.bf16.mxu0 %v3849
      %4348 = vmatmul.mubr.bf16.gmra.mrb[0].mxu0 %v3848
      %v4349 = vpop.f32.mrb[0].mxu0
      %v4350 = vadd.f32 %v3945, %v4349
      %v4351 = vpop.f32.mrb[0].mxu0
      %v4352 = vpop.f32.mrb[0].mxu0
      %v4353 = vadd.f32 %v3945, %v4352
      %v4354 = vpop.f32.mrb[0].mxu0
      %4355 = vmatprep.mubr.bf16.mxu0 %v3851
      %4356 = vmatmul.mubr.bf16.gmra.mrb[0].mxu0 %v3850
      %v4357 = vpop.f32.mrb[0].mxu0
      %v4358 = vadd.f32 %v3945, %v4357
      %v4359 = vpop.f32.mrb[0].mxu0
      %v4360 = vpop.f32.mrb[0].mxu0
      %v4361 = vadd.f32 %v3945, %v4360
      %v4362 = vpop.f32.mrb[0].mxu0
      %4363 = vmatprep.mubr.bf16.mxu0 %v3853
      %4364 = vmatmul.mubr.bf16.gmra.mrb[0].mxu0 %v3852
      %v4365 = vpop.f32.mrb[0].mxu0
      %v4366 = vadd.f32 %v3945, %v4365
      %v4367 = vpop.f32.mrb[0].mxu0
      %v4368 = vpop.f32.mrb[0].mxu0
      %v4369 = vadd.f32 %v3945, %v4368
      %v4370 = vpop.f32.mrb[0].mxu0
      %4371 = vmatprep.mubr.bf16.mxu0 %v3855
      %4372 = vmatmul.mubr.bf16.gmra.mrb[0].mxu0 %v3854
      %v4373 = vpop.f32.mrb[0].mxu0
      %v4374 = vadd.f32 %v3945, %v4373
      %v4375 = vpop.f32.mrb[0].mxu0
      %v4376 = vpop.f32.mrb[0].mxu0
      %v4377 = vadd.f32 %v3945, %v4376
      %v4378 = vpop.f32.mrb[0].mxu0
      %4379 = vmatprep.mubr.bf16.mxu0 %v3857
      %4380 = vmatmul.mubr.bf16.gmra.mrb[0].mxu0 %v3856
      %v4381 = vpop.f32.mrb[0].mxu0
      %v4382 = vadd.f32 %v3945, %v4381
      %v4383 = vpop.f32.mrb[0].mxu0
      %v4384 = vpop.f32.mrb[0].mxu0
      %v4385 = vadd.f32 %v3945, %v4384
      %v4386 = vpop.f32.mrb[0].mxu0
      %4387 = vmatprep.mubr.bf16.mxu0 %v3859
      %4388 = vmatmul.mubr.bf16.gmra.mrb[0].mxu0 %v3858
      %v4389 = vpop.f32.mrb[0].mxu0
      %v4390 = vadd.f32 %v3945, %v4389
      %v4391 = vpop.f32.mrb[0].mxu0
      %v4392 = vpop.f32.mrb[0].mxu0
      %v4393 = vadd.f32 %v3945, %v4392
      %v4394 = vpop.f32.mrb[0].mxu0
      %4395 = vmatprep.mubr.bf16.mxu0 %v3861
      %4396 = vmatmul.mubr.bf16.gmra.mrb[0].mxu0 %v3860
      %v4397 = vpop.f32.mrb[0].mxu0
      %v4398 = vadd.f32 %v3945, %v4397
      %v4399 = vpop.f32.mrb[0].mxu0
      %v4400 = vpop.f32.mrb[0].mxu0
      %v4401 = vadd.f32 %v3945, %v4400
      %v4402 = vpop.f32.mrb[0].mxu0
      %4403 = vmatprep.mubr.bf16.mxu0 %v3863
      %4404 = vmatmul.mubr.bf16.gmra.mrb[0].mxu0 %v3862
      %v4405 = vpop.f32.mrb[0].mxu0
      %v4406 = vadd.f32 %v3945, %v4405
      %v4407 = vpop.f32.mrb[0].mxu0
      %v4408 = vpop.f32.mrb[0].mxu0
      %v4409 = vadd.f32 %v3945, %v4408
      %v4410 = vpop.f32.mrb[0].mxu0
      %4411 = vmatprep.mubr.bf16.mxu0 %v3865
      %4412 = vmatmul.mubr.bf16.gmra.mrb[0].mxu0 %v3864
      %v4413 = vpop.f32.mrb[0].mxu0
      %v4414 = vadd.f32 %v3945, %v4413
      %v4415 = vpop.f32.mrb[0].mxu0
      %v4416 = vpop.f32.mrb[0].mxu0
      %v4417 = vadd.f32 %v3945, %v4416
      %v4418 = vpop.f32.mrb[0].mxu0
      %4419 = vmatprep.mubr.bf16.mxu0 %v3867
      %4420 = vmatmul.mubr.bf16.gmra.mrb[0].mxu0 %v3866
      %v4421 = vpop.f32.mrb[0].mxu0
      %v4422 = vadd.f32 %v3945, %v4421
      %v4423 = vpop.f32.mrb[0].mxu0
      %v4424 = vpop.f32.mrb[0].mxu0
      %v4425 = vadd.f32 %v3945, %v4424
      %v4426 = vpop.f32.mrb[0].mxu0
      %4427 = vmatprep.mubr.bf16.mxu0 %v3869
      %4428 = vmatmul.mubr.bf16.gmra.mrb[0].mxu0 %v3868
      %v4429 = vpop.f32.mrb[0].mxu0
      %v4430 = vadd.f32 %v3945, %v4429
      %v4431 = vpop.f32.mrb[0].mxu0
      %v4432 = vpop.f32.mrb[0].mxu0
      %v4433 = vadd.f32 %v3945, %v4432
      %v4434 = vpop.f32.mrb[0].mxu0
      %4435 = vmatprep.mubr.bf16.mxu0 %v3871
      %4436 = vmatmul.mubr.bf16.gmra.mrb[0].mxu0 %v3870
      %v4437 = vpop.f32.mrb[0].mxu0
      %v4438 = vadd.f32 %v3945, %v4437
      %v4439 = vpop.f32.mrb[0].mxu0
      %v4440 = vpop.f32.mrb[0].mxu0
      %v4441 = vadd.f32 %v3945, %v4440
      %v4442 = vpop.f32.mrb[0].mxu0
      %4443 = vmatprep.mubr.bf16.mxu0 %v3873
      %4444 = vmatmul.mubr.bf16.gmra.mrb[0].mxu0 %v3872
      %v4445 = vpop.f32.mrb[0].mxu0
      %v4446 = vadd.f32 %v3945, %v4445
      %v4447 = vpop.f32.mrb[0].mxu0
      %v4448 = vpop.f32.mrb[0].mxu0
      %v4449 = vadd.f32 %v3945, %v4448
      %v4450 = vpop.f32.mrb[0].mxu0
      %4451 = vmatprep.mubr.bf16.mxu0 %v3875
      %4452 = vmatmul.mubr.bf16.gmra.mrb[0].mxu0 %v3874
      %v4453 = vpop.f32.mrb[0].mxu0
      %v4454 = vadd.f32 %v3945, %v4453
      %v4455 = vpop.f32.mrb[0].mxu0
      %v4456 = vpop.f32.mrb[0].mxu0
      %v4457 = vadd.f32 %v3945, %v4456
      %v4458 = vpop.f32.mrb[0].mxu0
      %4459 = vmatprep.mubr.bf16.mxu0 %v3877
      %4460 = vmatmul.mubr.bf16.gmra.mrb[0].mxu0 %v3876
      %v4461 = vpop.f32.mrb[0].mxu0
      %v4462 = vadd.f32 %v3945, %v4461
      %v4463 = vpop.f32.mrb[0].mxu0
      %v4464 = vpop.f32.mrb[0].mxu0
      %v4465 = vadd.f32 %v3945, %v4464
      %v4466 = vpop.f32.mrb[0].mxu0
      %4467 = vmatprep.mubr.bf16.mxu0 %v3879
      %4468 = vmatmul.mubr.bf16.gmra.mrb[0].mxu0 %v3878
      %v4469 = vpop.f32.mrb[0].mxu0
      %v4470 = vadd.f32 %v3945, %v4469
      %v4471 = vpop.f32.mrb[0].mxu0
      %v4472 = vpop.f32.mrb[0].mxu0
      %v4473 = vadd.f32 %v3945, %v4472
      %v4474 = vpop.f32.mrb[0].mxu0
      %4475 = vmatprep.mubr.bf16.mxu0 %v3881
      %4476 = vmatmul.mubr.bf16.gmra.mrb[0].mxu0 %v3880
      %v4477 = vpop.f32.mrb[0].mxu0
      %v4478 = vadd.f32 %v3945, %v4477
      %v4479 = vpop.f32.mrb[0].mxu0
      %v4480 = vpop.f32.mrb[0].mxu0
      %v4481 = vadd.f32 %v3945, %v4480
      %v4482 = vpop.f32.mrb[0].mxu0
      %4483 = vmatprep.mubr.bf16.mxu0 %v3883
      %4484 = vmatmul.mubr.bf16.gmra.mrb[0].mxu0 %v3882
      %v4485 = vpop.f32.mrb[0].mxu0
      %v4486 = vadd.f32 %v3945, %v4485
      %v4487 = vpop.f32.mrb[0].mxu0
      %v4488 = vpop.f32.mrb[0].mxu0
      %v4489 = vadd.f32 %v3945, %v4488
      %v4490 = vpop.f32.mrb[0].mxu0
      %4491 = vmatprep.mubr.bf16.mxu0 %v3885
      %4492 = vmatmul.mubr.bf16.gmra.mrb[0].mxu0 %v3884
      %v4493 = vpop.f32.mrb[0].mxu0
      %v4494 = vadd.f32 %v3945, %v4493
      %v4495 = vpop.f32.mrb[0].mxu0
      %v4496 = vpop.f32.mrb[0].mxu0
      %v4497 = vadd.f32 %v3945, %v4496
      %v4498 = vpop.f32.mrb[0].mxu0
      %4499 = vmatprep.mubr.bf16.mxu0 %v3887
      %4500 = vmatmul.mubr.bf16.gmra.mrb[0].mxu0 %v3886
      %v4501 = vpop.f32.mrb[0].mxu0
      %v4502 = vadd.f32 %v3945, %v4501
      %v4503 = vpop.f32.mrb[0].mxu0
      %v4504 = vpop.f32.mrb[0].mxu0
      %v4505 = vadd.f32 %v3945, %v4504
      %v4506 = vpop.f32.mrb[0].mxu0
      %4507 = vmatprep.mubr.bf16.mxu0 %v3889
      %4508 = vmatmul.mubr.bf16.gmra.mrb[0].mxu0 %v3888
      %v4509 = vpop.f32.mrb[0].mxu0
      %v4510 = vadd.f32 %v3945, %v4509
      %v4511 = vpop.f32.mrb[0].mxu0
      %v4512 = vpop.f32.mrb[0].mxu0
      %v4513 = vadd.f32 %v3945, %v4512
      %v4514 = vpop.f32.mrb[0].mxu0
      %4515 = vmatprep.mubr.bf16.mxu0 %v3891
      %4516 = vmatmul.mubr.bf16.gmra.mrb[0].mxu0 %v3890
      %v4517 = vpop.f32.mrb[0].mxu0
      %v4518 = vadd.f32 %v3945, %v4517
      %v4519 = vpop.f32.mrb[0].mxu0
      %v4520 = vpop.f32.mrb[0].mxu0
      %v4521 = vadd.f32 %v3945, %v4520
      %v4522 = vpop.f32.mrb[0].mxu0
      %4523 = vmatprep.mubr.bf16.mxu0 %v3893
      %4524 = vmatmul.mubr.bf16.gmra.mrb[0].mxu0 %v3892
      %v4525 = vpop.f32.mrb[0].mxu0
      %v4526 = vadd.f32 %v3945, %v4525
      %v4527 = vpop.f32.mrb[0].mxu0
      %v4528 = vpop.f32.mrb[0].mxu0
      %v4529 = vadd.f32 %v3945, %v4528
      %v4530 = vpop.f32.mrb[0].mxu0
      %4531 = vmatprep.mubr.bf16.mxu0 %v3895
      %4532 = vmatmul.mubr.bf16.gmra.mrb[0].mxu0 %v3894
      %v4533 = vpop.f32.mrb[0].mxu0
      %v4534 = vadd.f32 %v3945, %v4533
      %v4535 = vpop.f32.mrb[0].mxu0
      %v4536 = vpop.f32.mrb[0].mxu0
      %v4537 = vadd.f32 %v3945, %v4536
      %v4538 = vpop.f32.mrb[0].mxu0
      %4539 = vmatprep.mubr.bf16.mxu0 %v3897
      %4540 = vmatmul.mubr.bf16.gmra.mrb[0].mxu0 %v3896
      %v4541 = vpop.f32.mrb[0].mxu0
      %v4542 = vadd.f32 %v3945, %v4541
      %v4543 = vpop.f32.mrb[0].mxu0
      %v4544 = vpop.f32.mrb[0].mxu0
      %v4545 = vadd.f32 %v3945, %v4544
      %v4546 = vpop.f32.mrb[0].mxu0
      %4547 = vmatprep.mubr.bf16.mxu0 %v3899
      %4548 = vmatmul.mubr.bf16.gmra.mrb[0].mxu0 %v3898
      %v4549 = vpop.f32.mrb[0].mxu0
      %v4550 = vadd.f32 %v3945, %v4549
      %v4551 = vpop.f32.mrb[0].mxu0
      %v4552 = vpop.f32.mrb[0].mxu0
      %v4553 = vadd.f32 %v3945, %v4552
      %v4554 = vpop.f32.mrb[0].mxu0
      %4555 = vmatprep.mubr.bf16.mxu0 %v3901
      %4556 = vmatmul.mubr.bf16.gmra.mrb[0].mxu0 %v3900
      %v4557 = vpop.f32.mrb[0].mxu0
      %v4558 = vadd.f32 %v3945, %v4557
      %v4559 = vpop.f32.mrb[0].mxu0
      %v4560 = vpop.f32.mrb[0].mxu0
      %v4561 = vadd.f32 %v3945, %v4560
      %v4562 = vpop.f32.mrb[0].mxu0
      %4563 = vmatprep.mubr.bf16.mxu0 %v3903
      %4564 = vmatmul.mubr.bf16.gmra.mrb[0].mxu0 %v3902
      %v4565 = vpop.f32.mrb[0].mxu0
      %v4566 = vadd.f32 %v3945, %v4565
      %v4567 = vpop.f32.mrb[0].mxu0
      %v4568 = vpop.f32.mrb[0].mxu0
      %v4569 = vadd.f32 %v3945, %v4568
      %v4570 = vpop.f32.mrb[0].mxu0
      %4571 = vmatprep.mubr.bf16.mxu0 %v3905
      %4572 = vmatmul.mubr.bf16.gmra.mrb[0].mxu0 %v3904
      %v4573 = vpop.f32.mrb[0].mxu0
      %v4574 = vadd.f32 %v3945, %v4573
      %v4575 = vpop.f32.mrb[0].mxu0
      %v4576 = vpop.f32.mrb[0].mxu0
      %v4577 = vadd.f32 %v3945, %v4576
      %v4578 = vpop.f32.mrb[0].mxu0
      %4579 = vmatprep.mubr.bf16.mxu0 %v3907
      %4580 = vmatmul.mubr.bf16.gmra.mrb[0].mxu0 %v3906
      %v4581 = vpop.f32.mrb[0].mxu0
      %v4582 = vadd.f32 %v3945, %v4581
      %v4583 = vpop.f32.mrb[0].mxu0
      %v4584 = vpop.f32.mrb[0].mxu0
      %v4585 = vadd.f32 %v3945, %v4584
      %v4586 = vpop.f32.mrb[0].mxu0
      %4587 = vdwg.mxu0
      %v4588 = vadd.f32 %v337, %v4078
      %v4589 = vadd.f32 %v338, %v4081
      %v4590 = vadd.f32 %v339, %v4086
      %v4591 = vadd.f32 %v340, %v4089
      %v4592 = vadd.f32 %v341, %v4094
      %v4593 = vadd.f32 %v342, %v4097
      %v4594 = vadd.f32 %v343, %v4102
      %v4595 = vadd.f32 %v344, %v4105
      %v4596 = vadd.f32 %v345, %v4110
      %v4597 = vadd.f32 %v346, %v4113
      %v4598 = vadd.f32 %v347, %v4118
      %v4599 = vadd.f32 %v348, %v4121
      %v4600 = vadd.f32 %v349, %v4126
      %v4601 = vadd.f32 %v350, %v4129
      %v4602 = vadd.f32 %v351, %v4134
      %v4603 = vadd.f32 %v352, %v4137
      %v4604 = vadd.f32 %v353, %v4142
      %v4605 = vadd.f32 %v354, %v4145
      %v4606 = vadd.f32 %v355, %v4150
      %v4607 = vadd.f32 %v356, %v4153
      %v4608 = vadd.f32 %v357, %v4158
      %v4609 = vadd.f32 %v358, %v4161
      %v4610 = vadd.f32 %v359, %v4166
      %v4611 = vadd.f32 %v360, %v4169
      %v4612 = vadd.f32 %v361, %v4174
      %v4613 = vadd.f32 %v362, %v4177
      %v4614 = vadd.f32 %v363, %v4182
      %v4615 = vadd.f32 %v364, %v4185
      %v4616 = vadd.f32 %v365, %v4190
      %v4617 = vadd.f32 %v366, %v4193
      %v4618 = vadd.f32 %v367, %v4198
      %v4619 = vadd.f32 %v368, %v4201
      %v4620 = vadd.f32 %v369, %v4206
      %v4621 = vadd.f32 %v370, %v4209
      %v4622 = vadd.f32 %v371, %v4214
      %v4623 = vadd.f32 %v372, %v4217
      %v4624 = vadd.f32 %v373, %v4222
      %v4625 = vadd.f32 %v374, %v4225
      %v4626 = vadd.f32 %v375, %v4230
      %v4627 = vadd.f32 %v376, %v4233
      %v4628 = vadd.f32 %v377, %v4238
      %v4629 = vadd.f32 %v378, %v4241
      %v4630 = vadd.f32 %v379, %v4246
      %v4631 = vadd.f32 %v380, %v4249
      %v4632 = vadd.f32 %v381, %v4254
      %v4633 = vadd.f32 %v382, %v4257
      %v4634 = vadd.f32 %v383, %v4262
      %v4635 = vadd.f32 %v384, %v4265
      %v4636 = vadd.f32 %v385, %v4270
      %v4637 = vadd.f32 %v386, %v4273
      %v4638 = vadd.f32 %v387, %v4278
      %v4639 = vadd.f32 %v388, %v4281
      %v4640 = vadd.f32 %v389, %v4286
      %v4641 = vadd.f32 %v390, %v4289
      %v4642 = vadd.f32 %v391, %v4294
      %v4643 = vadd.f32 %v392, %v4297
      %v4644 = vadd.f32 %v393, %v4302
      %v4645 = vadd.f32 %v394, %v4305
      %v4646 = vadd.f32 %v395, %v4310
      %v4647 = vadd.f32 %v396, %v4313
      %v4648 = vadd.f32 %v397, %v4318
      %v4649 = vadd.f32 %v398, %v4321
      %v4650 = vadd.f32 %v399, %v4326
      %v4651 = vadd.f32 %v400, %v4329
      %v4652 = vadd.f32 %v401, %v4334
      %v4653 = vadd.f32 %v402, %v4337
      %v4654 = vadd.f32 %v403, %v4342
      %v4655 = vadd.f32 %v404, %v4345
      %v4656 = vadd.f32 %v405, %v4350
      %v4657 = vadd.f32 %v406, %v4353
      %v4658 = vadd.f32 %v407, %v4358
      %v4659 = vadd.f32 %v408, %v4361
      %v4660 = vadd.f32 %v409, %v4366
      %v4661 = vadd.f32 %v410, %v4369
      %v4662 = vadd.f32 %v411, %v4374
      %v4663 = vadd.f32 %v412, %v4377
      %v4664 = vadd.f32 %v413, %v4382
      %v4665 = vadd.f32 %v414, %v4385
      %v4666 = vadd.f32 %v415, %v4390
      %v4667 = vadd.f32 %v416, %v4393
      %v4668 = vadd.f32 %v417, %v4398
      %v4669 = vadd.f32 %v418, %v4401
      %v4670 = vadd.f32 %v419, %v4406
      %v4671 = vadd.f32 %v420, %v4409
      %v4672 = vadd.f32 %v421, %v4414
      %v4673 = vadd.f32 %v422, %v4417
      %v4674 = vadd.f32 %v423, %v4422
      %v4675 = vadd.f32 %v424, %v4425
      %v4676 = vadd.f32 %v425, %v4430
      %v4677 = vadd.f32 %v426, %v4433
      %v4678 = vadd.f32 %v427, %v4438
      %v4679 = vadd.f32 %v428, %v4441
      %v4680 = vadd.f32 %v429, %v4446
      %v4681 = vadd.f32 %v430, %v4449
      %v4682 = vadd.f32 %v431, %v4454
      %v4683 = vadd.f32 %v432, %v4457
      %v4684 = vadd.f32 %v433, %v4462
      %v4685 = vadd.f32 %v434, %v4465
      %v4686 = vadd.f32 %v435, %v4470
      %v4687 = vadd.f32 %v436, %v4473
      %v4688 = vadd.f32 %v437, %v4478
      %v4689 = vadd.f32 %v438, %v4481
      %v4690 = vadd.f32 %v439, %v4486
      %v4691 = vadd.f32 %v440, %v4489
      %v4692 = vadd.f32 %v441, %v4494
      %v4693 = vadd.f32 %v442, %v4497
      %v4694 = vadd.f32 %v443, %v4502
      %v4695 = vadd.f32 %v444, %v4505
      %v4696 = vadd.f32 %v445, %v4510
      %v4697 = vadd.f32 %v446, %v4513
      %v4698 = vadd.f32 %v447, %v4518
      %v4699 = vadd.f32 %v448, %v4521
      %v4700 = vadd.f32 %v449, %v4526
      %v4701 = vadd.f32 %v450, %v4529
      %v4702 = vadd.f32 %v451, %v4534
      %v4703 = vadd.f32 %v452, %v4537
      %v4704 = vadd.f32 %v453, %v4542
      %v4705 = vadd.f32 %v454, %v4545
      %v4706 = vadd.f32 %v455, %v4550
      %v4707 = vadd.f32 %v456, %v4553
      %v4708 = vadd.f32 %v457, %v4558
      %v4709 = vadd.f32 %v458, %v4561
      %v4710 = vadd.f32 %v459, %v4566
      %v4711 = vadd.f32 %v460, %v4569
      %v4712 = vadd.f32 %v461, %v4574
      %v4713 = vadd.f32 %v462, %v4577
      %v4714 = vadd.f32 %v463, %v4582
      %v4715 = vadd.f32 %v464, %v4585
      %4844 = vrot.lane.b32.xlu0 %v4078, 2
      %v4845 = vpop.permute.xlu0 %4844
      %4846 = vrot.lane.b32.xlu0 %v4081, 2
      %v4847 = vpop.permute.xlu0 %4846
      %4848 = vrot.lane.b32.xlu0 %v4086, 2
      %v4849 = vpop.permute.xlu0 %4848
      %4850 = vrot.lane.b32.xlu0 %v4089, 2
      %v4851 = vpop.permute.xlu0 %4850
      %4852 = vrot.lane.b32.xlu0 %v4094, 2
      %v4853 = vpop.permute.xlu0 %4852
      %4854 = vrot.lane.b32.xlu0 %v4097, 2
      %v4855 = vpop.permute.xlu0 %4854
      %4856 = vrot.lane.b32.xlu0 %v4102, 2
      %v4857 = vpop.permute.xlu0 %4856
      %4858 = vrot.lane.b32.xlu0 %v4105, 2
      %v4859 = vpop.permute.xlu0 %4858
      %4860 = vrot.lane.b32.xlu0 %v4110, 2
      %v4861 = vpop.permute.xlu0 %4860
      %4862 = vrot.lane.b32.xlu0 %v4113, 2
      %v4863 = vpop.permute.xlu0 %4862
      %4864 = vrot.lane.b32.xlu0 %v4118, 2
      %v4865 = vpop.permute.xlu0 %4864
      %4866 = vrot.lane.b32.xlu0 %v4121, 2
      %v4867 = vpop.permute.xlu0 %4866
      %4868 = vrot.lane.b32.xlu0 %v4126, 2
      %v4869 = vpop.permute.xlu0 %4868
      %4870 = vrot.lane.b32.xlu0 %v4129, 2
      %v4871 = vpop.permute.xlu0 %4870
      %4872 = vrot.lane.b32.xlu0 %v4134, 2
      %v4873 = vpop.permute.xlu0 %4872
      %4874 = vrot.lane.b32.xlu0 %v4137, 2
      %v4875 = vpop.permute.xlu0 %4874
      %4876 = vrot.lane.b32.xlu0 %v4142, 2
      %v4877 = vpop.permute.xlu0 %4876
      %4878 = vrot.lane.b32.xlu0 %v4145, 2
      %v4879 = vpop.permute.xlu0 %4878
      %4880 = vrot.lane.b32.xlu0 %v4150, 2
      %v4881 = vpop.permute.xlu0 %4880
      %4882 = vrot.lane.b32.xlu0 %v4153, 2
      %v4883 = vpop.permute.xlu0 %4882
      %4884 = vrot.lane.b32.xlu0 %v4158, 2
      %v4885 = vpop.permute.xlu0 %4884
      %4886 = vrot.lane.b32.xlu0 %v4161, 2
      %v4887 = vpop.permute.xlu0 %4886
      %4888 = vrot.lane.b32.xlu0 %v4166, 2
      %v4889 = vpop.permute.xlu0 %4888
      %4890 = vrot.lane.b32.xlu0 %v4169, 2
      %v4891 = vpop.permute.xlu0 %4890
      %4892 = vrot.lane.b32.xlu0 %v4174, 2
      %v4893 = vpop.permute.xlu0 %4892
      %4894 = vrot.lane.b32.xlu0 %v4177, 2
      %v4895 = vpop.permute.xlu0 %4894
      %4896 = vrot.lane.b32.xlu0 %v4182, 2
      %v4897 = vpop.permute.xlu0 %4896
      %4898 = vrot.lane.b32.xlu0 %v4185, 2
      %v4899 = vpop.permute.xlu0 %4898
      %4900 = vrot.lane.b32.xlu0 %v4190, 2
      %v4901 = vpop.permute.xlu0 %4900
      %4902 = vrot.lane.b32.xlu0 %v4193, 2
      %v4903 = vpop.permute.xlu0 %4902
      %4904 = vrot.lane.b32.xlu0 %v4198, 2
      %v4905 = vpop.permute.xlu0 %4904
      %4906 = vrot.lane.b32.xlu0 %v4201, 2
      %v4907 = vpop.permute.xlu0 %4906
      %4908 = vrot.lane.b32.xlu0 %v4206, 2
      %v4909 = vpop.permute.xlu0 %4908
      %4910 = vrot.lane.b32.xlu0 %v4209, 2
      %v4911 = vpop.permute.xlu0 %4910
      %4912 = vrot.lane.b32.xlu0 %v4214, 2
      %v4913 = vpop.permute.xlu0 %4912
      %4914 = vrot.lane.b32.xlu0 %v4217, 2
      %v4915 = vpop.permute.xlu0 %4914
      %4916 = vrot.lane.b32.xlu0 %v4222, 2
      %v4917 = vpop.permute.xlu0 %4916
      %4918 = vrot.lane.b32.xlu0 %v4225, 2
      %v4919 = vpop.permute.xlu0 %4918
      %4920 = vrot.lane.b32.xlu0 %v4230, 2
      %v4921 = vpop.permute.xlu0 %4920
      %4922 = vrot.lane.b32.xlu0 %v4233, 2
      %v4923 = vpop.permute.xlu0 %4922
      %4924 = vrot.lane.b32.xlu0 %v4238, 2
      %v4925 = vpop.permute.xlu0 %4924
      %4926 = vrot.lane.b32.xlu0 %v4241, 2
      %v4927 = vpop.permute.xlu0 %4926
      %4928 = vrot.lane.b32.xlu0 %v4246, 2
      %v4929 = vpop.permute.xlu0 %4928
      %4930 = vrot.lane.b32.xlu0 %v4249, 2
      %v4931 = vpop.permute.xlu0 %4930
      %4932 = vrot.lane.b32.xlu0 %v4254, 2
      %v4933 = vpop.permute.xlu0 %4932
      %4934 = vrot.lane.b32.xlu0 %v4257, 2
      %v4935 = vpop.permute.xlu0 %4934
      %4936 = vrot.lane.b32.xlu0 %v4262, 2
      %v4937 = vpop.permute.xlu0 %4936
      %4938 = vrot.lane.b32.xlu0 %v4265, 2
      %v4939 = vpop.permute.xlu0 %4938
      %4940 = vrot.lane.b32.xlu0 %v4270, 2
      %v4941 = vpop.permute.xlu0 %4940
      %4942 = vrot.lane.b32.xlu0 %v4273, 2
      %v4943 = vpop.permute.xlu0 %4942
      %4944 = vrot.lane.b32.xlu0 %v4278, 2
      %v4945 = vpop.permute.xlu0 %4944
      %4946 = vrot.lane.b32.xlu0 %v4281, 2
      %v4947 = vpop.permute.xlu0 %4946
      %4948 = vrot.lane.b32.xlu0 %v4286, 2
      %v4949 = vpop.permute.xlu0 %4948
      %4950 = vrot.lane.b32.xlu0 %v4289, 2
      %v4951 = vpop.permute.xlu0 %4950
      %4952 = vrot.lane.b32.xlu0 %v4294, 2
      %v4953 = vpop.permute.xlu0 %4952
      %4954 = vrot.lane.b32.xlu0 %v4297, 2
      %v4955 = vpop.permute.xlu0 %4954
      %4956 = vrot.lane.b32.xlu0 %v4302, 2
      %v4957 = vpop.permute.xlu0 %4956
      %4958 = vrot.lane.b32.xlu0 %v4305, 2
      %v4959 = vpop.permute.xlu0 %4958
      %4960 = vrot.lane.b32.xlu0 %v4310, 2
      %v4961 = vpop.permute.xlu0 %4960
      %4962 = vrot.lane.b32.xlu0 %v4313, 2
      %v4963 = vpop.permute.xlu0 %4962
      %4964 = vrot.lane.b32.xlu0 %v4318, 2
      %v4965 = vpop.permute.xlu0 %4964
      %4966 = vrot.lane.b32.xlu0 %v4321, 2
      %v4967 = vpop.permute.xlu0 %4966
      %4968 = vrot.lane.b32.xlu0 %v4326, 2
      %v4969 = vpop.permute.xlu0 %4968
      %4970 = vrot.lane.b32.xlu0 %v4329, 2
      %v4971 = vpop.permute.xlu0 %4970
      %4972 = vrot.lane.b32.xlu0 %v4334, 2
      %v4973 = vpop.permute.xlu0 %4972
      %4974 = vrot.lane.b32.xlu0 %v4337, 2
      %v4975 = vpop.permute.xlu0 %4974
      %4976 = vrot.lane.b32.xlu0 %v4342, 2
      %v4977 = vpop.permute.xlu0 %4976
      %4978 = vrot.lane.b32.xlu0 %v4345, 2
      %v4979 = vpop.permute.xlu0 %4978
      %4980 = vrot.lane.b32.xlu0 %v4350, 2
      %v4981 = vpop.permute.xlu0 %4980
      %4982 = vrot.lane.b32.xlu0 %v4353, 2
      %v4983 = vpop.permute.xlu0 %4982
      %4984 = vrot.lane.b32.xlu0 %v4358, 2
      %v4985 = vpop.permute.xlu0 %4984
      %4986 = vrot.lane.b32.xlu0 %v4361, 2
      %v4987 = vpop.permute.xlu0 %4986
      %4988 = vrot.lane.b32.xlu0 %v4366, 2
      %v4989 = vpop.permute.xlu0 %4988
      %4990 = vrot.lane.b32.xlu0 %v4369, 2
      %v4991 = vpop.permute.xlu0 %4990
      %4992 = vrot.lane.b32.xlu0 %v4374, 2
      %v4993 = vpop.permute.xlu0 %4992
      %4994 = vrot.lane.b32.xlu0 %v4377, 2
      %v4995 = vpop.permute.xlu0 %4994
      %4996 = vrot.lane.b32.xlu0 %v4382, 2
      %v4997 = vpop.permute.xlu0 %4996
      %4998 = vrot.lane.b32.xlu0 %v4385, 2
      %v4999 = vpop.permute.xlu0 %4998
      %5000 = vrot.lane.b32.xlu0 %v4390, 2
      %v5001 = vpop.permute.xlu0 %5000
      %5002 = vrot.lane.b32.xlu0 %v4393, 2
      %v5003 = vpop.permute.xlu0 %5002
      %5004 = vrot.lane.b32.xlu0 %v4398, 2
      %v5005 = vpop.permute.xlu0 %5004
      %5006 = vrot.lane.b32.xlu0 %v4401, 2
      %v5007 = vpop.permute.xlu0 %5006
      %5008 = vrot.lane.b32.xlu0 %v4406, 2
      %v5009 = vpop.permute.xlu0 %5008
      %5010 = vrot.lane.b32.xlu0 %v4409, 2
      %v5011 = vpop.permute.xlu0 %5010
      %5012 = vrot.lane.b32.xlu0 %v4414, 2
      %v5013 = vpop.permute.xlu0 %5012
      %5014 = vrot.lane.b32.xlu0 %v4417, 2
      %v5015 = vpop.permute.xlu0 %5014
      %5016 = vrot.lane.b32.xlu0 %v4422, 2
      %v5017 = vpop.permute.xlu0 %5016
      %5018 = vrot.lane.b32.xlu0 %v4425, 2
      %v5019 = vpop.permute.xlu0 %5018
      %5020 = vrot.lane.b32.xlu0 %v4430, 2
      %v5021 = vpop.permute.xlu0 %5020
      %5022 = vrot.lane.b32.xlu0 %v4433, 2
      %v5023 = vpop.permute.xlu0 %5022
      %5024 = vrot.lane.b32.xlu0 %v4438, 2
      %v5025 = vpop.permute.xlu0 %5024
      %5026 = vrot.lane.b32.xlu0 %v4441, 2
      %v5027 = vpop.permute.xlu0 %5026
      %5028 = vrot.lane.b32.xlu0 %v4446, 2
      %v5029 = vpop.permute.xlu0 %5028
      %5030 = vrot.lane.b32.xlu0 %v4449, 2
      %v5031 = vpop.permute.xlu0 %5030
      %5032 = vrot.lane.b32.xlu0 %v4454, 2
      %v5033 = vpop.permute.xlu0 %5032
      %5034 = vrot.lane.b32.xlu0 %v4457, 2
      %v5035 = vpop.permute.xlu0 %5034
      %5036 = vrot.lane.b32.xlu0 %v4462, 2
      %v5037 = vpop.permute.xlu0 %5036
      %5038 = vrot.lane.b32.xlu0 %v4465, 2
      %v5039 = vpop.permute.xlu0 %5038
      %5040 = vrot.lane.b32.xlu0 %v4470, 2
      %v5041 = vpop.permute.xlu0 %5040
      %5042 = vrot.lane.b32.xlu0 %v4473, 2
      %v5043 = vpop.permute.xlu0 %5042
      %5044 = vrot.lane.b32.xlu0 %v4478, 2
      %v5045 = vpop.permute.xlu0 %5044
      %5046 = vrot.lane.b32.xlu0 %v4481, 2
      %v5047 = vpop.permute.xlu0 %5046
      %5048 = vrot.lane.b32.xlu0 %v4486, 2
      %v5049 = vpop.permute.xlu0 %5048
      %5050 = vrot.lane.b32.xlu0 %v4489, 2
      %v5051 = vpop.permute.xlu0 %5050
      %5052 = vrot.lane.b32.xlu0 %v4494, 2
      %v5053 = vpop.permute.xlu0 %5052
      %5054 = vrot.lane.b32.xlu0 %v4497, 2
      %v5055 = vpop.permute.xlu0 %5054
      %5056 = vrot.lane.b32.xlu0 %v4502, 2
      %v5057 = vpop.permute.xlu0 %5056
      %5058 = vrot.lane.b32.xlu0 %v4505, 2
      %v5059 = vpop.permute.xlu0 %5058
      %5060 = vrot.lane.b32.xlu0 %v4510, 2
      %v5061 = vpop.permute.xlu0 %5060
      %5062 = vrot.lane.b32.xlu0 %v4513, 2
      %v5063 = vpop.permute.xlu0 %5062
      %5064 = vrot.lane.b32.xlu0 %v4518, 2
      %v5065 = vpop.permute.xlu0 %5064
      %5066 = vrot.lane.b32.xlu0 %v4521, 2
      %v5067 = vpop.permute.xlu0 %5066
      %5068 = vrot.lane.b32.xlu0 %v4526, 2
      %v5069 = vpop.permute.xlu0 %5068
      %5070 = vrot.lane.b32.xlu0 %v4529, 2
      %v5071 = vpop.permute.xlu0 %5070
      %5072 = vrot.lane.b32.xlu0 %v4534, 2
      %v5073 = vpop.permute.xlu0 %5072
      %5074 = vrot.lane.b32.xlu0 %v4537, 2
      %v5075 = vpop.permute.xlu0 %5074
      %5076 = vrot.lane.b32.xlu0 %v4542, 2
      %v5077 = vpop.permute.xlu0 %5076
      %5078 = vrot.lane.b32.xlu0 %v4545, 2
      %v5079 = vpop.permute.xlu0 %5078
      %5080 = vrot.lane.b32.xlu0 %v4550, 2
      %v5081 = vpop.permute.xlu0 %5080
      %5082 = vrot.lane.b32.xlu0 %v4553, 2
      %v5083 = vpop.permute.xlu0 %5082
      %5084 = vrot.lane.b32.xlu0 %v4558, 2
      %v5085 = vpop.permute.xlu0 %5084
      %5086 = vrot.lane.b32.xlu0 %v4561, 2
      %v5087 = vpop.permute.xlu0 %5086
      %5088 = vrot.lane.b32.xlu0 %v4566, 2
      %v5089 = vpop.permute.xlu0 %5088
      %5090 = vrot.lane.b32.xlu0 %v4569, 2
      %v5091 = vpop.permute.xlu0 %5090
      %5092 = vrot.lane.b32.xlu0 %v4574, 2
      %v5093 = vpop.permute.xlu0 %5092
      %5094 = vrot.lane.b32.xlu0 %v4577, 2
      %v5095 = vpop.permute.xlu0 %5094
      %5096 = vrot.lane.b32.xlu0 %v4582, 2
      %v5097 = vpop.permute.xlu0 %5096
      %5098 = vrot.lane.b32.xlu0 %v4585, 2
      %v5099 = vpop.permute.xlu0 %5098
      %v5228 = vsub.f32 %v337, %v4845
      %v5229 = vsub.f32 %v338, %v4847
      %v5230 = vsub.f32 %v339, %v4849
      %v5231 = vsub.f32 %v340, %v4851
      %v5232 = vsub.f32 %v341, %v4853
      %v5233 = vsub.f32 %v342, %v4855
      %v5234 = vsub.f32 %v343, %v4857
      %v5235 = vsub.f32 %v344, %v4859
      %v5236 = vsub.f32 %v345, %v4861
      %v5237 = vsub.f32 %v346, %v4863
      %v5238 = vsub.f32 %v347, %v4865
      %v5239 = vsub.f32 %v348, %v4867
      %v5240 = vsub.f32 %v349, %v4869
      %v5241 = vsub.f32 %v350, %v4871
      %v5242 = vsub.f32 %v351, %v4873
      %v5243 = vsub.f32 %v352, %v4875
      %v5244 = vsub.f32 %v353, %v4877
      %v5245 = vsub.f32 %v354, %v4879
      %v5246 = vsub.f32 %v355, %v4881
      %v5247 = vsub.f32 %v356, %v4883
      %v5248 = vsub.f32 %v357, %v4885
      %v5249 = vsub.f32 %v358, %v4887
      %v5250 = vsub.f32 %v359, %v4889
      %v5251 = vsub.f32 %v360, %v4891
      %v5252 = vsub.f32 %v361, %v4893
      %v5253 = vsub.f32 %v362, %v4895
      %v5254 = vsub.f32 %v363, %v4897
      %v5255 = vsub.f32 %v364, %v4899
      %v5256 = vsub.f32 %v365, %v4901
      %v5257 = vsub.f32 %v366, %v4903
      %v5258 = vsub.f32 %v367, %v4905
      %v5259 = vsub.f32 %v368, %v4907
      %v5260 = vsub.f32 %v369, %v4909
      %v5261 = vsub.f32 %v370, %v4911
      %v5262 = vsub.f32 %v371, %v4913
      %v5263 = vsub.f32 %v372, %v4915
      %v5264 = vsub.f32 %v373, %v4917
      %v5265 = vsub.f32 %v374, %v4919
      %v5266 = vsub.f32 %v375, %v4921
      %v5267 = vsub.f32 %v376, %v4923
      %v5268 = vsub.f32 %v377, %v4925
      %v5269 = vsub.f32 %v378, %v4927
      %v5270 = vsub.f32 %v379, %v4929
      %v5271 = vsub.f32 %v380, %v4931
      %v5272 = vsub.f32 %v381, %v4933
      %v5273 = vsub.f32 %v382, %v4935
      %v5274 = vsub.f32 %v383, %v4937
      %v5275 = vsub.f32 %v384, %v4939
      %v5276 = vsub.f32 %v385, %v4941
      %v5277 = vsub.f32 %v386, %v4943
      %v5278 = vsub.f32 %v387, %v4945
      %v5279 = vsub.f32 %v388, %v4947
      %v5280 = vsub.f32 %v389, %v4949
      %v5281 = vsub.f32 %v390, %v4951
      %v5282 = vsub.f32 %v391, %v4953
      %v5283 = vsub.f32 %v392, %v4955
      %v5284 = vsub.f32 %v393, %v4957
      %v5285 = vsub.f32 %v394, %v4959
      %v5286 = vsub.f32 %v395, %v4961
      %v5287 = vsub.f32 %v396, %v4963
      %v5288 = vsub.f32 %v397, %v4965
      %v5289 = vsub.f32 %v398, %v4967
      %v5290 = vsub.f32 %v399, %v4969
      %v5291 = vsub.f32 %v400, %v4971
      %v5292 = vsub.f32 %v401, %v4973
      %v5293 = vsub.f32 %v402, %v4975
      %v5294 = vsub.f32 %v403, %v4977
      %v5295 = vsub.f32 %v404, %v4979
      %v5296 = vsub.f32 %v405, %v4981
      %v5297 = vsub.f32 %v406, %v4983
      %v5298 = vsub.f32 %v407, %v4985
      %v5299 = vsub.f32 %v408, %v4987
      %v5300 = vsub.f32 %v409, %v4989
      %v5301 = vsub.f32 %v410, %v4991
      %v5302 = vsub.f32 %v411, %v4993
      %v5303 = vsub.f32 %v412, %v4995
      %v5304 = vsub.f32 %v413, %v4997
      %v5305 = vsub.f32 %v414, %v4999
      %v5306 = vsub.f32 %v415, %v5001
      %v5307 = vsub.f32 %v416, %v5003
      %v5308 = vsub.f32 %v417, %v5005
      %v5309 = vsub.f32 %v418, %v5007
      %v5310 = vsub.f32 %v419, %v5009
      %v5311 = vsub.f32 %v420, %v5011
      %v5312 = vsub.f32 %v421, %v5013
      %v5313 = vsub.f32 %v422, %v5015
      %v5314 = vsub.f32 %v423, %v5017
      %v5315 = vsub.f32 %v424, %v5019
      %v5316 = vsub.f32 %v425, %v5021
      %v5317 = vsub.f32 %v426, %v5023
      %v5318 = vsub.f32 %v427, %v5025
      %v5319 = vsub.f32 %v428, %v5027
      %v5320 = vsub.f32 %v429, %v5029
      %v5321 = vsub.f32 %v430, %v5031
      %v5322 = vsub.f32 %v431, %v5033
      %v5323 = vsub.f32 %v432, %v5035
      %v5324 = vsub.f32 %v433, %v5037
      %v5325 = vsub.f32 %v434, %v5039
      %v5326 = vsub.f32 %v435, %v5041
      %v5327 = vsub.f32 %v436, %v5043
      %v5328 = vsub.f32 %v437, %v5045
      %v5329 = vsub.f32 %v438, %v5047
      %v5330 = vsub.f32 %v439, %v5049
      %v5331 = vsub.f32 %v440, %v5051
      %v5332 = vsub.f32 %v441, %v5053
      %v5333 = vsub.f32 %v442, %v5055
      %v5334 = vsub.f32 %v443, %v5057
      %v5335 = vsub.f32 %v444, %v5059
      %v5336 = vsub.f32 %v445, %v5061
      %v5337 = vsub.f32 %v446, %v5063
      %v5338 = vsub.f32 %v447, %v5065
      %v5339 = vsub.f32 %v448, %v5067
      %v5340 = vsub.f32 %v449, %v5069
      %v5341 = vsub.f32 %v450, %v5071
      %v5342 = vsub.f32 %v451, %v5073
      %v5343 = vsub.f32 %v452, %v5075
      %v5344 = vsub.f32 %v453, %v5077
      %v5345 = vsub.f32 %v454, %v5079
      %v5346 = vsub.f32 %v455, %v5081
      %v5347 = vsub.f32 %v456, %v5083
      %v5348 = vsub.f32 %v457, %v5085
      %v5349 = vsub.f32 %v458, %v5087
      %v5350 = vsub.f32 %v459, %v5089
      %v5351 = vsub.f32 %v460, %v5091
      %v5352 = vsub.f32 %v461, %v5093
      %v5353 = vsub.f32 %v462, %v5095
      %v5354 = vsub.f32 %v463, %v5097
      %v5355 = vsub.f32 %v464, %v5099
      %v5356 = vmul.f32 %v4078, -2.0
      %v5357 = vmul.f32 %v4081, -2.0
      %v5358 = vmul.f32 %v4086, -2.0
      %v5359 = vmul.f32 %v4089, -2.0
      %v5360 = vmul.f32 %v4094, -2.0
      %v5361 = vmul.f32 %v4097, -2.0
      %v5362 = vmul.f32 %v4102, -2.0
      %v5363 = vmul.f32 %v4105, -2.0
      %v5364 = vmul.f32 %v4110, -2.0
      %v5365 = vmul.f32 %v4113, -2.0
      %v5366 = vmul.f32 %v4118, -2.0
      %v5367 = vmul.f32 %v4121, -2.0
      %v5368 = vmul.f32 %v4126, -2.0
      %v5369 = vmul.f32 %v4129, -2.0
      %v5370 = vmul.f32 %v4134, -2.0
      %v5371 = vmul.f32 %v4137, -2.0
      %v5372 = vmul.f32 %v4142, -2.0
      %v5373 = vmul.f32 %v4145, -2.0
      %v5374 = vmul.f32 %v4150, -2.0
      %v5375 = vmul.f32 %v4153, -2.0
      %v5376 = vmul.f32 %v4158, -2.0
      %v5377 = vmul.f32 %v4161, -2.0
      %v5378 = vmul.f32 %v4166, -2.0
      %v5379 = vmul.f32 %v4169, -2.0
      %v5380 = vmul.f32 %v4174, -2.0
      %v5381 = vmul.f32 %v4177, -2.0
      %v5382 = vmul.f32 %v4182, -2.0
      %v5383 = vmul.f32 %v4185, -2.0
      %v5384 = vmul.f32 %v4190, -2.0
      %v5385 = vmul.f32 %v4193, -2.0
      %v5386 = vmul.f32 %v4198, -2.0
      %v5387 = vmul.f32 %v4201, -2.0
      %v5388 = vmul.f32 %v4206, -2.0
      %v5389 = vmul.f32 %v4209, -2.0
      %v5390 = vmul.f32 %v4214, -2.0
      %v5391 = vmul.f32 %v4217, -2.0
      %v5392 = vmul.f32 %v4222, -2.0
      %v5393 = vmul.f32 %v4225, -2.0
      %v5394 = vmul.f32 %v4230, -2.0
      %v5395 = vmul.f32 %v4233, -2.0
      %v5396 = vmul.f32 %v4238, -2.0
      %v5397 = vmul.f32 %v4241, -2.0
      %v5398 = vmul.f32 %v4246, -2.0
      %v5399 = vmul.f32 %v4249, -2.0
      %v5400 = vmul.f32 %v4254, -2.0
      %v5401 = vmul.f32 %v4257, -2.0
      %v5402 = vmul.f32 %v4262, -2.0
      %v5403 = vmul.f32 %v4265, -2.0
      %v5404 = vmul.f32 %v4270, -2.0
      %v5405 = vmul.f32 %v4273, -2.0
      %v5406 = vmul.f32 %v4278, -2.0
      %v5407 = vmul.f32 %v4281, -2.0
      %v5408 = vmul.f32 %v4286, -2.0
      %v5409 = vmul.f32 %v4289, -2.0
      %v5410 = vmul.f32 %v4294, -2.0
      %v5411 = vmul.f32 %v4297, -2.0
      %v5412 = vmul.f32 %v4302, -2.0
      %v5413 = vmul.f32 %v4305, -2.0
      %v5414 = vmul.f32 %v4310, -2.0
      %v5415 = vmul.f32 %v4313, -2.0
      %v5416 = vmul.f32 %v4318, -2.0
      %v5417 = vmul.f32 %v4321, -2.0
      %v5418 = vmul.f32 %v4326, -2.0
      %v5419 = vmul.f32 %v4329, -2.0
      %v5420 = vmul.f32 %v4334, -2.0
      %v5421 = vmul.f32 %v4337, -2.0
      %v5422 = vmul.f32 %v4342, -2.0
      %v5423 = vmul.f32 %v4345, -2.0
      %v5424 = vmul.f32 %v4350, -2.0
      %v5425 = vmul.f32 %v4353, -2.0
      %v5426 = vmul.f32 %v4358, -2.0
      %v5427 = vmul.f32 %v4361, -2.0
      %v5428 = vmul.f32 %v4366, -2.0
      %v5429 = vmul.f32 %v4369, -2.0
      %v5430 = vmul.f32 %v4374, -2.0
      %v5431 = vmul.f32 %v4377, -2.0
      %v5432 = vmul.f32 %v4382, -2.0
      %v5433 = vmul.f32 %v4385, -2.0
      %v5434 = vmul.f32 %v4390, -2.0
      %v5435 = vmul.f32 %v4393, -2.0
      %v5436 = vmul.f32 %v4398, -2.0
      %v5437 = vmul.f32 %v4401, -2.0
      %v5438 = vmul.f32 %v4406, -2.0
      %v5439 = vmul.f32 %v4409, -2.0
      %v5440 = vmul.f32 %v4414, -2.0
      %v5441 = vmul.f32 %v4417, -2.0
      %v5442 = vmul.f32 %v4422, -2.0
      %v5443 = vmul.f32 %v4425, -2.0
      %v5444 = vmul.f32 %v4430, -2.0
      %v5445 = vmul.f32 %v4433, -2.0
      %v5446 = vmul.f32 %v4438, -2.0
      %v5447 = vmul.f32 %v4441, -2.0
      %v5448 = vmul.f32 %v4446, -2.0
      %v5449 = vmul.f32 %v4449, -2.0
      %v5450 = vmul.f32 %v4454, -2.0
      %v5451 = vmul.f32 %v4457, -2.0
      %v5452 = vmul.f32 %v4462, -2.0
      %v5453 = vmul.f32 %v4465, -2.0
      %v5454 = vmul.f32 %v4470, -2.0
      %v5455 = vmul.f32 %v4473, -2.0
      %v5456 = vmul.f32 %v4478, -2.0
      %v5457 = vmul.f32 %v4481, -2.0
      %v5458 = vmul.f32 %v4486, -2.0
      %v5459 = vmul.f32 %v4489, -2.0
      %v5460 = vmul.f32 %v4494, -2.0
      %v5461 = vmul.f32 %v4497, -2.0
      %v5462 = vmul.f32 %v4502, -2.0
      %v5463 = vmul.f32 %v4505, -2.0
      %v5464 = vmul.f32 %v4510, -2.0
      %v5465 = vmul.f32 %v4513, -2.0
      %v5466 = vmul.f32 %v4518, -2.0
      %v5467 = vmul.f32 %v4521, -2.0
      %v5468 = vmul.f32 %v4526, -2.0
      %v5469 = vmul.f32 %v4529, -2.0
      %v5470 = vmul.f32 %v4534, -2.0
      %v5471 = vmul.f32 %v4537, -2.0
      %v5472 = vmul.f32 %v4542, -2.0
      %v5473 = vmul.f32 %v4545, -2.0
      %v5474 = vmul.f32 %v4550, -2.0
      %v5475 = vmul.f32 %v4553, -2.0
      %v5476 = vmul.f32 %v4558, -2.0
      %v5477 = vmul.f32 %v4561, -2.0
      %v5478 = vmul.f32 %v4566, -2.0
      %v5479 = vmul.f32 %v4569, -2.0
      %v5480 = vmul.f32 %v4574, -2.0
      %v5481 = vmul.f32 %v4577, -2.0
      %v5482 = vmul.f32 %v4582, -2.0
      %v5483 = vmul.f32 %v4585, -2.0
      %v5484 = vmul.f32 %v5356, 1.442695
      %v5485 = vpow.pop %v5484
      %v5486 = vmul.f32 %v5357, 1.442695
      %v5487 = vpow.pop %v5486
      %v5488 = vmul.f32 %v5358, 1.442695
      %v5489 = vpow.pop %v5488
      %v5490 = vmul.f32 %v5359, 1.442695
      %v5491 = vpow.pop %v5490
      %v5492 = vmul.f32 %v5360, 1.442695
      %v5493 = vpow.pop %v5492
      %v5494 = vmul.f32 %v5361, 1.442695
      %v5495 = vpow.pop %v5494
      %v5496 = vmul.f32 %v5362, 1.442695
      %v5497 = vpow.pop %v5496
      %v5498 = vmul.f32 %v5363, 1.442695
      %v5499 = vpow.pop %v5498
      %v5500 = vmul.f32 %v5364, 1.442695
      %v5501 = vpow.pop %v5500
      %v5502 = vmul.f32 %v5365, 1.442695
      %v5503 = vpow.pop %v5502
      %v5504 = vmul.f32 %v5366, 1.442695
      %v5505 = vpow.pop %v5504
      %v5506 = vmul.f32 %v5367, 1.442695
      %v5507 = vpow.pop %v5506
      %v5508 = vmul.f32 %v5368, 1.442695
      %v5509 = vpow.pop %v5508
      %v5510 = vmul.f32 %v5369, 1.442695
      %v5511 = vpow.pop %v5510
      %v5512 = vmul.f32 %v5370, 1.442695
      %v5513 = vpow.pop %v5512
      %v5514 = vmul.f32 %v5371, 1.442695
      %v5515 = vpow.pop %v5514
      %v5516 = vmul.f32 %v5372, 1.442695
      %v5517 = vpow.pop %v5516
      %v5518 = vmul.f32 %v5373, 1.442695
      %v5519 = vpow.pop %v5518
      %v5520 = vmul.f32 %v5374, 1.442695
      %v5521 = vpow.pop %v5520
      %v5522 = vmul.f32 %v5375, 1.442695
      %v5523 = vpow.pop %v5522
      %v5524 = vmul.f32 %v5376, 1.442695
      %v5525 = vpow.pop %v5524
      %v5526 = vmul.f32 %v5377, 1.442695
      %v5527 = vpow.pop %v5526
      %v5528 = vmul.f32 %v5378, 1.442695
      %v5529 = vpow.pop %v5528
      %v5530 = vmul.f32 %v5379, 1.442695
      %v5531 = vpow.pop %v5530
      %v5532 = vmul.f32 %v5380, 1.442695
      %v5533 = vpow.pop %v5532
      %v5534 = vmul.f32 %v5381, 1.442695
      %v5535 = vpow.pop %v5534
      %v5536 = vmul.f32 %v5382, 1.442695
      %v5537 = vpow.pop %v5536
      %v5538 = vmul.f32 %v5383, 1.442695
      %v5539 = vpow.pop %v5538
      %v5540 = vmul.f32 %v5384, 1.442695
      %v5541 = vpow.pop %v5540
      %v5542 = vmul.f32 %v5385, 1.442695
      %v5543 = vpow.pop %v5542
      %v5544 = vmul.f32 %v5386, 1.442695
      %v5545 = vpow.pop %v5544
      %v5546 = vmul.f32 %v5387, 1.442695
      %v5547 = vpow.pop %v5546
      %v5548 = vmul.f32 %v5388, 1.442695
      %v5549 = vpow.pop %v5548
      %v5550 = vmul.f32 %v5389, 1.442695
      %v5551 = vpow.pop %v5550
      %v5552 = vmul.f32 %v5390, 1.442695
      %v5553 = vpow.pop %v5552
      %v5554 = vmul.f32 %v5391, 1.442695
      %v5555 = vpow.pop %v5554
      %v5556 = vmul.f32 %v5392, 1.442695
      %v5557 = vpow.pop %v5556
      %v5558 = vmul.f32 %v5393, 1.442695
      %v5559 = vpow.pop %v5558
      %v5560 = vmul.f32 %v5394, 1.442695
      %v5561 = vpow.pop %v5560
      %v5562 = vmul.f32 %v5395, 1.442695
      %v5563 = vpow.pop %v5562
      %v5564 = vmul.f32 %v5396, 1.442695
      %v5565 = vpow.pop %v5564
      %v5566 = vmul.f32 %v5397, 1.442695
      %v5567 = vpow.pop %v5566
      %v5568 = vmul.f32 %v5398, 1.442695
      %v5569 = vpow.pop %v5568
      %v5570 = vmul.f32 %v5399, 1.442695
      %v5571 = vpow.pop %v5570
      %v5572 = vmul.f32 %v5400, 1.442695
      %v5573 = vpow.pop %v5572
      %v5574 = vmul.f32 %v5401, 1.442695
      %v5575 = vpow.pop %v5574
      %v5576 = vmul.f32 %v5402, 1.442695
      %v5577 = vpow.pop %v5576
      %v5578 = vmul.f32 %v5403, 1.442695
      %v5579 = vpow.pop %v5578
      %v5580 = vmul.f32 %v5404, 1.442695
      %v5581 = vpow.pop %v5580
      %v5582 = vmul.f32 %v5405, 1.442695
      %v5583 = vpow.pop %v5582
      %v5584 = vmul.f32 %v5406, 1.442695
      %v5585 = vpow.pop %v5584
      %v5586 = vmul.f32 %v5407, 1.442695
      %v5587 = vpow.pop %v5586
      %v5588 = vmul.f32 %v5408, 1.442695
      %v5589 = vpow.pop %v5588
      %v5590 = vmul.f32 %v5409, 1.442695
      %v5591 = vpow.pop %v5590
      %v5592 = vmul.f32 %v5410, 1.442695
      %v5593 = vpow.pop %v5592
      %v5594 = vmul.f32 %v5411, 1.442695
      %v5595 = vpow.pop %v5594
      %v5596 = vmul.f32 %v5412, 1.442695
      %v5597 = vpow.pop %v5596
      %v5598 = vmul.f32 %v5413, 1.442695
      %v5599 = vpow.pop %v5598
      %v5600 = vmul.f32 %v5414, 1.442695
      %v5601 = vpow.pop %v5600
      %v5602 = vmul.f32 %v5415, 1.442695
      %v5603 = vpow.pop %v5602
      %v5604 = vmul.f32 %v5416, 1.442695
      %v5605 = vpow.pop %v5604
      %v5606 = vmul.f32 %v5417, 1.442695
      %v5607 = vpow.pop %v5606
      %v5608 = vmul.f32 %v5418, 1.442695
      %v5609 = vpow.pop %v5608
      %v5610 = vmul.f32 %v5419, 1.442695
      %v5611 = vpow.pop %v5610
      %v5612 = vmul.f32 %v5420, 1.442695
      %v5613 = vpow.pop %v5612
      %v5614 = vmul.f32 %v5421, 1.442695
      %v5615 = vpow.pop %v5614
      %v5616 = vmul.f32 %v5422, 1.442695
      %v5617 = vpow.pop %v5616
      %v5618 = vmul.f32 %v5423, 1.442695
      %v5619 = vpow.pop %v5618
      %v5620 = vmul.f32 %v5424, 1.442695
      %v5621 = vpow.pop %v5620
      %v5622 = vmul.f32 %v5425, 1.442695
      %v5623 = vpow.pop %v5622
      %v5624 = vmul.f32 %v5426, 1.442695
      %v5625 = vpow.pop %v5624
      %v5626 = vmul.f32 %v5427, 1.442695
      %v5627 = vpow.pop %v5626
      %v5628 = vmul.f32 %v5428, 1.442695
      %v5629 = vpow.pop %v5628
      %v5630 = vmul.f32 %v5429, 1.442695
      %v5631 = vpow.pop %v5630
      %v5632 = vmul.f32 %v5430, 1.442695
      %v5633 = vpow.pop %v5632
      %v5634 = vmul.f32 %v5431, 1.442695
      %v5635 = vpow.pop %v5634
      %v5636 = vmul.f32 %v5432, 1.442695
      %v5637 = vpow.pop %v5636
      %v5638 = vmul.f32 %v5433, 1.442695
      %v5639 = vpow.pop %v5638
      %v5640 = vmul.f32 %v5434, 1.442695
      %v5641 = vpow.pop %v5640
      %v5642 = vmul.f32 %v5435, 1.442695
      %v5643 = vpow.pop %v5642
      %v5644 = vmul.f32 %v5436, 1.442695
      %v5645 = vpow.pop %v5644
      %v5646 = vmul.f32 %v5437, 1.442695
      %v5647 = vpow.pop %v5646
      %v5648 = vmul.f32 %v5438, 1.442695
      %v5649 = vpow.pop %v5648
      %v5650 = vmul.f32 %v5439, 1.442695
      %v5651 = vpow.pop %v5650
      %v5652 = vmul.f32 %v5440, 1.442695
      %v5653 = vpow.pop %v5652
      %v5654 = vmul.f32 %v5441, 1.442695
      %v5655 = vpow.pop %v5654
      %v5656 = vmul.f32 %v5442, 1.442695
      %v5657 = vpow.pop %v5656
      %v5658 = vmul.f32 %v5443, 1.442695
      %v5659 = vpow.pop %v5658
      %v5660 = vmul.f32 %v5444, 1.442695
      %v5661 = vpow.pop %v5660
      %v5662 = vmul.f32 %v5445, 1.442695
      %v5663 = vpow.pop %v5662
      %v5664 = vmul.f32 %v5446, 1.442695
      %v5665 = vpow.pop %v5664
      %v5666 = vmul.f32 %v5447, 1.442695
      %v5667 = vpow.pop %v5666
      %v5668 = vmul.f32 %v5448, 1.442695
      %v5669 = vpow.pop %v5668
      %v5670 = vmul.f32 %v5449, 1.442695
      %v5671 = vpow.pop %v5670
      %v5672 = vmul.f32 %v5450, 1.442695
      %v5673 = vpow.pop %v5672
      %v5674 = vmul.f32 %v5451, 1.442695
      %v5675 = vpow.pop %v5674
      %v5676 = vmul.f32 %v5452, 1.442695
      %v5677 = vpow.pop %v5676
      %v5678 = vmul.f32 %v5453, 1.442695
      %v5679 = vpow.pop %v5678
      %v5680 = vmul.f32 %v5454, 1.442695
      %v5681 = vpow.pop %v5680
      %v5682 = vmul.f32 %v5455, 1.442695
      %v5683 = vpow.pop %v5682
      %v5684 = vmul.f32 %v5456, 1.442695
      %v5685 = vpow.pop %v5684
      %v5686 = vmul.f32 %v5457, 1.442695
      %v5687 = vpow.pop %v5686
      %v5688 = vmul.f32 %v5458, 1.442695
      %v5689 = vpow.pop %v5688
      %v5690 = vmul.f32 %v5459, 1.442695
      %v5691 = vpow.pop %v5690
      %v5692 = vmul.f32 %v5460, 1.442695
      %v5693 = vpow.pop %v5692
      %v5694 = vmul.f32 %v5461, 1.442695
      %v5695 = vpow.pop %v5694
      %v5696 = vmul.f32 %v5462, 1.442695
      %v5697 = vpow.pop %v5696
      %v5698 = vmul.f32 %v5463, 1.442695
      %v5699 = vpow.pop %v5698
      %v5700 = vmul.f32 %v5464, 1.442695
      %v5701 = vpow.pop %v5700
      %v5702 = vmul.f32 %v5465, 1.442695
      %v5703 = vpow.pop %v5702
      %v5704 = vmul.f32 %v5466, 1.442695
      %v5705 = vpow.pop %v5704
      %v5706 = vmul.f32 %v5467, 1.442695
      %v5707 = vpow.pop %v5706
      %v5708 = vmul.f32 %v5468, 1.442695
      %v5709 = vpow.pop %v5708
      %v5710 = vmul.f32 %v5469, 1.442695
      %v5711 = vpow.pop %v5710
      %v5712 = vmul.f32 %v5470, 1.442695
      %v5713 = vpow.pop %v5712
      %v5714 = vmul.f32 %v5471, 1.442695
      %v5715 = vpow.pop %v5714
      %v5716 = vmul.f32 %v5472, 1.442695
      %v5717 = vpow.pop %v5716
      %v5718 = vmul.f32 %v5473, 1.442695
      %v5719 = vpow.pop %v5718
      %v5720 = vmul.f32 %v5474, 1.442695
      %v5721 = vpow.pop %v5720
      %v5722 = vmul.f32 %v5475, 1.442695
      %v5723 = vpow.pop %v5722
      %v5724 = vmul.f32 %v5476, 1.442695
      %v5725 = vpow.pop %v5724
      %v5726 = vmul.f32 %v5477, 1.442695
      %v5727 = vpow.pop %v5726
      %v5728 = vmul.f32 %v5478, 1.442695
      %v5729 = vpow.pop %v5728
      %v5730 = vmul.f32 %v5479, 1.442695
      %v5731 = vpow.pop %v5730
      %v5732 = vmul.f32 %v5480, 1.442695
      %v5733 = vpow.pop %v5732
      %v5734 = vmul.f32 %v5481, 1.442695
      %v5735 = vpow.pop %v5734
      %v5736 = vmul.f32 %v5482, 1.442695
      %v5737 = vpow.pop %v5736
      %v5738 = vmul.f32 %v5483, 1.442695
      %v5739 = vpow.pop %v5738
      %v5740 = vmul.f32 %v5228, %v5228
      %v5741 = vmul.f32 %v5229, %v5229
      %v5742 = vmul.f32 %v5230, %v5230
      %v5743 = vmul.f32 %v5231, %v5231
      %v5744 = vmul.f32 %v5232, %v5232
      %v5745 = vmul.f32 %v5233, %v5233
      %v5746 = vmul.f32 %v5234, %v5234
      %v5747 = vmul.f32 %v5235, %v5235
      %v5748 = vmul.f32 %v5236, %v5236
      %v5749 = vmul.f32 %v5237, %v5237
      %v5750 = vmul.f32 %v5238, %v5238
      %v5751 = vmul.f32 %v5239, %v5239
      %v5752 = vmul.f32 %v5240, %v5240
      %v5753 = vmul.f32 %v5241, %v5241
      %v5754 = vmul.f32 %v5242, %v5242
      %v5755 = vmul.f32 %v5243, %v5243
      %v5756 = vmul.f32 %v5244, %v5244
      %v5757 = vmul.f32 %v5245, %v5245
      %v5758 = vmul.f32 %v5246, %v5246
      %v5759 = vmul.f32 %v5247, %v5247
      %v5760 = vmul.f32 %v5248, %v5248
      %v5761 = vmul.f32 %v5249, %v5249
      %v5762 = vmul.f32 %v5250, %v5250
      %v5763 = vmul.f32 %v5251, %v5251
      %v5764 = vmul.f32 %v5252, %v5252
      %v5765 = vmul.f32 %v5253, %v5253
      %v5766 = vmul.f32 %v5254, %v5254
      %v5767 = vmul.f32 %v5255, %v5255
      %v5768 = vmul.f32 %v5256, %v5256
      %v5769 = vmul.f32 %v5257, %v5257
      %v5770 = vmul.f32 %v5258, %v5258
      %v5771 = vmul.f32 %v5259, %v5259
      %v5772 = vmul.f32 %v5260, %v5260
      %v5773 = vmul.f32 %v5261, %v5261
      %v5774 = vmul.f32 %v5262, %v5262
      %v5775 = vmul.f32 %v5263, %v5263
      %v5776 = vmul.f32 %v5264, %v5264
      %v5777 = vmul.f32 %v5265, %v5265
      %v5778 = vmul.f32 %v5266, %v5266
      %v5779 = vmul.f32 %v5267, %v5267
      %v5780 = vmul.f32 %v5268, %v5268
      %v5781 = vmul.f32 %v5269, %v5269
      %v5782 = vmul.f32 %v5270, %v5270
      %v5783 = vmul.f32 %v5271, %v5271
      %v5784 = vmul.f32 %v5272, %v5272
      %v5785 = vmul.f32 %v5273, %v5273
      %v5786 = vmul.f32 %v5274, %v5274
      %v5787 = vmul.f32 %v5275, %v5275
      %v5788 = vmul.f32 %v5276, %v5276
      %v5789 = vmul.f32 %v5277, %v5277
      %v5790 = vmul.f32 %v5278, %v5278
      %v5791 = vmul.f32 %v5279, %v5279
      %v5792 = vmul.f32 %v5280, %v5280
      %v5793 = vmul.f32 %v5281, %v5281
      %v5794 = vmul.f32 %v5282, %v5282
      %v5795 = vmul.f32 %v5283, %v5283
      %v5796 = vmul.f32 %v5284, %v5284
      %v5797 = vmul.f32 %v5285, %v5285
      %v5798 = vmul.f32 %v5286, %v5286
      %v5799 = vmul.f32 %v5287, %v5287
      %v5800 = vmul.f32 %v5288, %v5288
      %v5801 = vmul.f32 %v5289, %v5289
      %v5802 = vmul.f32 %v5290, %v5290
      %v5803 = vmul.f32 %v5291, %v5291
      %v5804 = vmul.f32 %v5292, %v5292
      %v5805 = vmul.f32 %v5293, %v5293
      %v5806 = vmul.f32 %v5294, %v5294
      %v5807 = vmul.f32 %v5295, %v5295
      %v5808 = vmul.f32 %v5296, %v5296
      %v5809 = vmul.f32 %v5297, %v5297
      %v5810 = vmul.f32 %v5298, %v5298
      %v5811 = vmul.f32 %v5299, %v5299
      %v5812 = vmul.f32 %v5300, %v5300
      %v5813 = vmul.f32 %v5301, %v5301
      %v5814 = vmul.f32 %v5302, %v5302
      %v5815 = vmul.f32 %v5303, %v5303
      %v5816 = vmul.f32 %v5304, %v5304
      %v5817 = vmul.f32 %v5305, %v5305
      %v5818 = vmul.f32 %v5306, %v5306
      %v5819 = vmul.f32 %v5307, %v5307
      %v5820 = vmul.f32 %v5308, %v5308
      %v5821 = vmul.f32 %v5309, %v5309
      %v5822 = vmul.f32 %v5310, %v5310
      %v5823 = vmul.f32 %v5311, %v5311
      %v5824 = vmul.f32 %v5312, %v5312
      %v5825 = vmul.f32 %v5313, %v5313
      %v5826 = vmul.f32 %v5314, %v5314
      %v5827 = vmul.f32 %v5315, %v5315
      %v5828 = vmul.f32 %v5316, %v5316
      %v5829 = vmul.f32 %v5317, %v5317
      %v5830 = vmul.f32 %v5318, %v5318
      %v5831 = vmul.f32 %v5319, %v5319
      %v5832 = vmul.f32 %v5320, %v5320
      %v5833 = vmul.f32 %v5321, %v5321
      %v5834 = vmul.f32 %v5322, %v5322
      %v5835 = vmul.f32 %v5323, %v5323
      %v5836 = vmul.f32 %v5324, %v5324
      %v5837 = vmul.f32 %v5325, %v5325
      %v5838 = vmul.f32 %v5326, %v5326
      %v5839 = vmul.f32 %v5327, %v5327
      %v5840 = vmul.f32 %v5328, %v5328
      %v5841 = vmul.f32 %v5329, %v5329
      %v5842 = vmul.f32 %v5330, %v5330
      %v5843 = vmul.f32 %v5331, %v5331
      %v5844 = vmul.f32 %v5332, %v5332
      %v5845 = vmul.f32 %v5333, %v5333
      %v5846 = vmul.f32 %v5334, %v5334
      %v5847 = vmul.f32 %v5335, %v5335
      %v5848 = vmul.f32 %v5336, %v5336
      %v5849 = vmul.f32 %v5337, %v5337
      %v5850 = vmul.f32 %v5338, %v5338
      %v5851 = vmul.f32 %v5339, %v5339
      %v5852 = vmul.f32 %v5340, %v5340
      %v5853 = vmul.f32 %v5341, %v5341
      %v5854 = vmul.f32 %v5342, %v5342
      %v5855 = vmul.f32 %v5343, %v5343
      %v5856 = vmul.f32 %v5344, %v5344
      %v5857 = vmul.f32 %v5345, %v5345
      %v5858 = vmul.f32 %v5346, %v5346
      %v5859 = vmul.f32 %v5347, %v5347
      %v5860 = vmul.f32 %v5348, %v5348
      %v5861 = vmul.f32 %v5349, %v5349
      %v5862 = vmul.f32 %v5350, %v5350
      %v5863 = vmul.f32 %v5351, %v5351
      %v5864 = vmul.f32 %v5352, %v5352
      %v5865 = vmul.f32 %v5353, %v5353
      %v5866 = vmul.f32 %v5354, %v5354
      %v5867 = vmul.f32 %v5355, %v5355
      %v5868 = vmul.f32 %v5740, -0.5
      %v5869 = vmul.f32 %v5741, -0.5
      %v5870 = vmul.f32 %v5742, -0.5
      %v5871 = vmul.f32 %v5743, -0.5
      %v5872 = vmul.f32 %v5744, -0.5
      %v5873 = vmul.f32 %v5745, -0.5
      %v5874 = vmul.f32 %v5746, -0.5
      %v5875 = vmul.f32 %v5747, -0.5
      %v5876 = vmul.f32 %v5748, -0.5
      %v5877 = vmul.f32 %v5749, -0.5
      %v5878 = vmul.f32 %v5750, -0.5
      %v5879 = vmul.f32 %v5751, -0.5
      %v5880 = vmul.f32 %v5752, -0.5
      %v5881 = vmul.f32 %v5753, -0.5
      %v5882 = vmul.f32 %v5754, -0.5
      %v5883 = vmul.f32 %v5755, -0.5
      %v5884 = vmul.f32 %v5756, -0.5
      %v5885 = vmul.f32 %v5757, -0.5
      %v5886 = vmul.f32 %v5758, -0.5
      %v5887 = vmul.f32 %v5759, -0.5
      %v5888 = vmul.f32 %v5760, -0.5
      %v5889 = vmul.f32 %v5761, -0.5
      %v5890 = vmul.f32 %v5762, -0.5
      %v5891 = vmul.f32 %v5763, -0.5
      %v5892 = vmul.f32 %v5764, -0.5
      %v5893 = vmul.f32 %v5765, -0.5
      %v5894 = vmul.f32 %v5766, -0.5
      %v5895 = vmul.f32 %v5767, -0.5
      %v5896 = vmul.f32 %v5768, -0.5
      %v5897 = vmul.f32 %v5769, -0.5
      %v5898 = vmul.f32 %v5770, -0.5
      %v5899 = vmul.f32 %v5771, -0.5
      %v5900 = vmul.f32 %v5772, -0.5
      %v5901 = vmul.f32 %v5773, -0.5
      %v5902 = vmul.f32 %v5774, -0.5
      %v5903 = vmul.f32 %v5775, -0.5
      %v5904 = vmul.f32 %v5776, -0.5
      %v5905 = vmul.f32 %v5777, -0.5
      %v5906 = vmul.f32 %v5778, -0.5
      %v5907 = vmul.f32 %v5779, -0.5
      %v5908 = vmul.f32 %v5780, -0.5
      %v5909 = vmul.f32 %v5781, -0.5
      %v5910 = vmul.f32 %v5782, -0.5
      %v5911 = vmul.f32 %v5783, -0.5
      %v5912 = vmul.f32 %v5784, -0.5
      %v5913 = vmul.f32 %v5785, -0.5
      %v5914 = vmul.f32 %v5786, -0.5
      %v5915 = vmul.f32 %v5787, -0.5
      %v5916 = vmul.f32 %v5788, -0.5
      %v5917 = vmul.f32 %v5789, -0.5
      %v5918 = vmul.f32 %v5790, -0.5
      %v5919 = vmul.f32 %v5791, -0.5
      %v5920 = vmul.f32 %v5792, -0.5
      %v5921 = vmul.f32 %v5793, -0.5
      %v5922 = vmul.f32 %v5794, -0.5
      %v5923 = vmul.f32 %v5795, -0.5
      %v5924 = vmul.f32 %v5796, -0.5
      %v5925 = vmul.f32 %v5797, -0.5
      %v5926 = vmul.f32 %v5798, -0.5
      %v5927 = vmul.f32 %v5799, -0.5
      %v5928 = vmul.f32 %v5800, -0.5
      %v5929 = vmul.f32 %v5801, -0.5
      %v5930 = vmul.f32 %v5802, -0.5
      %v5931 = vmul.f32 %v5803, -0.5
      %v5932 = vmul.f32 %v5804, -0.5
      %v5933 = vmul.f32 %v5805, -0.5
      %v5934 = vmul.f32 %v5806, -0.5
      %v5935 = vmul.f32 %v5807, -0.5
      %v5936 = vmul.f32 %v5808, -0.5
      %v5937 = vmul.f32 %v5809, -0.5
      %v5938 = vmul.f32 %v5810, -0.5
      %v5939 = vmul.f32 %v5811, -0.5
      %v5940 = vmul.f32 %v5812, -0.5
      %v5941 = vmul.f32 %v5813, -0.5
      %v5942 = vmul.f32 %v5814, -0.5
      %v5943 = vmul.f32 %v5815, -0.5
      %v5944 = vmul.f32 %v5816, -0.5
      %v5945 = vmul.f32 %v5817, -0.5
      %v5946 = vmul.f32 %v5818, -0.5
      %v5947 = vmul.f32 %v5819, -0.5
      %v5948 = vmul.f32 %v5820, -0.5
      %v5949 = vmul.f32 %v5821, -0.5
      %v5950 = vmul.f32 %v5822, -0.5
      %v5951 = vmul.f32 %v5823, -0.5
      %v5952 = vmul.f32 %v5824, -0.5
      %v5953 = vmul.f32 %v5825, -0.5
      %v5954 = vmul.f32 %v5826, -0.5
      %v5955 = vmul.f32 %v5827, -0.5
      %v5956 = vmul.f32 %v5828, -0.5
      %v5957 = vmul.f32 %v5829, -0.5
      %v5958 = vmul.f32 %v5830, -0.5
      %v5959 = vmul.f32 %v5831, -0.5
      %v5960 = vmul.f32 %v5832, -0.5
      %v5961 = vmul.f32 %v5833, -0.5
      %v5962 = vmul.f32 %v5834, -0.5
      %v5963 = vmul.f32 %v5835, -0.5
      %v5964 = vmul.f32 %v5836, -0.5
      %v5965 = vmul.f32 %v5837, -0.5
      %v5966 = vmul.f32 %v5838, -0.5
      %v5967 = vmul.f32 %v5839, -0.5
      %v5968 = vmul.f32 %v5840, -0.5
      %v5969 = vmul.f32 %v5841, -0.5
      %v5970 = vmul.f32 %v5842, -0.5
      %v5971 = vmul.f32 %v5843, -0.5
      %v5972 = vmul.f32 %v5844, -0.5
      %v5973 = vmul.f32 %v5845, -0.5
      %v5974 = vmul.f32 %v5846, -0.5
      %v5975 = vmul.f32 %v5847, -0.5
      %v5976 = vmul.f32 %v5848, -0.5
      %v5977 = vmul.f32 %v5849, -0.5
      %v5978 = vmul.f32 %v5850, -0.5
      %v5979 = vmul.f32 %v5851, -0.5
      %v5980 = vmul.f32 %v5852, -0.5
      %v5981 = vmul.f32 %v5853, -0.5
      %v5982 = vmul.f32 %v5854, -0.5
      %v5983 = vmul.f32 %v5855, -0.5
      %v5984 = vmul.f32 %v5856, -0.5
      %v5985 = vmul.f32 %v5857, -0.5
      %v5986 = vmul.f32 %v5858, -0.5
      %v5987 = vmul.f32 %v5859, -0.5
      %v5988 = vmul.f32 %v5860, -0.5
      %v5989 = vmul.f32 %v5861, -0.5
      %v5990 = vmul.f32 %v5862, -0.5
      %v5991 = vmul.f32 %v5863, -0.5
      %v5992 = vmul.f32 %v5864, -0.5
      %v5993 = vmul.f32 %v5865, -0.5
      %v5994 = vmul.f32 %v5866, -0.5
      %v5995 = vmul.f32 %v5867, -0.5
      %6124 = vrot.lane.b32.xlu0 %v5485, 1
      %v6125 = vpop.permute.xlu0 %6124
      %6126 = vrot.lane.b32.xlu0 %v5487, 1
      %v6127 = vpop.permute.xlu0 %6126
      %6128 = vrot.lane.b32.xlu0 %v5489, 1
      %v6129 = vpop.permute.xlu0 %6128
      %6130 = vrot.lane.b32.xlu0 %v5491, 1
      %v6131 = vpop.permute.xlu0 %6130
      %6132 = vrot.lane.b32.xlu0 %v5493, 1
      %v6133 = vpop.permute.xlu0 %6132
      %6134 = vrot.lane.b32.xlu0 %v5495, 1
      %v6135 = vpop.permute.xlu0 %6134
      %6136 = vrot.lane.b32.xlu0 %v5497, 1
      %v6137 = vpop.permute.xlu0 %6136
      %6138 = vrot.lane.b32.xlu0 %v5499, 1
      %v6139 = vpop.permute.xlu0 %6138
      %6140 = vrot.lane.b32.xlu0 %v5501, 1
      %v6141 = vpop.permute.xlu0 %6140
      %6142 = vrot.lane.b32.xlu0 %v5503, 1
      %v6143 = vpop.permute.xlu0 %6142
      %6144 = vrot.lane.b32.xlu0 %v5505, 1
      %v6145 = vpop.permute.xlu0 %6144
      %6146 = vrot.lane.b32.xlu0 %v5507, 1
      %v6147 = vpop.permute.xlu0 %6146
      %6148 = vrot.lane.b32.xlu0 %v5509, 1
      %v6149 = vpop.permute.xlu0 %6148
      %6150 = vrot.lane.b32.xlu0 %v5511, 1
      %v6151 = vpop.permute.xlu0 %6150
      %6152 = vrot.lane.b32.xlu0 %v5513, 1
      %v6153 = vpop.permute.xlu0 %6152
      %6154 = vrot.lane.b32.xlu0 %v5515, 1
      %v6155 = vpop.permute.xlu0 %6154
      %6156 = vrot.lane.b32.xlu0 %v5517, 1
      %v6157 = vpop.permute.xlu0 %6156
      %6158 = vrot.lane.b32.xlu0 %v5519, 1
      %v6159 = vpop.permute.xlu0 %6158
      %6160 = vrot.lane.b32.xlu0 %v5521, 1
      %v6161 = vpop.permute.xlu0 %6160
      %6162 = vrot.lane.b32.xlu0 %v5523, 1
      %v6163 = vpop.permute.xlu0 %6162
      %6164 = vrot.lane.b32.xlu0 %v5525, 1
      %v6165 = vpop.permute.xlu0 %6164
      %6166 = vrot.lane.b32.xlu0 %v5527, 1
      %v6167 = vpop.permute.xlu0 %6166
      %6168 = vrot.lane.b32.xlu0 %v5529, 1
      %v6169 = vpop.permute.xlu0 %6168
      %6170 = vrot.lane.b32.xlu0 %v5531, 1
      %v6171 = vpop.permute.xlu0 %6170
      %6172 = vrot.lane.b32.xlu0 %v5533, 1
      %v6173 = vpop.permute.xlu0 %6172
      %6174 = vrot.lane.b32.xlu0 %v5535, 1
      %v6175 = vpop.permute.xlu0 %6174
      %6176 = vrot.lane.b32.xlu0 %v5537, 1
      %v6177 = vpop.permute.xlu0 %6176
      %6178 = vrot.lane.b32.xlu0 %v5539, 1
      %v6179 = vpop.permute.xlu0 %6178
      %6180 = vrot.lane.b32.xlu0 %v5541, 1
      %v6181 = vpop.permute.xlu0 %6180
      %6182 = vrot.lane.b32.xlu0 %v5543, 1
      %v6183 = vpop.permute.xlu0 %6182
      %6184 = vrot.lane.b32.xlu0 %v5545, 1
      %v6185 = vpop.permute.xlu0 %6184
      %6186 = vrot.lane.b32.xlu0 %v5547, 1
      %v6187 = vpop.permute.xlu0 %6186
      %6188 = vrot.lane.b32.xlu0 %v5549, 1
      %v6189 = vpop.permute.xlu0 %6188
      %6190 = vrot.lane.b32.xlu0 %v5551, 1
      %v6191 = vpop.permute.xlu0 %6190
      %6192 = vrot.lane.b32.xlu0 %v5553, 1
      %v6193 = vpop.permute.xlu0 %6192
      %6194 = vrot.lane.b32.xlu0 %v5555, 1
      %v6195 = vpop.permute.xlu0 %6194
      %6196 = vrot.lane.b32.xlu0 %v5557, 1
      %v6197 = vpop.permute.xlu0 %6196
      %6198 = vrot.lane.b32.xlu0 %v5559, 1
      %v6199 = vpop.permute.xlu0 %6198
      %6200 = vrot.lane.b32.xlu0 %v5561, 1
      %v6201 = vpop.permute.xlu0 %6200
      %6202 = vrot.lane.b32.xlu0 %v5563, 1
      %v6203 = vpop.permute.xlu0 %6202
      %6204 = vrot.lane.b32.xlu0 %v5565, 1
      %v6205 = vpop.permute.xlu0 %6204
      %6206 = vrot.lane.b32.xlu0 %v5567, 1
      %v6207 = vpop.permute.xlu0 %6206
      %6208 = vrot.lane.b32.xlu0 %v5569, 1
      %v6209 = vpop.permute.xlu0 %6208
      %6210 = vrot.lane.b32.xlu0 %v5571, 1
      %v6211 = vpop.permute.xlu0 %6210
      %6212 = vrot.lane.b32.xlu0 %v5573, 1
      %v6213 = vpop.permute.xlu0 %6212
      %6214 = vrot.lane.b32.xlu0 %v5575, 1
      %v6215 = vpop.permute.xlu0 %6214
      %6216 = vrot.lane.b32.xlu0 %v5577, 1
      %v6217 = vpop.permute.xlu0 %6216
      %6218 = vrot.lane.b32.xlu0 %v5579, 1
      %v6219 = vpop.permute.xlu0 %6218
      %6220 = vrot.lane.b32.xlu0 %v5581, 1
      %v6221 = vpop.permute.xlu0 %6220
      %6222 = vrot.lane.b32.xlu0 %v5583, 1
      %v6223 = vpop.permute.xlu0 %6222
      %6224 = vrot.lane.b32.xlu0 %v5585, 1
      %v6225 = vpop.permute.xlu0 %6224
      %6226 = vrot.lane.b32.xlu0 %v5587, 1
      %v6227 = vpop.permute.xlu0 %6226
      %6228 = vrot.lane.b32.xlu0 %v5589, 1
      %v6229 = vpop.permute.xlu0 %6228
      %6230 = vrot.lane.b32.xlu0 %v5591, 1
      %v6231 = vpop.permute.xlu0 %6230
      %6232 = vrot.lane.b32.xlu0 %v5593, 1
      %v6233 = vpop.permute.xlu0 %6232
      %6234 = vrot.lane.b32.xlu0 %v5595, 1
      %v6235 = vpop.permute.xlu0 %6234
      %6236 = vrot.lane.b32.xlu0 %v5597, 1
      %v6237 = vpop.permute.xlu0 %6236
      %6238 = vrot.lane.b32.xlu0 %v5599, 1
      %v6239 = vpop.permute.xlu0 %6238
      %6240 = vrot.lane.b32.xlu0 %v5601, 1
      %v6241 = vpop.permute.xlu0 %6240
      %6242 = vrot.lane.b32.xlu0 %v5603, 1
      %v6243 = vpop.permute.xlu0 %6242
      %6244 = vrot.lane.b32.xlu0 %v5605, 1
      %v6245 = vpop.permute.xlu0 %6244
      %6246 = vrot.lane.b32.xlu0 %v5607, 1
      %v6247 = vpop.permute.xlu0 %6246
      %6248 = vrot.lane.b32.xlu0 %v5609, 1
      %v6249 = vpop.permute.xlu0 %6248
      %6250 = vrot.lane.b32.xlu0 %v5611, 1
      %v6251 = vpop.permute.xlu0 %6250
      %6252 = vrot.lane.b32.xlu0 %v5613, 1
      %v6253 = vpop.permute.xlu0 %6252
      %6254 = vrot.lane.b32.xlu0 %v5615, 1
      %v6255 = vpop.permute.xlu0 %6254
      %6256 = vrot.lane.b32.xlu0 %v5617, 1
      %v6257 = vpop.permute.xlu0 %6256
      %6258 = vrot.lane.b32.xlu0 %v5619, 1
      %v6259 = vpop.permute.xlu0 %6258
      %6260 = vrot.lane.b32.xlu0 %v5621, 1
      %v6261 = vpop.permute.xlu0 %6260
      %6262 = vrot.lane.b32.xlu0 %v5623, 1
      %v6263 = vpop.permute.xlu0 %6262
      %6264 = vrot.lane.b32.xlu0 %v5625, 1
      %v6265 = vpop.permute.xlu0 %6264
      %6266 = vrot.lane.b32.xlu0 %v5627, 1
      %v6267 = vpop.permute.xlu0 %6266
      %6268 = vrot.lane.b32.xlu0 %v5629, 1
      %v6269 = vpop.permute.xlu0 %6268
      %6270 = vrot.lane.b32.xlu0 %v5631, 1
      %v6271 = vpop.permute.xlu0 %6270
      %6272 = vrot.lane.b32.xlu0 %v5633, 1
      %v6273 = vpop.permute.xlu0 %6272
      %6274 = vrot.lane.b32.xlu0 %v5635, 1
      %v6275 = vpop.permute.xlu0 %6274
      %6276 = vrot.lane.b32.xlu0 %v5637, 1
      %v6277 = vpop.permute.xlu0 %6276
      %6278 = vrot.lane.b32.xlu0 %v5639, 1
      %v6279 = vpop.permute.xlu0 %6278
      %6280 = vrot.lane.b32.xlu0 %v5641, 1
      %v6281 = vpop.permute.xlu0 %6280
      %6282 = vrot.lane.b32.xlu0 %v5643, 1
      %v6283 = vpop.permute.xlu0 %6282
      %6284 = vrot.lane.b32.xlu0 %v5645, 1
      %v6285 = vpop.permute.xlu0 %6284
      %6286 = vrot.lane.b32.xlu0 %v5647, 1
      %v6287 = vpop.permute.xlu0 %6286
      %6288 = vrot.lane.b32.xlu0 %v5649, 1
      %v6289 = vpop.permute.xlu0 %6288
      %6290 = vrot.lane.b32.xlu0 %v5651, 1
      %v6291 = vpop.permute.xlu0 %6290
      %6292 = vrot.lane.b32.xlu0 %v5653, 1
      %v6293 = vpop.permute.xlu0 %6292
      %6294 = vrot.lane.b32.xlu0 %v5655, 1
      %v6295 = vpop.permute.xlu0 %6294
      %6296 = vrot.lane.b32.xlu0 %v5657, 1
      %v6297 = vpop.permute.xlu0 %6296
      %6298 = vrot.lane.b32.xlu0 %v5659, 1
      %v6299 = vpop.permute.xlu0 %6298
      %6300 = vrot.lane.b32.xlu0 %v5661, 1
      %v6301 = vpop.permute.xlu0 %6300
      %6302 = vrot.lane.b32.xlu0 %v5663, 1
      %v6303 = vpop.permute.xlu0 %6302
      %6304 = vrot.lane.b32.xlu0 %v5665, 1
      %v6305 = vpop.permute.xlu0 %6304
      %6306 = vrot.lane.b32.xlu0 %v5667, 1
      %v6307 = vpop.permute.xlu0 %6306
      %6308 = vrot.lane.b32.xlu0 %v5669, 1
      %v6309 = vpop.permute.xlu0 %6308
      %6310 = vrot.lane.b32.xlu0 %v5671, 1
      %v6311 = vpop.permute.xlu0 %6310
      %6312 = vrot.lane.b32.xlu0 %v5673, 1
      %v6313 = vpop.permute.xlu0 %6312
      %6314 = vrot.lane.b32.xlu0 %v5675, 1
      %v6315 = vpop.permute.xlu0 %6314
      %6316 = vrot.lane.b32.xlu0 %v5677, 1
      %v6317 = vpop.permute.xlu0 %6316
      %6318 = vrot.lane.b32.xlu0 %v5679, 1
      %v6319 = vpop.permute.xlu0 %6318
      %6320 = vrot.lane.b32.xlu0 %v5681, 1
      %v6321 = vpop.permute.xlu0 %6320
      %6322 = vrot.lane.b32.xlu0 %v5683, 1
      %v6323 = vpop.permute.xlu0 %6322
      %6324 = vrot.lane.b32.xlu0 %v5685, 1
      %v6325 = vpop.permute.xlu0 %6324
      %6326 = vrot.lane.b32.xlu0 %v5687, 1
      %v6327 = vpop.permute.xlu0 %6326
      %6328 = vrot.lane.b32.xlu0 %v5689, 1
      %v6329 = vpop.permute.xlu0 %6328
      %6330 = vrot.lane.b32.xlu0 %v5691, 1
      %v6331 = vpop.permute.xlu0 %6330
      %6332 = vrot.lane.b32.xlu0 %v5693, 1
      %v6333 = vpop.permute.xlu0 %6332
      %6334 = vrot.lane.b32.xlu0 %v5695, 1
      %v6335 = vpop.permute.xlu0 %6334
      %6336 = vrot.lane.b32.xlu0 %v5697, 1
      %v6337 = vpop.permute.xlu0 %6336
      %6338 = vrot.lane.b32.xlu0 %v5699, 1
      %v6339 = vpop.permute.xlu0 %6338
      %6340 = vrot.lane.b32.xlu0 %v5701, 1
      %v6341 = vpop.permute.xlu0 %6340
      %6342 = vrot.lane.b32.xlu0 %v5703, 1
      %v6343 = vpop.permute.xlu0 %6342
      %6344 = vrot.lane.b32.xlu0 %v5705, 1
      %v6345 = vpop.permute.xlu0 %6344
      %6346 = vrot.lane.b32.xlu0 %v5707, 1
      %v6347 = vpop.permute.xlu0 %6346
      %6348 = vrot.lane.b32.xlu0 %v5709, 1
      %v6349 = vpop.permute.xlu0 %6348
      %6350 = vrot.lane.b32.xlu0 %v5711, 1
      %v6351 = vpop.permute.xlu0 %6350
      %6352 = vrot.lane.b32.xlu0 %v5713, 1
      %v6353 = vpop.permute.xlu0 %6352
      %6354 = vrot.lane.b32.xlu0 %v5715, 1
      %v6355 = vpop.permute.xlu0 %6354
      %6356 = vrot.lane.b32.xlu0 %v5717, 1
      %v6357 = vpop.permute.xlu0 %6356
      %6358 = vrot.lane.b32.xlu0 %v5719, 1
      %v6359 = vpop.permute.xlu0 %6358
      %6360 = vrot.lane.b32.xlu0 %v5721, 1
      %v6361 = vpop.permute.xlu0 %6360
      %6362 = vrot.lane.b32.xlu0 %v5723, 1
      %v6363 = vpop.permute.xlu0 %6362
      %6364 = vrot.lane.b32.xlu0 %v5725, 1
      %v6365 = vpop.permute.xlu0 %6364
      %6366 = vrot.lane.b32.xlu0 %v5727, 1
      %v6367 = vpop.permute.xlu0 %6366
      %6368 = vrot.lane.b32.xlu0 %v5729, 1
      %v6369 = vpop.permute.xlu0 %6368
      %6370 = vrot.lane.b32.xlu0 %v5731, 1
      %v6371 = vpop.permute.xlu0 %6370
      %6372 = vrot.lane.b32.xlu0 %v5733, 1
      %v6373 = vpop.permute.xlu0 %6372
      %6374 = vrot.lane.b32.xlu0 %v5735, 1
      %v6375 = vpop.permute.xlu0 %6374
      %6376 = vrot.lane.b32.xlu0 %v5737, 1
      %v6377 = vpop.permute.xlu0 %6376
      %6378 = vrot.lane.b32.xlu0 %v5739, 1
      %v6379 = vpop.permute.xlu0 %6378
      %v6508 = vmul.f32 %v5868, %v6125
      %v6509 = vmul.f32 %v5869, %v6127
      %v6510 = vmul.f32 %v5870, %v6129
      %v6511 = vmul.f32 %v5871, %v6131
      %v6512 = vmul.f32 %v5872, %v6133
      %v6513 = vmul.f32 %v5873, %v6135
      %v6514 = vmul.f32 %v5874, %v6137
      %v6515 = vmul.f32 %v5875, %v6139
      %v6516 = vmul.f32 %v5876, %v6141
      %v6517 = vmul.f32 %v5877, %v6143
      %v6518 = vmul.f32 %v5878, %v6145
      %v6519 = vmul.f32 %v5879, %v6147
      %v6520 = vmul.f32 %v5880, %v6149
      %v6521 = vmul.f32 %v5881, %v6151
      %v6522 = vmul.f32 %v5882, %v6153
      %v6523 = vmul.f32 %v5883, %v6155
      %v6524 = vmul.f32 %v5884, %v6157
      %v6525 = vmul.f32 %v5885, %v6159
      %v6526 = vmul.f32 %v5886, %v6161
      %v6527 = vmul.f32 %v5887, %v6163
      %v6528 = vmul.f32 %v5888, %v6165
      %v6529 = vmul.f32 %v5889, %v6167
      %v6530 = vmul.f32 %v5890, %v6169
      %v6531 = vmul.f32 %v5891, %v6171
      %v6532 = vmul.f32 %v5892, %v6173
      %v6533 = vmul.f32 %v5893, %v6175
      %v6534 = vmul.f32 %v5894, %v6177
      %v6535 = vmul.f32 %v5895, %v6179
      %v6536 = vmul.f32 %v5896, %v6181
      %v6537 = vmul.f32 %v5897, %v6183
      %v6538 = vmul.f32 %v5898, %v6185
      %v6539 = vmul.f32 %v5899, %v6187
      %v6540 = vmul.f32 %v5900, %v6189
      %v6541 = vmul.f32 %v5901, %v6191
      %v6542 = vmul.f32 %v5902, %v6193
      %v6543 = vmul.f32 %v5903, %v6195
      %v6544 = vmul.f32 %v5904, %v6197
      %v6545 = vmul.f32 %v5905, %v6199
      %v6546 = vmul.f32 %v5906, %v6201
      %v6547 = vmul.f32 %v5907, %v6203
      %v6548 = vmul.f32 %v5908, %v6205
      %v6549 = vmul.f32 %v5909, %v6207
      %v6550 = vmul.f32 %v5910, %v6209
      %v6551 = vmul.f32 %v5911, %v6211
      %v6552 = vmul.f32 %v5912, %v6213
      %v6553 = vmul.f32 %v5913, %v6215
      %v6554 = vmul.f32 %v5914, %v6217
      %v6555 = vmul.f32 %v5915, %v6219
      %v6556 = vmul.f32 %v5916, %v6221
      %v6557 = vmul.f32 %v5917, %v6223
      %v6558 = vmul.f32 %v5918, %v6225
      %v6559 = vmul.f32 %v5919, %v6227
      %v6560 = vmul.f32 %v5920, %v6229
      %v6561 = vmul.f32 %v5921, %v6231
      %v6562 = vmul.f32 %v5922, %v6233
      %v6563 = vmul.f32 %v5923, %v6235
      %v6564 = vmul.f32 %v5924, %v6237
      %v6565 = vmul.f32 %v5925, %v6239
      %v6566 = vmul.f32 %v5926, %v6241
      %v6567 = vmul.f32 %v5927, %v6243
      %v6568 = vmul.f32 %v5928, %v6245
      %v6569 = vmul.f32 %v5929, %v6247
      %v6570 = vmul.f32 %v5930, %v6249
      %v6571 = vmul.f32 %v5931, %v6251
      %v6572 = vmul.f32 %v5932, %v6253
      %v6573 = vmul.f32 %v5933, %v6255
      %v6574 = vmul.f32 %v5934, %v6257
      %v6575 = vmul.f32 %v5935, %v6259
      %v6576 = vmul.f32 %v5936, %v6261
      %v6577 = vmul.f32 %v5937, %v6263
      %v6578 = vmul.f32 %v5938, %v6265
      %v6579 = vmul.f32 %v5939, %v6267
      %v6580 = vmul.f32 %v5940, %v6269
      %v6581 = vmul.f32 %v5941, %v6271
      %v6582 = vmul.f32 %v5942, %v6273
      %v6583 = vmul.f32 %v5943, %v6275
      %v6584 = vmul.f32 %v5944, %v6277
      %v6585 = vmul.f32 %v5945, %v6279
      %v6586 = vmul.f32 %v5946, %v6281
      %v6587 = vmul.f32 %v5947, %v6283
      %v6588 = vmul.f32 %v5948, %v6285
      %v6589 = vmul.f32 %v5949, %v6287
      %v6590 = vmul.f32 %v5950, %v6289
      %v6591 = vmul.f32 %v5951, %v6291
      %v6592 = vmul.f32 %v5952, %v6293
      %v6593 = vmul.f32 %v5953, %v6295
      %v6594 = vmul.f32 %v5954, %v6297
      %v6595 = vmul.f32 %v5955, %v6299
      %v6596 = vmul.f32 %v5956, %v6301
      %v6597 = vmul.f32 %v5957, %v6303
      %v6598 = vmul.f32 %v5958, %v6305
      %v6599 = vmul.f32 %v5959, %v6307
      %v6600 = vmul.f32 %v5960, %v6309
      %v6601 = vmul.f32 %v5961, %v6311
      %v6602 = vmul.f32 %v5962, %v6313
      %v6603 = vmul.f32 %v5963, %v6315
      %v6604 = vmul.f32 %v5964, %v6317
      %v6605 = vmul.f32 %v5965, %v6319
      %v6606 = vmul.f32 %v5966, %v6321
      %v6607 = vmul.f32 %v5967, %v6323
      %v6608 = vmul.f32 %v5968, %v6325
      %v6609 = vmul.f32 %v5969, %v6327
      %v6610 = vmul.f32 %v5970, %v6329
      %v6611 = vmul.f32 %v5971, %v6331
      %v6612 = vmul.f32 %v5972, %v6333
      %v6613 = vmul.f32 %v5973, %v6335
      %v6614 = vmul.f32 %v5974, %v6337
      %v6615 = vmul.f32 %v5975, %v6339
      %v6616 = vmul.f32 %v5976, %v6341
      %v6617 = vmul.f32 %v5977, %v6343
      %v6618 = vmul.f32 %v5978, %v6345
      %v6619 = vmul.f32 %v5979, %v6347
      %v6620 = vmul.f32 %v5980, %v6349
      %v6621 = vmul.f32 %v5981, %v6351
      %v6622 = vmul.f32 %v5982, %v6353
      %v6623 = vmul.f32 %v5983, %v6355
      %v6624 = vmul.f32 %v5984, %v6357
      %v6625 = vmul.f32 %v5985, %v6359
      %v6626 = vmul.f32 %v5986, %v6361
      %v6627 = vmul.f32 %v5987, %v6363
      %v6628 = vmul.f32 %v5988, %v6365
      %v6629 = vmul.f32 %v5989, %v6367
      %v6630 = vmul.f32 %v5990, %v6369
      %v6631 = vmul.f32 %v5991, %v6371
      %v6632 = vmul.f32 %v5992, %v6373
      %v6633 = vmul.f32 %v5993, %v6375
      %v6634 = vmul.f32 %v5994, %v6377
      %v6635 = vmul.f32 %v5995, %v6379
      %v6636 = vmul.f32 %v6508, 1.442695
      %v6637 = vpow.pop %v6636
      %v6638 = vmul.f32 %v6509, 1.442695
      %v6639 = vpow.pop %v6638
      %v6640 = vmul.f32 %v6510, 1.442695
      %v6641 = vpow.pop %v6640
      %v6642 = vmul.f32 %v6511, 1.442695
      %v6643 = vpow.pop %v6642
      %v6644 = vmul.f32 %v6512, 1.442695
      %v6645 = vpow.pop %v6644
      %v6646 = vmul.f32 %v6513, 1.442695
      %v6647 = vpow.pop %v6646
      %v6648 = vmul.f32 %v6514, 1.442695
      %v6649 = vpow.pop %v6648
      %v6650 = vmul.f32 %v6515, 1.442695
      %v6651 = vpow.pop %v6650
      %v6652 = vmul.f32 %v6516, 1.442695
      %v6653 = vpow.pop %v6652
      %v6654 = vmul.f32 %v6517, 1.442695
      %v6655 = vpow.pop %v6654
      %v6656 = vmul.f32 %v6518, 1.442695
      %v6657 = vpow.pop %v6656
      %v6658 = vmul.f32 %v6519, 1.442695
      %v6659 = vpow.pop %v6658
      %v6660 = vmul.f32 %v6520, 1.442695
      %v6661 = vpow.pop %v6660
      %v6662 = vmul.f32 %v6521, 1.442695
      %v6663 = vpow.pop %v6662
      %v6664 = vmul.f32 %v6522, 1.442695
      %v6665 = vpow.pop %v6664
      %v6666 = vmul.f32 %v6523, 1.442695
      %v6667 = vpow.pop %v6666
      %v6668 = vmul.f32 %v6524, 1.442695
      %v6669 = vpow.pop %v6668
      %v6670 = vmul.f32 %v6525, 1.442695
      %v6671 = vpow.pop %v6670
      %v6672 = vmul.f32 %v6526, 1.442695
      %v6673 = vpow.pop %v6672
      %v6674 = vmul.f32 %v6527, 1.442695
      %v6675 = vpow.pop %v6674
      %v6676 = vmul.f32 %v6528, 1.442695
      %v6677 = vpow.pop %v6676
      %v6678 = vmul.f32 %v6529, 1.442695
      %v6679 = vpow.pop %v6678
      %v6680 = vmul.f32 %v6530, 1.442695
      %v6681 = vpow.pop %v6680
      %v6682 = vmul.f32 %v6531, 1.442695
      %v6683 = vpow.pop %v6682
      %v6684 = vmul.f32 %v6532, 1.442695
      %v6685 = vpow.pop %v6684
      %v6686 = vmul.f32 %v6533, 1.442695
      %v6687 = vpow.pop %v6686
      %v6688 = vmul.f32 %v6534, 1.442695
      %v6689 = vpow.pop %v6688
      %v6690 = vmul.f32 %v6535, 1.442695
      %v6691 = vpow.pop %v6690
      %v6692 = vmul.f32 %v6536, 1.442695
      %v6693 = vpow.pop %v6692
      %v6694 = vmul.f32 %v6537, 1.442695
      %v6695 = vpow.pop %v6694
      %v6696 = vmul.f32 %v6538, 1.442695
      %v6697 = vpow.pop %v6696
      %v6698 = vmul.f32 %v6539, 1.442695
      %v6699 = vpow.pop %v6698
      %v6700 = vmul.f32 %v6540, 1.442695
      %v6701 = vpow.pop %v6700
      %v6702 = vmul.f32 %v6541, 1.442695
      %v6703 = vpow.pop %v6702
      %v6704 = vmul.f32 %v6542, 1.442695
      %v6705 = vpow.pop %v6704
      %v6706 = vmul.f32 %v6543, 1.442695
      %v6707 = vpow.pop %v6706
      %v6708 = vmul.f32 %v6544, 1.442695
      %v6709 = vpow.pop %v6708
      %v6710 = vmul.f32 %v6545, 1.442695
      %v6711 = vpow.pop %v6710
      %v6712 = vmul.f32 %v6546, 1.442695
      %v6713 = vpow.pop %v6712
      %v6714 = vmul.f32 %v6547, 1.442695
      %v6715 = vpow.pop %v6714
      %v6716 = vmul.f32 %v6548, 1.442695
      %v6717 = vpow.pop %v6716
      %v6718 = vmul.f32 %v6549, 1.442695
      %v6719 = vpow.pop %v6718
      %v6720 = vmul.f32 %v6550, 1.442695
      %v6721 = vpow.pop %v6720
      %v6722 = vmul.f32 %v6551, 1.442695
      %v6723 = vpow.pop %v6722
      %v6724 = vmul.f32 %v6552, 1.442695
      %v6725 = vpow.pop %v6724
      %v6726 = vmul.f32 %v6553, 1.442695
      %v6727 = vpow.pop %v6726
      %v6728 = vmul.f32 %v6554, 1.442695
      %v6729 = vpow.pop %v6728
      %v6730 = vmul.f32 %v6555, 1.442695
      %v6731 = vpow.pop %v6730
      %v6732 = vmul.f32 %v6556, 1.442695
      %v6733 = vpow.pop %v6732
      %v6734 = vmul.f32 %v6557, 1.442695
      %v6735 = vpow.pop %v6734
      %v6736 = vmul.f32 %v6558, 1.442695
      %v6737 = vpow.pop %v6736
      %v6738 = vmul.f32 %v6559, 1.442695
      %v6739 = vpow.pop %v6738
      %v6740 = vmul.f32 %v6560, 1.442695
      %v6741 = vpow.pop %v6740
      %v6742 = vmul.f32 %v6561, 1.442695
      %v6743 = vpow.pop %v6742
      %v6744 = vmul.f32 %v6562, 1.442695
      %v6745 = vpow.pop %v6744
      %v6746 = vmul.f32 %v6563, 1.442695
      %v6747 = vpow.pop %v6746
      %v6748 = vmul.f32 %v6564, 1.442695
      %v6749 = vpow.pop %v6748
      %v6750 = vmul.f32 %v6565, 1.442695
      %v6751 = vpow.pop %v6750
      %v6752 = vmul.f32 %v6566, 1.442695
      %v6753 = vpow.pop %v6752
      %v6754 = vmul.f32 %v6567, 1.442695
      %v6755 = vpow.pop %v6754
      %v6756 = vmul.f32 %v6568, 1.442695
      %v6757 = vpow.pop %v6756
      %v6758 = vmul.f32 %v6569, 1.442695
      %v6759 = vpow.pop %v6758
      %v6760 = vmul.f32 %v6570, 1.442695
      %v6761 = vpow.pop %v6760
      %v6762 = vmul.f32 %v6571, 1.442695
      %v6763 = vpow.pop %v6762
      %v6764 = vmul.f32 %v6572, 1.442695
      %v6765 = vpow.pop %v6764
      %v6766 = vmul.f32 %v6573, 1.442695
      %v6767 = vpow.pop %v6766
      %v6768 = vmul.f32 %v6574, 1.442695
      %v6769 = vpow.pop %v6768
      %v6770 = vmul.f32 %v6575, 1.442695
      %v6771 = vpow.pop %v6770
      %v6772 = vmul.f32 %v6576, 1.442695
      %v6773 = vpow.pop %v6772
      %v6774 = vmul.f32 %v6577, 1.442695
      %v6775 = vpow.pop %v6774
      %v6776 = vmul.f32 %v6578, 1.442695
      %v6777 = vpow.pop %v6776
      %v6778 = vmul.f32 %v6579, 1.442695
      %v6779 = vpow.pop %v6778
      %v6780 = vmul.f32 %v6580, 1.442695
      %v6781 = vpow.pop %v6780
      %v6782 = vmul.f32 %v6581, 1.442695
      %v6783 = vpow.pop %v6782
      %v6784 = vmul.f32 %v6582, 1.442695
      %v6785 = vpow.pop %v6784
      %v6786 = vmul.f32 %v6583, 1.442695
      %v6787 = vpow.pop %v6786
      %v6788 = vmul.f32 %v6584, 1.442695
      %v6789 = vpow.pop %v6788
      %v6790 = vmul.f32 %v6585, 1.442695
      %v6791 = vpow.pop %v6790
      %v6792 = vmul.f32 %v6586, 1.442695
      %v6793 = vpow.pop %v6792
      %v6794 = vmul.f32 %v6587, 1.442695
      %v6795 = vpow.pop %v6794
      %v6796 = vmul.f32 %v6588, 1.442695
      %v6797 = vpow.pop %v6796
      %v6798 = vmul.f32 %v6589, 1.442695
      %v6799 = vpow.pop %v6798
      %v6800 = vmul.f32 %v6590, 1.442695
      %v6801 = vpow.pop %v6800
      %v6802 = vmul.f32 %v6591, 1.442695
      %v6803 = vpow.pop %v6802
      %v6804 = vmul.f32 %v6592, 1.442695
      %v6805 = vpow.pop %v6804
      %v6806 = vmul.f32 %v6593, 1.442695
      %v6807 = vpow.pop %v6806
      %v6808 = vmul.f32 %v6594, 1.442695
      %v6809 = vpow.pop %v6808
      %v6810 = vmul.f32 %v6595, 1.442695
      %v6811 = vpow.pop %v6810
      %v6812 = vmul.f32 %v6596, 1.442695
      %v6813 = vpow.pop %v6812
      %v6814 = vmul.f32 %v6597, 1.442695
      %v6815 = vpow.pop %v6814
      %v6816 = vmul.f32 %v6598, 1.442695
      %v6817 = vpow.pop %v6816
      %v6818 = vmul.f32 %v6599, 1.442695
      %v6819 = vpow.pop %v6818
      %v6820 = vmul.f32 %v6600, 1.442695
      %v6821 = vpow.pop %v6820
      %v6822 = vmul.f32 %v6601, 1.442695
      %v6823 = vpow.pop %v6822
      %v6824 = vmul.f32 %v6602, 1.442695
      %v6825 = vpow.pop %v6824
      %v6826 = vmul.f32 %v6603, 1.442695
      %v6827 = vpow.pop %v6826
      %v6828 = vmul.f32 %v6604, 1.442695
      %v6829 = vpow.pop %v6828
      %v6830 = vmul.f32 %v6605, 1.442695
      %v6831 = vpow.pop %v6830
      %v6832 = vmul.f32 %v6606, 1.442695
      %v6833 = vpow.pop %v6832
      %v6834 = vmul.f32 %v6607, 1.442695
      %v6835 = vpow.pop %v6834
      %v6836 = vmul.f32 %v6608, 1.442695
      %v6837 = vpow.pop %v6836
      %v6838 = vmul.f32 %v6609, 1.442695
      %v6839 = vpow.pop %v6838
      %v6840 = vmul.f32 %v6610, 1.442695
      %v6841 = vpow.pop %v6840
      %v6842 = vmul.f32 %v6611, 1.442695
      %v6843 = vpow.pop %v6842
      %v6844 = vmul.f32 %v6612, 1.442695
      %v6845 = vpow.pop %v6844
      %v6846 = vmul.f32 %v6613, 1.442695
      %v6847 = vpow.pop %v6846
      %v6848 = vmul.f32 %v6614, 1.442695
      %v6849 = vpow.pop %v6848
      %v6850 = vmul.f32 %v6615, 1.442695
      %v6851 = vpow.pop %v6850
      %v6852 = vmul.f32 %v6616, 1.442695
      %v6853 = vpow.pop %v6852
      %v6854 = vmul.f32 %v6617, 1.442695
      %v6855 = vpow.pop %v6854
      %v6856 = vmul.f32 %v6618, 1.442695
      %v6857 = vpow.pop %v6856
      %v6858 = vmul.f32 %v6619, 1.442695
      %v6859 = vpow.pop %v6858
      %v6860 = vmul.f32 %v6620, 1.442695
      %v6861 = vpow.pop %v6860
      %v6862 = vmul.f32 %v6621, 1.442695
      %v6863 = vpow.pop %v6862
      %v6864 = vmul.f32 %v6622, 1.442695
      %v6865 = vpow.pop %v6864
      %v6866 = vmul.f32 %v6623, 1.442695
      %v6867 = vpow.pop %v6866
      %v6868 = vmul.f32 %v6624, 1.442695
      %v6869 = vpow.pop %v6868
      %v6870 = vmul.f32 %v6625, 1.442695
      %v6871 = vpow.pop %v6870
      %v6872 = vmul.f32 %v6626, 1.442695
      %v6873 = vpow.pop %v6872
      %v6874 = vmul.f32 %v6627, 1.442695
      %v6875 = vpow.pop %v6874
      %v6876 = vmul.f32 %v6628, 1.442695
      %v6877 = vpow.pop %v6876
      %v6878 = vmul.f32 %v6629, 1.442695
      %v6879 = vpow.pop %v6878
      %v6880 = vmul.f32 %v6630, 1.442695
      %v6881 = vpow.pop %v6880
      %v6882 = vmul.f32 %v6631, 1.442695
      %v6883 = vpow.pop %v6882
      %v6884 = vmul.f32 %v6632, 1.442695
      %v6885 = vpow.pop %v6884
      %v6886 = vmul.f32 %v6633, 1.442695
      %v6887 = vpow.pop %v6886
      %v6888 = vmul.f32 %v6634, 1.442695
      %v6889 = vpow.pop %v6888
      %v6890 = vmul.f32 %v6635, 1.442695
      %v6891 = vpow.pop %v6890
      %v6892 = vmul.f32 %v4078, 1.442695
      %v6893 = vpow.pop %v6892
      %v6894 = vmul.f32 %v4081, 1.442695
      %v6895 = vpow.pop %v6894
      %v6896 = vmul.f32 %v4086, 1.442695
      %v6897 = vpow.pop %v6896
      %v6898 = vmul.f32 %v4089, 1.442695
      %v6899 = vpow.pop %v6898
      %v6900 = vmul.f32 %v4094, 1.442695
      %v6901 = vpow.pop %v6900
      %v6902 = vmul.f32 %v4097, 1.442695
      %v6903 = vpow.pop %v6902
      %v6904 = vmul.f32 %v4102, 1.442695
      %v6905 = vpow.pop %v6904
      %v6906 = vmul.f32 %v4105, 1.442695
      %v6907 = vpow.pop %v6906
      %v6908 = vmul.f32 %v4110, 1.442695
      %v6909 = vpow.pop %v6908
      %v6910 = vmul.f32 %v4113, 1.442695
      %v6911 = vpow.pop %v6910
      %v6912 = vmul.f32 %v4118, 1.442695
      %v6913 = vpow.pop %v6912
      %v6914 = vmul.f32 %v4121, 1.442695
      %v6915 = vpow.pop %v6914
      %v6916 = vmul.f32 %v4126, 1.442695
      %v6917 = vpow.pop %v6916
      %v6918 = vmul.f32 %v4129, 1.442695
      %v6919 = vpow.pop %v6918
      %v6920 = vmul.f32 %v4134, 1.442695
      %v6921 = vpow.pop %v6920
      %v6922 = vmul.f32 %v4137, 1.442695
      %v6923 = vpow.pop %v6922
      %v6924 = vmul.f32 %v4142, 1.442695
      %v6925 = vpow.pop %v6924
      %v6926 = vmul.f32 %v4145, 1.442695
      %v6927 = vpow.pop %v6926
      %v6928 = vmul.f32 %v4150, 1.442695
      %v6929 = vpow.pop %v6928
      %v6930 = vmul.f32 %v4153, 1.442695
      %v6931 = vpow.pop %v6930
      %v6932 = vmul.f32 %v4158, 1.442695
      %v6933 = vpow.pop %v6932
      %v6934 = vmul.f32 %v4161, 1.442695
      %v6935 = vpow.pop %v6934
      %v6936 = vmul.f32 %v4166, 1.442695
      %v6937 = vpow.pop %v6936
      %v6938 = vmul.f32 %v4169, 1.442695
      %v6939 = vpow.pop %v6938
      %v6940 = vmul.f32 %v4174, 1.442695
      %v6941 = vpow.pop %v6940
      %v6942 = vmul.f32 %v4177, 1.442695
      %v6943 = vpow.pop %v6942
      %v6944 = vmul.f32 %v4182, 1.442695
      %v6945 = vpow.pop %v6944
      %v6946 = vmul.f32 %v4185, 1.442695
      %v6947 = vpow.pop %v6946
      %v6948 = vmul.f32 %v4190, 1.442695
      %v6949 = vpow.pop %v6948
      %v6950 = vmul.f32 %v4193, 1.442695
      %v6951 = vpow.pop %v6950
      %v6952 = vmul.f32 %v4198, 1.442695
      %v6953 = vpow.pop %v6952
      %v6954 = vmul.f32 %v4201, 1.442695
      %v6955 = vpow.pop %v6954
      %v6956 = vmul.f32 %v4206, 1.442695
      %v6957 = vpow.pop %v6956
      %v6958 = vmul.f32 %v4209, 1.442695
      %v6959 = vpow.pop %v6958
      %v6960 = vmul.f32 %v4214, 1.442695
      %v6961 = vpow.pop %v6960
      %v6962 = vmul.f32 %v4217, 1.442695
      %v6963 = vpow.pop %v6962
      %v6964 = vmul.f32 %v4222, 1.442695
      %v6965 = vpow.pop %v6964
      %v6966 = vmul.f32 %v4225, 1.442695
      %v6967 = vpow.pop %v6966
      %v6968 = vmul.f32 %v4230, 1.442695
      %v6969 = vpow.pop %v6968
      %v6970 = vmul.f32 %v4233, 1.442695
      %v6971 = vpow.pop %v6970
      %v6972 = vmul.f32 %v4238, 1.442695
      %v6973 = vpow.pop %v6972
      %v6974 = vmul.f32 %v4241, 1.442695
      %v6975 = vpow.pop %v6974
      %v6976 = vmul.f32 %v4246, 1.442695
      %v6977 = vpow.pop %v6976
      %v6978 = vmul.f32 %v4249, 1.442695
      %v6979 = vpow.pop %v6978
      %v6980 = vmul.f32 %v4254, 1.442695
      %v6981 = vpow.pop %v6980
      %v6982 = vmul.f32 %v4257, 1.442695
      %v6983 = vpow.pop %v6982
      %v6984 = vmul.f32 %v4262, 1.442695
      %v6985 = vpow.pop %v6984
      %v6986 = vmul.f32 %v4265, 1.442695
      %v6987 = vpow.pop %v6986
      %v6988 = vmul.f32 %v4270, 1.442695
      %v6989 = vpow.pop %v6988
      %v6990 = vmul.f32 %v4273, 1.442695
      %v6991 = vpow.pop %v6990
      %v6992 = vmul.f32 %v4278, 1.442695
      %v6993 = vpow.pop %v6992
      %v6994 = vmul.f32 %v4281, 1.442695
      %v6995 = vpow.pop %v6994
      %v6996 = vmul.f32 %v4286, 1.442695
      %v6997 = vpow.pop %v6996
      %v6998 = vmul.f32 %v4289, 1.442695
      %v6999 = vpow.pop %v6998
      %v7000 = vmul.f32 %v4294, 1.442695
      %v7001 = vpow.pop %v7000
      %v7002 = vmul.f32 %v4297, 1.442695
      %v7003 = vpow.pop %v7002
      %v7004 = vmul.f32 %v4302, 1.442695
      %v7005 = vpow.pop %v7004
      %v7006 = vmul.f32 %v4305, 1.442695
      %v7007 = vpow.pop %v7006
      %v7008 = vmul.f32 %v4310, 1.442695
      %v7009 = vpow.pop %v7008
      %v7010 = vmul.f32 %v4313, 1.442695
      %v7011 = vpow.pop %v7010
      %v7012 = vmul.f32 %v4318, 1.442695
      %v7013 = vpow.pop %v7012
      %v7014 = vmul.f32 %v4321, 1.442695
      %v7015 = vpow.pop %v7014
      %v7016 = vmul.f32 %v4326, 1.442695
      %v7017 = vpow.pop %v7016
      %v7018 = vmul.f32 %v4329, 1.442695
      %v7019 = vpow.pop %v7018
      %v7020 = vmul.f32 %v4334, 1.442695
      %v7021 = vpow.pop %v7020
      %v7022 = vmul.f32 %v4337, 1.442695
      %v7023 = vpow.pop %v7022
      %v7024 = vmul.f32 %v4342, 1.442695
      %v7025 = vpow.pop %v7024
      %v7026 = vmul.f32 %v4345, 1.442695
      %v7027 = vpow.pop %v7026
      %v7028 = vmul.f32 %v4350, 1.442695
      %v7029 = vpow.pop %v7028
      %v7030 = vmul.f32 %v4353, 1.442695
      %v7031 = vpow.pop %v7030
      %v7032 = vmul.f32 %v4358, 1.442695
      %v7033 = vpow.pop %v7032
      %v7034 = vmul.f32 %v4361, 1.442695
      %v7035 = vpow.pop %v7034
      %v7036 = vmul.f32 %v4366, 1.442695
      %v7037 = vpow.pop %v7036
      %v7038 = vmul.f32 %v4369, 1.442695
      %v7039 = vpow.pop %v7038
      %v7040 = vmul.f32 %v4374, 1.442695
      %v7041 = vpow.pop %v7040
      %v7042 = vmul.f32 %v4377, 1.442695
      %v7043 = vpow.pop %v7042
      %v7044 = vmul.f32 %v4382, 1.442695
      %v7045 = vpow.pop %v7044
      %v7046 = vmul.f32 %v4385, 1.442695
      %v7047 = vpow.pop %v7046
      %v7048 = vmul.f32 %v4390, 1.442695
      %v7049 = vpow.pop %v7048
      %v7050 = vmul.f32 %v4393, 1.442695
      %v7051 = vpow.pop %v7050
      %v7052 = vmul.f32 %v4398, 1.442695
      %v7053 = vpow.pop %v7052
      %v7054 = vmul.f32 %v4401, 1.442695
      %v7055 = vpow.pop %v7054
      %v7056 = vmul.f32 %v4406, 1.442695
      %v7057 = vpow.pop %v7056
      %v7058 = vmul.f32 %v4409, 1.442695
      %v7059 = vpow.pop %v7058
      %v7060 = vmul.f32 %v4414, 1.442695
      %v7061 = vpow.pop %v7060
      %v7062 = vmul.f32 %v4417, 1.442695
      %v7063 = vpow.pop %v7062
      %v7064 = vmul.f32 %v4422, 1.442695
      %v7065 = vpow.pop %v7064
      %v7066 = vmul.f32 %v4425, 1.442695
      %v7067 = vpow.pop %v7066
      %v7068 = vmul.f32 %v4430, 1.442695
      %v7069 = vpow.pop %v7068
      %v7070 = vmul.f32 %v4433, 1.442695
      %v7071 = vpow.pop %v7070
      %v7072 = vmul.f32 %v4438, 1.442695
      %v7073 = vpow.pop %v7072
      %v7074 = vmul.f32 %v4441, 1.442695
      %v7075 = vpow.pop %v7074
      %v7076 = vmul.f32 %v4446, 1.442695
      %v7077 = vpow.pop %v7076
      %v7078 = vmul.f32 %v4449, 1.442695
      %v7079 = vpow.pop %v7078
      %v7080 = vmul.f32 %v4454, 1.442695
      %v7081 = vpow.pop %v7080
      %v7082 = vmul.f32 %v4457, 1.442695
      %v7083 = vpow.pop %v7082
      %v7084 = vmul.f32 %v4462, 1.442695
      %v7085 = vpow.pop %v7084
      %v7086 = vmul.f32 %v4465, 1.442695
      %v7087 = vpow.pop %v7086
      %v7088 = vmul.f32 %v4470, 1.442695
      %v7089 = vpow.pop %v7088
      %v7090 = vmul.f32 %v4473, 1.442695
      %v7091 = vpow.pop %v7090
      %v7092 = vmul.f32 %v4478, 1.442695
      %v7093 = vpow.pop %v7092
      %v7094 = vmul.f32 %v4481, 1.442695
      %v7095 = vpow.pop %v7094
      %v7096 = vmul.f32 %v4486, 1.442695
      %v7097 = vpow.pop %v7096
      %v7098 = vmul.f32 %v4489, 1.442695
      %v7099 = vpow.pop %v7098
      %v7100 = vmul.f32 %v4494, 1.442695
      %v7101 = vpow.pop %v7100
      %v7102 = vmul.f32 %v4497, 1.442695
      %v7103 = vpow.pop %v7102
      %v7104 = vmul.f32 %v4502, 1.442695
      %v7105 = vpow.pop %v7104
      %v7106 = vmul.f32 %v4505, 1.442695
      %v7107 = vpow.pop %v7106
      %v7108 = vmul.f32 %v4510, 1.442695
      %v7109 = vpow.pop %v7108
      %v7110 = vmul.f32 %v4513, 1.442695
      %v7111 = vpow.pop %v7110
      %v7112 = vmul.f32 %v4518, 1.442695
      %v7113 = vpow.pop %v7112
      %v7114 = vmul.f32 %v4521, 1.442695
      %v7115 = vpow.pop %v7114
      %v7116 = vmul.f32 %v4526, 1.442695
      %v7117 = vpow.pop %v7116
      %v7118 = vmul.f32 %v4529, 1.442695
      %v7119 = vpow.pop %v7118
      %v7120 = vmul.f32 %v4534, 1.442695
      %v7121 = vpow.pop %v7120
      %v7122 = vmul.f32 %v4537, 1.442695
      %v7123 = vpow.pop %v7122
      %v7124 = vmul.f32 %v4542, 1.442695
      %v7125 = vpow.pop %v7124
      %v7126 = vmul.f32 %v4545, 1.442695
      %v7127 = vpow.pop %v7126
      %v7128 = vmul.f32 %v4550, 1.442695
      %v7129 = vpow.pop %v7128
      %v7130 = vmul.f32 %v4553, 1.442695
      %v7131 = vpow.pop %v7130
      %v7132 = vmul.f32 %v4558, 1.442695
      %v7133 = vpow.pop %v7132
      %v7134 = vmul.f32 %v4561, 1.442695
      %v7135 = vpow.pop %v7134
      %v7136 = vmul.f32 %v4566, 1.442695
      %v7137 = vpow.pop %v7136
      %v7138 = vmul.f32 %v4569, 1.442695
      %v7139 = vpow.pop %v7138
      %v7140 = vmul.f32 %v4574, 1.442695
      %v7141 = vpow.pop %v7140
      %v7142 = vmul.f32 %v4577, 1.442695
      %v7143 = vpow.pop %v7142
      %v7144 = vmul.f32 %v4582, 1.442695
      %v7145 = vpow.pop %v7144
      %v7146 = vmul.f32 %v4585, 1.442695
      %v7147 = vpow.pop %v7146
      %vm7148 = vcmp.eq.s32.totalorder %v530, 10
      %v7149 = vsel %vm7148, 1, 0
      %vm7150 = vcmp.eq.s32.totalorder %v7149, 1
      %7152 = vset.pattern.permute.xlu0 44
      %7153 = vperm.xlu0 %7152, %v6637
      %v7154 = vpop.permute.xlu0 %7153
      %7157 = vset.pattern.permute.xlu0 44
      %7158 = vperm.xlu0 %7157, %v6639
      %v7159 = vpop.permute.xlu0 %7158
      %7162 = vset.pattern.permute.xlu0 44
      %7163 = vperm.xlu0 %7162, %v6641
      %v7164 = vpop.permute.xlu0 %7163
      %7167 = vset.pattern.permute.xlu0 44
      %7168 = vperm.xlu0 %7167, %v6643
      %v7169 = vpop.permute.xlu0 %7168
      %7172 = vset.pattern.permute.xlu0 44
      %7173 = vperm.xlu0 %7172, %v6645
      %v7174 = vpop.permute.xlu0 %7173
      %7177 = vset.pattern.permute.xlu0 44
      %7178 = vperm.xlu0 %7177, %v6647
      %v7179 = vpop.permute.xlu0 %7178
      %7182 = vset.pattern.permute.xlu0 44
      %7183 = vperm.xlu0 %7182, %v6649
      %v7184 = vpop.permute.xlu0 %7183
      %7187 = vset.pattern.permute.xlu0 44
      %7188 = vperm.xlu0 %7187, %v6651
      %v7189 = vpop.permute.xlu0 %7188
      %7192 = vset.pattern.permute.xlu0 44
      %7193 = vperm.xlu0 %7192, %v6653
      %v7194 = vpop.permute.xlu0 %7193
      %7197 = vset.pattern.permute.xlu0 44
      %7198 = vperm.xlu0 %7197, %v6655
      %v7199 = vpop.permute.xlu0 %7198
      %7202 = vset.pattern.permute.xlu0 44
      %7203 = vperm.xlu0 %7202, %v6657
      %v7204 = vpop.permute.xlu0 %7203
      %7207 = vset.pattern.permute.xlu0 44
      %7208 = vperm.xlu0 %7207, %v6659
      %v7209 = vpop.permute.xlu0 %7208
      %7212 = vset.pattern.permute.xlu0 44
      %7213 = vperm.xlu0 %7212, %v6661
      %v7214 = vpop.permute.xlu0 %7213
      %7217 = vset.pattern.permute.xlu0 44
      %7218 = vperm.xlu0 %7217, %v6663
      %v7219 = vpop.permute.xlu0 %7218
      %7222 = vset.pattern.permute.xlu0 44
      %7223 = vperm.xlu0 %7222, %v6665
      %v7224 = vpop.permute.xlu0 %7223
      %7227 = vset.pattern.permute.xlu0 44
      %7228 = vperm.xlu0 %7227, %v6667
      %v7229 = vpop.permute.xlu0 %7228
      %7232 = vset.pattern.permute.xlu0 44
      %7233 = vperm.xlu0 %7232, %v6669
      %v7234 = vpop.permute.xlu0 %7233
      %7237 = vset.pattern.permute.xlu0 44
      %7238 = vperm.xlu0 %7237, %v6671
      %v7239 = vpop.permute.xlu0 %7238
      %7242 = vset.pattern.permute.xlu0 44
      %7243 = vperm.xlu0 %7242, %v6673
      %v7244 = vpop.permute.xlu0 %7243
      %7247 = vset.pattern.permute.xlu0 44
      %7248 = vperm.xlu0 %7247, %v6675
      %v7249 = vpop.permute.xlu0 %7248
      %7252 = vset.pattern.permute.xlu0 44
      %7253 = vperm.xlu0 %7252, %v6677
      %v7254 = vpop.permute.xlu0 %7253
      %7257 = vset.pattern.permute.xlu0 44
      %7258 = vperm.xlu0 %7257, %v6679
      %v7259 = vpop.permute.xlu0 %7258
      %7262 = vset.pattern.permute.xlu0 44
      %7263 = vperm.xlu0 %7262, %v6681
      %v7264 = vpop.permute.xlu0 %7263
      %7267 = vset.pattern.permute.xlu0 44
      %7268 = vperm.xlu0 %7267, %v6683
      %v7269 = vpop.permute.xlu0 %7268
      %7272 = vset.pattern.permute.xlu0 44
      %7273 = vperm.xlu0 %7272, %v6685
      %v7274 = vpop.permute.xlu0 %7273
      %7277 = vset.pattern.permute.xlu0 44
      %7278 = vperm.xlu0 %7277, %v6687
      %v7279 = vpop.permute.xlu0 %7278
      %7282 = vset.pattern.permute.xlu0 44
      %7283 = vperm.xlu0 %7282, %v6689
      %v7284 = vpop.permute.xlu0 %7283
      %7287 = vset.pattern.permute.xlu0 44
      %7288 = vperm.xlu0 %7287, %v6691
      %v7289 = vpop.permute.xlu0 %7288
      %7292 = vset.pattern.permute.xlu0 44
      %7293 = vperm.xlu0 %7292, %v6693
      %v7294 = vpop.permute.xlu0 %7293
      %7297 = vset.pattern.permute.xlu0 44
      %7298 = vperm.xlu0 %7297, %v6695
      %v7299 = vpop.permute.xlu0 %7298
      %7302 = vset.pattern.permute.xlu0 44
      %7303 = vperm.xlu0 %7302, %v6697
      %v7304 = vpop.permute.xlu0 %7303
      %7307 = vset.pattern.permute.xlu0 44
      %7308 = vperm.xlu0 %7307, %v6699
      %v7309 = vpop.permute.xlu0 %7308
      %7312 = vset.pattern.permute.xlu0 44
      %7313 = vperm.xlu0 %7312, %v6701
      %v7314 = vpop.permute.xlu0 %7313
      %7317 = vset.pattern.permute.xlu0 44
      %7318 = vperm.xlu0 %7317, %v6703
      %v7319 = vpop.permute.xlu0 %7318
      %7322 = vset.pattern.permute.xlu0 44
      %7323 = vperm.xlu0 %7322, %v6705
      %v7324 = vpop.permute.xlu0 %7323
      %7327 = vset.pattern.permute.xlu0 44
      %7328 = vperm.xlu0 %7327, %v6707
      %v7329 = vpop.permute.xlu0 %7328
      %7332 = vset.pattern.permute.xlu0 44
      %7333 = vperm.xlu0 %7332, %v6709
      %v7334 = vpop.permute.xlu0 %7333
      %7337 = vset.pattern.permute.xlu0 44
      %7338 = vperm.xlu0 %7337, %v6711
      %v7339 = vpop.permute.xlu0 %7338
      %7342 = vset.pattern.permute.xlu0 44
      %7343 = vperm.xlu0 %7342, %v6713
      %v7344 = vpop.permute.xlu0 %7343
      %7347 = vset.pattern.permute.xlu0 44
      %7348 = vperm.xlu0 %7347, %v6715
      %v7349 = vpop.permute.xlu0 %7348
      %7352 = vset.pattern.permute.xlu0 44
      %7353 = vperm.xlu0 %7352, %v6717
      %v7354 = vpop.permute.xlu0 %7353
      %7357 = vset.pattern.permute.xlu0 44
      %7358 = vperm.xlu0 %7357, %v6719
      %v7359 = vpop.permute.xlu0 %7358
      %7362 = vset.pattern.permute.xlu0 44
      %7363 = vperm.xlu0 %7362, %v6721
      %v7364 = vpop.permute.xlu0 %7363
      %7367 = vset.pattern.permute.xlu0 44
      %7368 = vperm.xlu0 %7367, %v6723
      %v7369 = vpop.permute.xlu0 %7368
      %7372 = vset.pattern.permute.xlu0 44
      %7373 = vperm.xlu0 %7372, %v6725
      %v7374 = vpop.permute.xlu0 %7373
      %7377 = vset.pattern.permute.xlu0 44
      %7378 = vperm.xlu0 %7377, %v6727
      %v7379 = vpop.permute.xlu0 %7378
      %7382 = vset.pattern.permute.xlu0 44
      %7383 = vperm.xlu0 %7382, %v6729
      %v7384 = vpop.permute.xlu0 %7383
      %7387 = vset.pattern.permute.xlu0 44
      %7388 = vperm.xlu0 %7387, %v6731
      %v7389 = vpop.permute.xlu0 %7388
      %7392 = vset.pattern.permute.xlu0 44
      %7393 = vperm.xlu0 %7392, %v6733
      %v7394 = vpop.permute.xlu0 %7393
      %7397 = vset.pattern.permute.xlu0 44
      %7398 = vperm.xlu0 %7397, %v6735
      %v7399 = vpop.permute.xlu0 %7398
      %7402 = vset.pattern.permute.xlu0 44
      %7403 = vperm.xlu0 %7402, %v6737
      %v7404 = vpop.permute.xlu0 %7403
      %7407 = vset.pattern.permute.xlu0 44
      %7408 = vperm.xlu0 %7407, %v6739
      %v7409 = vpop.permute.xlu0 %7408
      %7412 = vset.pattern.permute.xlu0 44
      %7413 = vperm.xlu0 %7412, %v6741
      %v7414 = vpop.permute.xlu0 %7413
      %7417 = vset.pattern.permute.xlu0 44
      %7418 = vperm.xlu0 %7417, %v6743
      %v7419 = vpop.permute.xlu0 %7418
      %7422 = vset.pattern.permute.xlu0 44
      %7423 = vperm.xlu0 %7422, %v6745
      %v7424 = vpop.permute.xlu0 %7423
      %7427 = vset.pattern.permute.xlu0 44
      %7428 = vperm.xlu0 %7427, %v6747
      %v7429 = vpop.permute.xlu0 %7428
      %7432 = vset.pattern.permute.xlu0 44
      %7433 = vperm.xlu0 %7432, %v6749
      %v7434 = vpop.permute.xlu0 %7433
      %7437 = vset.pattern.permute.xlu0 44
      %7438 = vperm.xlu0 %7437, %v6751
      %v7439 = vpop.permute.xlu0 %7438
      %7442 = vset.pattern.permute.xlu0 44
      %7443 = vperm.xlu0 %7442, %v6753
      %v7444 = vpop.permute.xlu0 %7443
      %7447 = vset.pattern.permute.xlu0 44
      %7448 = vperm.xlu0 %7447, %v6755
      %v7449 = vpop.permute.xlu0 %7448
      %7452 = vset.pattern.permute.xlu0 44
      %7453 = vperm.xlu0 %7452, %v6757
      %v7454 = vpop.permute.xlu0 %7453
      %7457 = vset.pattern.permute.xlu0 44
      %7458 = vperm.xlu0 %7457, %v6759
      %v7459 = vpop.permute.xlu0 %7458
      %7462 = vset.pattern.permute.xlu0 44
      %7463 = vperm.xlu0 %7462, %v6761
      %v7464 = vpop.permute.xlu0 %7463
      %7467 = vset.pattern.permute.xlu0 44
      %7468 = vperm.xlu0 %7467, %v6763
      %v7469 = vpop.permute.xlu0 %7468
      %7472 = vset.pattern.permute.xlu0 44
      %7473 = vperm.xlu0 %7472, %v6765
      %v7474 = vpop.permute.xlu0 %7473
      %7477 = vset.pattern.permute.xlu0 44
      %7478 = vperm.xlu0 %7477, %v6767
      %v7479 = vpop.permute.xlu0 %7478
      %7482 = vset.pattern.permute.xlu0 44
      %7483 = vperm.xlu0 %7482, %v6769
      %v7484 = vpop.permute.xlu0 %7483
      %7487 = vset.pattern.permute.xlu0 44
      %7488 = vperm.xlu0 %7487, %v6771
      %v7489 = vpop.permute.xlu0 %7488
      %7492 = vset.pattern.permute.xlu0 44
      %7493 = vperm.xlu0 %7492, %v6773
      %v7494 = vpop.permute.xlu0 %7493
      %7497 = vset.pattern.permute.xlu0 44
      %7498 = vperm.xlu0 %7497, %v6775
      %v7499 = vpop.permute.xlu0 %7498
      %7502 = vset.pattern.permute.xlu0 44
      %7503 = vperm.xlu0 %7502, %v6777
      %v7504 = vpop.permute.xlu0 %7503
      %7507 = vset.pattern.permute.xlu0 44
      %7508 = vperm.xlu0 %7507, %v6779
      %v7509 = vpop.permute.xlu0 %7508
      %7512 = vset.pattern.permute.xlu0 44
      %7513 = vperm.xlu0 %7512, %v6781
      %v7514 = vpop.permute.xlu0 %7513
      %7517 = vset.pattern.permute.xlu0 44
      %7518 = vperm.xlu0 %7517, %v6783
      %v7519 = vpop.permute.xlu0 %7518
      %7522 = vset.pattern.permute.xlu0 44
      %7523 = vperm.xlu0 %7522, %v6785
      %v7524 = vpop.permute.xlu0 %7523
      %7527 = vset.pattern.permute.xlu0 44
      %7528 = vperm.xlu0 %7527, %v6787
      %v7529 = vpop.permute.xlu0 %7528
      %7532 = vset.pattern.permute.xlu0 44
      %7533 = vperm.xlu0 %7532, %v6789
      %v7534 = vpop.permute.xlu0 %7533
      %7537 = vset.pattern.permute.xlu0 44
      %7538 = vperm.xlu0 %7537, %v6791
      %v7539 = vpop.permute.xlu0 %7538
      %7542 = vset.pattern.permute.xlu0 44
      %7543 = vperm.xlu0 %7542, %v6793
      %v7544 = vpop.permute.xlu0 %7543
      %7547 = vset.pattern.permute.xlu0 44
      %7548 = vperm.xlu0 %7547, %v6795
      %v7549 = vpop.permute.xlu0 %7548
      %7552 = vset.pattern.permute.xlu0 44
      %7553 = vperm.xlu0 %7552, %v6797
      %v7554 = vpop.permute.xlu0 %7553
      %7557 = vset.pattern.permute.xlu0 44
      %7558 = vperm.xlu0 %7557, %v6799
      %v7559 = vpop.permute.xlu0 %7558
      %7562 = vset.pattern.permute.xlu0 44
      %7563 = vperm.xlu0 %7562, %v6801
      %v7564 = vpop.permute.xlu0 %7563
      %7567 = vset.pattern.permute.xlu0 44
      %7568 = vperm.xlu0 %7567, %v6803
      %v7569 = vpop.permute.xlu0 %7568
      %7572 = vset.pattern.permute.xlu0 44
      %7573 = vperm.xlu0 %7572, %v6805
      %v7574 = vpop.permute.xlu0 %7573
      %7577 = vset.pattern.permute.xlu0 44
      %7578 = vperm.xlu0 %7577, %v6807
      %v7579 = vpop.permute.xlu0 %7578
      %7582 = vset.pattern.permute.xlu0 44
      %7583 = vperm.xlu0 %7582, %v6809
      %v7584 = vpop.permute.xlu0 %7583
      %7587 = vset.pattern.permute.xlu0 44
      %7588 = vperm.xlu0 %7587, %v6811
      %v7589 = vpop.permute.xlu0 %7588
      %7592 = vset.pattern.permute.xlu0 44
      %7593 = vperm.xlu0 %7592, %v6813
      %v7594 = vpop.permute.xlu0 %7593
      %7597 = vset.pattern.permute.xlu0 44
      %7598 = vperm.xlu0 %7597, %v6815
      %v7599 = vpop.permute.xlu0 %7598
      %7602 = vset.pattern.permute.xlu0 44
      %7603 = vperm.xlu0 %7602, %v6817
      %v7604 = vpop.permute.xlu0 %7603
      %7607 = vset.pattern.permute.xlu0 44
      %7608 = vperm.xlu0 %7607, %v6819
      %v7609 = vpop.permute.xlu0 %7608
      %7612 = vset.pattern.permute.xlu0 44
      %7613 = vperm.xlu0 %7612, %v6821
      %v7614 = vpop.permute.xlu0 %7613
      %7617 = vset.pattern.permute.xlu0 44
      %7618 = vperm.xlu0 %7617, %v6823
      %v7619 = vpop.permute.xlu0 %7618
      %7622 = vset.pattern.permute.xlu0 44
      %7623 = vperm.xlu0 %7622, %v6825
      %v7624 = vpop.permute.xlu0 %7623
      %7627 = vset.pattern.permute.xlu0 44
      %7628 = vperm.xlu0 %7627, %v6827
      %v7629 = vpop.permute.xlu0 %7628
      %7632 = vset.pattern.permute.xlu0 44
      %7633 = vperm.xlu0 %7632, %v6829
      %v7634 = vpop.permute.xlu0 %7633
      %7637 = vset.pattern.permute.xlu0 44
      %7638 = vperm.xlu0 %7637, %v6831
      %v7639 = vpop.permute.xlu0 %7638
      %7642 = vset.pattern.permute.xlu0 44
      %7643 = vperm.xlu0 %7642, %v6833
      %v7644 = vpop.permute.xlu0 %7643
      %7647 = vset.pattern.permute.xlu0 44
      %7648 = vperm.xlu0 %7647, %v6835
      %v7649 = vpop.permute.xlu0 %7648
      %7652 = vset.pattern.permute.xlu0 44
      %7653 = vperm.xlu0 %7652, %v6837
      %v7654 = vpop.permute.xlu0 %7653
      %7657 = vset.pattern.permute.xlu0 44
      %7658 = vperm.xlu0 %7657, %v6839
      %v7659 = vpop.permute.xlu0 %7658
      %7662 = vset.pattern.permute.xlu0 44
      %7663 = vperm.xlu0 %7662, %v6841
      %v7664 = vpop.permute.xlu0 %7663
      %7667 = vset.pattern.permute.xlu0 44
      %7668 = vperm.xlu0 %7667, %v6843
      %v7669 = vpop.permute.xlu0 %7668
      %7672 = vset.pattern.permute.xlu0 44
      %7673 = vperm.xlu0 %7672, %v6845
      %v7674 = vpop.permute.xlu0 %7673
      %7677 = vset.pattern.permute.xlu0 44
      %7678 = vperm.xlu0 %7677, %v6847
      %v7679 = vpop.permute.xlu0 %7678
      %7682 = vset.pattern.permute.xlu0 44
      %7683 = vperm.xlu0 %7682, %v6849
      %v7684 = vpop.permute.xlu0 %7683
      %7687 = vset.pattern.permute.xlu0 44
      %7688 = vperm.xlu0 %7687, %v6851
      %v7689 = vpop.permute.xlu0 %7688
      %7692 = vset.pattern.permute.xlu0 44
      %7693 = vperm.xlu0 %7692, %v6853
      %v7694 = vpop.permute.xlu0 %7693
      %7697 = vset.pattern.permute.xlu0 44
      %7698 = vperm.xlu0 %7697, %v6855
      %v7699 = vpop.permute.xlu0 %7698
      %7702 = vset.pattern.permute.xlu0 44
      %7703 = vperm.xlu0 %7702, %v6857
      %v7704 = vpop.permute.xlu0 %7703
      %7707 = vset.pattern.permute.xlu0 44
      %7708 = vperm.xlu0 %7707, %v6859
      %v7709 = vpop.permute.xlu0 %7708
      %7712 = vset.pattern.permute.xlu0 44
      %7713 = vperm.xlu0 %7712, %v6861
      %v7714 = vpop.permute.xlu0 %7713
      %7717 = vset.pattern.permute.xlu0 44
      %7718 = vperm.xlu0 %7717, %v6863
      %v7719 = vpop.permute.xlu0 %7718
      %7722 = vset.pattern.permute.xlu0 44
      %7723 = vperm.xlu0 %7722, %v6865
      %v7724 = vpop.permute.xlu0 %7723
      %7727 = vset.pattern.permute.xlu0 44
      %7728 = vperm.xlu0 %7727, %v6867
      %v7729 = vpop.permute.xlu0 %7728
      %7732 = vset.pattern.permute.xlu0 44
      %7733 = vperm.xlu0 %7732, %v6869
      %v7734 = vpop.permute.xlu0 %7733
      %7737 = vset.pattern.permute.xlu0 44
      %7738 = vperm.xlu0 %7737, %v6871
      %v7739 = vpop.permute.xlu0 %7738
      %7742 = vset.pattern.permute.xlu0 44
      %7743 = vperm.xlu0 %7742, %v6873
      %v7744 = vpop.permute.xlu0 %7743
      %7747 = vset.pattern.permute.xlu0 44
      %7748 = vperm.xlu0 %7747, %v6875
      %v7749 = vpop.permute.xlu0 %7748
      %7752 = vset.pattern.permute.xlu0 44
      %7753 = vperm.xlu0 %7752, %v6877
      %v7754 = vpop.permute.xlu0 %7753
      %7757 = vset.pattern.permute.xlu0 44
      %7758 = vperm.xlu0 %7757, %v6879
      %v7759 = vpop.permute.xlu0 %7758
      %7762 = vset.pattern.permute.xlu0 44
      %7763 = vperm.xlu0 %7762, %v6881
      %v7764 = vpop.permute.xlu0 %7763
      %7767 = vset.pattern.permute.xlu0 44
      %7768 = vperm.xlu0 %7767, %v6883
      %v7769 = vpop.permute.xlu0 %7768
      %7772 = vset.pattern.permute.xlu0 44
      %7773 = vperm.xlu0 %7772, %v6885
      %v7774 = vpop.permute.xlu0 %7773
      %7777 = vset.pattern.permute.xlu0 44
      %7778 = vperm.xlu0 %7777, %v6887
      %v7779 = vpop.permute.xlu0 %7778
      %7782 = vset.pattern.permute.xlu0 44
      %7783 = vperm.xlu0 %7782, %v6889
      %v7784 = vpop.permute.xlu0 %7783
      %7787 = vset.pattern.permute.xlu0 44
      %7788 = vperm.xlu0 %7787, %v6891
      %v7789 = vpop.permute.xlu0 %7788
      %v7791 = vsel %vm7150, %v7154, 1.0
      %v7792 = vsel %vm7150, %v7159, 1.0
      %v7793 = vsel %vm7150, %v7164, 1.0
      %v7794 = vsel %vm7150, %v7169, 1.0
      %v7795 = vsel %vm7150, %v7174, 1.0
      %v7796 = vsel %vm7150, %v7179, 1.0
      %v7797 = vsel %vm7150, %v7184, 1.0
      %v7798 = vsel %vm7150, %v7189, 1.0
      %v7799 = vsel %vm7150, %v7194, 1.0
      %v7800 = vsel %vm7150, %v7199, 1.0
      %v7801 = vsel %vm7150, %v7204, 1.0
      %v7802 = vsel %vm7150, %v7209, 1.0
      %v7803 = vsel %vm7150, %v7214, 1.0
      %v7804 = vsel %vm7150, %v7219, 1.0
      %v7805 = vsel %vm7150, %v7224, 1.0
      %v7806 = vsel %vm7150, %v7229, 1.0
      %v7807 = vsel %vm7150, %v7234, 1.0
      %v7808 = vsel %vm7150, %v7239, 1.0
      %v7809 = vsel %vm7150, %v7244, 1.0
      %v7810 = vsel %vm7150, %v7249, 1.0
      %v7811 = vsel %vm7150, %v7254, 1.0
      %v7812 = vsel %vm7150, %v7259, 1.0
      %v7813 = vsel %vm7150, %v7264, 1.0
      %v7814 = vsel %vm7150, %v7269, 1.0
      %v7815 = vsel %vm7150, %v7274, 1.0
      %v7816 = vsel %vm7150, %v7279, 1.0
      %v7817 = vsel %vm7150, %v7284, 1.0
      %v7818 = vsel %vm7150, %v7289, 1.0
      %v7819 = vsel %vm7150, %v7294, 1.0
      %v7820 = vsel %vm7150, %v7299, 1.0
      %v7821 = vsel %vm7150, %v7304, 1.0
      %v7822 = vsel %vm7150, %v7309, 1.0
      %v7823 = vsel %vm7150, %v7314, 1.0
      %v7824 = vsel %vm7150, %v7319, 1.0
      %v7825 = vsel %vm7150, %v7324, 1.0
      %v7826 = vsel %vm7150, %v7329, 1.0
      %v7827 = vsel %vm7150, %v7334, 1.0
      %v7828 = vsel %vm7150, %v7339, 1.0
      %v7829 = vsel %vm7150, %v7344, 1.0
      %v7830 = vsel %vm7150, %v7349, 1.0
      %v7831 = vsel %vm7150, %v7354, 1.0
      %v7832 = vsel %vm7150, %v7359, 1.0
      %v7833 = vsel %vm7150, %v7364, 1.0
      %v7834 = vsel %vm7150, %v7369, 1.0
      %v7835 = vsel %vm7150, %v7374, 1.0
      %v7836 = vsel %vm7150, %v7379, 1.0
      %v7837 = vsel %vm7150, %v7384, 1.0
      %v7838 = vsel %vm7150, %v7389, 1.0
      %v7839 = vsel %vm7150, %v7394, 1.0
      %v7840 = vsel %vm7150, %v7399, 1.0
      %v7841 = vsel %vm7150, %v7404, 1.0
      %v7842 = vsel %vm7150, %v7409, 1.0
      %v7843 = vsel %vm7150, %v7414, 1.0
      %v7844 = vsel %vm7150, %v7419, 1.0
      %v7845 = vsel %vm7150, %v7424, 1.0
      %v7846 = vsel %vm7150, %v7429, 1.0
      %v7847 = vsel %vm7150, %v7434, 1.0
      %v7848 = vsel %vm7150, %v7439, 1.0
      %v7849 = vsel %vm7150, %v7444, 1.0
      %v7850 = vsel %vm7150, %v7449, 1.0
      %v7851 = vsel %vm7150, %v7454, 1.0
      %v7852 = vsel %vm7150, %v7459, 1.0
      %v7853 = vsel %vm7150, %v7464, 1.0
      %v7854 = vsel %vm7150, %v7469, 1.0
      %v7855 = vsel %vm7150, %v7474, 1.0
      %v7856 = vsel %vm7150, %v7479, 1.0
      %v7857 = vsel %vm7150, %v7484, 1.0
      %v7858 = vsel %vm7150, %v7489, 1.0
      %v7859 = vsel %vm7150, %v7494, 1.0
      %v7860 = vsel %vm7150, %v7499, 1.0
      %v7861 = vsel %vm7150, %v7504, 1.0
      %v7862 = vsel %vm7150, %v7509, 1.0
      %v7863 = vsel %vm7150, %v7514, 1.0
      %v7864 = vsel %vm7150, %v7519, 1.0
      %v7865 = vsel %vm7150, %v7524, 1.0
      %v7866 = vsel %vm7150, %v7529, 1.0
      %v7867 = vsel %vm7150, %v7534, 1.0
      %v7868 = vsel %vm7150, %v7539, 1.0
      %v7869 = vsel %vm7150, %v7544, 1.0
      %v7870 = vsel %vm7150, %v7549, 1.0
      %v7871 = vsel %vm7150, %v7554, 1.0
      %v7872 = vsel %vm7150, %v7559, 1.0
      %v7873 = vsel %vm7150, %v7564, 1.0
      %v7874 = vsel %vm7150, %v7569, 1.0
      %v7875 = vsel %vm7150, %v7574, 1.0
      %v7876 = vsel %vm7150, %v7579, 1.0
      %v7877 = vsel %vm7150, %v7584, 1.0
      %v7878 = vsel %vm7150, %v7589, 1.0
      %v7879 = vsel %vm7150, %v7594, 1.0
      %v7880 = vsel %vm7150, %v7599, 1.0
      %v7881 = vsel %vm7150, %v7604, 1.0
      %v7882 = vsel %vm7150, %v7609, 1.0
      %v7883 = vsel %vm7150, %v7614, 1.0
      %v7884 = vsel %vm7150, %v7619, 1.0
      %v7885 = vsel %vm7150, %v7624, 1.0
      %v7886 = vsel %vm7150, %v7629, 1.0
      %v7887 = vsel %vm7150, %v7634, 1.0
      %v7888 = vsel %vm7150, %v7639, 1.0
      %v7889 = vsel %vm7150, %v7644, 1.0
      %v7890 = vsel %vm7150, %v7649, 1.0
      %v7891 = vsel %vm7150, %v7654, 1.0
      %v7892 = vsel %vm7150, %v7659, 1.0
      %v7893 = vsel %vm7150, %v7664, 1.0
      %v7894 = vsel %vm7150, %v7669, 1.0
      %v7895 = vsel %vm7150, %v7674, 1.0
      %v7896 = vsel %vm7150, %v7679, 1.0
      %v7897 = vsel %vm7150, %v7684, 1.0
      %v7898 = vsel %vm7150, %v7689, 1.0
      %v7899 = vsel %vm7150, %v7694, 1.0
      %v7900 = vsel %vm7150, %v7699, 1.0
      %v7901 = vsel %vm7150, %v7704, 1.0
      %v7902 = vsel %vm7150, %v7709, 1.0
      %v7903 = vsel %vm7150, %v7714, 1.0
      %v7904 = vsel %vm7150, %v7719, 1.0
      %v7905 = vsel %vm7150, %v7724, 1.0
      %v7906 = vsel %vm7150, %v7729, 1.0
      %v7907 = vsel %vm7150, %v7734, 1.0
      %v7908 = vsel %vm7150, %v7739, 1.0
      %v7909 = vsel %vm7150, %v7744, 1.0
      %v7910 = vsel %vm7150, %v7749, 1.0
      %v7911 = vsel %vm7150, %v7754, 1.0
      %v7912 = vsel %vm7150, %v7759, 1.0
      %v7913 = vsel %vm7150, %v7764, 1.0
      %v7914 = vsel %vm7150, %v7769, 1.0
      %v7915 = vsel %vm7150, %v7774, 1.0
      %v7916 = vsel %vm7150, %v7779, 1.0
      %v7917 = vsel %vm7150, %v7784, 1.0
      %v7918 = vsel %vm7150, %v7789, 1.0
      %v7919 = vmul.f32 %v4588, %v7791
      %v7920 = vmul.f32 %v4589, %v7792
      %v7921 = vmul.f32 %v4590, %v7793
      %v7922 = vmul.f32 %v4591, %v7794
      %v7923 = vmul.f32 %v4592, %v7795
      %v7924 = vmul.f32 %v4593, %v7796
      %v7925 = vmul.f32 %v4594, %v7797
      %v7926 = vmul.f32 %v4595, %v7798
      %v7927 = vmul.f32 %v4596, %v7799
      %v7928 = vmul.f32 %v4597, %v7800
      %v7929 = vmul.f32 %v4598, %v7801
      %v7930 = vmul.f32 %v4599, %v7802
      %v7931 = vmul.f32 %v4600, %v7803
      %v7932 = vmul.f32 %v4601, %v7804
      %v7933 = vmul.f32 %v4602, %v7805
      %v7934 = vmul.f32 %v4603, %v7806
      %v7935 = vmul.f32 %v4604, %v7807
      %v7936 = vmul.f32 %v4605, %v7808
      %v7937 = vmul.f32 %v4606, %v7809
      %v7938 = vmul.f32 %v4607, %v7810
      %v7939 = vmul.f32 %v4608, %v7811
      %v7940 = vmul.f32 %v4609, %v7812
      %v7941 = vmul.f32 %v4610, %v7813
      %v7942 = vmul.f32 %v4611, %v7814
      %v7943 = vmul.f32 %v4612, %v7815
      %v7944 = vmul.f32 %v4613, %v7816
      %v7945 = vmul.f32 %v4614, %v7817
      %v7946 = vmul.f32 %v4615, %v7818
      %v7947 = vmul.f32 %v4616, %v7819
      %v7948 = vmul.f32 %v4617, %v7820
      %v7949 = vmul.f32 %v4618, %v7821
      %v7950 = vmul.f32 %v4619, %v7822
      %v7951 = vmul.f32 %v4620, %v7823
      %v7952 = vmul.f32 %v4621, %v7824
      %v7953 = vmul.f32 %v4622, %v7825
      %v7954 = vmul.f32 %v4623, %v7826
      %v7955 = vmul.f32 %v4624, %v7827
      %v7956 = vmul.f32 %v4625, %v7828
      %v7957 = vmul.f32 %v4626, %v7829
      %v7958 = vmul.f32 %v4627, %v7830
      %v7959 = vmul.f32 %v4628, %v7831
      %v7960 = vmul.f32 %v4629, %v7832
      %v7961 = vmul.f32 %v4630, %v7833
      %v7962 = vmul.f32 %v4631, %v7834
      %v7963 = vmul.f32 %v4632, %v7835
      %v7964 = vmul.f32 %v4633, %v7836
      %v7965 = vmul.f32 %v4634, %v7837
      %v7966 = vmul.f32 %v4635, %v7838
      %v7967 = vmul.f32 %v4636, %v7839
      %v7968 = vmul.f32 %v4637, %v7840
      %v7969 = vmul.f32 %v4638, %v7841
      %v7970 = vmul.f32 %v4639, %v7842
      %v7971 = vmul.f32 %v4640, %v7843
      %v7972 = vmul.f32 %v4641, %v7844
      %v7973 = vmul.f32 %v4642, %v7845
      %v7974 = vmul.f32 %v4643, %v7846
      %v7975 = vmul.f32 %v4644, %v7847
      %v7976 = vmul.f32 %v4645, %v7848
      %v7977 = vmul.f32 %v4646, %v7849
      %v7978 = vmul.f32 %v4647, %v7850
      %v7979 = vmul.f32 %v4648, %v7851
      %v7980 = vmul.f32 %v4649, %v7852
      %v7981 = vmul.f32 %v4650, %v7853
      %v7982 = vmul.f32 %v4651, %v7854
      %v7983 = vmul.f32 %v4652, %v7855
      %v7984 = vmul.f32 %v4653, %v7856
      %v7985 = vmul.f32 %v4654, %v7857
      %v7986 = vmul.f32 %v4655, %v7858
      %v7987 = vmul.f32 %v4656, %v7859
      %v7988 = vmul.f32 %v4657, %v7860
      %v7989 = vmul.f32 %v4658, %v7861
      %v7990 = vmul.f32 %v4659, %v7862
      %v7991 = vmul.f32 %v4660, %v7863
      %v7992 = vmul.f32 %v4661, %v7864
      %v7993 = vmul.f32 %v4662, %v7865
      %v7994 = vmul.f32 %v4663, %v7866
      %v7995 = vmul.f32 %v4664, %v7867
      %v7996 = vmul.f32 %v4665, %v7868
      %v7997 = vmul.f32 %v4666, %v7869
      %v7998 = vmul.f32 %v4667, %v7870
      %v7999 = vmul.f32 %v4668, %v7871
      %v8000 = vmul.f32 %v4669, %v7872
      %v8001 = vmul.f32 %v4670, %v7873
      %v8002 = vmul.f32 %v4671, %v7874
      %v8003 = vmul.f32 %v4672, %v7875
      %v8004 = vmul.f32 %v4673, %v7876
      %v8005 = vmul.f32 %v4674, %v7877
      %v8006 = vmul.f32 %v4675, %v7878
      %v8007 = vmul.f32 %v4676, %v7879
      %v8008 = vmul.f32 %v4677, %v7880
      %v8009 = vmul.f32 %v4678, %v7881
      %v8010 = vmul.f32 %v4679, %v7882
      %v8011 = vmul.f32 %v4680, %v7883
      %v8012 = vmul.f32 %v4681, %v7884
      %v8013 = vmul.f32 %v4682, %v7885
      %v8014 = vmul.f32 %v4683, %v7886
      %v8015 = vmul.f32 %v4684, %v7887
      %v8016 = vmul.f32 %v4685, %v7888
      %v8017 = vmul.f32 %v4686, %v7889
      %v8018 = vmul.f32 %v4687, %v7890
      %v8019 = vmul.f32 %v4688, %v7891
      %v8020 = vmul.f32 %v4689, %v7892
      %v8021 = vmul.f32 %v4690, %v7893
      %v8022 = vmul.f32 %v4691, %v7894
      %v8023 = vmul.f32 %v4692, %v7895
      %v8024 = vmul.f32 %v4693, %v7896
      %v8025 = vmul.f32 %v4694, %v7897
      %v8026 = vmul.f32 %v4695, %v7898
      %v8027 = vmul.f32 %v4696, %v7899
      %v8028 = vmul.f32 %v4697, %v7900
      %v8029 = vmul.f32 %v4698, %v7901
      %v8030 = vmul.f32 %v4699, %v7902
      %v8031 = vmul.f32 %v4700, %v7903
      %v8032 = vmul.f32 %v4701, %v7904
      %v8033 = vmul.f32 %v4702, %v7905
      %v8034 = vmul.f32 %v4703, %v7906
      %v8035 = vmul.f32 %v4704, %v7907
      %v8036 = vmul.f32 %v4705, %v7908
      %v8037 = vmul.f32 %v4706, %v7909
      %v8038 = vmul.f32 %v4707, %v7910
      %v8039 = vmul.f32 %v4708, %v7911
      %v8040 = vmul.f32 %v4709, %v7912
      %v8041 = vmul.f32 %v4710, %v7913
      %v8042 = vmul.f32 %v4711, %v7914
      %v8043 = vmul.f32 %v4712, %v7915
      %v8044 = vmul.f32 %v4713, %v7916
      %v8045 = vmul.f32 %v4714, %v7917
      %v8046 = vmul.f32 %v4715, %v7918
      %vm8047 = vcmp.eq.s32.totalorder %v530, 43
      %v8048 = vsel %vm8047, 1, 0
      %vm8049 = vcmp.eq.s32.totalorder %v8048, 1
      %8051 = vset.pattern.permute.xlu0 43
      %8052 = vperm.xlu0 %8051, %v6893
      %v8053 = vpop.permute.xlu0 %8052
      %8056 = vset.pattern.permute.xlu0 43
      %8057 = vperm.xlu0 %8056, %v6895
      %v8058 = vpop.permute.xlu0 %8057
      %8061 = vset.pattern.permute.xlu0 43
      %8062 = vperm.xlu0 %8061, %v6897
      %v8063 = vpop.permute.xlu0 %8062
      %8066 = vset.pattern.permute.xlu0 43
      %8067 = vperm.xlu0 %8066, %v6899
      %v8068 = vpop.permute.xlu0 %8067
      %8071 = vset.pattern.permute.xlu0 43
      %8072 = vperm.xlu0 %8071, %v6901
      %v8073 = vpop.permute.xlu0 %8072
      %8076 = vset.pattern.permute.xlu0 43
      %8077 = vperm.xlu0 %8076, %v6903
      %v8078 = vpop.permute.xlu0 %8077
      %8081 = vset.pattern.permute.xlu0 43
      %8082 = vperm.xlu0 %8081, %v6905
      %v8083 = vpop.permute.xlu0 %8082
      %8086 = vset.pattern.permute.xlu0 43
      %8087 = vperm.xlu0 %8086, %v6907
      %v8088 = vpop.permute.xlu0 %8087
      %8091 = vset.pattern.permute.xlu0 43
      %8092 = vperm.xlu0 %8091, %v6909
      %v8093 = vpop.permute.xlu0 %8092
      %8096 = vset.pattern.permute.xlu0 43
      %8097 = vperm.xlu0 %8096, %v6911
      %v8098 = vpop.permute.xlu0 %8097
      %8101 = vset.pattern.permute.xlu0 43
      %8102 = vperm.xlu0 %8101, %v6913
      %v8103 = vpop.permute.xlu0 %8102
      %8106 = vset.pattern.permute.xlu0 43
      %8107 = vperm.xlu0 %8106, %v6915
      %v8108 = vpop.permute.xlu0 %8107
      %8111 = vset.pattern.permute.xlu0 43
      %8112 = vperm.xlu0 %8111, %v6917
      %v8113 = vpop.permute.xlu0 %8112
      %8116 = vset.pattern.permute.xlu0 43
      %8117 = vperm.xlu0 %8116, %v6919
      %v8118 = vpop.permute.xlu0 %8117
      %8121 = vset.pattern.permute.xlu0 43
      %8122 = vperm.xlu0 %8121, %v6921
      %v8123 = vpop.permute.xlu0 %8122
      %8126 = vset.pattern.permute.xlu0 43
      %8127 = vperm.xlu0 %8126, %v6923
      %v8128 = vpop.permute.xlu0 %8127
      %8131 = vset.pattern.permute.xlu0 43
      %8132 = vperm.xlu0 %8131, %v6925
      %v8133 = vpop.permute.xlu0 %8132
      %8136 = vset.pattern.permute.xlu0 43
      %8137 = vperm.xlu0 %8136, %v6927
      %v8138 = vpop.permute.xlu0 %8137
      %8141 = vset.pattern.permute.xlu0 43
      %8142 = vperm.xlu0 %8141, %v6929
      %v8143 = vpop.permute.xlu0 %8142
      %8146 = vset.pattern.permute.xlu0 43
      %8147 = vperm.xlu0 %8146, %v6931
      %v8148 = vpop.permute.xlu0 %8147
      %8151 = vset.pattern.permute.xlu0 43
      %8152 = vperm.xlu0 %8151, %v6933
      %v8153 = vpop.permute.xlu0 %8152
      %8156 = vset.pattern.permute.xlu0 43
      %8157 = vperm.xlu0 %8156, %v6935
      %v8158 = vpop.permute.xlu0 %8157
      %8161 = vset.pattern.permute.xlu0 43
      %8162 = vperm.xlu0 %8161, %v6937
      %v8163 = vpop.permute.xlu0 %8162
      %8166 = vset.pattern.permute.xlu0 43
      %8167 = vperm.xlu0 %8166, %v6939
      %v8168 = vpop.permute.xlu0 %8167
      %8171 = vset.pattern.permute.xlu0 43
      %8172 = vperm.xlu0 %8171, %v6941
      %v8173 = vpop.permute.xlu0 %8172
      %8176 = vset.pattern.permute.xlu0 43
      %8177 = vperm.xlu0 %8176, %v6943
      %v8178 = vpop.permute.xlu0 %8177
      %8181 = vset.pattern.permute.xlu0 43
      %8182 = vperm.xlu0 %8181, %v6945
      %v8183 = vpop.permute.xlu0 %8182
      %8186 = vset.pattern.permute.xlu0 43
      %8187 = vperm.xlu0 %8186, %v6947
      %v8188 = vpop.permute.xlu0 %8187
      %8191 = vset.pattern.permute.xlu0 43
      %8192 = vperm.xlu0 %8191, %v6949
      %v8193 = vpop.permute.xlu0 %8192
      %8196 = vset.pattern.permute.xlu0 43
      %8197 = vperm.xlu0 %8196, %v6951
      %v8198 = vpop.permute.xlu0 %8197
      %8201 = vset.pattern.permute.xlu0 43
      %8202 = vperm.xlu0 %8201, %v6953
      %v8203 = vpop.permute.xlu0 %8202
      %8206 = vset.pattern.permute.xlu0 43
      %8207 = vperm.xlu0 %8206, %v6955
      %v8208 = vpop.permute.xlu0 %8207
      %8211 = vset.pattern.permute.xlu0 43
      %8212 = vperm.xlu0 %8211, %v6957
      %v8213 = vpop.permute.xlu0 %8212
      %8216 = vset.pattern.permute.xlu0 43
      %8217 = vperm.xlu0 %8216, %v6959
      %v8218 = vpop.permute.xlu0 %8217
      %8221 = vset.pattern.permute.xlu0 43
      %8222 = vperm.xlu0 %8221, %v6961
      %v8223 = vpop.permute.xlu0 %8222
      %8226 = vset.pattern.permute.xlu0 43
      %8227 = vperm.xlu0 %8226, %v6963
      %v8228 = vpop.permute.xlu0 %8227
      %8231 = vset.pattern.permute.xlu0 43
      %8232 = vperm.xlu0 %8231, %v6965
      %v8233 = vpop.permute.xlu0 %8232
      %8236 = vset.pattern.permute.xlu0 43
      %8237 = vperm.xlu0 %8236, %v6967
      %v8238 = vpop.permute.xlu0 %8237
      %8241 = vset.pattern.permute.xlu0 43
      %8242 = vperm.xlu0 %8241, %v6969
      %v8243 = vpop.permute.xlu0 %8242
      %8246 = vset.pattern.permute.xlu0 43
      %8247 = vperm.xlu0 %8246, %v6971
      %v8248 = vpop.permute.xlu0 %8247
      %8251 = vset.pattern.permute.xlu0 43
      %8252 = vperm.xlu0 %8251, %v6973
      %v8253 = vpop.permute.xlu0 %8252
      %8256 = vset.pattern.permute.xlu0 43
      %8257 = vperm.xlu0 %8256, %v6975
      %v8258 = vpop.permute.xlu0 %8257
      %8261 = vset.pattern.permute.xlu0 43
      %8262 = vperm.xlu0 %8261, %v6977
      %v8263 = vpop.permute.xlu0 %8262
      %8266 = vset.pattern.permute.xlu0 43
      %8267 = vperm.xlu0 %8266, %v6979
      %v8268 = vpop.permute.xlu0 %8267
      %8271 = vset.pattern.permute.xlu0 43
      %8272 = vperm.xlu0 %8271, %v6981
      %v8273 = vpop.permute.xlu0 %8272
      %8276 = vset.pattern.permute.xlu0 43
      %8277 = vperm.xlu0 %8276, %v6983
      %v8278 = vpop.permute.xlu0 %8277
      %8281 = vset.pattern.permute.xlu0 43
      %8282 = vperm.xlu0 %8281, %v6985
      %v8283 = vpop.permute.xlu0 %8282
      %8286 = vset.pattern.permute.xlu0 43
      %8287 = vperm.xlu0 %8286, %v6987
      %v8288 = vpop.permute.xlu0 %8287
      %8291 = vset.pattern.permute.xlu0 43
      %8292 = vperm.xlu0 %8291, %v6989
      %v8293 = vpop.permute.xlu0 %8292
      %8296 = vset.pattern.permute.xlu0 43
      %8297 = vperm.xlu0 %8296, %v6991
      %v8298 = vpop.permute.xlu0 %8297
      %8301 = vset.pattern.permute.xlu0 43
      %8302 = vperm.xlu0 %8301, %v6993
      %v8303 = vpop.permute.xlu0 %8302
      %8306 = vset.pattern.permute.xlu0 43
      %8307 = vperm.xlu0 %8306, %v6995
      %v8308 = vpop.permute.xlu0 %8307
      %8311 = vset.pattern.permute.xlu0 43
      %8312 = vperm.xlu0 %8311, %v6997
      %v8313 = vpop.permute.xlu0 %8312
      %8316 = vset.pattern.permute.xlu0 43
      %8317 = vperm.xlu0 %8316, %v6999
      %v8318 = vpop.permute.xlu0 %8317
      %8321 = vset.pattern.permute.xlu0 43
      %8322 = vperm.xlu0 %8321, %v7001
      %v8323 = vpop.permute.xlu0 %8322
      %8326 = vset.pattern.permute.xlu0 43
      %8327 = vperm.xlu0 %8326, %v7003
      %v8328 = vpop.permute.xlu0 %8327
      %8331 = vset.pattern.permute.xlu0 43
      %8332 = vperm.xlu0 %8331, %v7005
      %v8333 = vpop.permute.xlu0 %8332
      %8336 = vset.pattern.permute.xlu0 43
      %8337 = vperm.xlu0 %8336, %v7007
      %v8338 = vpop.permute.xlu0 %8337
      %8341 = vset.pattern.permute.xlu0 43
      %8342 = vperm.xlu0 %8341, %v7009
      %v8343 = vpop.permute.xlu0 %8342
      %8346 = vset.pattern.permute.xlu0 43
      %8347 = vperm.xlu0 %8346, %v7011
      %v8348 = vpop.permute.xlu0 %8347
      %8351 = vset.pattern.permute.xlu0 43
      %8352 = vperm.xlu0 %8351, %v7013
      %v8353 = vpop.permute.xlu0 %8352
      %8356 = vset.pattern.permute.xlu0 43
      %8357 = vperm.xlu0 %8356, %v7015
      %v8358 = vpop.permute.xlu0 %8357
      %8361 = vset.pattern.permute.xlu0 43
      %8362 = vperm.xlu0 %8361, %v7017
      %v8363 = vpop.permute.xlu0 %8362
      %8366 = vset.pattern.permute.xlu0 43
      %8367 = vperm.xlu0 %8366, %v7019
      %v8368 = vpop.permute.xlu0 %8367
      %8371 = vset.pattern.permute.xlu0 43
      %8372 = vperm.xlu0 %8371, %v7021
      %v8373 = vpop.permute.xlu0 %8372
      %8376 = vset.pattern.permute.xlu0 43
      %8377 = vperm.xlu0 %8376, %v7023
      %v8378 = vpop.permute.xlu0 %8377
      %8381 = vset.pattern.permute.xlu0 43
      %8382 = vperm.xlu0 %8381, %v7025
      %v8383 = vpop.permute.xlu0 %8382
      %8386 = vset.pattern.permute.xlu0 43
      %8387 = vperm.xlu0 %8386, %v7027
      %v8388 = vpop.permute.xlu0 %8387
      %8391 = vset.pattern.permute.xlu0 43
      %8392 = vperm.xlu0 %8391, %v7029
      %v8393 = vpop.permute.xlu0 %8392
      %8396 = vset.pattern.permute.xlu0 43
      %8397 = vperm.xlu0 %8396, %v7031
      %v8398 = vpop.permute.xlu0 %8397
      %8401 = vset.pattern.permute.xlu0 43
      %8402 = vperm.xlu0 %8401, %v7033
      %v8403 = vpop.permute.xlu0 %8402
      %8406 = vset.pattern.permute.xlu0 43
      %8407 = vperm.xlu0 %8406, %v7035
      %v8408 = vpop.permute.xlu0 %8407
      %8411 = vset.pattern.permute.xlu0 43
      %8412 = vperm.xlu0 %8411, %v7037
      %v8413 = vpop.permute.xlu0 %8412
      %8416 = vset.pattern.permute.xlu0 43
      %8417 = vperm.xlu0 %8416, %v7039
      %v8418 = vpop.permute.xlu0 %8417
      %8421 = vset.pattern.permute.xlu0 43
      %8422 = vperm.xlu0 %8421, %v7041
      %v8423 = vpop.permute.xlu0 %8422
      %8426 = vset.pattern.permute.xlu0 43
      %8427 = vperm.xlu0 %8426, %v7043
      %v8428 = vpop.permute.xlu0 %8427
      %8431 = vset.pattern.permute.xlu0 43
      %8432 = vperm.xlu0 %8431, %v7045
      %v8433 = vpop.permute.xlu0 %8432
      %8436 = vset.pattern.permute.xlu0 43
      %8437 = vperm.xlu0 %8436, %v7047
      %v8438 = vpop.permute.xlu0 %8437
      %8441 = vset.pattern.permute.xlu0 43
      %8442 = vperm.xlu0 %8441, %v7049
      %v8443 = vpop.permute.xlu0 %8442
      %8446 = vset.pattern.permute.xlu0 43
      %8447 = vperm.xlu0 %8446, %v7051
      %v8448 = vpop.permute.xlu0 %8447
      %8451 = vset.pattern.permute.xlu0 43
      %8452 = vperm.xlu0 %8451, %v7053
      %v8453 = vpop.permute.xlu0 %8452
      %8456 = vset.pattern.permute.xlu0 43
      %8457 = vperm.xlu0 %8456, %v7055
      %v8458 = vpop.permute.xlu0 %8457
      %8461 = vset.pattern.permute.xlu0 43
      %8462 = vperm.xlu0 %8461, %v7057
      %v8463 = vpop.permute.xlu0 %8462
      %8466 = vset.pattern.permute.xlu0 43
      %8467 = vperm.xlu0 %8466, %v7059
      %v8468 = vpop.permute.xlu0 %8467
      %8471 = vset.pattern.permute.xlu0 43
      %8472 = vperm.xlu0 %8471, %v7061
      %v8473 = vpop.permute.xlu0 %8472
      %8476 = vset.pattern.permute.xlu0 43
      %8477 = vperm.xlu0 %8476, %v7063
      %v8478 = vpop.permute.xlu0 %8477
      %8481 = vset.pattern.permute.xlu0 43
      %8482 = vperm.xlu0 %8481, %v7065
      %v8483 = vpop.permute.xlu0 %8482
      %8486 = vset.pattern.permute.xlu0 43
      %8487 = vperm.xlu0 %8486, %v7067
      %v8488 = vpop.permute.xlu0 %8487
      %8491 = vset.pattern.permute.xlu0 43
      %8492 = vperm.xlu0 %8491, %v7069
      %v8493 = vpop.permute.xlu0 %8492
      %8496 = vset.pattern.permute.xlu0 43
      %8497 = vperm.xlu0 %8496, %v7071
      %v8498 = vpop.permute.xlu0 %8497
      %8501 = vset.pattern.permute.xlu0 43
      %8502 = vperm.xlu0 %8501, %v7073
      %v8503 = vpop.permute.xlu0 %8502
      %8506 = vset.pattern.permute.xlu0 43
      %8507 = vperm.xlu0 %8506, %v7075
      %v8508 = vpop.permute.xlu0 %8507
      %8511 = vset.pattern.permute.xlu0 43
      %8512 = vperm.xlu0 %8511, %v7077
      %v8513 = vpop.permute.xlu0 %8512
      %8516 = vset.pattern.permute.xlu0 43
      %8517 = vperm.xlu0 %8516, %v7079
      %v8518 = vpop.permute.xlu0 %8517
      %8521 = vset.pattern.permute.xlu0 43
      %8522 = vperm.xlu0 %8521, %v7081
      %v8523 = vpop.permute.xlu0 %8522
      %8526 = vset.pattern.permute.xlu0 43
      %8527 = vperm.xlu0 %8526, %v7083
      %v8528 = vpop.permute.xlu0 %8527
      %8531 = vset.pattern.permute.xlu0 43
      %8532 = vperm.xlu0 %8531, %v7085
      %v8533 = vpop.permute.xlu0 %8532
      %8536 = vset.pattern.permute.xlu0 43
      %8537 = vperm.xlu0 %8536, %v7087
      %v8538 = vpop.permute.xlu0 %8537
      %8541 = vset.pattern.permute.xlu0 43
      %8542 = vperm.xlu0 %8541, %v7089
      %v8543 = vpop.permute.xlu0 %8542
      %8546 = vset.pattern.permute.xlu0 43
      %8547 = vperm.xlu0 %8546, %v7091
      %v8548 = vpop.permute.xlu0 %8547
      %8551 = vset.pattern.permute.xlu0 43
      %8552 = vperm.xlu0 %8551, %v7093
      %v8553 = vpop.permute.xlu0 %8552
      %8556 = vset.pattern.permute.xlu0 43
      %8557 = vperm.xlu0 %8556, %v7095
      %v8558 = vpop.permute.xlu0 %8557
      %8561 = vset.pattern.permute.xlu0 43
      %8562 = vperm.xlu0 %8561, %v7097
      %v8563 = vpop.permute.xlu0 %8562
      %8566 = vset.pattern.permute.xlu0 43
      %8567 = vperm.xlu0 %8566, %v7099
      %v8568 = vpop.permute.xlu0 %8567
      %8571 = vset.pattern.permute.xlu0 43
      %8572 = vperm.xlu0 %8571, %v7101
      %v8573 = vpop.permute.xlu0 %8572
      %8576 = vset.pattern.permute.xlu0 43
      %8577 = vperm.xlu0 %8576, %v7103
      %v8578 = vpop.permute.xlu0 %8577
      %8581 = vset.pattern.permute.xlu0 43
      %8582 = vperm.xlu0 %8581, %v7105
      %v8583 = vpop.permute.xlu0 %8582
      %8586 = vset.pattern.permute.xlu0 43
      %8587 = vperm.xlu0 %8586, %v7107
      %v8588 = vpop.permute.xlu0 %8587
      %8591 = vset.pattern.permute.xlu0 43
      %8592 = vperm.xlu0 %8591, %v7109
      %v8593 = vpop.permute.xlu0 %8592
      %8596 = vset.pattern.permute.xlu0 43
      %8597 = vperm.xlu0 %8596, %v7111
      %v8598 = vpop.permute.xlu0 %8597
      %8601 = vset.pattern.permute.xlu0 43
      %8602 = vperm.xlu0 %8601, %v7113
      %v8603 = vpop.permute.xlu0 %8602
      %8606 = vset.pattern.permute.xlu0 43
      %8607 = vperm.xlu0 %8606, %v7115
      %v8608 = vpop.permute.xlu0 %8607
      %8611 = vset.pattern.permute.xlu0 43
      %8612 = vperm.xlu0 %8611, %v7117
      %v8613 = vpop.permute.xlu0 %8612
      %8616 = vset.pattern.permute.xlu0 43
      %8617 = vperm.xlu0 %8616, %v7119
      %v8618 = vpop.permute.xlu0 %8617
      %8621 = vset.pattern.permute.xlu0 43
      %8622 = vperm.xlu0 %8621, %v7121
      %v8623 = vpop.permute.xlu0 %8622
      %8626 = vset.pattern.permute.xlu0 43
      %8627 = vperm.xlu0 %8626, %v7123
      %v8628 = vpop.permute.xlu0 %8627
      %8631 = vset.pattern.permute.xlu0 43
      %8632 = vperm.xlu0 %8631, %v7125
      %v8633 = vpop.permute.xlu0 %8632
      %8636 = vset.pattern.permute.xlu0 43
      %8637 = vperm.xlu0 %8636, %v7127
      %v8638 = vpop.permute.xlu0 %8637
      %8641 = vset.pattern.permute.xlu0 43
      %8642 = vperm.xlu0 %8641, %v7129
      %v8643 = vpop.permute.xlu0 %8642
      %8646 = vset.pattern.permute.xlu0 43
      %8647 = vperm.xlu0 %8646, %v7131
      %v8648 = vpop.permute.xlu0 %8647
      %8651 = vset.pattern.permute.xlu0 43
      %8652 = vperm.xlu0 %8651, %v7133
      %v8653 = vpop.permute.xlu0 %8652
      %8656 = vset.pattern.permute.xlu0 43
      %8657 = vperm.xlu0 %8656, %v7135
      %v8658 = vpop.permute.xlu0 %8657
      %8661 = vset.pattern.permute.xlu0 43
      %8662 = vperm.xlu0 %8661, %v7137
      %v8663 = vpop.permute.xlu0 %8662
      %8666 = vset.pattern.permute.xlu0 43
      %8667 = vperm.xlu0 %8666, %v7139
      %v8668 = vpop.permute.xlu0 %8667
      %8671 = vset.pattern.permute.xlu0 43
      %8672 = vperm.xlu0 %8671, %v7141
      %v8673 = vpop.permute.xlu0 %8672
      %8676 = vset.pattern.permute.xlu0 43
      %8677 = vperm.xlu0 %8676, %v7143
      %v8678 = vpop.permute.xlu0 %8677
      %8681 = vset.pattern.permute.xlu0 43
      %8682 = vperm.xlu0 %8681, %v7145
      %v8683 = vpop.permute.xlu0 %8682
      %8686 = vset.pattern.permute.xlu0 43
      %8687 = vperm.xlu0 %8686, %v7147
      %v8688 = vpop.permute.xlu0 %8687
      %v8690 = vsel %vm8049, %v8053, %v7919
      %v8691 = vsel %vm8049, %v8058, %v7920
      %v8692 = vsel %vm8049, %v8063, %v7921
      %v8693 = vsel %vm8049, %v8068, %v7922
      %v8694 = vsel %vm8049, %v8073, %v7923
      %v8695 = vsel %vm8049, %v8078, %v7924
      %v8696 = vsel %vm8049, %v8083, %v7925
      %v8697 = vsel %vm8049, %v8088, %v7926
      %v8698 = vsel %vm8049, %v8093, %v7927
      %v8699 = vsel %vm8049, %v8098, %v7928
      %v8700 = vsel %vm8049, %v8103, %v7929
      %v8701 = vsel %vm8049, %v8108, %v7930
      %v8702 = vsel %vm8049, %v8113, %v7931
      %v8703 = vsel %vm8049, %v8118, %v7932
      %v8704 = vsel %vm8049, %v8123, %v7933
      %v8705 = vsel %vm8049, %v8128, %v7934
      %v8706 = vsel %vm8049, %v8133, %v7935
      %v8707 = vsel %vm8049, %v8138, %v7936
      %v8708 = vsel %vm8049, %v8143, %v7937
      %v8709 = vsel %vm8049, %v8148, %v7938
      %v8710 = vsel %vm8049, %v8153, %v7939
      %v8711 = vsel %vm8049, %v8158, %v7940
      %v8712 = vsel %vm8049, %v8163, %v7941
      %v8713 = vsel %vm8049, %v8168, %v7942
      %v8714 = vsel %vm8049, %v8173, %v7943
      %v8715 = vsel %vm8049, %v8178, %v7944
      %v8716 = vsel %vm8049, %v8183, %v7945
      %v8717 = vsel %vm8049, %v8188, %v7946
      %v8718 = vsel %vm8049, %v8193, %v7947
      %v8719 = vsel %vm8049, %v8198, %v7948
      %v8720 = vsel %vm8049, %v8203, %v7949
      %v8721 = vsel %vm8049, %v8208, %v7950
      %v8722 = vsel %vm8049, %v8213, %v7951
      %v8723 = vsel %vm8049, %v8218, %v7952
      %v8724 = vsel %vm8049, %v8223, %v7953
      %v8725 = vsel %vm8049, %v8228, %v7954
      %v8726 = vsel %vm8049, %v8233, %v7955
      %v8727 = vsel %vm8049, %v8238, %v7956
      %v8728 = vsel %vm8049, %v8243, %v7957
      %v8729 = vsel %vm8049, %v8248, %v7958
      %v8730 = vsel %vm8049, %v8253, %v7959
      %v8731 = vsel %vm8049, %v8258, %v7960
      %v8732 = vsel %vm8049, %v8263, %v7961
      %v8733 = vsel %vm8049, %v8268, %v7962
      %v8734 = vsel %vm8049, %v8273, %v7963
      %v8735 = vsel %vm8049, %v8278, %v7964
      %v8736 = vsel %vm8049, %v8283, %v7965
      %v8737 = vsel %vm8049, %v8288, %v7966
      %v8738 = vsel %vm8049, %v8293, %v7967
      %v8739 = vsel %vm8049, %v8298, %v7968
      %v8740 = vsel %vm8049, %v8303, %v7969
      %v8741 = vsel %vm8049, %v8308, %v7970
      %v8742 = vsel %vm8049, %v8313, %v7971
      %v8743 = vsel %vm8049, %v8318, %v7972
      %v8744 = vsel %vm8049, %v8323, %v7973
      %v8745 = vsel %vm8049, %v8328, %v7974
      %v8746 = vsel %vm8049, %v8333, %v7975
      %v8747 = vsel %vm8049, %v8338, %v7976
      %v8748 = vsel %vm8049, %v8343, %v7977
      %v8749 = vsel %vm8049, %v8348, %v7978
      %v8750 = vsel %vm8049, %v8353, %v7979
      %v8751 = vsel %vm8049, %v8358, %v7980
      %v8752 = vsel %vm8049, %v8363, %v7981
      %v8753 = vsel %vm8049, %v8368, %v7982
      %v8754 = vsel %vm8049, %v8373, %v7983
      %v8755 = vsel %vm8049, %v8378, %v7984
      %v8756 = vsel %vm8049, %v8383, %v7985
      %v8757 = vsel %vm8049, %v8388, %v7986
      %v8758 = vsel %vm8049, %v8393, %v7987
      %v8759 = vsel %vm8049, %v8398, %v7988
      %v8760 = vsel %vm8049, %v8403, %v7989
      %v8761 = vsel %vm8049, %v8408, %v7990
      %v8762 = vsel %vm8049, %v8413, %v7991
      %v8763 = vsel %vm8049, %v8418, %v7992
      %v8764 = vsel %vm8049, %v8423, %v7993
      %v8765 = vsel %vm8049, %v8428, %v7994
      %v8766 = vsel %vm8049, %v8433, %v7995
      %v8767 = vsel %vm8049, %v8438, %v7996
      %v8768 = vsel %vm8049, %v8443, %v7997
      %v8769 = vsel %vm8049, %v8448, %v7998
      %v8770 = vsel %vm8049, %v8453, %v7999
      %v8771 = vsel %vm8049, %v8458, %v8000
      %v8772 = vsel %vm8049, %v8463, %v8001
      %v8773 = vsel %vm8049, %v8468, %v8002
      %v8774 = vsel %vm8049, %v8473, %v8003
      %v8775 = vsel %vm8049, %v8478, %v8004
      %v8776 = vsel %vm8049, %v8483, %v8005
      %v8777 = vsel %vm8049, %v8488, %v8006
      %v8778 = vsel %vm8049, %v8493, %v8007
      %v8779 = vsel %vm8049, %v8498, %v8008
      %v8780 = vsel %vm8049, %v8503, %v8009
      %v8781 = vsel %vm8049, %v8508, %v8010
      %v8782 = vsel %vm8049, %v8513, %v8011
      %v8783 = vsel %vm8049, %v8518, %v8012
      %v8784 = vsel %vm8049, %v8523, %v8013
      %v8785 = vsel %vm8049, %v8528, %v8014
      %v8786 = vsel %vm8049, %v8533, %v8015
      %v8787 = vsel %vm8049, %v8538, %v8016
      %v8788 = vsel %vm8049, %v8543, %v8017
      %v8789 = vsel %vm8049, %v8548, %v8018
      %v8790 = vsel %vm8049, %v8553, %v8019
      %v8791 = vsel %vm8049, %v8558, %v8020
      %v8792 = vsel %vm8049, %v8563, %v8021
      %v8793 = vsel %vm8049, %v8568, %v8022
      %v8794 = vsel %vm8049, %v8573, %v8023
      %v8795 = vsel %vm8049, %v8578, %v8024
      %v8796 = vsel %vm8049, %v8583, %v8025
      %v8797 = vsel %vm8049, %v8588, %v8026
      %v8798 = vsel %vm8049, %v8593, %v8027
      %v8799 = vsel %vm8049, %v8598, %v8028
      %v8800 = vsel %vm8049, %v8603, %v8029
      %v8801 = vsel %vm8049, %v8608, %v8030
      %v8802 = vsel %vm8049, %v8613, %v8031
      %v8803 = vsel %vm8049, %v8618, %v8032
      %v8804 = vsel %vm8049, %v8623, %v8033
      %v8805 = vsel %vm8049, %v8628, %v8034
      %v8806 = vsel %vm8049, %v8633, %v8035
      %v8807 = vsel %vm8049, %v8638, %v8036
      %v8808 = vsel %vm8049, %v8643, %v8037
      %v8809 = vsel %vm8049, %v8648, %v8038
      %v8810 = vsel %vm8049, %v8653, %v8039
      %v8811 = vsel %vm8049, %v8658, %v8040
      %v8812 = vsel %vm8049, %v8663, %v8041
      %v8813 = vsel %vm8049, %v8668, %v8042
      %v8814 = vsel %vm8049, %v8673, %v8043
      %v8815 = vsel %vm8049, %v8678, %v8044
      %v8816 = vsel %vm8049, %v8683, %v8045
      %v8817 = vsel %vm8049, %v8688, %v8046
      %8818 = vst.msk [vmem:[%s334] sm:$0xff] %vm570, %v8690
      %8819 = vst.msk [vmem:[%s334 + $0x8] sm:$0xff] %vm570, %v8691
      %8820 = vst.msk [vmem:[%s334 + $0x10] sm:$0xff] %vm570, %v8692
      %8821 = vst.msk [vmem:[%s334 + $0x18] sm:$0xff] %vm570, %v8693
      %8822 = vst.msk [vmem:[%s334 + $0x20] sm:$0xff] %vm570, %v8694
      %8823 = vst.msk [vmem:[%s334 + $0x28] sm:$0xff] %vm570, %v8695
      %8824 = vst.msk [vmem:[%s334 + $0x30] sm:$0xff] %vm570, %v8696
      %8825 = vst.msk [vmem:[%s334 + $0x38] sm:$0xff] %vm570, %v8697
      %8826 = vst.msk [vmem:[%s334 + $0x40] sm:$0xff] %vm570, %v8698
      %8827 = vst.msk [vmem:[%s334 + $0x48] sm:$0xff] %vm570, %v8699
      %8828 = vst.msk [vmem:[%s334 + $0x50] sm:$0xff] %vm570, %v8700
      %8829 = vst.msk [vmem:[%s334 + $0x58] sm:$0xff] %vm570, %v8701
      %8830 = vst.msk [vmem:[%s334 + $0x60] sm:$0xff] %vm570, %v8702
      %8831 = vst.msk [vmem:[%s334 + $0x68] sm:$0xff] %vm570, %v8703
      %8832 = vst.msk [vmem:[%s334 + $0x70] sm:$0xff] %vm570, %v8704
      %8833 = vst.msk [vmem:[%s334 + $0x78] sm:$0xff] %vm570, %v8705
      %8834 = vst.msk [vmem:[%s334 + $0x80] sm:$0xff] %vm570, %v8706
      %8835 = vst.msk [vmem:[%s334 + $0x88] sm:$0xff] %vm570, %v8707
      %8836 = vst.msk [vmem:[%s334 + $0x90] sm:$0xff] %vm570, %v8708
      %8837 = vst.msk [vmem:[%s334 + $0x98] sm:$0xff] %vm570, %v8709
      %8838 = vst.msk [vmem:[%s334 + $0xa0] sm:$0xff] %vm570, %v8710
      %8839 = vst.msk [vmem:[%s334 + $0xa8] sm:$0xff] %vm570, %v8711
      %8840 = vst.msk [vmem:[%s334 + $0xb0] sm:$0xff] %vm570, %v8712
      %8841 = vst.msk [vmem:[%s334 + $0xb8] sm:$0xff] %vm570, %v8713
      %8842 = vst.msk [vmem:[%s334 + $0xc0] sm:$0xff] %vm570, %v8714
      %8843 = vst.msk [vmem:[%s334 + $0xc8] sm:$0xff] %vm570, %v8715
      %8844 = vst.msk [vmem:[%s334 + $0xd0] sm:$0xff] %vm570, %v8716
      %8845 = vst.msk [vmem:[%s334 + $0xd8] sm:$0xff] %vm570, %v8717
      %8846 = vst.msk [vmem:[%s334 + $0xe0] sm:$0xff] %vm570, %v8718
      %8847 = vst.msk [vmem:[%s334 + $0xe8] sm:$0xff] %vm570, %v8719
      %8848 = vst.msk [vmem:[%s334 + $0xf0] sm:$0xff] %vm570, %v8720
      %8849 = vst.msk [vmem:[%s334 + $0xf8] sm:$0xff] %vm570, %v8721
      %8850 = vst.msk [vmem:[%s334 + $0x100] sm:$0xff] %vm570, %v8722
      %8851 = vst.msk [vmem:[%s334 + $0x108] sm:$0xff] %vm570, %v8723
      %8852 = vst.msk [vmem:[%s334 + $0x110] sm:$0xff] %vm570, %v8724
      %8853 = vst.msk [vmem:[%s334 + $0x118] sm:$0xff] %vm570, %v8725
      %8854 = vst.msk [vmem:[%s334 + $0x120] sm:$0xff] %vm570, %v8726
      %8855 = vst.msk [vmem:[%s334 + $0x128] sm:$0xff] %vm570, %v8727
      %8856 = vst.msk [vmem:[%s334 + $0x130] sm:$0xff] %vm570, %v8728
      %8857 = vst.msk [vmem:[%s334 + $0x138] sm:$0xff] %vm570, %v8729
      %8858 = vst.msk [vmem:[%s334 + $0x140] sm:$0xff] %vm570, %v8730
      %8859 = vst.msk [vmem:[%s334 + $0x148] sm:$0xff] %vm570, %v8731
      %8860 = vst.msk [vmem:[%s334 + $0x150] sm:$0xff] %vm570, %v8732
      %8861 = vst.msk [vmem:[%s334 + $0x158] sm:$0xff] %vm570, %v8733
      %8862 = vst.msk [vmem:[%s334 + $0x160] sm:$0xff] %vm570, %v8734
      %8863 = vst.msk [vmem:[%s334 + $0x168] sm:$0xff] %vm570, %v8735
      %8864 = vst.msk [vmem:[%s334 + $0x170] sm:$0xff] %vm570, %v8736
      %8865 = vst.msk [vmem:[%s334 + $0x178] sm:$0xff] %vm570, %v8737
      %8866 = vst.msk [vmem:[%s334 + $0x180] sm:$0xff] %vm570, %v8738
      %8867 = vst.msk [vmem:[%s334 + $0x188] sm:$0xff] %vm570, %v8739
      %8868 = vst.msk [vmem:[%s334 + $0x190] sm:$0xff] %vm570, %v8740
      %8869 = vst.msk [vmem:[%s334 + $0x198] sm:$0xff] %vm570, %v8741
      %8870 = vst.msk [vmem:[%s334 + $0x1a0] sm:$0xff] %vm570, %v8742
      %8871 = vst.msk [vmem:[%s334 + $0x1a8] sm:$0xff] %vm570, %v8743
      %8872 = vst.msk [vmem:[%s334 + $0x1b0] sm:$0xff] %vm570, %v8744
      %8873 = vst.msk [vmem:[%s334 + $0x1b8] sm:$0xff] %vm570, %v8745
      %8874 = vst.msk [vmem:[%s334 + $0x1c0] sm:$0xff] %vm570, %v8746
      %8875 = vst.msk [vmem:[%s334 + $0x1c8] sm:$0xff] %vm570, %v8747
      %8876 = vst.msk [vmem:[%s334 + $0x1d0] sm:$0xff] %vm570, %v8748
      %8877 = vst.msk [vmem:[%s334 + $0x1d8] sm:$0xff] %vm570, %v8749
      %8878 = vst.msk [vmem:[%s334 + $0x1e0] sm:$0xff] %vm570, %v8750
      %8879 = vst.msk [vmem:[%s334 + $0x1e8] sm:$0xff] %vm570, %v8751
      %8880 = vst.msk [vmem:[%s334 + $0x1f0] sm:$0xff] %vm570, %v8752
      %8881 = vst.msk [vmem:[%s334 + $0x1f8] sm:$0xff] %vm570, %v8753
      %8882 = vst.msk [vmem:[%s334 + $0x200] sm:$0xff] %vm570, %v8754
      %8883 = vst.msk [vmem:[%s334 + $0x208] sm:$0xff] %vm570, %v8755
      %8884 = vst.msk [vmem:[%s334 + $0x210] sm:$0xff] %vm570, %v8756
      %8885 = vst.msk [vmem:[%s334 + $0x218] sm:$0xff] %vm570, %v8757
      %8886 = vst.msk [vmem:[%s334 + $0x220] sm:$0xff] %vm570, %v8758
      %8887 = vst.msk [vmem:[%s334 + $0x228] sm:$0xff] %vm570, %v8759
      %8888 = vst.msk [vmem:[%s334 + $0x230] sm:$0xff] %vm570, %v8760
      %8889 = vst.msk [vmem:[%s334 + $0x238] sm:$0xff] %vm570, %v8761
      %8890 = vst.msk [vmem:[%s334 + $0x240] sm:$0xff] %vm570, %v8762
      %8891 = vst.msk [vmem:[%s334 + $0x248] sm:$0xff] %vm570, %v8763
      %8892 = vst.msk [vmem:[%s334 + $0x250] sm:$0xff] %vm570, %v8764
      %8893 = vst.msk [vmem:[%s334 + $0x258] sm:$0xff] %vm570, %v8765
      %8894 = vst.msk [vmem:[%s334 + $0x260] sm:$0xff] %vm570, %v8766
      %8895 = vst.msk [vmem:[%s334 + $0x268] sm:$0xff] %vm570, %v8767
      %8896 = vst.msk [vmem:[%s334 + $0x270] sm:$0xff] %vm570, %v8768
      %8897 = vst.msk [vmem:[%s334 + $0x278] sm:$0xff] %vm570, %v8769
      %8898 = vst.msk [vmem:[%s334 + $0x280] sm:$0xff] %vm570, %v8770
      %8899 = vst.msk [vmem:[%s334 + $0x288] sm:$0xff] %vm570, %v8771
      %8900 = vst.msk [vmem:[%s334 + $0x290] sm:$0xff] %vm570, %v8772
      %8901 = vst.msk [vmem:[%s334 + $0x298] sm:$0xff] %vm570, %v8773
      %8902 = vst.msk [vmem:[%s334 + $0x2a0] sm:$0xff] %vm570, %v8774
      %8903 = vst.msk [vmem:[%s334 + $0x2a8] sm:$0xff] %vm570, %v8775
      %8904 = vst.msk [vmem:[%s334 + $0x2b0] sm:$0xff] %vm570, %v8776
      %8905 = vst.msk [vmem:[%s334 + $0x2b8] sm:$0xff] %vm570, %v8777
      %8906 = vst.msk [vmem:[%s334 + $0x2c0] sm:$0xff] %vm570, %v8778
      %8907 = vst.msk [vmem:[%s334 + $0x2c8] sm:$0xff] %vm570, %v8779
      %8908 = vst.msk [vmem:[%s334 + $0x2d0] sm:$0xff] %vm570, %v8780
      %8909 = vst.msk [vmem:[%s334 + $0x2d8] sm:$0xff] %vm570, %v8781
      %8910 = vst.msk [vmem:[%s334 + $0x2e0] sm:$0xff] %vm570, %v8782
      %8911 = vst.msk [vmem:[%s334 + $0x2e8] sm:$0xff] %vm570, %v8783
      %8912 = vst.msk [vmem:[%s334 + $0x2f0] sm:$0xff] %vm570, %v8784
      %8913 = vst.msk [vmem:[%s334 + $0x2f8] sm:$0xff] %vm570, %v8785
      %8914 = vst.msk [vmem:[%s334 + $0x300] sm:$0xff] %vm570, %v8786
      %8915 = vst.msk [vmem:[%s334 + $0x308] sm:$0xff] %vm570, %v8787
      %8916 = vst.msk [vmem:[%s334 + $0x310] sm:$0xff] %vm570, %v8788
      %8917 = vst.msk [vmem:[%s334 + $0x318] sm:$0xff] %vm570, %v8789
      %8918 = vst.msk [vmem:[%s334 + $0x320] sm:$0xff] %vm570, %v8790
      %8919 = vst.msk [vmem:[%s334 + $0x328] sm:$0xff] %vm570, %v8791
      %8920 = vst.msk [vmem:[%s334 + $0x330] sm:$0xff] %vm570, %v8792
      %8921 = vst.msk [vmem:[%s334 + $0x338] sm:$0xff] %vm570, %v8793
      %8922 = vst.msk [vmem:[%s334 + $0x340] sm:$0xff] %vm570, %v8794
      %8923 = vst.msk [vmem:[%s334 + $0x348] sm:$0xff] %vm570, %v8795
      %8924 = vst.msk [vmem:[%s334 + $0x350] sm:$0xff] %vm570, %v8796
      %8925 = vst.msk [vmem:[%s334 + $0x358] sm:$0xff] %vm570, %v8797
      %8926 = vst.msk [vmem:[%s334 + $0x360] sm:$0xff] %vm570, %v8798
      %8927 = vst.msk [vmem:[%s334 + $0x368] sm:$0xff] %vm570, %v8799
      %8928 = vst.msk [vmem:[%s334 + $0x370] sm:$0xff] %vm570, %v8800
      %8929 = vst.msk [vmem:[%s334 + $0x378] sm:$0xff] %vm570, %v8801
      %8930 = vst.msk [vmem:[%s334 + $0x380] sm:$0xff] %vm570, %v8802
      %8931 = vst.msk [vmem:[%s334 + $0x388] sm:$0xff] %vm570, %v8803
      %8932 = vst.msk [vmem:[%s334 + $0x390] sm:$0xff] %vm570, %v8804
      %8933 = vst.msk [vmem:[%s334 + $0x398] sm:$0xff] %vm570, %v8805
      %8934 = vst.msk [vmem:[%s334 + $0x3a0] sm:$0xff] %vm570, %v8806
      %8935 = vst.msk [vmem:[%s334 + $0x3a8] sm:$0xff] %vm570, %v8807
      %8936 = vst.msk [vmem:[%s334 + $0x3b0] sm:$0xff] %vm570, %v8808
      %8937 = vst.msk [vmem:[%s334 + $0x3b8] sm:$0xff] %vm570, %v8809
      %8938 = vst.msk [vmem:[%s334 + $0x3c0] sm:$0xff] %vm570, %v8810
      %8939 = vst.msk [vmem:[%s334 + $0x3c8] sm:$0xff] %vm570, %v8811
      %8940 = vst.msk [vmem:[%s334 + $0x3d0] sm:$0xff] %vm570, %v8812
      %8941 = vst.msk [vmem:[%s334 + $0x3d8] sm:$0xff] %vm570, %v8813
      %8942 = vst.msk [vmem:[%s334 + $0x3e0] sm:$0xff] %vm570, %v8814
      %8943 = vst.msk [vmem:[%s334 + $0x3e8] sm:$0xff] %vm570, %v8815
      %8944 = vst.msk [vmem:[%s334 + $0x3f0] sm:$0xff] %vm570, %v8816
      %8945 = vst.msk [vmem:[%s334 + $0x3f8] sm:$0xff] %vm570, %v8817
      %s8946 = smul.u32 128, %s20
      %p8947 = scmp.lt.s32.totalorder %s8946, 511
      %s8948 = scalar_select %p8947, %s8946, 511
      %s8949 = smul.addr %s8948, 8
      %s8950 = scalar_lea.vmem %s9, %s8949
      // Predicated region
      $region57: #{tpu_custom_call.1} parent=55 // pred_check
        %p8951 = pneg %p232
      $region58: #{tpu_custom_call.1} parent=55 // pred_check_branch
        %8953 = sbr.rel (%p8951) target = $region60
      $region59: #{tpu_custom_call.1} parent=55 // pred_region
        %s8954 = smul.u32 128, %s20
      $region60: #{tpu_custom_call.1} parent=55 // pred_fallthru
        _
    $region56: #{tpu_custom_call.1} parent=5 // pred_fallthru
      _
    %p8955 = scmp.le.s32.totalorder 2, %s15
    // Predicated region
    $region61: #{tpu_custom_call.1} parent=5 // pred_check
      %p8956 = pneg %p8955
    $region62: #{tpu_custom_call.1} parent=5 // pred_check_branch
      %8958 = sbr.rel (%p8956) target = $region64
    $region63: #{tpu_custom_call.1} parent=5 // pred_region
      %s8959 = ssub.s32 %s15, 2
      // Predicated region
      $region65: #{tpu_custom_call.1} parent=63 // pred_check
        %p8960 = pneg %p238
      $region66: #{tpu_custom_call.1} parent=63 // pred_check_branch
        %8962 = sbr.rel (%p8960) target = $region68
      $region67: #{tpu_custom_call.1} parent=63 // pred_region
        %s8963 = smul.u32 128, %s21
        %p8964 = scmp.lt.s32.totalorder %s8963, 511
        %s8965 = scalar_select %p8964, %s8963, 511
        %s8966 = smul.addr %s8965, 8
        %s8967 = scalar_lea.vmem %s9, %s8966
      $region68: #{tpu_custom_call.1} parent=63 // pred_fallthru
        _
    $region64: #{tpu_custom_call.1} parent=5 // pred_fallthru
      _
  $region6: #{tpu_custom_call.1} parent=0 // loop_footer
    %s19 = sadd.s32 1, %s15
  $region7: #{tpu_custom_call.1} parent=0 // loop_footer_branch
    %14 = sbr.rel target = $region3
  $region8: #{tpu_custom_call.1} parent=0 // loop_exit
    _

</llo_original>
